<compile_context>
chip_gen: v7x
topology: tpu7x:2x2x1
jax: 0.10.0
libtpu: 0.0.40
codegen_flags: <defaults>
</compile_context>

<pallas_src>
import functools

import jax
import jax.numpy as jnp
from jax import lax
from jax.experimental import pallas as pl
from jax.experimental.pallas import tpu as pltpu

NEG_SLOPE = 0.01  # nn.LeakyReLU default


# ---------------------------------------------------------------------------
# Small helpers
# ---------------------------------------------------------------------------
def _round_up(v, m):
    return ((v + m - 1) // m) * m


def _pad2(a, rows, cols):
    pr, pc = rows - a.shape[0], cols - a.shape[1]
    if pr or pc:
        a = jnp.pad(a, ((0, pr), (0, pc)))
    return a


def _pick_tk(dim_padded, tm, tk_max):
    """Largest tile tm * 2^j <= tk_max that divides dim_padded (dim_padded % tm == 0)."""
    tk = tm
    while tk * 2 <= tk_max and dim_padded % (tk * 2) == 0:
        tk *= 2
    return tk


def _vmem_budget_bytes():
    """Generation-aware per-call VMEM budget (~48 MiB on v7x, ~96 MiB on v5e/v6e)."""
    try:
        cap = int(pltpu.get_tpu_info().vmem_capacity_bytes)
    except Exception:  # query unavailable -> conservative (v7x-safe) default
        cap = 64 * 1024 * 1024
    return max(32 * 1024 * 1024, min(cap * 3 // 4, 100 * 1024 * 1024))


def _mlp(v, w1_ref, b1_ref, w2_ref, b2_ref):
    """Linear -> LeakyReLU -> Linear on VMEM-resident weight refs.

    Activations are cast to the (bf16) weight dtype before each MXU dot and
    accumulated in f32; biases are added in f32.
    """
    w1 = w1_ref[...]
    h = jnp.dot(v.astype(w1.dtype), w1,
                preferred_element_type=jnp.float32) + b1_ref[...]
    h = jnp.maximum(h, NEG_SLOPE * h)               # LeakyReLU (slope in [0,1])
    w2 = w2_ref[...]
    return jnp.dot(h.astype(w2.dtype), w2,
                   preferred_element_type=jnp.float32) + b2_ref[...]


# ---------------------------------------------------------------------------
# Phase 1: yy = outlayer(emby(y) + embx(A @ x))        grid = (Np/tm, Mp/tk1)
# ---------------------------------------------------------------------------
def _phase1_kernel(A_ref, x_ref, y_ref,
                   exw1, exb1, exw2, exb2,            # embx
                   eyw1, eyb1, eyw2, eyb2,            # emby
                   ow1, ob1, ow2, ob2,                # outlayer
                   yf32_ref, ybf16_ref, acc_ref,
                   *, tk, x_resident):
    k = pl.program_id(1)

    @pl.when(k == 0)
    def _():
        acc_ref[...] = jnp.zeros_like(acc_ref)

    if x_resident:
        # x is fully VMEM-resident; take the reduction slice in-kernel.
        x_blk = x_ref[pl.ds(pl.multiple_of(k * tk, tk), tk), :]
    else:
        x_blk = x_ref[...]

    # Partial A @ x over the M (reduction) tiles, f32 accumulation on the MXU.
    acc_ref[...] += jnp.dot(A_ref[...], x_blk,
                            preferred_element_type=jnp.float32)

    @pl.when(k == pl.num_programs(1) - 1)
    def _():
        Ax = _mlp(acc_ref[...], exw1, exb1, exw2, exb2)
        yy = _mlp(y_ref[...], eyw1, eyb1, eyw2, eyb2) + Ax
        yy = _mlp(yy, ow1, ob1, ow2, ob2)
        yf32_ref[...] = yy                               # returned result (f32)
        ybf16_ref[...] = yy.astype(ybf16_ref.dtype)      # feeds phase 2 directly


# ---------------------------------------------------------------------------
# Phase 2: xx = outlayer2(embx2(x) + emby2(A.T @ yy))  grid = (Mp/tm, Np/tk2)
# A is streamed un-transposed; the contraction is over A's first axis.
# ---------------------------------------------------------------------------
def _phase2_kernel(A_ref, yy_ref, x_ref,
                   ey2w1, ey2b1, ey2w2, ey2b2,        # emby2
                   ex2w1, ex2b1, ex2w2, ex2b2,        # embx2
                   o2w1, o2b1, o2w2, o2b2,            # outlayer2
                   x_out_ref, acc_ref,
                   *, tk, yy_resident):
    k = pl.program_id(1)

    @pl.when(k == 0)
    def _():
        acc_ref[...] = jnp.zeros_like(acc_ref)

    if yy_resident:
        yy_blk = yy_ref[pl.ds(pl.multiple_of(k * tk, tk), tk), :]
    else:
        yy_blk = yy_ref[...]

    # A.T @ yy without materializing A.T: contract dim 0 of both operands.
    acc_ref[...] += lax.dot_general(
        A_ref[...], yy_blk,
        dimension_numbers=(((0,), (0,)), ((), ())),
        preferred_element_type=jnp.float32)

    @pl.when(k == pl.num_programs(1) - 1)
    def _():
        ATy = _mlp(acc_ref[...], ey2w1, ey2b1, ey2w2, ey2b2)
        xx = _mlp(x_ref[...], ex2w1, ex2b1, ex2w2, ex2b2) + ATy
        xx = _mlp(xx, o2w1, o2b1, o2w2, o2b2)
        x_out_ref[...] = xx.astype(x_out_ref.dtype)


# ---------------------------------------------------------------------------
# Wrapper
# ---------------------------------------------------------------------------
def gcn_layer_forward(A, x, y, params, *, tm=256, tk_max=2048,
                      compute_dtype=jnp.bfloat16):
    """params: flat list of 24 arrays, (w1, b1, w2, b2) for each of
    [embx, emby, outlayer, embx2, emby2, outlayer2]."""
    N, M = A.shape
    x_size, y_size = x.shape[1], y.shape[1]
    feat = params[2].shape[1]          # embx second Linear: (feat, feat)

    Np, Mp = _round_up(N, tm), _round_up(M, tm)
    fp = _round_up(feat, 128)
    xp = _round_up(x_size, 128)
    yp = _round_up(y_size, 128)

    budget = _vmem_budget_bytes()
    resident_cap = max(budget // 8, 4 * 1024 * 1024)
    itemsz = jnp.dtype(compute_dtype).itemsize

    # Zero-padded, lane-dense, bf16 operands.  Padding is exact: padded A
    # rows/cols are zero, padded weight rows and bias columns are zero.
    # TODO(synk): int8/fp8 A storage (halves the dominant HBM stream) is only
    # exact for {0,+-1}-valued adjacency; gate on actual A contents.
    A_p = _pad2(A, Np, Mp).astype(compute_dtype)
    x_p = _pad2(x, Mp, xp).astype(compute_dtype)
    y_p = _pad2(y, Np, yp).astype(compute_dtype)

    def _pad_block(w1, b1, w2, b2):
        in_p = _round_up(w1.shape[0], 128)
        return (_pad2(w1, in_p, fp).astype(compute_dtype),
                _pad2(b1, 1, fp).astype(jnp.float32),
                _pad2(w2, fp, fp).astype(compute_dtype),
                _pad2(b2, 1, fp).astype(jnp.float32))

    blocks = [_pad_block(*params[4 * i:4 * i + 4]) for i in range(6)]
    embx, emby, outl, embx2, emby2, outl2 = blocks

    def _wspec(a):                      # whole array, VMEM-resident across grid
        return pl.BlockSpec(a.shape, lambda i, k: (0, 0))

    cparams = pltpu.CompilerParams(
        dimension_semantics=("parallel", "arbitrary"),
        vmem_limit_bytes=budget,
    )

    # ---- Phase 1 ----------------------------------------------------------
    p1_w = list(embx) + list(emby) + list(outl)
    w1_bytes = 2 * sum(int(w.size) * w.dtype.itemsize for w in p1_w)
    x_res = Mp * xp * itemsz <= resident_cap
    tk1 = _pick_tk(Mp, tm, tk_max)

    def _p1_bytes(tk):
        b = 2 * tm * tk * itemsz                                          # A stream
        b += (2 * Mp * xp * itemsz) if x_res else (2 * tk * xp * itemsz)  # x
        b += 2 * tm * yp * itemsz                                         # y
        b += 2 * tm * fp * (4 + itemsz)                                   # yy f32+bf16
        b += tm * xp * 4                                                  # acc scratch
        return b + w1_bytes

    while tk1 > tm and _p1_bytes(tk1) > budget:
        tk1 //= 2

    x_spec = (pl.BlockSpec((Mp, xp), lambda i, k: (0, 0)) if x_res
              else pl.BlockSpec((tk1, xp), lambda i, k: (k, 0)))

    yy_f32, yy_bf16 = pl.pallas_call(
        functools.partial(_phase1_kernel, tk=tk1, x_resident=x_res),
        out_shape=(jax.ShapeDtypeStruct((Np, fp), jnp.float32),
                   jax.ShapeDtypeStruct((Np, fp), compute_dtype)),
        grid=(Np // tm, Mp // tk1),
        in_specs=[pl.BlockSpec((tm, tk1), lambda i, k: (i, k)),    # A
                  x_spec,                                          # x
                  pl.BlockSpec((tm, yp), lambda i, k: (i, 0)),     # y
                  ] + [_wspec(a) for a in p1_w],
        out_specs=(pl.BlockSpec((tm, fp), lambda i, k: (i, 0)),
                   pl.BlockSpec((tm, fp), lambda i, k: (i, 0))),
        scratch_shapes=[pltpu.VMEM((tm, xp), jnp.float32)],
        compiler_params=cparams,
    )(A_p, x_p, y_p, *p1_w)

    # ---- Phase 2 ----------------------------------------------------------
    p2_w = list(emby2) + list(embx2) + list(outl2)
    w2_bytes = 2 * sum(int(w.size) * w.dtype.itemsize for w in p2_w)
    yy_res = Np * fp * itemsz <= resident_cap
    tk2 = _pick_tk(Np, tm, tk_max)

    def _p2_bytes(tk):
        b = 2 * tk * tm * itemsz                                          # A stream
        b += (2 * Np * fp * itemsz) if yy_res else (2 * tk * fp * itemsz)  # yy
        b += 2 * tm * xp * itemsz                                         # x
        b += 2 * tm * fp * 4                                              # xx out
        b += tm * fp * 4                                                  # acc scratch
        return b + w2_bytes

    while tk2 > tm and _p2_bytes(tk2) > budget:
        tk2 //= 2

    yy_spec = (pl.BlockSpec((Np, fp), lambda i, k: (0, 0)) if yy_res
               else pl.BlockSpec((tk2, fp), lambda i, k: (k, 0)))

    xx_f32 = pl.pallas_call(
        functools.partial(_phase2_kernel, tk=tk2, yy_resident=yy_res),
        out_shape=jax.ShapeDtypeStruct((Mp, fp), jnp.float32),
        grid=(Mp // tm, Np // tk2),
        in_specs=[pl.BlockSpec((tk2, tm), lambda i, k: (k, i)),    # A (reduction rows)
                  yy_spec,                                         # yy (bf16, phase 1)
                  pl.BlockSpec((tm, xp), lambda i, k: (i, 0)),     # x
                  ] + [_wspec(a) for a in p2_w],
        out_specs=pl.BlockSpec((tm, fp), lambda i, k: (i, 0)),
        scratch_shapes=[pltpu.VMEM((tm, fp), jnp.float32)],
        compiler_params=cparams,
    )(A_p, yy_bf16, x_p, *p2_w)

    # Strip padding.
    return xx_f32[:M, :feat], yy_f32[:N, :feat]


# ---------------------------------------------------------------------------
# Parameters (PyTorch nn.Linear default init, deterministic) and references
# ---------------------------------------------------------------------------
def _linear_params(key, in_f, out_f):
    kw, kb = jax.random.split(key)
    bound = 1.0 / (in_f ** 0.5)
    w = jax.random.uniform(kw, (in_f, out_f), jnp.float32, -bound, bound)
    b = jax.random.uniform(kb, (1, out_f), jnp.float32, -bound, bound)
    return w, b


def make_params(key, x_size, y_size, feat_size):
    # 6 blocks: embx, emby, outlayer, embx2, emby2, outlayer2
    in_sizes = [x_size, y_size, feat_size, x_size, y_size, feat_size]
    params = []
    keys = jax.random.split(key, 12)
    for i, in_f in enumerate(in_sizes):
        w1, b1 = _linear_params(keys[2 * i], in_f, feat_size)
        w2, b2 = _linear_params(keys[2 * i + 1], feat_size, feat_size)
        params += [w1, b1, w2, b2]
    return params


def _mlp_ref(v, w1, b1, w2, b2, cd):
    h = jnp.dot(v.astype(cd), w1.astype(cd),
                preferred_element_type=jnp.float32) + b1
    h = jnp.maximum(h, NEG_SLOPE * h)
    return jnp.dot(h.astype(cd), w2.astype(cd),
                   preferred_element_type=jnp.float32) + b2


def gcn_layer_reference(A, x, y, params, compute_dtype=jnp.float32):
    """Plain-JAX mirror of the PyTorch forward.  With compute_dtype=float32 it
    is the exact reference math; with bfloat16 it mirrors the kernel's casts."""
    cd = compute_dtype
    (exw1, exb1, exw2, exb2,
     eyw1, eyb1, eyw2, eyb2,
     ow1, ob1, ow2, ob2,
     ex2w1, ex2b1, ex2w2, ex2b2,
     ey2w1, ey2b1, ey2w2, ey2b2,
     o2w1, o2b1, o2w2, o2b2) = params
    A_c, x_c, y_c = A.astype(cd), x.astype(cd), y.astype(cd)
    Ax = _mlp_ref(jnp.dot(A_c, x_c, preferred_element_type=jnp.float32),
                  exw1, exb1, exw2, exb2, cd)
    yy = _mlp_ref(y_c, eyw1, eyb1, eyw2, eyb2, cd) + Ax
    yy = _mlp_ref(yy, ow1, ob1, ow2, ob2, cd)
    # Second branch consumes the *updated* y, exactly as in the PyTorch module.
    ATy = _mlp_ref(jnp.dot(A_c.T, yy.astype(cd),
                           preferred_element_type=jnp.float32),
                   ey2w1, ey2b1, ey2w2, ey2b2, cd)
    xx = _mlp_ref(x_c, ex2w1, ex2b1, ex2w2, ex2b2, cd) + ATy
    xx = _mlp_ref(xx, o2w1, o2b1, o2w2, o2b2, cd)
    return xx, yy


if __name__ == "__main__":
    # Small but multi-tile shapes.  The PyTorch module itself requires
    # y_size == feat_size (emby2 is applied to A.T @ y, which already has
    # feat_size columns).
    N, M = 300, 200
    x_size = 24
    feat_size = 64
    y_size = feat_size

    key = jax.random.PRNGKey(0)
    k_a, k_x, k_y, k_p = jax.random.split(key, 4)
    A = jax.random.normal(k_a, (N, M), jnp.float32)
    x = jax.random.normal(k_x, (M, x_size), jnp.float32)
    y = jax.random.normal(k_y, (N, y_size), jnp.float32)
    params = make_params(k_p, x_size, y_size, feat_size)

    fwd = jax.jit(gcn_layer_forward)
    x_out, y_out = jax.block_until_ready(fwd(A, x, y, params))
    assert x_out.shape == (M, feat_size) and y_out.shape == (N, feat_size)

    # 1) Tight check against a reference doing the same bf16-in / f32-accum math.
    x_bf, y_bf = gcn_layer_reference(A, x, y, params,
                                     compute_dtype=jnp.bfloat16)
    assert jnp.allclose(y_out, y_bf, atol=3e-2, rtol=3e-2)
    assert jnp.allclose(x_out, x_bf, atol=3e-2, rtol=3e-2)

    # 2) Loose semantic check against the exact f32 PyTorch-equivalent math
    #    (bf16 inputs with f32 accumulation -> ~1%-level differences expected).
    x_f32, y_f32 = gcn_layer_reference(A, x, y, params)
    assert jnp.allclose(y_out, y_f32, atol=0.5, rtol=0.1)
    assert jnp.allclose(x_out, x_f32, atol=0.5, rtol=0.1)

    print("KERNEL_OK")
</pallas_src>

<mosaic_0001>
module attributes {stable_mosaic.version = 11 : i64} {
  func.func @_phase2_kernel(%arg0: i32, %arg1: i32, %arg2: memref<512x256xbf16, #tpu.memory_space<vmem>>, %arg3: memref<512x128xbf16, #tpu.memory_space<vmem>>, %arg4: memref<256x128xbf16, #tpu.memory_space<vmem>>, %arg5: memref<128x128xbf16, #tpu.memory_space<vmem>>, %arg6: memref<1x128xf32, #tpu.memory_space<vmem>>, %arg7: memref<128x128xbf16, #tpu.memory_space<vmem>>, %arg8: memref<1x128xf32, #tpu.memory_space<vmem>>, %arg9: memref<128x128xbf16, #tpu.memory_space<vmem>>, %arg10: memref<1x128xf32, #tpu.memory_space<vmem>>, %arg11: memref<128x128xbf16, #tpu.memory_space<vmem>>, %arg12: memref<1x128xf32, #tpu.memory_space<vmem>>, %arg13: memref<128x128xbf16, #tpu.memory_space<vmem>>, %arg14: memref<1x128xf32, #tpu.memory_space<vmem>>, %arg15: memref<128x128xbf16, #tpu.memory_space<vmem>>, %arg16: memref<1x128xf32, #tpu.memory_space<vmem>>, %arg17: memref<256x128xf32, #tpu.memory_space<vmem>>, %arg18: memref<256x128xf32, #tpu.memory_space<vmem>>) attributes {dimension_semantics = [#tpu.dimension_semantics<parallel>, #tpu.dimension_semantics<arbitrary>], iteration_bounds = array<i64: 1, 1>, scalar_prefetch = 0 : i64, scratch_operands = 1 : i64, tpu.core_type = #tpu.core_type<tc>, window_params = [{transform_indices = @transform_0, window_bounds = array<i64: 512, 256>}, {pipeline_mode = #tpu.pipeline_mode<synchronous>, transform_indices = @transform_1, window_bounds = array<i64: 512, 128>}, {transform_indices = @transform_2, window_bounds = array<i64: 256, 128>}, {pipeline_mode = #tpu.pipeline_mode<synchronous>, transform_indices = @transform_3, window_bounds = array<i64: 128, 128>}, {pipeline_mode = #tpu.pipeline_mode<synchronous>, transform_indices = @transform_4, window_bounds = array<i64: 1, 128>}, {pipeline_mode = #tpu.pipeline_mode<synchronous>, transform_indices = @transform_5, window_bounds = array<i64: 128, 128>}, {pipeline_mode = #tpu.pipeline_mode<synchronous>, transform_indices = @transform_6, window_bounds = array<i64: 1, 128>}, {pipeline_mode = #tpu.pipeline_mode<synchronous>, transform_indices = @transform_7, window_bounds = array<i64: 128, 128>}, {pipeline_mode = #tpu.pipeline_mode<synchronous>, transform_indices = @transform_8, window_bounds = array<i64: 1, 128>}, {pipeline_mode = #tpu.pipeline_mode<synchronous>, transform_indices = @transform_9, window_bounds = array<i64: 128, 128>}, {pipeline_mode = #tpu.pipeline_mode<synchronous>, transform_indices = @transform_10, window_bounds = array<i64: 1, 128>}, {pipeline_mode = #tpu.pipeline_mode<synchronous>, transform_indices = @transform_11, window_bounds = array<i64: 128, 128>}, {pipeline_mode = #tpu.pipeline_mode<synchronous>, transform_indices = @transform_12, window_bounds = array<i64: 1, 128>}, {pipeline_mode = #tpu.pipeline_mode<synchronous>, transform_indices = @transform_13, window_bounds = array<i64: 128, 128>}, {pipeline_mode = #tpu.pipeline_mode<synchronous>, transform_indices = @transform_14, window_bounds = array<i64: 1, 128>}, {transform_indices = @transform_15, window_bounds = array<i64: 256, 128>}]} {
    %c0_i32 = arith.constant 0 : i32
    %0 = arith.cmpi eq, %arg1, %c0_i32 : i32
    %1 = arith.extui %0 : i1 to i32
    %c0_i32_0 = arith.constant 0 : i32
    %2 = arith.cmpi ne, %1, %c0_i32_0 : i32
    scf.if %2 {
      %cst_9 = arith.constant 0.000000e+00 : f32
      %15 = vector.broadcast %cst_9 : f32 to vector<256x128xf32>
      %c0_10 = arith.constant 0 : index
      %c0_11 = arith.constant 0 : index
      %16 = vector.load %arg18[%c0_10, %c0_11] : memref<256x128xf32, #tpu.memory_space<vmem>>, vector<256x128xf32>
      tpu.vector_store %arg18[%c0_10, %c0_11], %15 {strides = array<i32>} : memref<256x128xf32, #tpu.memory_space<vmem>>, vector<256x128xf32>,
    } else {
    }
    %c512_i32 = arith.constant 512 : i32
    %3 = arith.muli %arg1, %c512_i32 : i32
    %4 = tpu.assume_multiple %3, 512 : i32
    %5 = arith.index_cast %4 : i32 to index
    %c0 = arith.constant 0 : index
    %6 = vector.load %arg3[%5, %c0] : memref<512x128xbf16, #tpu.memory_space<vmem>>, vector<512x128xbf16>
    %c0_1 = arith.constant 0 : index
    %c0_2 = arith.constant 0 : index
    %7 = vector.load %arg18[%c0_1, %c0_2] : memref<256x128xf32, #tpu.memory_space<vmem>>, vector<256x128xf32>
    %c0_3 = arith.constant 0 : index
    %c0_4 = arith.constant 0 : index
    %8 = vector.load %arg2[%c0_3, %c0_4] : memref<512x256xbf16, #tpu.memory_space<vmem>>, vector<512x256xbf16>
    %cst = arith.constant dense<0.000000e+00> : vector<256x128xf32>
    %9 = tpu.matmul %8, %6, %cst {dimension_numbers = #tpu.dot_dimension_numbers<[0], [0], [1], [1], [0, 1, 1, 1], [], []>} : vector<512x256xbf16>, vector<512x128xbf16>, vector<256x128xf32> -> vector<256x128xf32>
    %10 = arith.addf %7, %9 : vector<256x128xf32>
    %c0_5 = arith.constant 0 : index
    %c0_6 = arith.constant 0 : index
    %11 = vector.load %arg18[%c0_5, %c0_6] : memref<256x128xf32, #tpu.memory_space<vmem>>, vector<256x128xf32>
    tpu.vector_store %arg18[%c0_5, %c0_6], %10 {strides = array<i32>} : memref<256x128xf32, #tpu.memory_space<vmem>>, vector<256x128xf32>,
    %c0_i32_7 = arith.constant 0 : i32
    %12 = arith.cmpi eq, %arg1, %c0_i32_7 : i32
    %13 = arith.extui %12 : i1 to i32
    %c0_i32_8 = arith.constant 0 : i32
    %14 = arith.cmpi ne, %13, %c0_i32_8 : i32
    scf.if %14 {
      %c0_9 = arith.constant 0 : index
      %c0_10 = arith.constant 0 : index
      %15 = vector.load %arg18[%c0_9, %c0_10] : memref<256x128xf32, #tpu.memory_space<vmem>>, vector<256x128xf32>
      %c0_11 = arith.constant 0 : index
      %c0_12 = arith.constant 0 : index
      %16 = vector.load %arg5[%c0_11, %c0_12] : memref<128x128xbf16, #tpu.memory_space<vmem>>, vector<128x128xbf16>
      %17 = arith.truncf %15 : vector<256x128xf32> to vector<256x128xbf16>
      %cst_13 = arith.constant dense<0.000000e+00> : vector<256x128xf32>
      %18 = tpu.matmul %17, %16, %cst_13 {dimension_numbers = #tpu.dot_dimension_numbers<[1], [0], [0], [1], [0, 0, 1, 1], [], []>} : vector<256x128xbf16>, vector<128x128xbf16>, vector<256x128xf32> -> vector<256x128xf32>
      %c0_14 = arith.constant 0 : index
      %c0_15 = arith.constant 0 : index
      %19 = vector.load %arg6[%c0_14, %c0_15] : memref<1x128xf32, #tpu.memory_space<vmem>>, vector<1x128xf32>
      %20 = vector.broadcast %19 : vector<1x128xf32> to vector<256x128xf32>
      %21 = arith.addf %18, %20 : vector<256x128xf32>
      %cst_16 = arith.constant 0.00999999977 : f32
      %22 = vector.broadcast %cst_16 : f32 to vector<256x128xf32>
      %23 = arith.mulf %22, %21 : vector<256x128xf32>
      %24 = arith.maximumf %21, %23 : vector<256x128xf32>
      %c0_17 = arith.constant 0 : index
      %c0_18 = arith.constant 0 : index
      %25 = vector.load %arg7[%c0_17, %c0_18] : memref<128x128xbf16, #tpu.memory_space<vmem>>, vector<128x128xbf16>
      %26 = arith.truncf %24 : vector<256x128xf32> to vector<256x128xbf16>
      %cst_19 = arith.constant dense<0.000000e+00> : vector<256x128xf32>
      %27 = tpu.matmul %26, %25, %cst_19 {dimension_numbers = #tpu.dot_dimension_numbers<[1], [0], [0], [1], [0, 0, 1, 1], [], []>} : vector<256x128xbf16>, vector<128x128xbf16>, vector<256x128xf32> -> vector<256x128xf32>
      %c0_20 = arith.constant 0 : index
      %c0_21 = arith.constant 0 : index
      %28 = vector.load %arg8[%c0_20, %c0_21] : memref<1x128xf32, #tpu.memory_space<vmem>>, vector<1x128xf32>
      %29 = vector.broadcast %28 : vector<1x128xf32> to vector<256x128xf32>
      %30 = arith.addf %27, %29 : vector<256x128xf32>
      %c0_22 = arith.constant 0 : index
      %c0_23 = arith.constant 0 : index
      %31 = vector.load %arg4[%c0_22, %c0_23] : memref<256x128xbf16, #tpu.memory_space<vmem>>, vector<256x128xbf16>
      %c0_24 = arith.constant 0 : index
      %c0_25 = arith.constant 0 : index
      %32 = vector.load %arg9[%c0_24, %c0_25] : memref<128x128xbf16, #tpu.memory_space<vmem>>, vector<128x128xbf16>
      %cst_26 = arith.constant dense<0.000000e+00> : vector<256x128xf32>
      %33 = tpu.matmul %31, %32, %cst_26 {dimension_numbers = #tpu.dot_dimension_numbers<[1], [0], [0], [1], [0, 0, 1, 1], [], []>} : vector<256x128xbf16>, vector<128x128xbf16>, vector<256x128xf32> -> vector<256x128xf32>
      %c0_27 = arith.constant 0 : index
      %c0_28 = arith.constant 0 : index
      %34 = vector.load %arg10[%c0_27, %c0_28] : memref<1x128xf32, #tpu.memory_space<vmem>>, vector<1x128xf32>
      %35 = vector.broadcast %34 : vector<1x128xf32> to vector<256x128xf32>
      %36 = arith.addf %33, %35 : vector<256x128xf32>
      %cst_29 = arith.constant 0.00999999977 : f32
      %37 = vector.broadcast %cst_29 : f32 to vector<256x128xf32>
      %38 = arith.mulf %37, %36 : vector<256x128xf32>
      %39 = arith.maximumf %36, %38 : vector<256x128xf32>
      %c0_30 = arith.constant 0 : index
      %c0_31 = arith.constant 0 : index
      %40 = vector.load %arg11[%c0_30, %c0_31] : memref<128x128xbf16, #tpu.memory_space<vmem>>, vector<128x128xbf16>
      %41 = arith.truncf %39 : vector<256x128xf32> to vector<256x128xbf16>
      %cst_32 = arith.constant dense<0.000000e+00> : vector<256x128xf32>
      %42 = tpu.matmul %41, %40, %cst_32 {dimension_numbers = #tpu.dot_dimension_numbers<[1], [0], [0], [1], [0, 0, 1, 1], [], []>} : vector<256x128xbf16>, vector<128x128xbf16>, vector<256x128xf32> -> vector<256x128xf32>
      %c0_33 = arith.constant 0 : index
      %c0_34 = arith.constant 0 : index
      %43 = vector.load %arg12[%c0_33, %c0_34] : memref<1x128xf32, #tpu.memory_space<vmem>>, vector<1x128xf32>
      %44 = vector.broadcast %43 : vector<1x128xf32> to vector<256x128xf32>
      %45 = arith.addf %42, %44 : vector<256x128xf32>
      %46 = arith.addf %45, %30 : vector<256x128xf32>
      %c0_35 = arith.constant 0 : index
      %c0_36 = arith.constant 0 : index
      %47 = vector.load %arg13[%c0_35, %c0_36] : memref<128x128xbf16, #tpu.memory_space<vmem>>, vector<128x128xbf16>
      %48 = arith.truncf %46 : vector<256x128xf32> to vector<256x128xbf16>
      %cst_37 = arith.constant dense<0.000000e+00> : vector<256x128xf32>
      %49 = tpu.matmul %48, %47, %cst_37 {dimension_numbers = #tpu.dot_dimension_numbers<[1], [0], [0], [1], [0, 0, 1, 1], [], []>} : vector<256x128xbf16>, vector<128x128xbf16>, vector<256x128xf32> -> vector<256x128xf32>
      %c0_38 = arith.constant 0 : index
      %c0_39 = arith.constant 0 : index
      %50 = vector.load %arg14[%c0_38, %c0_39] : memref<1x128xf32, #tpu.memory_space<vmem>>, vector<1x128xf32>
      %51 = vector.broadcast %50 : vector<1x128xf32> to vector<256x128xf32>
      %52 = arith.addf %49, %51 : vector<256x128xf32>
      %cst_40 = arith.constant 0.00999999977 : f32
      %53 = vector.broadcast %cst_40 : f32 to vector<256x128xf32>
      %54 = arith.mulf %53, %52 : vector<256x128xf32>
      %55 = arith.maximumf %52, %54 : vector<256x128xf32>
      %c0_41 = arith.constant 0 : index
      %c0_42 = arith.constant 0 : index
      %56 = vector.load %arg15[%c0_41, %c0_42] : memref<128x128xbf16, #tpu.memory_space<vmem>>, vector<128x128xbf16>
      %57 = arith.truncf %55 : vector<256x128xf32> to vector<256x128xbf16>
      %cst_43 = arith.constant dense<0.000000e+00> : vector<256x128xf32>
      %58 = tpu.matmul %57, %56, %cst_43 {dimension_numbers = #tpu.dot_dimension_numbers<[1], [0], [0], [1], [0, 0, 1, 1], [], []>} : vector<256x128xbf16>, vector<128x128xbf16>, vector<256x128xf32> -> vector<256x128xf32>
      %c0_44 = arith.constant 0 : index
      %c0_45 = arith.constant 0 : index
      %59 = vector.load %arg16[%c0_44, %c0_45] : memref<1x128xf32, #tpu.memory_space<vmem>>, vector<1x128xf32>
      %60 = vector.broadcast %59 : vector<1x128xf32> to vector<256x128xf32>
      %61 = arith.addf %58, %60 : vector<256x128xf32>
      %c0_46 = arith.constant 0 : index
      %c0_47 = arith.constant 0 : index
      %62 = vector.load %arg17[%c0_46, %c0_47] : memref<256x128xf32, #tpu.memory_space<vmem>>, vector<256x128xf32>
      tpu.vector_store %arg17[%c0_46, %c0_47], %61 {strides = array<i32>} : memref<256x128xf32, #tpu.memory_space<vmem>>, vector<256x128xf32>,
    } else {
    }
    return
  }
  func.func @transform_0(%arg0: i32, %arg1: i32) -> (i32, i32) {
    %c0_i32 = arith.constant 0 : i32
    return %arg1, %arg0 : i32, i32
  }
  func.func @transform_1(%arg0: i32, %arg1: i32) -> (i32, i32) {
    %c0_i32 = arith.constant 0 : i32
    %c0_i32_0 = arith.constant 0 : i32
    %c0_i32_1 = arith.constant 0 : i32
    return %c0_i32, %c0_i32_0 : i32, i32
  }
  func.func @transform_2(%arg0: i32, %arg1: i32) -> (i32, i32) {
    %c0_i32 = arith.constant 0 : i32
    %c0_i32_0 = arith.constant 0 : i32
    return %arg0, %c0_i32 : i32, i32
  }
  func.func @transform_3(%arg0: i32, %arg1: i32) -> (i32, i32) {
    %c0_i32 = arith.constant 0 : i32
    %c0_i32_0 = arith.constant 0 : i32
    %c0_i32_1 = arith.constant 0 : i32
    return %c0_i32, %c0_i32_0 : i32, i32
  }
  func.func @transform_4(%arg0: i32, %arg1: i32) -> (i32, i32) {
    %c0_i32 = arith.constant 0 : i32
    %c0_i32_0 = arith.constant 0 : i32
    %c0_i32_1 = arith.constant 0 : i32
    return %c0_i32, %c0_i32_0 : i32, i32
  }
  func.func @transform_5(%arg0: i32, %arg1: i32) -> (i32, i32) {
    %c0_i32 = arith.constant 0 : i32
    %c0_i32_0 = arith.constant 0 : i32
    %c0_i32_1 = arith.constant 0 : i32
    return %c0_i32, %c0_i32_0 : i32, i32
  }
  func.func @transform_6(%arg0: i32, %arg1: i32) -> (i32, i32) {
    %c0_i32 = arith.constant 0 : i32
    %c0_i32_0 = arith.constant 0 : i32
    %c0_i32_1 = arith.constant 0 : i32
    return %c0_i32, %c0_i32_0 : i32, i32
  }
  func.func @transform_7(%arg0: i32, %arg1: i32) -> (i32, i32) {
    %c0_i32 = arith.constant 0 : i32
    %c0_i32_0 = arith.constant 0 : i32
    %c0_i32_1 = arith.constant 0 : i32
    return %c0_i32, %c0_i32_0 : i32, i32
  }
  func.func @transform_8(%arg0: i32, %arg1: i32) -> (i32, i32) {
    %c0_i32 = arith.constant 0 : i32
    %c0_i32_0 = arith.constant 0 : i32
    %c0_i32_1 = arith.constant 0 : i32
    return %c0_i32, %c0_i32_0 : i32, i32
  }
  func.func @transform_9(%arg0: i32, %arg1: i32) -> (i32, i32) {
    %c0_i32 = arith.constant 0 : i32
    %c0_i32_0 = arith.constant 0 : i32
    %c0_i32_1 = arith.constant 0 : i32
    return %c0_i32, %c0_i32_0 : i32, i32
  }
  func.func @transform_10(%arg0: i32, %arg1: i32) -> (i32, i32) {
    %c0_i32 = arith.constant 0 : i32
    %c0_i32_0 = arith.constant 0 : i32
    %c0_i32_1 = arith.constant 0 : i32
    return %c0_i32, %c0_i32_0 : i32, i32
  }
  func.func @transform_11(%arg0: i32, %arg1: i32) -> (i32, i32) {
    %c0_i32 = arith.constant 0 : i32
    %c0_i32_0 = arith.constant 0 : i32
    %c0_i32_1 = arith.constant 0 : i32
    return %c0_i32, %c0_i32_0 : i32, i32
  }
  func.func @transform_12(%arg0: i32, %arg1: i32) -> (i32, i32) {
    %c0_i32 = arith.constant 0 : i32
    %c0_i32_0 = arith.constant 0 : i32
    %c0_i32_1 = arith.constant 0 : i32
    return %c0_i32, %c0_i32_0 : i32, i32
  }
  func.func @transform_13(%arg0: i32, %arg1: i32) -> (i32, i32) {
    %c0_i32 = arith.constant 0 : i32
    %c0_i32_0 = arith.constant 0 : i32
    %c0_i32_1 = arith.constant 0 : i32
    return %c0_i32, %c0_i32_0 : i32, i32
  }
  func.func @transform_14(%arg0: i32, %arg1: i32) -> (i32, i32) {
    %c0_i32 = arith.constant 0 : i32
    %c0_i32_0 = arith.constant 0 : i32
    %c0_i32_1 = arith.constant 0 : i32
    return %c0_i32, %c0_i32_0 : i32, i32
  }
  func.func @transform_15(%arg0: i32, %arg1: i32) -> (i32, i32) {
    %c0_i32 = arith.constant 0 : i32
    %c0_i32_0 = arith.constant 0 : i32
    return %arg0, %c0_i32 : i32, i32
  }
}

module attributes {stable_mosaic.version = 11 : i64} {
  func.func @_phase1_kernel(%arg0: i32, %arg1: i32, %arg2: memref<256x256xbf16, #tpu.memory_space<vmem>>, %arg3: memref<256x128xbf16, #tpu.memory_space<vmem>>, %arg4: memref<256x128xbf16, #tpu.memory_space<vmem>>, %arg5: memref<128x128xbf16, #tpu.memory_space<vmem>>, %arg6: memref<1x128xf32, #tpu.memory_space<vmem>>, %arg7: memref<128x128xbf16, #tpu.memory_space<vmem>>, %arg8: memref<1x128xf32, #tpu.memory_space<vmem>>, %arg9: memref<128x128xbf16, #tpu.memory_space<vmem>>, %arg10: memref<1x128xf32, #tpu.memory_space<vmem>>, %arg11: memref<128x128xbf16, #tpu.memory_space<vmem>>, %arg12: memref<1x128xf32, #tpu.memory_space<vmem>>, %arg13: memref<128x128xbf16, #tpu.memory_space<vmem>>, %arg14: memref<1x128xf32, #tpu.memory_space<vmem>>, %arg15: memref<128x128xbf16, #tpu.memory_space<vmem>>, %arg16: memref<1x128xf32, #tpu.memory_space<vmem>>, %arg17: memref<256x128xf32, #tpu.memory_space<vmem>>, %arg18: memref<256x128xbf16, #tpu.memory_space<vmem>>, %arg19: memref<256x128xf32, #tpu.memory_space<vmem>>) attributes {dimension_semantics = [#tpu.dimension_semantics<parallel>, #tpu.dimension_semantics<arbitrary>], iteration_bounds = array<i64: 2, 1>, scalar_prefetch = 0 : i64, scratch_operands = 1 : i64, tpu.core_type = #tpu.core_type<tc>, window_params = [{transform_indices = @transform_0, window_bounds = array<i64: 256, 256>}, {pipeline_mode = #tpu.pipeline_mode<synchronous>, transform_indices = @transform_1, window_bounds = array<i64: 256, 128>}, {transform_indices = @transform_2, window_bounds = array<i64: 256, 128>}, {pipeline_mode = #tpu.pipeline_mode<synchronous>, transform_indices = @transform_3, window_bounds = array<i64: 128, 128>}, {pipeline_mode = #tpu.pipeline_mode<synchronous>, transform_indices = @transform_4, window_bounds = array<i64: 1, 128>}, {pipeline_mode = #tpu.pipeline_mode<synchronous>, transform_indices = @transform_5, window_bounds = array<i64: 128, 128>}, {pipeline_mode = #tpu.pipeline_mode<synchronous>, transform_indices = @transform_6, window_bounds = array<i64: 1, 128>}, {pipeline_mode = #tpu.pipeline_mode<synchronous>, transform_indices = @transform_7, window_bounds = array<i64: 128, 128>}, {pipeline_mode = #tpu.pipeline_mode<synchronous>, transform_indices = @transform_8, window_bounds = array<i64: 1, 128>}, {pipeline_mode = #tpu.pipeline_mode<synchronous>, transform_indices = @transform_9, window_bounds = array<i64: 128, 128>}, {pipeline_mode = #tpu.pipeline_mode<synchronous>, transform_indices = @transform_10, window_bounds = array<i64: 1, 128>}, {pipeline_mode = #tpu.pipeline_mode<synchronous>, transform_indices = @transform_11, window_bounds = array<i64: 128, 128>}, {pipeline_mode = #tpu.pipeline_mode<synchronous>, transform_indices = @transform_12, window_bounds = array<i64: 1, 128>}, {pipeline_mode = #tpu.pipeline_mode<synchronous>, transform_indices = @transform_13, window_bounds = array<i64: 128, 128>}, {pipeline_mode = #tpu.pipeline_mode<synchronous>, transform_indices = @transform_14, window_bounds = array<i64: 1, 128>}, {transform_indices = @transform_15, window_bounds = array<i64: 256, 128>}, {transform_indices = @transform_16, window_bounds = array<i64: 256, 128>}]} {
    %c0_i32 = arith.constant 0 : i32
    %0 = arith.cmpi eq, %arg1, %c0_i32 : i32
    %1 = arith.extui %0 : i1 to i32
    %c0_i32_0 = arith.constant 0 : i32
    %2 = arith.cmpi ne, %1, %c0_i32_0 : i32
    scf.if %2 {
      %cst_9 = arith.constant 0.000000e+00 : f32
      %15 = vector.broadcast %cst_9 : f32 to vector<256x128xf32>
      %c0_10 = arith.constant 0 : index
      %c0_11 = arith.constant 0 : index
      %16 = vector.load %arg19[%c0_10, %c0_11] : memref<256x128xf32, #tpu.memory_space<vmem>>, vector<256x128xf32>
      tpu.vector_store %arg19[%c0_10, %c0_11], %15 {strides = array<i32>} : memref<256x128xf32, #tpu.memory_space<vmem>>, vector<256x128xf32>,
    } else {
    }
    %c256_i32 = arith.constant 256 : i32
    %3 = arith.muli %arg1, %c256_i32 : i32
    %4 = tpu.assume_multiple %3, 256 : i32
    %5 = arith.index_cast %4 : i32 to index
    %c0 = arith.constant 0 : index
    %6 = vector.load %arg3[%5, %c0] : memref<256x128xbf16, #tpu.memory_space<vmem>>, vector<256x128xbf16>
    %c0_1 = arith.constant 0 : index
    %c0_2 = arith.constant 0 : index
    %7 = vector.load %arg19[%c0_1, %c0_2] : memref<256x128xf32, #tpu.memory_space<vmem>>, vector<256x128xf32>
    %c0_3 = arith.constant 0 : index
    %c0_4 = arith.constant 0 : index
    %8 = vector.load %arg2[%c0_3, %c0_4] : memref<256x256xbf16, #tpu.memory_space<vmem>>, vector<256x256xbf16>
    %cst = arith.constant dense<0.000000e+00> : vector<256x128xf32>
    %9 = tpu.matmul %8, %6, %cst {dimension_numbers = #tpu.dot_dimension_numbers<[1], [0], [0], [1], [0, 0, 1, 1], [], []>} : vector<256x256xbf16>, vector<256x128xbf16>, vector<256x128xf32> -> vector<256x128xf32>
    %10 = arith.addf %7, %9 : vector<256x128xf32>
    %c0_5 = arith.constant 0 : index
    %c0_6 = arith.constant 0 : index
    %11 = vector.load %arg19[%c0_5, %c0_6] : memref<256x128xf32, #tpu.memory_space<vmem>>, vector<256x128xf32>
    tpu.vector_store %arg19[%c0_5, %c0_6], %10 {strides = array<i32>} : memref<256x128xf32, #tpu.memory_space<vmem>>, vector<256x128xf32>,
    %c0_i32_7 = arith.constant 0 : i32
    %12 = arith.cmpi eq, %arg1, %c0_i32_7 : i32
    %13 = arith.extui %12 : i1 to i32
    %c0_i32_8 = arith.constant 0 : i32
    %14 = arith.cmpi ne, %13, %c0_i32_8 : i32
    scf.if %14 {
      %c0_9 = arith.constant 0 : index
      %c0_10 = arith.constant 0 : index
      %15 = vector.load %arg19[%c0_9, %c0_10] : memref<256x128xf32, #tpu.memory_space<vmem>>, vector<256x128xf32>
      %c0_11 = arith.constant 0 : index
      %c0_12 = arith.constant 0 : index
      %16 = vector.load %arg5[%c0_11, %c0_12] : memref<128x128xbf16, #tpu.memory_space<vmem>>, vector<128x128xbf16>
      %17 = arith.truncf %15 : vector<256x128xf32> to vector<256x128xbf16>
      %cst_13 = arith.constant dense<0.000000e+00> : vector<256x128xf32>
      %18 = tpu.matmul %17, %16, %cst_13 {dimension_numbers = #tpu.dot_dimension_numbers<[1], [0], [0], [1], [0, 0, 1, 1], [], []>} : vector<256x128xbf16>, vector<128x128xbf16>, vector<256x128xf32> -> vector<256x128xf32>
      %c0_14 = arith.constant 0 : index
      %c0_15 = arith.constant 0 : index
      %19 = vector.load %arg6[%c0_14, %c0_15] : memref<1x128xf32, #tpu.memory_space<vmem>>, vector<1x128xf32>
      %20 = vector.broadcast %19 : vector<1x128xf32> to vector<256x128xf32>
      %21 = arith.addf %18, %20 : vector<256x128xf32>
      %cst_16 = arith.constant 0.00999999977 : f32
      %22 = vector.broadcast %cst_16 : f32 to vector<256x128xf32>
      %23 = arith.mulf %22, %21 : vector<256x128xf32>
      %24 = arith.maximumf %21, %23 : vector<256x128xf32>
      %c0_17 = arith.constant 0 : index
      %c0_18 = arith.constant 0 : index
      %25 = vector.load %arg7[%c0_17, %c0_18] : memref<128x128xbf16, #tpu.memory_space<vmem>>, vector<128x128xbf16>
      %26 = arith.truncf %24 : vector<256x128xf32> to vector<256x128xbf16>
      %cst_19 = arith.constant dense<0.000000e+00> : vector<256x128xf32>
      %27 = tpu.matmul %26, %25, %cst_19 {dimension_numbers = #tpu.dot_dimension_numbers<[1], [0], [0], [1], [0, 0, 1, 1], [], []>} : vector<256x128xbf16>, vector<128x128xbf16>, vector<256x128xf32> -> vector<256x128xf32>
      %c0_20 = arith.constant 0 : index
      %c0_21 = arith.constant 0 : index
      %28 = vector.load %arg8[%c0_20, %c0_21] : memref<1x128xf32, #tpu.memory_space<vmem>>, vector<1x128xf32>
      %29 = vector.broadcast %28 : vector<1x128xf32> to vector<256x128xf32>
      %30 = arith.addf %27, %29 : vector<256x128xf32>
      %c0_22 = arith.constant 0 : index
      %c0_23 = arith.constant 0 : index
      %31 = vector.load %arg4[%c0_22, %c0_23] : memref<256x128xbf16, #tpu.memory_space<vmem>>, vector<256x128xbf16>
      %c0_24 = arith.constant 0 : index
      %c0_25 = arith.constant 0 : index
      %32 = vector.load %arg9[%c0_24, %c0_25] : memref<128x128xbf16, #tpu.memory_space<vmem>>, vector<128x128xbf16>
      %cst_26 = arith.constant dense<0.000000e+00> : vector<256x128xf32>
      %33 = tpu.matmul %31, %32, %cst_26 {dimension_numbers = #tpu.dot_dimension_numbers<[1], [0], [0], [1], [0, 0, 1, 1], [], []>} : vector<256x128xbf16>, vector<128x128xbf16>, vector<256x128xf32> -> vector<256x128xf32>
      %c0_27 = arith.constant 0 : index
      %c0_28 = arith.constant 0 : index
      %34 = vector.load %arg10[%c0_27, %c0_28] : memref<1x128xf32, #tpu.memory_space<vmem>>, vector<1x128xf32>
      %35 = vector.broadcast %34 : vector<1x128xf32> to vector<256x128xf32>
      %36 = arith.addf %33, %35 : vector<256x128xf32>
      %cst_29 = arith.constant 0.00999999977 : f32
      %37 = vector.broadcast %cst_29 : f32 to vector<256x128xf32>
      %38 = arith.mulf %37, %36 : vector<256x128xf32>
      %39 = arith.maximumf %36, %38 : vector<256x128xf32>
      %c0_30 = arith.constant 0 : index
      %c0_31 = arith.constant 0 : index
      %40 = vector.load %arg11[%c0_30, %c0_31] : memref<128x128xbf16, #tpu.memory_space<vmem>>, vector<128x128xbf16>
      %41 = arith.truncf %39 : vector<256x128xf32> to vector<256x128xbf16>
      %cst_32 = arith.constant dense<0.000000e+00> : vector<256x128xf32>
      %42 = tpu.matmul %41, %40, %cst_32 {dimension_numbers = #tpu.dot_dimension_numbers<[1], [0], [0], [1], [0, 0, 1, 1], [], []>} : vector<256x128xbf16>, vector<128x128xbf16>, vector<256x128xf32> -> vector<256x128xf32>
      %c0_33 = arith.constant 0 : index
      %c0_34 = arith.constant 0 : index
      %43 = vector.load %arg12[%c0_33, %c0_34] : memref<1x128xf32, #tpu.memory_space<vmem>>, vector<1x128xf32>
      %44 = vector.broadcast %43 : vector<1x128xf32> to vector<256x128xf32>
      %45 = arith.addf %42, %44 : vector<256x128xf32>
      %46 = arith.addf %45, %30 : vector<256x128xf32>
      %c0_35 = arith.constant 0 : index
      %c0_36 = arith.constant 0 : index
      %47 = vector.load %arg13[%c0_35, %c0_36] : memref<128x128xbf16, #tpu.memory_space<vmem>>, vector<128x128xbf16>
      %48 = arith.truncf %46 : vector<256x128xf32> to vector<256x128xbf16>
      %cst_37 = arith.constant dense<0.000000e+00> : vector<256x128xf32>
      %49 = tpu.matmul %48, %47, %cst_37 {dimension_numbers = #tpu.dot_dimension_numbers<[1], [0], [0], [1], [0, 0, 1, 1], [], []>} : vector<256x128xbf16>, vector<128x128xbf16>, vector<256x128xf32> -> vector<256x128xf32>
      %c0_38 = arith.constant 0 : index
      %c0_39 = arith.constant 0 : index
      %50 = vector.load %arg14[%c0_38, %c0_39] : memref<1x128xf32, #tpu.memory_space<vmem>>, vector<1x128xf32>
      %51 = vector.broadcast %50 : vector<1x128xf32> to vector<256x128xf32>
      %52 = arith.addf %49, %51 : vector<256x128xf32>
      %cst_40 = arith.constant 0.00999999977 : f32
      %53 = vector.broadcast %cst_40 : f32 to vector<256x128xf32>
      %54 = arith.mulf %53, %52 : vector<256x128xf32>
      %55 = arith.maximumf %52, %54 : vector<256x128xf32>
      %c0_41 = arith.constant 0 : index
      %c0_42 = arith.constant 0 : index
      %56 = vector.load %arg15[%c0_41, %c0_42] : memref<128x128xbf16, #tpu.memory_space<vmem>>, vector<128x128xbf16>
      %57 = arith.truncf %55 : vector<256x128xf32> to vector<256x128xbf16>
      %cst_43 = arith.constant dense<0.000000e+00> : vector<256x128xf32>
      %58 = tpu.matmul %57, %56, %cst_43 {dimension_numbers = #tpu.dot_dimension_numbers<[1], [0], [0], [1], [0, 0, 1, 1], [], []>} : vector<256x128xbf16>, vector<128x128xbf16>, vector<256x128xf32> -> vector<256x128xf32>
      %c0_44 = arith.constant 0 : index
      %c0_45 = arith.constant 0 : index
      %59 = vector.load %arg16[%c0_44, %c0_45] : memref<1x128xf32, #tpu.memory_space<vmem>>, vector<1x128xf32>
      %60 = vector.broadcast %59 : vector<1x128xf32> to vector<256x128xf32>
      %61 = arith.addf %58, %60 : vector<256x128xf32>
      %c0_46 = arith.constant 0 : index
      %c0_47 = arith.constant 0 : index
      %62 = vector.load %arg17[%c0_46, %c0_47] : memref<256x128xf32, #tpu.memory_space<vmem>>, vector<256x128xf32>
      tpu.vector_store %arg17[%c0_46, %c0_47], %61 {strides = array<i32>} : memref<256x128xf32, #tpu.memory_space<vmem>>, vector<256x128xf32>,
      %63 = arith.truncf %61 : vector<256x128xf32> to vector<256x128xbf16>
      %c0_48 = arith.constant 0 : index
      %c0_49 = arith.constant 0 : index
      %64 = vector.load %arg18[%c0_48, %c0_49] : memref<256x128xbf16, #tpu.memory_space<vmem>>, vector<256x128xbf16>
      tpu.vector_store %arg18[%c0_48, %c0_49], %63 {strides = array<i32>} : memref<256x128xbf16, #tpu.memory_space<vmem>>, vector<256x128xbf16>,
    } else {
    }
    return
  }
  func.func @transform_0(%arg0: i32, %arg1: i32) -> (i32, i32) {
    %c0_i32 = arith.constant 0 : i32
    return %arg0, %arg1 : i32, i32
  }
  func.func @transform_1(%arg0: i32, %arg1: i32) -> (i32, i32) {
    %c0_i32 = arith.constant 0 : i32
    %c0_i32_0 = arith.constant 0 : i32
    %c0_i32_1 = arith.constant 0 : i32
    return %c0_i32, %c0_i32_0 : i32, i32
  }
  func.func @transform_2(%arg0: i32, %arg1: i32) -> (i32, i32) {
    %c0_i32 = arith.constant 0 : i32
    %c0_i32_0 = arith.constant 0 : i32
    return %arg0, %c0_i32 : i32, i32
  }
  func.func @transform_3(%arg0: i32, %arg1: i32) -> (i32, i32) {
    %c0_i32 = arith.constant 0 : i32
    %c0_i32_0 = arith.constant 0 : i32
    %c0_i32_1 = arith.constant 0 : i32
    return %c0_i32, %c0_i32_0 : i32, i32
  }
  func.func @transform_4(%arg0: i32, %arg1: i32) -> (i32, i32) {
    %c0_i32 = arith.constant 0 : i32
    %c0_i32_0 = arith.constant 0 : i32
    %c0_i32_1 = arith.constant 0 : i32
    return %c0_i32, %c0_i32_0 : i32, i32
  }
  func.func @transform_5(%arg0: i32, %arg1: i32) -> (i32, i32) {
    %c0_i32 = arith.constant 0 : i32
    %c0_i32_0 = arith.constant 0 : i32
    %c0_i32_1 = arith.constant 0 : i32
    return %c0_i32, %c0_i32_0 : i32, i32
  }
  func.func @transform_6(%arg0: i32, %arg1: i32) -> (i32, i32) {
    %c0_i32 = arith.constant 0 : i32
    %c0_i32_0 = arith.constant 0 : i32
    %c0_i32_1 = arith.constant 0 : i32
    return %c0_i32, %c0_i32_0 : i32, i32
  }
  func.func @transform_7(%arg0: i32, %arg1: i32) -> (i32, i32) {
    %c0_i32 = arith.constant 0 : i32
    %c0_i32_0 = arith.constant 0 : i32
    %c0_i32_1 = arith.constant 0 : i32
    return %c0_i32, %c0_i32_0 : i32, i32
  }
  func.func @transform_8(%arg0: i32, %arg1: i32) -> (i32, i32) {
    %c0_i32 = arith.constant 0 : i32
    %c0_i32_0 = arith.constant 0 : i32
    %c0_i32_1 = arith.constant 0 : i32
    return %c0_i32, %c0_i32_0 : i32, i32
  }
  func.func @transform_9(%arg0: i32, %arg1: i32) -> (i32, i32) {
    %c0_i32 = arith.constant 0 : i32
    %c0_i32_0 = arith.constant 0 : i32
    %c0_i32_1 = arith.constant 0 : i32
    return %c0_i32, %c0_i32_0 : i32, i32
  }
  func.func @transform_10(%arg0: i32, %arg1: i32) -> (i32, i32) {
    %c0_i32 = arith.constant 0 : i32
    %c0_i32_0 = arith.constant 0 : i32
    %c0_i32_1 = arith.constant 0 : i32
    return %c0_i32, %c0_i32_0 : i32, i32
  }
  func.func @transform_11(%arg0: i32, %arg1: i32) -> (i32, i32) {
    %c0_i32 = arith.constant 0 : i32
    %c0_i32_0 = arith.constant 0 : i32
    %c0_i32_1 = arith.constant 0 : i32
    return %c0_i32, %c0_i32_0 : i32, i32
  }
  func.func @transform_12(%arg0: i32, %arg1: i32) -> (i32, i32) {
    %c0_i32 = arith.constant 0 : i32
    %c0_i32_0 = arith.constant 0 : i32
    %c0_i32_1 = arith.constant 0 : i32
    return %c0_i32, %c0_i32_0 : i32, i32
  }
  func.func @transform_13(%arg0: i32, %arg1: i32) -> (i32, i32) {
    %c0_i32 = arith.constant 0 : i32
    %c0_i32_0 = arith.constant 0 : i32
    %c0_i32_1 = arith.constant 0 : i32
    return %c0_i32, %c0_i32_0 : i32, i32
  }
  func.func @transform_14(%arg0: i32, %arg1: i32) -> (i32, i32) {
    %c0_i32 = arith.constant 0 : i32
    %c0_i32_0 = arith.constant 0 : i32
    %c0_i32_1 = arith.constant 0 : i32
    return %c0_i32, %c0_i32_0 : i32, i32
  }
  func.func @transform_15(%arg0: i32, %arg1: i32) -> (i32, i32) {
    %c0_i32 = arith.constant 0 : i32
    %c0_i32_0 = arith.constant 0 : i32
    return %arg0, %c0_i32 : i32, i32
  }
  func.func @transform_16(%arg0: i32, %arg1: i32) -> (i32, i32) {
    %c0_i32 = arith.constant 0 : i32
    %c0_i32_0 = arith.constant 0 : i32
    return %arg0, %c0_i32 : i32, i32
  }
}

</mosaic_0001>

<llo_original>
// kernel: gcn_layer_forward.2
$region0: #{gcn_layer_forward.2}
  #allocation0 [shape = 'u32[]', space=smem, size = 0x4, offset = 0x4, fixed_abs, tag = 'smem constant byte address 0x4 - core index']
  #allocation1 [shape = 'u32[144,128]{1,0:T(1,128)}', space=vmem, size = 0x12000, scoped, tag = 'internal scratch']
  #allocation2 [shape = 'f32[256,128]{1,0:T(8,128)}', space=vmem, size = 0x20000, scoped, tag = 'scratch operand']
  %s0 = inlined_call_operand.vmem [shape: bf16[512,256], index: 0, kind: input, shape index: {}]
  %s1 = inlined_call_operand.vmem [shape: bf16[256,128], index: 1, kind: input, shape index: {}]
  %s2 = inlined_call_operand.vmem [shape: bf16[512,128], index: 2, kind: input, shape index: {}]
  %s3 = inlined_call_operand.vmem [shape: bf16[128,128], index: 3, kind: input, shape index: {}]
  %s4 = inlined_call_operand.vmem [shape: f32[1,128], index: 4, kind: input, shape index: {}]
  %s5 = inlined_call_operand.vmem [shape: bf16[128,128], index: 5, kind: input, shape index: {}]
  %s6 = inlined_call_operand.vmem [shape: f32[1,128], index: 6, kind: input, shape index: {}]
  %s7 = inlined_call_operand.vmem [shape: bf16[128,128], index: 7, kind: input, shape index: {}]
  %s8 = inlined_call_operand.vmem [shape: f32[1,128], index: 8, kind: input, shape index: {}]
  %s9 = inlined_call_operand.vmem [shape: bf16[128,128], index: 9, kind: input, shape index: {}]
  %s10 = inlined_call_operand.vmem [shape: f32[1,128], index: 10, kind: input, shape index: {}]
  %s11 = inlined_call_operand.vmem [shape: bf16[128,128], index: 11, kind: input, shape index: {}]
  %s12 = inlined_call_operand.vmem [shape: f32[1,128], index: 12, kind: input, shape index: {}]
  %s13 = inlined_call_operand.vmem [shape: bf16[128,128], index: 13, kind: input, shape index: {}]
  %s14 = inlined_call_operand.vmem [shape: f32[1,128], index: 14, kind: input, shape index: {}]
  %s15 = inlined_call_operand.vmem [shape: f32[512,128], index: 15, kind: output, shape index: {0}]
  %s16 = inlined_call_operand.vmem [shape: bf16[512,128], index: 16, kind: output, shape index: {1}]
  %17 = xla_tuple %s15, %s16
  %s18 = sld [smem:[#allocation0]]
  $region109: #{gcn_layer_forward.2} parent=0
    _
  %s20 = ssub.s32 1, %s18
  %s21 = scalar_select 0, %s20, %s18
  loop: start=0, step=1, limit=4
  $region2: #{gcn_layer_forward.2} parent=0 // loop_pre_header
    _
  $region3: #{gcn_layer_forward.2} parent=0 // loop_header
    %s23 = sphi 0, %s27
    %p24 = scmp.ge.s32.totalorder %s23, 4
    %s30 = sphi 0, %s42
    %s31 = sphi 0, %s38
    %s32 = sphi 0, %s30
    %s33 = sphi 0, %s31
    %s34 = sphi 0, %s32
    %s35 = sphi 0, %s33
    %s47 = sphi 0, %s49
    %s50 = sphi 0, %s47
    %s51 = sphi 0, %s50
    %s67 = sphi 0, %s51
    %s71 = sphi 0, %s71
    %s73 = sphi 0, %s71
    %s74 = sphi 0, %s73
    %s88 = sphi 0, %s74
    %s94 = sphi 0, %s96
    %s97 = sphi 0, %s94
    %s98 = sphi 0, %s97
    %s114 = sphi 0, %s98
    %s118 = sphi 0, %s118
    %s120 = sphi 0, %s118
    %s121 = sphi 0, %s120
    %s135 = sphi 0, %s121
    %s139 = sphi 0, %s139
    %s141 = sphi 0, %s139
    %s142 = sphi 0, %s141
    %s156 = sphi 0, %s142
    %s160 = sphi 0, %s160
    %s162 = sphi 0, %s160
    %s163 = sphi 0, %s162
    %s177 = sphi 0, %s163
    %s181 = sphi 0, %s181
    %s183 = sphi 0, %s181
    %s184 = sphi 0, %s183
    %s198 = sphi 0, %s184
    %s202 = sphi 0, %s202
    %s204 = sphi 0, %s202
    %s205 = sphi 0, %s204
    %s219 = sphi 0, %s205
    %s223 = sphi 0, %s223
    %s225 = sphi 0, %s223
    %s226 = sphi 0, %s225
    %s240 = sphi 0, %s226
    %s244 = sphi 0, %s244
    %s246 = sphi 0, %s244
    %s247 = sphi 0, %s246
    %s261 = sphi 0, %s247
    %s265 = sphi 0, %s265
    %s267 = sphi 0, %s265
    %s268 = sphi 0, %s267
    %s282 = sphi 0, %s268
    %s286 = sphi 0, %s286
    %s288 = sphi 0, %s286
    %s289 = sphi 0, %s288
    %s303 = sphi 0, %s289
    %s307 = sphi 0, %s307
    %s309 = sphi 0, %s307
    %s310 = sphi 0, %s309
    %s324 = sphi 0, %s310
    %s328 = sphi 0, %s328
    %s330 = sphi 0, %s328
    %s331 = sphi 0, %s330
    %s345 = sphi 0, %s331
    %s349 = sphi 0, %s349
    %s351 = sphi 0, %s349
    %s352 = sphi 0, %s351
    %s366 = sphi 0, %s352
    %s372 = sphi 0, %s374
    %s375 = sphi 0, %s372
    %s376 = sphi 0, %s375
    %s392 = sphi 0, %s376
    %s398 = sphi 0, %s400
    %s401 = sphi 0, %s398
    %s402 = sphi 0, %s401
    %s418 = sphi 0, %s402
  $region4: #{gcn_layer_forward.2} parent=0 // loop_header_branch
    %26 = sbr.rel (%p24) target = $region8
  $region5: #{gcn_layer_forward.2} parent=0 // loop_body
    %s28 = ssub.s32 %s23, 1
    %s29 = ssub.s32 %s23, 2
    %s36 = sadd.s32 1, %s31
    %p37 = scmp.ge.s32.totalorder %s36, 1
    %s38 = scalar_select %p37, 0, %s36
    %s39 = sadd.s32 1, %s30
    %s40 = scalar_select %p37, %s39, %s30
    %p41 = scmp.ge.s32.totalorder %s40, 2
    %s42 = scalar_select %p41, 0, %s40
    %s43 = ssub.s32 %s30, %s42
    %s44 = ssub.s32 %s31, %s38
    %s45 = sor.u32 %s43, %s44
    %p46 = scmp.eq.s32.totalorder %s45, 0
    %s48 = sadd.s32 %s47, 1
    %s49 = scalar_select %p46, %s47, %s48
    %p52 = pneg %p46
    %p53 = scmp.eq.s32.totalorder %s23, 1
    %p54 = por %p52, %p53
    %p55 = scmp.ne.s32.totalorder %s47, %s50
    %p56 = scmp.eq.s32.totalorder %s23, 0
    %p57 = por %p55, %p56
    %p58 = scmp.ne.s32.totalorder %s47, %s50
    %p59 = scmp.eq.s32.totalorder %s28, 1
    %p60 = por %p58, %p59
    %p61 = scmp.ne.s32.totalorder %s50, %s51
    %p62 = scmp.eq.s32.totalorder %s28, 0
    %p63 = por %p61, %p62
    %p64 = scmp.ne.s32.totalorder %s50, %s51
    %p65 = scmp.eq.s32.totalorder %s29, 1
    %p66 = por %p64, %p65
    %p68 = scmp.ne.s32.totalorder %s51, %s67
    %p69 = scmp.eq.s32.totalorder %s29, 0
    %p70 = por %p68, %p69
    %s72 = sadd.s32 %s71, 1
    %p75 = scmp.eq.s32.totalorder %s23, 1
    %p76 = scmp.ne.s32.totalorder %s71, %s73
    %p77 = scmp.eq.s32.totalorder %s23, 0
    %p78 = por %p76, %p77
    %p79 = scmp.ne.s32.totalorder %s71, %s73
    %p80 = scmp.eq.s32.totalorder %s28, 1
    %p81 = por %p79, %p80
    %p82 = scmp.ne.s32.totalorder %s73, %s74
    %p83 = scmp.eq.s32.totalorder %s28, 0
    %p84 = por %p82, %p83
    %p85 = scmp.ne.s32.totalorder %s73, %s74
    %p86 = scmp.eq.s32.totalorder %s29, 1
    %p87 = por %p85, %p86
    %p89 = scmp.ne.s32.totalorder %s74, %s88
    %p90 = scmp.eq.s32.totalorder %s29, 0
    %p91 = por %p89, %p90
    %s92 = ssub.s32 %s30, %s42
    %p93 = scmp.eq.s32.totalorder %s92, 0
    %s95 = sadd.s32 %s94, 1
    %s96 = scalar_select %p93, %s94, %s95
    %p99 = pneg %p93
    %p100 = scmp.eq.s32.totalorder %s23, 1
    %p101 = por %p99, %p100
    %p102 = scmp.ne.s32.totalorder %s94, %s97
    %p103 = scmp.eq.s32.totalorder %s23, 0
    %p104 = por %p102, %p103
    %p105 = scmp.ne.s32.totalorder %s94, %s97
    %p106 = scmp.eq.s32.totalorder %s28, 1
    %p107 = por %p105, %p106
    %p108 = scmp.ne.s32.totalorder %s97, %s98
    %p109 = scmp.eq.s32.totalorder %s28, 0
    %p110 = por %p108, %p109
    %p111 = scmp.ne.s32.totalorder %s97, %s98
    %p112 = scmp.eq.s32.totalorder %s29, 1
    %p113 = por %p111, %p112
    %p115 = scmp.ne.s32.totalorder %s98, %s114
    %p116 = scmp.eq.s32.totalorder %s29, 0
    %p117 = por %p115, %p116
    %s119 = sadd.s32 %s118, 1
    %p122 = scmp.eq.s32.totalorder %s23, 1
    %p123 = scmp.ne.s32.totalorder %s118, %s120
    %p124 = scmp.eq.s32.totalorder %s23, 0
    %p125 = por %p123, %p124
    %p126 = scmp.ne.s32.totalorder %s118, %s120
    %p127 = scmp.eq.s32.totalorder %s28, 1
    %p128 = por %p126, %p127
    %p129 = scmp.ne.s32.totalorder %s120, %s121
    %p130 = scmp.eq.s32.totalorder %s28, 0
    %p131 = por %p129, %p130
    %p132 = scmp.ne.s32.totalorder %s120, %s121
    %p133 = scmp.eq.s32.totalorder %s29, 1
    %p134 = por %p132, %p133
    %p136 = scmp.ne.s32.totalorder %s121, %s135
    %p137 = scmp.eq.s32.totalorder %s29, 0
    %p138 = por %p136, %p137
    %s140 = sadd.s32 %s139, 1
    %p143 = scmp.eq.s32.totalorder %s23, 1
    %p144 = scmp.ne.s32.totalorder %s139, %s141
    %p145 = scmp.eq.s32.totalorder %s23, 0
    %p146 = por %p144, %p145
    %p147 = scmp.ne.s32.totalorder %s139, %s141
    %p148 = scmp.eq.s32.totalorder %s28, 1
    %p149 = por %p147, %p148
    %p150 = scmp.ne.s32.totalorder %s141, %s142
    %p151 = scmp.eq.s32.totalorder %s28, 0
    %p152 = por %p150, %p151
    %p153 = scmp.ne.s32.totalorder %s141, %s142
    %p154 = scmp.eq.s32.totalorder %s29, 1
    %p155 = por %p153, %p154
    %p157 = scmp.ne.s32.totalorder %s142, %s156
    %p158 = scmp.eq.s32.totalorder %s29, 0
    %p159 = por %p157, %p158
    %s161 = sadd.s32 %s160, 1
    %p164 = scmp.eq.s32.totalorder %s23, 1
    %p165 = scmp.ne.s32.totalorder %s160, %s162
    %p166 = scmp.eq.s32.totalorder %s23, 0
    %p167 = por %p165, %p166
    %p168 = scmp.ne.s32.totalorder %s160, %s162
    %p169 = scmp.eq.s32.totalorder %s28, 1
    %p170 = por %p168, %p169
    %p171 = scmp.ne.s32.totalorder %s162, %s163
    %p172 = scmp.eq.s32.totalorder %s28, 0
    %p173 = por %p171, %p172
    %p174 = scmp.ne.s32.totalorder %s162, %s163
    %p175 = scmp.eq.s32.totalorder %s29, 1
    %p176 = por %p174, %p175
    %p178 = scmp.ne.s32.totalorder %s163, %s177
    %p179 = scmp.eq.s32.totalorder %s29, 0
    %p180 = por %p178, %p179
    %s182 = sadd.s32 %s181, 1
    %p185 = scmp.eq.s32.totalorder %s23, 1
    %p186 = scmp.ne.s32.totalorder %s181, %s183
    %p187 = scmp.eq.s32.totalorder %s23, 0
    %p188 = por %p186, %p187
    %p189 = scmp.ne.s32.totalorder %s181, %s183
    %p190 = scmp.eq.s32.totalorder %s28, 1
    %p191 = por %p189, %p190
    %p192 = scmp.ne.s32.totalorder %s183, %s184
    %p193 = scmp.eq.s32.totalorder %s28, 0
    %p194 = por %p192, %p193
    %p195 = scmp.ne.s32.totalorder %s183, %s184
    %p196 = scmp.eq.s32.totalorder %s29, 1
    %p197 = por %p195, %p196
    %p199 = scmp.ne.s32.totalorder %s184, %s198
    %p200 = scmp.eq.s32.totalorder %s29, 0
    %p201 = por %p199, %p200
    %s203 = sadd.s32 %s202, 1
    %p206 = scmp.eq.s32.totalorder %s23, 1
    %p207 = scmp.ne.s32.totalorder %s202, %s204
    %p208 = scmp.eq.s32.totalorder %s23, 0
    %p209 = por %p207, %p208
    %p210 = scmp.ne.s32.totalorder %s202, %s204
    %p211 = scmp.eq.s32.totalorder %s28, 1
    %p212 = por %p210, %p211
    %p213 = scmp.ne.s32.totalorder %s204, %s205
    %p214 = scmp.eq.s32.totalorder %s28, 0
    %p215 = por %p213, %p214
    %p216 = scmp.ne.s32.totalorder %s204, %s205
    %p217 = scmp.eq.s32.totalorder %s29, 1
    %p218 = por %p216, %p217
    %p220 = scmp.ne.s32.totalorder %s205, %s219
    %p221 = scmp.eq.s32.totalorder %s29, 0
    %p222 = por %p220, %p221
    %s224 = sadd.s32 %s223, 1
    %p227 = scmp.eq.s32.totalorder %s23, 1
    %p228 = scmp.ne.s32.totalorder %s223, %s225
    %p229 = scmp.eq.s32.totalorder %s23, 0
    %p230 = por %p228, %p229
    %p231 = scmp.ne.s32.totalorder %s223, %s225
    %p232 = scmp.eq.s32.totalorder %s28, 1
    %p233 = por %p231, %p232
    %p234 = scmp.ne.s32.totalorder %s225, %s226
    %p235 = scmp.eq.s32.totalorder %s28, 0
    %p236 = por %p234, %p235
    %p237 = scmp.ne.s32.totalorder %s225, %s226
    %p238 = scmp.eq.s32.totalorder %s29, 1
    %p239 = por %p237, %p238
    %p241 = scmp.ne.s32.totalorder %s226, %s240
    %p242 = scmp.eq.s32.totalorder %s29, 0
    %p243 = por %p241, %p242
    %s245 = sadd.s32 %s244, 1
    %p248 = scmp.eq.s32.totalorder %s23, 1
    %p249 = scmp.ne.s32.totalorder %s244, %s246
    %p250 = scmp.eq.s32.totalorder %s23, 0
    %p251 = por %p249, %p250
    %p252 = scmp.ne.s32.totalorder %s244, %s246
    %p253 = scmp.eq.s32.totalorder %s28, 1
    %p254 = por %p252, %p253
    %p255 = scmp.ne.s32.totalorder %s246, %s247
    %p256 = scmp.eq.s32.totalorder %s28, 0
    %p257 = por %p255, %p256
    %p258 = scmp.ne.s32.totalorder %s246, %s247
    %p259 = scmp.eq.s32.totalorder %s29, 1
    %p260 = por %p258, %p259
    %p262 = scmp.ne.s32.totalorder %s247, %s261
    %p263 = scmp.eq.s32.totalorder %s29, 0
    %p264 = por %p262, %p263
    %s266 = sadd.s32 %s265, 1
    %p269 = scmp.eq.s32.totalorder %s23, 1
    %p270 = scmp.ne.s32.totalorder %s265, %s267
    %p271 = scmp.eq.s32.totalorder %s23, 0
    %p272 = por %p270, %p271
    %p273 = scmp.ne.s32.totalorder %s265, %s267
    %p274 = scmp.eq.s32.totalorder %s28, 1
    %p275 = por %p273, %p274
    %p276 = scmp.ne.s32.totalorder %s267, %s268
    %p277 = scmp.eq.s32.totalorder %s28, 0
    %p278 = por %p276, %p277
    %p279 = scmp.ne.s32.totalorder %s267, %s268
    %p280 = scmp.eq.s32.totalorder %s29, 1
    %p281 = por %p279, %p280
    %p283 = scmp.ne.s32.totalorder %s268, %s282
    %p284 = scmp.eq.s32.totalorder %s29, 0
    %p285 = por %p283, %p284
    %s287 = sadd.s32 %s286, 1
    %p290 = scmp.eq.s32.totalorder %s23, 1
    %p291 = scmp.ne.s32.totalorder %s286, %s288
    %p292 = scmp.eq.s32.totalorder %s23, 0
    %p293 = por %p291, %p292
    %p294 = scmp.ne.s32.totalorder %s286, %s288
    %p295 = scmp.eq.s32.totalorder %s28, 1
    %p296 = por %p294, %p295
    %p297 = scmp.ne.s32.totalorder %s288, %s289
    %p298 = scmp.eq.s32.totalorder %s28, 0
    %p299 = por %p297, %p298
    %p300 = scmp.ne.s32.totalorder %s288, %s289
    %p301 = scmp.eq.s32.totalorder %s29, 1
    %p302 = por %p300, %p301
    %p304 = scmp.ne.s32.totalorder %s289, %s303
    %p305 = scmp.eq.s32.totalorder %s29, 0
    %p306 = por %p304, %p305
    %s308 = sadd.s32 %s307, 1
    %p311 = scmp.eq.s32.totalorder %s23, 1
    %p312 = scmp.ne.s32.totalorder %s307, %s309
    %p313 = scmp.eq.s32.totalorder %s23, 0
    %p314 = por %p312, %p313
    %p315 = scmp.ne.s32.totalorder %s307, %s309
    %p316 = scmp.eq.s32.totalorder %s28, 1
    %p317 = por %p315, %p316
    %p318 = scmp.ne.s32.totalorder %s309, %s310
    %p319 = scmp.eq.s32.totalorder %s28, 0
    %p320 = por %p318, %p319
    %p321 = scmp.ne.s32.totalorder %s309, %s310
    %p322 = scmp.eq.s32.totalorder %s29, 1
    %p323 = por %p321, %p322
    %p325 = scmp.ne.s32.totalorder %s310, %s324
    %p326 = scmp.eq.s32.totalorder %s29, 0
    %p327 = por %p325, %p326
    %s329 = sadd.s32 %s328, 1
    %p332 = scmp.eq.s32.totalorder %s23, 1
    %p333 = scmp.ne.s32.totalorder %s328, %s330
    %p334 = scmp.eq.s32.totalorder %s23, 0
    %p335 = por %p333, %p334
    %p336 = scmp.ne.s32.totalorder %s328, %s330
    %p337 = scmp.eq.s32.totalorder %s28, 1
    %p338 = por %p336, %p337
    %p339 = scmp.ne.s32.totalorder %s330, %s331
    %p340 = scmp.eq.s32.totalorder %s28, 0
    %p341 = por %p339, %p340
    %p342 = scmp.ne.s32.totalorder %s330, %s331
    %p343 = scmp.eq.s32.totalorder %s29, 1
    %p344 = por %p342, %p343
    %p346 = scmp.ne.s32.totalorder %s331, %s345
    %p347 = scmp.eq.s32.totalorder %s29, 0
    %p348 = por %p346, %p347
    %s350 = sadd.s32 %s349, 1
    %p353 = scmp.eq.s32.totalorder %s23, 1
    %p354 = scmp.ne.s32.totalorder %s349, %s351
    %p355 = scmp.eq.s32.totalorder %s23, 0
    %p356 = por %p354, %p355
    %p357 = scmp.ne.s32.totalorder %s349, %s351
    %p358 = scmp.eq.s32.totalorder %s28, 1
    %p359 = por %p357, %p358
    %p360 = scmp.ne.s32.totalorder %s351, %s352
    %p361 = scmp.eq.s32.totalorder %s28, 0
    %p362 = por %p360, %p361
    %p363 = scmp.ne.s32.totalorder %s351, %s352
    %p364 = scmp.eq.s32.totalorder %s29, 1
    %p365 = por %p363, %p364
    %p367 = scmp.ne.s32.totalorder %s352, %s366
    %p368 = scmp.eq.s32.totalorder %s29, 0
    %p369 = por %p367, %p368
    %s370 = ssub.s32 %s30, %s42
    %p371 = scmp.eq.s32.totalorder %s370, 0
    %s373 = sadd.s32 %s372, 1
    %s374 = scalar_select %p371, %s372, %s373
    %p377 = pneg %p371
    %p378 = scmp.eq.s32.totalorder %s23, 1
    %p379 = por %p377, %p378
    %p380 = scmp.ne.s32.totalorder %s372, %s375
    %p381 = scmp.eq.s32.totalorder %s23, 0
    %p382 = por %p380, %p381
    %p383 = scmp.ne.s32.totalorder %s372, %s375
    %p384 = scmp.eq.s32.totalorder %s28, 1
    %p385 = por %p383, %p384
    %p386 = scmp.ne.s32.totalorder %s375, %s376
    %p387 = scmp.eq.s32.totalorder %s28, 0
    %p388 = por %p386, %p387
    %p389 = scmp.ne.s32.totalorder %s375, %s376
    %p390 = scmp.eq.s32.totalorder %s29, 1
    %p391 = por %p389, %p390
    %p393 = scmp.ne.s32.totalorder %s376, %s392
    %p394 = scmp.eq.s32.totalorder %s29, 0
    %p395 = por %p393, %p394
    %s396 = ssub.s32 %s30, %s42
    %p397 = scmp.eq.s32.totalorder %s396, 0
    %s399 = sadd.s32 %s398, 1
    %s400 = scalar_select %p397, %s398, %s399
    %p403 = pneg %p397
    %p404 = scmp.eq.s32.totalorder %s23, 1
    %p405 = por %p403, %p404
    %p406 = scmp.ne.s32.totalorder %s398, %s401
    %p407 = scmp.eq.s32.totalorder %s23, 0
    %p408 = por %p406, %p407
    %p409 = scmp.ne.s32.totalorder %s398, %s401
    %p410 = scmp.eq.s32.totalorder %s28, 1
    %p411 = por %p409, %p410
    %p412 = scmp.ne.s32.totalorder %s401, %s402
    %p413 = scmp.eq.s32.totalorder %s28, 0
    %p414 = por %p412, %p413
    %p415 = scmp.ne.s32.totalorder %s401, %s402
    %p416 = scmp.eq.s32.totalorder %s29, 1
    %p417 = por %p415, %p416
    %p419 = scmp.ne.s32.totalorder %s402, %s418
    %p420 = scmp.eq.s32.totalorder %s29, 0
    %p421 = por %p419, %p420
    %p422 = scmp.le.s32.totalorder 1, %s23
    %p423 = scmp.lt.s32.totalorder %s23, 3
    %p424 = pnand %p422, %p423
    %p425 = pneg %p424
    // Predicated region
    $region9: #{gcn_layer_forward.2} parent=5 // pred_check
      _
    $region10: #{gcn_layer_forward.2} parent=5 // pred_check_branch
      %427 = sbr.rel (%p424) target = $region12
    $region11: #{gcn_layer_forward.2} parent=5 // pred_region
      %s428 = ssub.s32 %s23, 1
      // Predicated region
      $region13: #{gcn_layer_forward.2} parent=11 // pred_check
        %p429 = pneg %p84
      $region14: #{gcn_layer_forward.2} parent=11 // pred_check_branch
        %431 = sbr.rel (%p429) target = $region16
      $region15: #{gcn_layer_forward.2} parent=11 // pred_region
        _
      $region16: #{gcn_layer_forward.2} parent=11 // pred_fallthru
        _
      // Predicated region
      $region17: #{gcn_layer_forward.2} parent=11 // pred_check
        %p432 = pneg %p131
      $region18: #{gcn_layer_forward.2} parent=11 // pred_check_branch
        %434 = sbr.rel (%p432) target = $region20
      $region19: #{gcn_layer_forward.2} parent=11 // pred_region
        _
      $region20: #{gcn_layer_forward.2} parent=11 // pred_fallthru
        _
      // Predicated region
      $region21: #{gcn_layer_forward.2} parent=11 // pred_check
        %p435 = pneg %p152
      $region22: #{gcn_layer_forward.2} parent=11 // pred_check_branch
        %437 = sbr.rel (%p435) target = $region24
      $region23: #{gcn_layer_forward.2} parent=11 // pred_region
        _
      $region24: #{gcn_layer_forward.2} parent=11 // pred_fallthru
        _
      // Predicated region
      $region25: #{gcn_layer_forward.2} parent=11 // pred_check
        %p438 = pneg %p173
      $region26: #{gcn_layer_forward.2} parent=11 // pred_check_branch
        %440 = sbr.rel (%p438) target = $region28
      $region27: #{gcn_layer_forward.2} parent=11 // pred_region
        _
      $region28: #{gcn_layer_forward.2} parent=11 // pred_fallthru
        _
      // Predicated region
      $region29: #{gcn_layer_forward.2} parent=11 // pred_check
        %p441 = pneg %p194
      $region30: #{gcn_layer_forward.2} parent=11 // pred_check_branch
        %443 = sbr.rel (%p441) target = $region32
      $region31: #{gcn_layer_forward.2} parent=11 // pred_region
        _
      $region32: #{gcn_layer_forward.2} parent=11 // pred_fallthru
        _
      // Predicated region
      $region33: #{gcn_layer_forward.2} parent=11 // pred_check
        %p444 = pneg %p215
      $region34: #{gcn_layer_forward.2} parent=11 // pred_check_branch
        %446 = sbr.rel (%p444) target = $region36
      $region35: #{gcn_layer_forward.2} parent=11 // pred_region
        _
      $region36: #{gcn_layer_forward.2} parent=11 // pred_fallthru
        _
      // Predicated region
      $region37: #{gcn_layer_forward.2} parent=11 // pred_check
        %p447 = pneg %p236
      $region38: #{gcn_layer_forward.2} parent=11 // pred_check_branch
        %449 = sbr.rel (%p447) target = $region40
      $region39: #{gcn_layer_forward.2} parent=11 // pred_region
        _
      $region40: #{gcn_layer_forward.2} parent=11 // pred_fallthru
        _
      // Predicated region
      $region41: #{gcn_layer_forward.2} parent=11 // pred_check
        %p450 = pneg %p257
      $region42: #{gcn_layer_forward.2} parent=11 // pred_check_branch
        %452 = sbr.rel (%p450) target = $region44
      $region43: #{gcn_layer_forward.2} parent=11 // pred_region
        _
      $region44: #{gcn_layer_forward.2} parent=11 // pred_fallthru
        _
      // Predicated region
      $region45: #{gcn_layer_forward.2} parent=11 // pred_check
        %p453 = pneg %p278
      $region46: #{gcn_layer_forward.2} parent=11 // pred_check_branch
        %455 = sbr.rel (%p453) target = $region48
      $region47: #{gcn_layer_forward.2} parent=11 // pred_region
        _
      $region48: #{gcn_layer_forward.2} parent=11 // pred_fallthru
        _
      // Predicated region
      $region49: #{gcn_layer_forward.2} parent=11 // pred_check
        %p456 = pneg %p299
      $region50: #{gcn_layer_forward.2} parent=11 // pred_check_branch
        %458 = sbr.rel (%p456) target = $region52
      $region51: #{gcn_layer_forward.2} parent=11 // pred_region
        _
      $region52: #{gcn_layer_forward.2} parent=11 // pred_fallthru
        _
      // Predicated region
      $region53: #{gcn_layer_forward.2} parent=11 // pred_check
        %p459 = pneg %p320
      $region54: #{gcn_layer_forward.2} parent=11 // pred_check_branch
        %461 = sbr.rel (%p459) target = $region56
      $region55: #{gcn_layer_forward.2} parent=11 // pred_region
        _
      $region56: #{gcn_layer_forward.2} parent=11 // pred_fallthru
        _
      // Predicated region
      $region57: #{gcn_layer_forward.2} parent=11 // pred_check
        %p462 = pneg %p341
      $region58: #{gcn_layer_forward.2} parent=11 // pred_check_branch
        %464 = sbr.rel (%p462) target = $region60
      $region59: #{gcn_layer_forward.2} parent=11 // pred_region
        _
      $region60: #{gcn_layer_forward.2} parent=11 // pred_fallthru
        _
      // Predicated region
      $region61: #{gcn_layer_forward.2} parent=11 // pred_check
        %p465 = pneg %p362
      $region62: #{gcn_layer_forward.2} parent=11 // pred_check_branch
        %467 = sbr.rel (%p465) target = $region64
      $region63: #{gcn_layer_forward.2} parent=11 // pred_region
        _
      $region64: #{gcn_layer_forward.2} parent=11 // pred_fallthru
        _
    $region12: #{gcn_layer_forward.2} parent=5 // pred_fallthru
      _
    %p468 = scmp.lt.s32.totalorder %s23, 2
    // Predicated region
    $region65: #{gcn_layer_forward.2} parent=5 // pred_check
      %p469 = pneg %p468
    $region66: #{gcn_layer_forward.2} parent=5 // pred_check_branch
      %471 = sbr.rel (%p469) target = $region68
    $region67: #{gcn_layer_forward.2} parent=5 // pred_region
      // Predicated region
      $region69: #{gcn_layer_forward.2} parent=67 // pred_check
        %p472 = pneg %p57
      $region70: #{gcn_layer_forward.2} parent=67 // pred_check_branch
        %474 = sbr.rel (%p472) target = $region72
      $region71: #{gcn_layer_forward.2} parent=67 // pred_region
        %s475 = smul.u32 32, %s30
        %s476 = smul.u32 2, %s31
        %p477 = scmp.lt.s32.totalorder %s475, 63
        %s478 = scalar_select %p477, %s475, 63
        %p479 = scmp.lt.s32.totalorder %s476, 1
        %s480 = scalar_select %p479, %s476, 1
        %s481 = smul.addr %s478, 2
        %s482 = sadd.s32 %s480, %s481
        %s483 = smul.addr %s482, 4
        %s484 = scalar_lea.vmem %s0, %s483
        %s485 = smul.u32 32, %s30
        %s486 = smul.u32 2, %s31
      $region72: #{gcn_layer_forward.2} parent=67 // pred_fallthru
        _
      // Predicated region
      $region73: #{gcn_layer_forward.2} parent=67 // pred_check
        %p487 = pneg %p104
      $region74: #{gcn_layer_forward.2} parent=67 // pred_check_branch
        %489 = sbr.rel (%p487) target = $region76
      $region75: #{gcn_layer_forward.2} parent=67 // pred_region
        %s490 = smul.u32 32, %s30
        %p491 = scmp.lt.s32.totalorder %s490, 63
        %s492 = scalar_select %p491, %s490, 63
        %s493 = smul.addr %s492, 4
        %s494 = scalar_lea.vmem %s2, %s493
        %s495 = smul.u32 32, %s30
      $region76: #{gcn_layer_forward.2} parent=67 // pred_fallthru
        _
    $region68: #{gcn_layer_forward.2} parent=5 // pred_fallthru
      _
    %p496 = scmp.le.s32.totalorder 1, %s23
    %p497 = scmp.lt.s32.totalorder %s23, 3
    %p498 = pnand %p496, %p497
    %p499 = pneg %p498
    // Predicated region
    $region77: #{gcn_layer_forward.2} parent=5 // pred_check
      _
    $region78: #{gcn_layer_forward.2} parent=5 // pred_check_branch
      %501 = sbr.rel (%p498) target = $region80
    $region79: #{gcn_layer_forward.2} parent=5 // pred_region
      %s502 = ssub.s32 %s23, 1
      %s503 = smul.u32 32, %s32
      %s504 = smul.u32 2, %s33
      %p505 = scmp.lt.s32.totalorder %s503, 63
      %s506 = scalar_select %p505, %s503, 63
      %p507 = scmp.lt.s32.totalorder %s504, 1
      %s508 = scalar_select %p507, %s504, 1
      %s509 = smul.addr %s506, 2
      %s510 = sadd.s32 %s508, %s509
      %s511 = smul.addr %s510, 4
      %s512 = scalar_lea.vmem %s0, %s511
      %p513 = pneg %p63
      %p514 = pneg %p60
      %p515 = pneg %p84
      %p516 = pneg %p81
      %s517 = smul.u32 32, %s32
      %p518 = scmp.lt.s32.totalorder %s517, 63
      %s519 = scalar_select %p518, %s517, 63
      %s520 = smul.addr %s519, 4
      %s521 = scalar_lea.vmem %s2, %s520
      %p522 = pneg %p110
      %p523 = pneg %p107
      %p524 = pneg %p131
      %p525 = pneg %p128
      %p526 = pneg %p152
      %p527 = pneg %p149
      %p528 = pneg %p173
      %p529 = pneg %p170
      %p530 = pneg %p194
      %p531 = pneg %p191
      %p532 = pneg %p215
      %p533 = pneg %p212
      %p534 = pneg %p236
      %p535 = pneg %p233
      %p536 = pneg %p257
      %p537 = pneg %p254
      %p538 = pneg %p278
      %p539 = pneg %p275
      %p540 = pneg %p299
      %p541 = pneg %p296
      %p542 = pneg %p320
      %p543 = pneg %p317
      %p544 = pneg %p341
      %p545 = pneg %p338
      %p546 = pneg %p362
      %p547 = pneg %p359
      %p548 = pneg %p388
      %p549 = pneg %p385
      %s550 = smul.u32 32, %s32
      %p551 = scmp.lt.s32.totalorder %s550, 63
      %s552 = scalar_select %p551, %s550, 63
      %s553 = smul.addr %s552, 8
      %s554 = scalar_lea.vmem %s15, %s553
      %p555 = pneg %p414
      %p556 = pneg %p411
      %s557 = smul.u32 32, %s32
      %p558 = scmp.lt.s32.totalorder %s557, 63
      %s559 = scalar_select %p558, %s557, 63
      %s560 = smul.addr %s559, 4
      %s561 = scalar_lea.vmem %s16, %s560
      %s562 = smul.u32 32, %s32
      %s563 = smul.u32 2, %s33
      %p564 = scmp.lt.s32.totalorder %s562, 63
      %s565 = scalar_select %p564, %s562, 63
      %p566 = scmp.lt.s32.totalorder %s563, 1
      %s567 = scalar_select %p566, %s563, 1
      %s568 = smul.addr %s565, 2
      %s569 = sadd.s32 %s567, %s568
      %s570 = smul.addr %s569, 4
      %s571 = scalar_lea.vmem %s0, %s570
      %s572 = smul.u32 32, %s32
      %s573 = smul.u32 2, %s33
      %s574 = smul.u32 32, %s32
      %p575 = scmp.lt.s32.totalorder %s574, 63
      %s576 = scalar_select %p575, %s574, 63
      %s577 = smul.addr %s576, 4
      %s578 = scalar_lea.vmem %s2, %s577
      %s579 = smul.u32 32, %s32
      %s580 = smul.u32 32, %s32
      %p581 = scmp.lt.s32.totalorder %s580, 63
      %s582 = scalar_select %p581, %s580, 63
      %s583 = smul.addr %s582, 8
      %s584 = scalar_lea.vmem %s15, %s583
      %s585 = smul.u32 32, %s32
      %s586 = smul.u32 32, %s32
      %p587 = scmp.lt.s32.totalorder %s586, 63
      %s588 = scalar_select %p587, %s586, 63
      %s589 = smul.addr %s588, 4
      %s590 = scalar_lea.vmem %s16, %s589
      %s591 = smul.u32 32, %s32
      %p593 = scmp.eq.s32.totalorder %s33, 0
      // Predicated region
      $region81: #{gcn_layer_forward.2} parent=79 // pred_check
        %p594 = pneg %p593
      $region82: #{gcn_layer_forward.2} parent=79 // pred_check_branch
        %596 = sbr.rel (%p594) target = $region84
      $region83: #{gcn_layer_forward.2} parent=79 // pred_region
        %597 = vst [vmem:[#allocation2] sm:$0xff] 0.0
        %598 = vst [vmem:[#allocation2 + $0x8] sm:$0xff] 0.0
        %599 = vst [vmem:[#allocation2 + $0x10] sm:$0xff] 0.0
        %600 = vst [vmem:[#allocation2 + $0x18] sm:$0xff] 0.0
        %601 = vst [vmem:[#allocation2 + $0x20] sm:$0xff] 0.0
        %602 = vst [vmem:[#allocation2 + $0x28] sm:$0xff] 0.0
        %603 = vst [vmem:[#allocation2 + $0x30] sm:$0xff] 0.0
        %604 = vst [vmem:[#allocation2 + $0x38] sm:$0xff] 0.0
        %605 = vst [vmem:[#allocation2 + $0x40] sm:$0xff] 0.0
        %606 = vst [vmem:[#allocation2 + $0x48] sm:$0xff] 0.0
        %607 = vst [vmem:[#allocation2 + $0x50] sm:$0xff] 0.0
        %608 = vst [vmem:[#allocation2 + $0x58] sm:$0xff] 0.0
        %609 = vst [vmem:[#allocation2 + $0x60] sm:$0xff] 0.0
        %610 = vst [vmem:[#allocation2 + $0x68] sm:$0xff] 0.0
        %611 = vst [vmem:[#allocation2 + $0x70] sm:$0xff] 0.0
        %612 = vst [vmem:[#allocation2 + $0x78] sm:$0xff] 0.0
        %613 = vst [vmem:[#allocation2 + $0x80] sm:$0xff] 0.0
        %614 = vst [vmem:[#allocation2 + $0x88] sm:$0xff] 0.0
        %615 = vst [vmem:[#allocation2 + $0x90] sm:$0xff] 0.0
        %616 = vst [vmem:[#allocation2 + $0x98] sm:$0xff] 0.0
        %617 = vst [vmem:[#allocation2 + $0xa0] sm:$0xff] 0.0
        %618 = vst [vmem:[#allocation2 + $0xa8] sm:$0xff] 0.0
        %619 = vst [vmem:[#allocation2 + $0xb0] sm:$0xff] 0.0
        %620 = vst [vmem:[#allocation2 + $0xb8] sm:$0xff] 0.0
        %621 = vst [vmem:[#allocation2 + $0xc0] sm:$0xff] 0.0
        %622 = vst [vmem:[#allocation2 + $0xc8] sm:$0xff] 0.0
        %623 = vst [vmem:[#allocation2 + $0xd0] sm:$0xff] 0.0
        %624 = vst [vmem:[#allocation2 + $0xd8] sm:$0xff] 0.0
        %625 = vst [vmem:[#allocation2 + $0xe0] sm:$0xff] 0.0
        %626 = vst [vmem:[#allocation2 + $0xe8] sm:$0xff] 0.0
        %627 = vst [vmem:[#allocation2 + $0xf0] sm:$0xff] 0.0
        %628 = vst [vmem:[#allocation2 + $0xf8] sm:$0xff] 0.0
      $region84: #{gcn_layer_forward.2} parent=79 // pred_fallthru
        _
      %s629 = smul.u32 %s33, 256
      %s630 = sshra.s32 %s629, 3
      %s631 = sand.u32 %s629, 7
      %s632 = smul.addr %s630, 4
      %s633 = scalar_lea.vmem %s1, %s632
      %v634 = vld [vmem:[%s633] sm:$0xf]
      %v635 = vld [vmem:[%s633 + $0x4] sm:$0xf]
      %v636 = vld [vmem:[%s633 + $0x8] sm:$0xf]
      %v637 = vld [vmem:[%s633 + $0xc] sm:$0xf]
      %v638 = vld [vmem:[%s633 + $0x10] sm:$0xf]
      %v639 = vld [vmem:[%s633 + $0x14] sm:$0xf]
      %v640 = vld [vmem:[%s633 + $0x18] sm:$0xf]
      %v641 = vld [vmem:[%s633 + $0x1c] sm:$0xf]
      %v642 = vld [vmem:[%s633 + $0x20] sm:$0xf]
      %v643 = vld [vmem:[%s633 + $0x24] sm:$0xf]
      %v644 = vld [vmem:[%s633 + $0x28] sm:$0xf]
      %v645 = vld [vmem:[%s633 + $0x2c] sm:$0xf]
      %v646 = vld [vmem:[%s633 + $0x30] sm:$0xf]
      %v647 = vld [vmem:[%s633 + $0x34] sm:$0xf]
      %v648 = vld [vmem:[%s633 + $0x38] sm:$0xf]
      %v649 = vld [vmem:[%s633 + $0x3c] sm:$0xf]
      %v650 = vld [vmem:[%s633 + $0x40] sm:$0xf]
      %v651 = vld [vmem:[%s633 + $0x44] sm:$0xf]
      %v652 = vld [vmem:[%s633 + $0x48] sm:$0xf]
      %v653 = vld [vmem:[%s633 + $0x4c] sm:$0xf]
      %v654 = vld [vmem:[%s633 + $0x50] sm:$0xf]
      %v655 = vld [vmem:[%s633 + $0x54] sm:$0xf]
      %v656 = vld [vmem:[%s633 + $0x58] sm:$0xf]
      %v657 = vld [vmem:[%s633 + $0x5c] sm:$0xf]
      %v658 = vld [vmem:[%s633 + $0x60] sm:$0xf]
      %v659 = vld [vmem:[%s633 + $0x64] sm:$0xf]
      %v660 = vld [vmem:[%s633 + $0x68] sm:$0xf]
      %v661 = vld [vmem:[%s633 + $0x6c] sm:$0xf]
      %v662 = vld [vmem:[%s633 + $0x70] sm:$0xf]
      %v663 = vld [vmem:[%s633 + $0x74] sm:$0xf]
      %v664 = vld [vmem:[%s633 + $0x78] sm:$0xf]
      %v665 = vld [vmem:[%s633 + $0x7c] sm:$0xf]
      %v666 = vld [vmem:[#allocation2] sm:$0xff]
      %v667 = vld [vmem:[#allocation2 + $0x8] sm:$0xff]
      %v668 = vld [vmem:[#allocation2 + $0x10] sm:$0xff]
      %v669 = vld [vmem:[#allocation2 + $0x18] sm:$0xff]
      %v670 = vld [vmem:[#allocation2 + $0x20] sm:$0xff]
      %v671 = vld [vmem:[#allocation2 + $0x28] sm:$0xff]
      %v672 = vld [vmem:[#allocation2 + $0x30] sm:$0xff]
      %v673 = vld [vmem:[#allocation2 + $0x38] sm:$0xff]
      %v674 = vld [vmem:[#allocation2 + $0x40] sm:$0xff]
      %v675 = vld [vmem:[#allocation2 + $0x48] sm:$0xff]
      %v676 = vld [vmem:[#allocation2 + $0x50] sm:$0xff]
      %v677 = vld [vmem:[#allocation2 + $0x58] sm:$0xff]
      %v678 = vld [vmem:[#allocation2 + $0x60] sm:$0xff]
      %v679 = vld [vmem:[#allocation2 + $0x68] sm:$0xff]
      %v680 = vld [vmem:[#allocation2 + $0x70] sm:$0xff]
      %v681 = vld [vmem:[#allocation2 + $0x78] sm:$0xff]
      %v682 = vld [vmem:[#allocation2 + $0x80] sm:$0xff]
      %v683 = vld [vmem:[#allocation2 + $0x88] sm:$0xff]
      %v684 = vld [vmem:[#allocation2 + $0x90] sm:$0xff]
      %v685 = vld [vmem:[#allocation2 + $0x98] sm:$0xff]
      %v686 = vld [vmem:[#allocation2 + $0xa0] sm:$0xff]
      %v687 = vld [vmem:[#allocation2 + $0xa8] sm:$0xff]
      %v688 = vld [vmem:[#allocation2 + $0xb0] sm:$0xff]
      %v689 = vld [vmem:[#allocation2 + $0xb8] sm:$0xff]
      %v690 = vld [vmem:[#allocation2 + $0xc0] sm:$0xff]
      %v691 = vld [vmem:[#allocation2 + $0xc8] sm:$0xff]
      %v692 = vld [vmem:[#allocation2 + $0xd0] sm:$0xff]
      %v693 = vld [vmem:[#allocation2 + $0xd8] sm:$0xff]
      %v694 = vld [vmem:[#allocation2 + $0xe0] sm:$0xff]
      %v695 = vld [vmem:[#allocation2 + $0xe8] sm:$0xff]
      %v696 = vld [vmem:[#allocation2 + $0xf0] sm:$0xff]
      %v697 = vld [vmem:[#allocation2 + $0xf8] sm:$0xff]
      %v698 = vld [vmem:[%s571] sm:$0xff]
      %v699 = vld [vmem:[%s571 + $0x8] sm:$0xff]
      %v700 = vld [vmem:[%s571 + $0x10] sm:$0xff]
      %v701 = vld [vmem:[%s571 + $0x18] sm:$0xff]
      %v702 = vld [vmem:[%s571 + $0x20] sm:$0xff]
      %v703 = vld [vmem:[%s571 + $0x28] sm:$0xff]
      %v704 = vld [vmem:[%s571 + $0x30] sm:$0xff]
      %v705 = vld [vmem:[%s571 + $0x38] sm:$0xff]
      %v706 = vld [vmem:[%s571 + $0x40] sm:$0xff]
      %v707 = vld [vmem:[%s571 + $0x48] sm:$0xff]
      %v708 = vld [vmem:[%s571 + $0x50] sm:$0xff]
      %v709 = vld [vmem:[%s571 + $0x58] sm:$0xff]
      %v710 = vld [vmem:[%s571 + $0x60] sm:$0xff]
      %v711 = vld [vmem:[%s571 + $0x68] sm:$0xff]
      %v712 = vld [vmem:[%s571 + $0x70] sm:$0xff]
      %v713 = vld [vmem:[%s571 + $0x78] sm:$0xff]
      %v714 = vld [vmem:[%s571 + $0x80] sm:$0xff]
      %v715 = vld [vmem:[%s571 + $0x88] sm:$0xff]
      %v716 = vld [vmem:[%s571 + $0x90] sm:$0xff]
      %v717 = vld [vmem:[%s571 + $0x98] sm:$0xff]
      %v718 = vld [vmem:[%s571 + $0xa0] sm:$0xff]
      %v719 = vld [vmem:[%s571 + $0xa8] sm:$0xff]
      %v720 = vld [vmem:[%s571 + $0xb0] sm:$0xff]
      %v721 = vld [vmem:[%s571 + $0xb8] sm:$0xff]
      %v722 = vld [vmem:[%s571 + $0xc0] sm:$0xff]
      %v723 = vld [vmem:[%s571 + $0xc8] sm:$0xff]
      %v724 = vld [vmem:[%s571 + $0xd0] sm:$0xff]
      %v725 = vld [vmem:[%s571 + $0xd8] sm:$0xff]
      %v726 = vld [vmem:[%s571 + $0xe0] sm:$0xff]
      %v727 = vld [vmem:[%s571 + $0xe8] sm:$0xff]
      %v728 = vld [vmem:[%s571 + $0xf0] sm:$0xff]
      %v729 = vld [vmem:[%s571 + $0xf8] sm:$0xff]
      %v762 = vunpack.c.l.b16 %v698
      %v763 = vunpack.c.h.b16 %v698
      %v764 = vunpack.c.l.b16 %v699
      %v765 = vunpack.c.h.b16 %v699
      %v766 = vunpack.c.l.b16 %v700
      %v767 = vunpack.c.h.b16 %v700
      %v768 = vunpack.c.l.b16 %v701
      %v769 = vunpack.c.h.b16 %v701
      %v770 = vunpack.c.l.b16 %v702
      %v771 = vunpack.c.h.b16 %v702
      %v772 = vunpack.c.l.b16 %v703
      %v773 = vunpack.c.h.b16 %v703
      %v774 = vunpack.c.l.b16 %v704
      %v775 = vunpack.c.h.b16 %v704
      %v776 = vunpack.c.l.b16 %v705
      %v777 = vunpack.c.h.b16 %v705
      %v778 = vunpack.c.l.b16 %v706
      %v779 = vunpack.c.h.b16 %v706
      %v780 = vunpack.c.l.b16 %v707
      %v781 = vunpack.c.h.b16 %v707
      %v782 = vunpack.c.l.b16 %v708
      %v783 = vunpack.c.h.b16 %v708
      %v784 = vunpack.c.l.b16 %v709
      %v785 = vunpack.c.h.b16 %v709
      %v786 = vunpack.c.l.b16 %v710
      %v787 = vunpack.c.h.b16 %v710
      %v788 = vunpack.c.l.b16 %v711
      %v789 = vunpack.c.h.b16 %v711
      %v790 = vunpack.c.l.b16 %v712
      %v791 = vunpack.c.h.b16 %v712
      %v792 = vunpack.c.l.b16 %v713
      %v793 = vunpack.c.h.b16 %v713
      %v794 = vunpack.c.l.b16 %v714
      %v795 = vunpack.c.h.b16 %v714
      %v796 = vunpack.c.l.b16 %v715
      %v797 = vunpack.c.h.b16 %v715
      %v798 = vunpack.c.l.b16 %v716
      %v799 = vunpack.c.h.b16 %v716
      %v800 = vunpack.c.l.b16 %v717
      %v801 = vunpack.c.h.b16 %v717
      %v802 = vunpack.c.l.b16 %v718
      %v803 = vunpack.c.h.b16 %v718
      %v804 = vunpack.c.l.b16 %v719
      %v805 = vunpack.c.h.b16 %v719
      %v806 = vunpack.c.l.b16 %v720
      %v807 = vunpack.c.h.b16 %v720
      %v808 = vunpack.c.l.b16 %v721
      %v809 = vunpack.c.h.b16 %v721
      %v810 = vunpack.c.l.b16 %v722
      %v811 = vunpack.c.h.b16 %v722
      %v812 = vunpack.c.l.b16 %v723
      %v813 = vunpack.c.h.b16 %v723
      %v814 = vunpack.c.l.b16 %v724
      %v815 = vunpack.c.h.b16 %v724
      %v816 = vunpack.c.l.b16 %v725
      %v817 = vunpack.c.h.b16 %v725
      %v818 = vunpack.c.l.b16 %v726
      %v819 = vunpack.c.h.b16 %v726
      %v820 = vunpack.c.l.b16 %v727
      %v821 = vunpack.c.h.b16 %v727
      %v822 = vunpack.c.l.b16 %v728
      %v823 = vunpack.c.h.b16 %v728
      %v824 = vunpack.c.l.b16 %v729
      %v825 = vunpack.c.h.b16 %v729
      %v826 = vpack.c.b16 %v764, %v762
      %v827 = vpack.c.b16 %v765, %v763
      %v828 = vpack.c.b16 %v768, %v766
      %v829 = vpack.c.b16 %v769, %v767
      %v830 = vpack.c.b16 %v772, %v770
      %v831 = vpack.c.b16 %v773, %v771
      %v832 = vpack.c.b16 %v776, %v774
      %v833 = vpack.c.b16 %v777, %v775
      %v834 = vpack.c.b16 %v780, %v778
      %v835 = vpack.c.b16 %v781, %v779
      %v836 = vpack.c.b16 %v784, %v782
      %v837 = vpack.c.b16 %v785, %v783
      %v838 = vpack.c.b16 %v788, %v786
      %v839 = vpack.c.b16 %v789, %v787
      %v840 = vpack.c.b16 %v792, %v790
      %v841 = vpack.c.b16 %v793, %v791
      %v842 = vpack.c.b16 %v796, %v794
      %v843 = vpack.c.b16 %v797, %v795
      %v844 = vpack.c.b16 %v800, %v798
      %v845 = vpack.c.b16 %v801, %v799
      %v846 = vpack.c.b16 %v804, %v802
      %v847 = vpack.c.b16 %v805, %v803
      %v848 = vpack.c.b16 %v808, %v806
      %v849 = vpack.c.b16 %v809, %v807
      %v850 = vpack.c.b16 %v812, %v810
      %v851 = vpack.c.b16 %v813, %v811
      %v852 = vpack.c.b16 %v816, %v814
      %v853 = vpack.c.b16 %v817, %v815
      %v854 = vpack.c.b16 %v820, %v818
      %v855 = vpack.c.b16 %v821, %v819
      %v856 = vpack.c.b16 %v824, %v822
      %v857 = vpack.c.b16 %v825, %v823
      %v922 = vunpack.c.l.b16 %v634
      %v923 = vunpack.c.l.b16 %v635
      %v924 = vunpack.c.l.b16 %v636
      %v925 = vunpack.c.l.b16 %v637
      %v926 = vunpack.c.l.b16 %v638
      %v927 = vunpack.c.l.b16 %v639
      %v928 = vunpack.c.l.b16 %v640
      %v929 = vunpack.c.l.b16 %v641
      %v930 = vunpack.c.l.b16 %v642
      %v931 = vunpack.c.l.b16 %v643
      %v932 = vunpack.c.l.b16 %v644
      %v933 = vunpack.c.l.b16 %v645
      %v934 = vunpack.c.l.b16 %v646
      %v935 = vunpack.c.l.b16 %v647
      %v936 = vunpack.c.l.b16 %v648
      %v937 = vunpack.c.l.b16 %v649
      %v938 = vunpack.c.l.b16 %v650
      %v939 = vunpack.c.l.b16 %v651
      %v940 = vunpack.c.l.b16 %v652
      %v941 = vunpack.c.l.b16 %v653
      %v942 = vunpack.c.l.b16 %v654
      %v943 = vunpack.c.l.b16 %v655
      %v944 = vunpack.c.l.b16 %v656
      %v945 = vunpack.c.l.b16 %v657
      %v946 = vunpack.c.l.b16 %v658
      %v947 = vunpack.c.l.b16 %v659
      %v948 = vunpack.c.l.b16 %v660
      %v949 = vunpack.c.l.b16 %v661
      %v950 = vunpack.c.l.b16 %v662
      %v951 = vunpack.c.l.b16 %v663
      %v952 = vunpack.c.l.b16 %v664
      %v953 = vunpack.c.l.b16 %v665
      %v954 = vpack.c.b16 %v923, %v922
      %v955 = vpack.c.b16 %v925, %v924
      %v956 = vpack.c.b16 %v927, %v926
      %v957 = vpack.c.b16 %v929, %v928
      %v958 = vpack.c.b16 %v931, %v930
      %v959 = vpack.c.b16 %v933, %v932
      %v960 = vpack.c.b16 %v935, %v934
      %v961 = vpack.c.b16 %v937, %v936
      %v962 = vpack.c.b16 %v939, %v938
      %v963 = vpack.c.b16 %v941, %v940
      %v964 = vpack.c.b16 %v943, %v942
      %v965 = vpack.c.b16 %v945, %v944
      %v966 = vpack.c.b16 %v947, %v946
      %v967 = vpack.c.b16 %v949, %v948
      %v968 = vpack.c.b16 %v951, %v950
      %v969 = vpack.c.b16 %v953, %v952
      %986 = vmatprep.subr.bf16.mxu0 0
      %987 = vmatpush1.bf16.msra.mxu0 %v954
      %988 = vmatprep.subr.bf16.mxu0 0
      %989 = vmatpush1.bf16.msra.mxu0 %v955
      %990 = vmatprep.subr.bf16.mxu0 0
      %991 = vmatpush1.bf16.msra.mxu0 %v956
      %992 = vmatprep.subr.bf16.mxu0 0
      %993 = vmatpush1.bf16.msra.mxu0 %v957
      %994 = vmatprep.subr.bf16.mxu0 0
      %995 = vmatpush1.bf16.msra.mxu0 %v958
      %996 = vmatprep.subr.bf16.mxu0 0
      %997 = vmatpush1.bf16.msra.mxu0 %v959
      %998 = vmatprep.subr.bf16.mxu0 0
      %999 = vmatpush1.bf16.msra.mxu0 %v960
      %1000 = vmatprep.subr.bf16.mxu0 0
      %1001 = vmatpush1.bf16.msra.mxu0 %v961
      %1002 = vmatprep.subr.bf16.mxu0 0
      %1003 = vmatpush1.bf16.msra.mxu0 %v962
      %1004 = vmatprep.subr.bf16.mxu0 0
      %1005 = vmatpush1.bf16.msra.mxu0 %v963
      %1006 = vmatprep.subr.bf16.mxu0 0
      %1007 = vmatpush1.bf16.msra.mxu0 %v964
      %1008 = vmatprep.subr.bf16.mxu0 0
      %1009 = vmatpush1.bf16.msra.mxu0 %v965
      %1010 = vmatprep.subr.bf16.mxu0 0
      %1011 = vmatpush1.bf16.msra.mxu0 %v966
      %1012 = vmatprep.subr.bf16.mxu0 0
      %1013 = vmatpush1.bf16.msra.mxu0 %v967
      %1014 = vmatprep.subr.bf16.mxu0 0
      %1015 = vmatpush1.bf16.msra.mxu0 %v968
      %1016 = vmatprep.subr.bf16.mxu0 0
      %1017 = vmatpush1.bf16.msra.mxu0 %v969
      %1018 = vmatprep.mubr.bf16.mxu0 %v827
      %1019 = vmatmul.mubr.bf16.gmra.mrb[0].mxu0 %v826
      %v1020 = vpop.f32.mrb[0].mxu0
      %v1021 = vadd.f32 0.0, %v1020
      %v1022 = vpop.f32.mrb[0].mxu0
      %v1023 = vpop.f32.mrb[0].mxu0
      %v1024 = vadd.f32 0.0, %v1023
      %v1025 = vpop.f32.mrb[0].mxu0
      %1026 = vmatprep.mubr.bf16.mxu0 %v829
      %1027 = vmatmul.mubr.bf16.gmra.mrb[0].mxu0 %v828
      %v1028 = vpop.f32.mrb[0].mxu0
      %v1029 = vadd.f32 0.0, %v1028
      %v1030 = vpop.f32.mrb[0].mxu0
      %v1031 = vpop.f32.mrb[0].mxu0
      %v1032 = vadd.f32 0.0, %v1031
      %v1033 = vpop.f32.mrb[0].mxu0
      %1034 = vmatprep.mubr.bf16.mxu0 %v831
      %1035 = vmatmul.mubr.bf16.gmra.mrb[0].mxu0 %v830
      %v1036 = vpop.f32.mrb[0].mxu0
      %v1037 = vadd.f32 0.0, %v1036
      %v1038 = vpop.f32.mrb[0].mxu0
      %v1039 = vpop.f32.mrb[0].mxu0
      %v1040 = vadd.f32 0.0, %v1039
      %v1041 = vpop.f32.mrb[0].mxu0
      %1042 = vmatprep.mubr.bf16.mxu0 %v833
      %1043 = vmatmul.mubr.bf16.gmra.mrb[0].mxu0 %v832
      %v1044 = vpop.f32.mrb[0].mxu0
      %v1045 = vadd.f32 0.0, %v1044
      %v1046 = vpop.f32.mrb[0].mxu0
      %v1047 = vpop.f32.mrb[0].mxu0
      %v1048 = vadd.f32 0.0, %v1047
      %v1049 = vpop.f32.mrb[0].mxu0
      %1050 = vmatprep.mubr.bf16.mxu0 %v835
      %1051 = vmatmul.mubr.bf16.gmra.mrb[0].mxu0 %v834
      %v1052 = vpop.f32.mrb[0].mxu0
      %v1053 = vadd.f32 0.0, %v1052
      %v1054 = vpop.f32.mrb[0].mxu0
      %v1055 = vpop.f32.mrb[0].mxu0
      %v1056 = vadd.f32 0.0, %v1055
      %v1057 = vpop.f32.mrb[0].mxu0
      %1058 = vmatprep.mubr.bf16.mxu0 %v837
      %1059 = vmatmul.mubr.bf16.gmra.mrb[0].mxu0 %v836
      %v1060 = vpop.f32.mrb[0].mxu0
      %v1061 = vadd.f32 0.0, %v1060
      %v1062 = vpop.f32.mrb[0].mxu0
      %v1063 = vpop.f32.mrb[0].mxu0
      %v1064 = vadd.f32 0.0, %v1063
      %v1065 = vpop.f32.mrb[0].mxu0
      %1066 = vmatprep.mubr.bf16.mxu0 %v839
      %1067 = vmatmul.mubr.bf16.gmra.mrb[0].mxu0 %v838
      %v1068 = vpop.f32.mrb[0].mxu0
      %v1069 = vadd.f32 0.0, %v1068
      %v1070 = vpop.f32.mrb[0].mxu0
      %v1071 = vpop.f32.mrb[0].mxu0
      %v1072 = vadd.f32 0.0, %v1071
      %v1073 = vpop.f32.mrb[0].mxu0
      %1074 = vmatprep.mubr.bf16.mxu0 %v841
      %1075 = vmatmul.mubr.bf16.gmra.mrb[0].mxu0 %v840
      %v1076 = vpop.f32.mrb[0].mxu0
      %v1077 = vadd.f32 0.0, %v1076
      %v1078 = vpop.f32.mrb[0].mxu0
      %v1079 = vpop.f32.mrb[0].mxu0
      %v1080 = vadd.f32 0.0, %v1079
      %v1081 = vpop.f32.mrb[0].mxu0
      %1082 = vmatprep.mubr.bf16.mxu0 %v843
      %1083 = vmatmul.mubr.bf16.gmra.mrb[0].mxu0 %v842
      %v1084 = vpop.f32.mrb[0].mxu0
      %v1085 = vadd.f32 0.0, %v1084
      %v1086 = vpop.f32.mrb[0].mxu0
      %v1087 = vpop.f32.mrb[0].mxu0
      %v1088 = vadd.f32 0.0, %v1087
      %v1089 = vpop.f32.mrb[0].mxu0
      %1090 = vmatprep.mubr.bf16.mxu0 %v845
      %1091 = vmatmul.mubr.bf16.gmra.mrb[0].mxu0 %v844
      %v1092 = vpop.f32.mrb[0].mxu0
      %v1093 = vadd.f32 0.0, %v1092
      %v1094 = vpop.f32.mrb[0].mxu0
      %v1095 = vpop.f32.mrb[0].mxu0
      %v1096 = vadd.f32 0.0, %v1095
      %v1097 = vpop.f32.mrb[0].mxu0
      %1098 = vmatprep.mubr.bf16.mxu0 %v847
      %1099 = vmatmul.mubr.bf16.gmra.mrb[0].mxu0 %v846
      %v1100 = vpop.f32.mrb[0].mxu0
      %v1101 = vadd.f32 0.0, %v1100
      %v1102 = vpop.f32.mrb[0].mxu0
      %v1103 = vpop.f32.mrb[0].mxu0
      %v1104 = vadd.f32 0.0, %v1103
      %v1105 = vpop.f32.mrb[0].mxu0
      %1106 = vmatprep.mubr.bf16.mxu0 %v849
      %1107 = vmatmul.mubr.bf16.gmra.mrb[0].mxu0 %v848
      %v1108 = vpop.f32.mrb[0].mxu0
      %v1109 = vadd.f32 0.0, %v1108
      %v1110 = vpop.f32.mrb[0].mxu0
      %v1111 = vpop.f32.mrb[0].mxu0
      %v1112 = vadd.f32 0.0, %v1111
      %v1113 = vpop.f32.mrb[0].mxu0
      %1114 = vmatprep.mubr.bf16.mxu0 %v851
      %1115 = vmatmul.mubr.bf16.gmra.mrb[0].mxu0 %v850
      %v1116 = vpop.f32.mrb[0].mxu0
      %v1117 = vadd.f32 0.0, %v1116
      %v1118 = vpop.f32.mrb[0].mxu0
      %v1119 = vpop.f32.mrb[0].mxu0
      %v1120 = vadd.f32 0.0, %v1119
      %v1121 = vpop.f32.mrb[0].mxu0
      %1122 = vmatprep.mubr.bf16.mxu0 %v853
      %1123 = vmatmul.mubr.bf16.gmra.mrb[0].mxu0 %v852
      %v1124 = vpop.f32.mrb[0].mxu0
      %v1125 = vadd.f32 0.0, %v1124
      %v1126 = vpop.f32.mrb[0].mxu0
      %v1127 = vpop.f32.mrb[0].mxu0
      %v1128 = vadd.f32 0.0, %v1127
      %v1129 = vpop.f32.mrb[0].mxu0
      %1130 = vmatprep.mubr.bf16.mxu0 %v855
      %1131 = vmatmul.mubr.bf16.gmra.mrb[0].mxu0 %v854
      %v1132 = vpop.f32.mrb[0].mxu0
      %v1133 = vadd.f32 0.0, %v1132
      %v1134 = vpop.f32.mrb[0].mxu0
      %v1135 = vpop.f32.mrb[0].mxu0
      %v1136 = vadd.f32 0.0, %v1135
      %v1137 = vpop.f32.mrb[0].mxu0
      %1138 = vmatprep.mubr.bf16.mxu0 %v857
      %1139 = vmatmul.mubr.bf16.gmra.mrb[0].mxu0 %v856
      %v1140 = vpop.f32.mrb[0].mxu0
      %v1141 = vadd.f32 0.0, %v1140
      %v1142 = vpop.f32.mrb[0].mxu0
      %v1143 = vpop.f32.mrb[0].mxu0
      %v1144 = vadd.f32 0.0, %v1143
      %v1145 = vpop.f32.mrb[0].mxu0
      %1146 = vdwg.mxu0
      %v1147 = vadd.f32 %v666, %v1021
      %v1148 = vadd.f32 %v667, %v1024
      %v1149 = vadd.f32 %v668, %v1029
      %v1150 = vadd.f32 %v669, %v1032
      %v1151 = vadd.f32 %v670, %v1037
      %v1152 = vadd.f32 %v671, %v1040
      %v1153 = vadd.f32 %v672, %v1045
      %v1154 = vadd.f32 %v673, %v1048
      %v1155 = vadd.f32 %v674, %v1053
      %v1156 = vadd.f32 %v675, %v1056
      %v1157 = vadd.f32 %v676, %v1061
      %v1158 = vadd.f32 %v677, %v1064
      %v1159 = vadd.f32 %v678, %v1069
      %v1160 = vadd.f32 %v679, %v1072
      %v1161 = vadd.f32 %v680, %v1077
      %v1162 = vadd.f32 %v681, %v1080
      %v1163 = vadd.f32 %v682, %v1085
      %v1164 = vadd.f32 %v683, %v1088
      %v1165 = vadd.f32 %v684, %v1093
      %v1166 = vadd.f32 %v685, %v1096
      %v1167 = vadd.f32 %v686, %v1101
      %v1168 = vadd.f32 %v687, %v1104
      %v1169 = vadd.f32 %v688, %v1109
      %v1170 = vadd.f32 %v689, %v1112
      %v1171 = vadd.f32 %v690, %v1117
      %v1172 = vadd.f32 %v691, %v1120
      %v1173 = vadd.f32 %v692, %v1125
      %v1174 = vadd.f32 %v693, %v1128
      %v1175 = vadd.f32 %v694, %v1133
      %v1176 = vadd.f32 %v695, %v1136
      %v1177 = vadd.f32 %v696, %v1141
      %v1178 = vadd.f32 %v697, %v1144
      %1179 = vst [vmem:[#allocation2] sm:$0xff] %v1147
      %1180 = vst [vmem:[#allocation2 + $0x8] sm:$0xff] %v1148
      %1181 = vst [vmem:[#allocation2 + $0x10] sm:$0xff] %v1149
      %1182 = vst [vmem:[#allocation2 + $0x18] sm:$0xff] %v1150
      %1183 = vst [vmem:[#allocation2 + $0x20] sm:$0xff] %v1151
      %1184 = vst [vmem:[#allocation2 + $0x28] sm:$0xff] %v1152
      %1185 = vst [vmem:[#allocation2 + $0x30] sm:$0xff] %v1153
      %1186 = vst [vmem:[#allocation2 + $0x38] sm:$0xff] %v1154
      %1187 = vst [vmem:[#allocation2 + $0x40] sm:$0xff] %v1155
      %1188 = vst [vmem:[#allocation2 + $0x48] sm:$0xff] %v1156
      %1189 = vst [vmem:[#allocation2 + $0x50] sm:$0xff] %v1157
      %1190 = vst [vmem:[#allocation2 + $0x58] sm:$0xff] %v1158
      %1191 = vst [vmem:[#allocation2 + $0x60] sm:$0xff] %v1159
      %1192 = vst [vmem:[#allocation2 + $0x68] sm:$0xff] %v1160
      %1193 = vst [vmem:[#allocation2 + $0x70] sm:$0xff] %v1161
      %1194 = vst [vmem:[#allocation2 + $0x78] sm:$0xff] %v1162
      %1195 = vst [vmem:[#allocation2 + $0x80] sm:$0xff] %v1163
      %1196 = vst [vmem:[#allocation2 + $0x88] sm:$0xff] %v1164
      %1197 = vst [vmem:[#allocation2 + $0x90] sm:$0xff] %v1165
      %1198 = vst [vmem:[#allocation2 + $0x98] sm:$0xff] %v1166
      %1199 = vst [vmem:[#allocation2 + $0xa0] sm:$0xff] %v1167
      %1200 = vst [vmem:[#allocation2 + $0xa8] sm:$0xff] %v1168
      %1201 = vst [vmem:[#allocation2 + $0xb0] sm:$0xff] %v1169
      %1202 = vst [vmem:[#allocation2 + $0xb8] sm:$0xff] %v1170
      %1203 = vst [vmem:[#allocation2 + $0xc0] sm:$0xff] %v1171
      %1204 = vst [vmem:[#allocation2 + $0xc8] sm:$0xff] %v1172
      %1205 = vst [vmem:[#allocation2 + $0xd0] sm:$0xff] %v1173
      %1206 = vst [vmem:[#allocation2 + $0xd8] sm:$0xff] %v1174
      %1207 = vst [vmem:[#allocation2 + $0xe0] sm:$0xff] %v1175
      %1208 = vst [vmem:[#allocation2 + $0xe8] sm:$0xff] %v1176
      %1209 = vst [vmem:[#allocation2 + $0xf0] sm:$0xff] %v1177
      %1210 = vst [vmem:[#allocation2 + $0xf8] sm:$0xff] %v1178
      // Predicated region
      $region85: #{gcn_layer_forward.2} parent=79 // pred_check
        %p1211 = pneg %p593
      $region86: #{gcn_layer_forward.2} parent=79 // pred_check_branch
        %1213 = sbr.rel (%p1211) target = $region88
      $region87: #{gcn_layer_forward.2} parent=79 // pred_region
        %v1214 = vld [vmem:[#allocation2] sm:$0xff]
        %v1215 = vld [vmem:[#allocation2 + $0x8] sm:$0xff]
        %v1216 = vld [vmem:[#allocation2 + $0x10] sm:$0xff]
        %v1217 = vld [vmem:[#allocation2 + $0x18] sm:$0xff]
        %v1218 = vld [vmem:[#allocation2 + $0x20] sm:$0xff]
        %v1219 = vld [vmem:[#allocation2 + $0x28] sm:$0xff]
        %v1220 = vld [vmem:[#allocation2 + $0x30] sm:$0xff]
        %v1221 = vld [vmem:[#allocation2 + $0x38] sm:$0xff]
        %v1222 = vld [vmem:[#allocation2 + $0x40] sm:$0xff]
        %v1223 = vld [vmem:[#allocation2 + $0x48] sm:$0xff]
        %v1224 = vld [vmem:[#allocation2 + $0x50] sm:$0xff]
        %v1225 = vld [vmem:[#allocation2 + $0x58] sm:$0xff]
        %v1226 = vld [vmem:[#allocation2 + $0x60] sm:$0xff]
        %v1227 = vld [vmem:[#allocation2 + $0x68] sm:$0xff]
        %v1228 = vld [vmem:[#allocation2 + $0x70] sm:$0xff]
        %v1229 = vld [vmem:[#allocation2 + $0x78] sm:$0xff]
        %v1230 = vld [vmem:[#allocation2 + $0x80] sm:$0xff]
        %v1231 = vld [vmem:[#allocation2 + $0x88] sm:$0xff]
        %v1232 = vld [vmem:[#allocation2 + $0x90] sm:$0xff]
        %v1233 = vld [vmem:[#allocation2 + $0x98] sm:$0xff]
        %v1234 = vld [vmem:[#allocation2 + $0xa0] sm:$0xff]
        %v1235 = vld [vmem:[#allocation2 + $0xa8] sm:$0xff]
        %v1236 = vld [vmem:[#allocation2 + $0xb0] sm:$0xff]
        %v1237 = vld [vmem:[#allocation2 + $0xb8] sm:$0xff]
        %v1238 = vld [vmem:[#allocation2 + $0xc0] sm:$0xff]
        %v1239 = vld [vmem:[#allocation2 + $0xc8] sm:$0xff]
        %v1240 = vld [vmem:[#allocation2 + $0xd0] sm:$0xff]
        %v1241 = vld [vmem:[#allocation2 + $0xd8] sm:$0xff]
        %v1242 = vld [vmem:[#allocation2 + $0xe0] sm:$0xff]
        %v1243 = vld [vmem:[#allocation2 + $0xe8] sm:$0xff]
        %v1244 = vld [vmem:[#allocation2 + $0xf0] sm:$0xff]
        %v1245 = vld [vmem:[#allocation2 + $0xf8] sm:$0xff]
        %v1246 = vld [vmem:[%s3] sm:$0xf]
        %v1247 = vld [vmem:[%s3 + $0x4] sm:$0xf]
        %v1248 = vld [vmem:[%s3 + $0x8] sm:$0xf]
        %v1249 = vld [vmem:[%s3 + $0xc] sm:$0xf]
        %v1250 = vld [vmem:[%s3 + $0x10] sm:$0xf]
        %v1251 = vld [vmem:[%s3 + $0x14] sm:$0xf]
        %v1252 = vld [vmem:[%s3 + $0x18] sm:$0xf]
        %v1253 = vld [vmem:[%s3 + $0x1c] sm:$0xf]
        %v1254 = vld [vmem:[%s3 + $0x20] sm:$0xf]
        %v1255 = vld [vmem:[%s3 + $0x24] sm:$0xf]
        %v1256 = vld [vmem:[%s3 + $0x28] sm:$0xf]
        %v1257 = vld [vmem:[%s3 + $0x2c] sm:$0xf]
        %v1258 = vld [vmem:[%s3 + $0x30] sm:$0xf]
        %v1259 = vld [vmem:[%s3 + $0x34] sm:$0xf]
        %v1260 = vld [vmem:[%s3 + $0x38] sm:$0xf]
        %v1261 = vld [vmem:[%s3 + $0x3c] sm:$0xf]
        %v1262 = vpack.c.bf16 %v1215, %v1214
        %v1263 = vpack.c.bf16 %v1217, %v1216
        %v1264 = vpack.c.bf16 %v1219, %v1218
        %v1265 = vpack.c.bf16 %v1221, %v1220
        %v1266 = vpack.c.bf16 %v1223, %v1222
        %v1267 = vpack.c.bf16 %v1225, %v1224
        %v1268 = vpack.c.bf16 %v1227, %v1226
        %v1269 = vpack.c.bf16 %v1229, %v1228
        %v1270 = vpack.c.bf16 %v1231, %v1230
        %v1271 = vpack.c.bf16 %v1233, %v1232
        %v1272 = vpack.c.bf16 %v1235, %v1234
        %v1273 = vpack.c.bf16 %v1237, %v1236
        %v1274 = vpack.c.bf16 %v1239, %v1238
        %v1275 = vpack.c.bf16 %v1241, %v1240
        %v1276 = vpack.c.bf16 %v1243, %v1242
        %v1277 = vpack.c.bf16 %v1245, %v1244
        %v1278 = vld [vmem:[%s4] sm:$0x1]
        %v1280 = vlaneseq
        %v1281 = vshrl.u32 %v1280, 7
        %v1282 = vsub.s32 0, %v1281
        %v1283 = vrot.slane %v1278, %v1282
        %v1301 = vunpack.c.l.b16 %v1246
        %v1302 = vunpack.c.l.b16 %v1247
        %v1303 = vunpack.c.l.b16 %v1248
        %v1304 = vunpack.c.l.b16 %v1249
        %v1305 = vunpack.c.l.b16 %v1250
        %v1306 = vunpack.c.l.b16 %v1251
        %v1307 = vunpack.c.l.b16 %v1252
        %v1308 = vunpack.c.l.b16 %v1253
        %v1309 = vunpack.c.l.b16 %v1254
        %v1310 = vunpack.c.l.b16 %v1255
        %v1311 = vunpack.c.l.b16 %v1256
        %v1312 = vunpack.c.l.b16 %v1257
        %v1313 = vunpack.c.l.b16 %v1258
        %v1314 = vunpack.c.l.b16 %v1259
        %v1315 = vunpack.c.l.b16 %v1260
        %v1316 = vunpack.c.l.b16 %v1261
        %v1317 = vpack.c.b16 %v1302, %v1301
        %v1318 = vpack.c.b16 %v1304, %v1303
        %v1319 = vpack.c.b16 %v1306, %v1305
        %v1320 = vpack.c.b16 %v1308, %v1307
        %v1321 = vpack.c.b16 %v1310, %v1309
        %v1322 = vpack.c.b16 %v1312, %v1311
        %v1323 = vpack.c.b16 %v1314, %v1313
        %v1324 = vpack.c.b16 %v1316, %v1315
        %1333 = vmatprep.subr.bf16.mxu0 0
        %1334 = vmatpush1.bf16.msra.mxu0 %v1317
        %1335 = vmatprep.subr.bf16.mxu0 0
        %1336 = vmatpush1.bf16.msra.mxu0 %v1318
        %1337 = vmatprep.subr.bf16.mxu0 0
        %1338 = vmatpush1.bf16.msra.mxu0 %v1319
        %1339 = vmatprep.subr.bf16.mxu0 0
        %1340 = vmatpush1.bf16.msra.mxu0 %v1320
        %1341 = vmatprep.subr.bf16.mxu0 0
        %1342 = vmatpush1.bf16.msra.mxu0 %v1321
        %1343 = vmatprep.subr.bf16.mxu0 0
        %1344 = vmatpush1.bf16.msra.mxu0 %v1322
        %1345 = vmatprep.subr.bf16.mxu0 0
        %1346 = vmatpush1.bf16.msra.mxu0 %v1323
        %1347 = vmatprep.subr.bf16.mxu0 0
        %1348 = vmatpush1.bf16.msra.mxu0 %v1324
        %1349 = vmatprep.subr.bf16.mxu0 0
        %1350 = vmatpush1.bf16.msra.mxu0 0
        %1351 = vmatprep.subr.bf16.mxu0 0
        %1352 = vmatpush1.bf16.msra.mxu0 0
        %1353 = vmatprep.subr.bf16.mxu0 0
        %1354 = vmatpush1.bf16.msra.mxu0 0
        %1355 = vmatprep.subr.bf16.mxu0 0
        %1356 = vmatpush1.bf16.msra.mxu0 0
        %1357 = vmatprep.subr.bf16.mxu0 0
        %1358 = vmatpush1.bf16.msra.mxu0 0
        %1359 = vmatprep.subr.bf16.mxu0 0
        %1360 = vmatpush1.bf16.msra.mxu0 0
        %1361 = vmatprep.subr.bf16.mxu0 0
        %1362 = vmatpush1.bf16.msra.mxu0 0
        %1363 = vmatprep.subr.bf16.mxu0 0
        %1364 = vmatpush1.bf16.msra.mxu0 0
        %1365 = vmatprep.mubr.bf16.mxu0 0
        %1366 = vmatmul.mubr.bf16.gmra.mrb[0].mxu0 %v1262
        %v1367 = vpop.f32.mrb[0].mxu0
        %v1368 = vadd.f32 %v1283, %v1367
        %v1369 = vpop.f32.mrb[0].mxu0
        %v1370 = vpop.f32.mrb[0].mxu0
        %v1371 = vadd.f32 %v1283, %v1370
        %v1372 = vpop.f32.mrb[0].mxu0
        %1373 = vmatprep.mubr.bf16.mxu0 0
        %1374 = vmatmul.mubr.bf16.gmra.mrb[0].mxu0 %v1263
        %v1375 = vpop.f32.mrb[0].mxu0
        %v1376 = vadd.f32 %v1283, %v1375
        %v1377 = vpop.f32.mrb[0].mxu0
        %v1378 = vpop.f32.mrb[0].mxu0
        %v1379 = vadd.f32 %v1283, %v1378
        %v1380 = vpop.f32.mrb[0].mxu0
        %1381 = vmatprep.mubr.bf16.mxu0 0
        %1382 = vmatmul.mubr.bf16.gmra.mrb[0].mxu0 %v1264
        %v1383 = vpop.f32.mrb[0].mxu0
        %v1384 = vadd.f32 %v1283, %v1383
        %v1385 = vpop.f32.mrb[0].mxu0
        %v1386 = vpop.f32.mrb[0].mxu0
        %v1387 = vadd.f32 %v1283, %v1386
        %v1388 = vpop.f32.mrb[0].mxu0
        %1389 = vmatprep.mubr.bf16.mxu0 0
        %1390 = vmatmul.mubr.bf16.gmra.mrb[0].mxu0 %v1265
        %v1391 = vpop.f32.mrb[0].mxu0
        %v1392 = vadd.f32 %v1283, %v1391
        %v1393 = vpop.f32.mrb[0].mxu0
        %v1394 = vpop.f32.mrb[0].mxu0
        %v1395 = vadd.f32 %v1283, %v1394
        %v1396 = vpop.f32.mrb[0].mxu0
        %1397 = vmatprep.mubr.bf16.mxu0 0
        %1398 = vmatmul.mubr.bf16.gmra.mrb[0].mxu0 %v1266
        %v1399 = vpop.f32.mrb[0].mxu0
        %v1400 = vadd.f32 %v1283, %v1399
        %v1401 = vpop.f32.mrb[0].mxu0
        %v1402 = vpop.f32.mrb[0].mxu0
        %v1403 = vadd.f32 %v1283, %v1402
        %v1404 = vpop.f32.mrb[0].mxu0
        %1405 = vmatprep.mubr.bf16.mxu0 0
        %1406 = vmatmul.mubr.bf16.gmra.mrb[0].mxu0 %v1267
        %v1407 = vpop.f32.mrb[0].mxu0
        %v1408 = vadd.f32 %v1283, %v1407
        %v1409 = vpop.f32.mrb[0].mxu0
        %v1410 = vpop.f32.mrb[0].mxu0
        %v1411 = vadd.f32 %v1283, %v1410
        %v1412 = vpop.f32.mrb[0].mxu0
        %1413 = vmatprep.mubr.bf16.mxu0 0
        %1414 = vmatmul.mubr.bf16.gmra.mrb[0].mxu0 %v1268
        %v1415 = vpop.f32.mrb[0].mxu0
        %v1416 = vadd.f32 %v1283, %v1415
        %v1417 = vpop.f32.mrb[0].mxu0
        %v1418 = vpop.f32.mrb[0].mxu0
        %v1419 = vadd.f32 %v1283, %v1418
        %v1420 = vpop.f32.mrb[0].mxu0
        %1421 = vmatprep.mubr.bf16.mxu0 0
        %1422 = vmatmul.mubr.bf16.gmra.mrb[0].mxu0 %v1269
        %v1423 = vpop.f32.mrb[0].mxu0
        %v1424 = vadd.f32 %v1283, %v1423
        %v1425 = vpop.f32.mrb[0].mxu0
        %v1426 = vpop.f32.mrb[0].mxu0
        %v1427 = vadd.f32 %v1283, %v1426
        %v1428 = vpop.f32.mrb[0].mxu0
        %1429 = vmatprep.mubr.bf16.mxu0 0
        %1430 = vmatmul.mubr.bf16.gmra.mrb[0].mxu0 %v1270
        %v1431 = vpop.f32.mrb[0].mxu0
        %v1432 = vadd.f32 %v1283, %v1431
        %v1433 = vpop.f32.mrb[0].mxu0
        %v1434 = vpop.f32.mrb[0].mxu0
        %v1435 = vadd.f32 %v1283, %v1434
        %v1436 = vpop.f32.mrb[0].mxu0
        %1437 = vmatprep.mubr.bf16.mxu0 0
        %1438 = vmatmul.mubr.bf16.gmra.mrb[0].mxu0 %v1271
        %v1439 = vpop.f32.mrb[0].mxu0
        %v1440 = vadd.f32 %v1283, %v1439
        %v1441 = vpop.f32.mrb[0].mxu0
        %v1442 = vpop.f32.mrb[0].mxu0
        %v1443 = vadd.f32 %v1283, %v1442
        %v1444 = vpop.f32.mrb[0].mxu0
        %1445 = vmatprep.mubr.bf16.mxu0 0
        %1446 = vmatmul.mubr.bf16.gmra.mrb[0].mxu0 %v1272
        %v1447 = vpop.f32.mrb[0].mxu0
        %v1448 = vadd.f32 %v1283, %v1447
        %v1449 = vpop.f32.mrb[0].mxu0
        %v1450 = vpop.f32.mrb[0].mxu0
        %v1451 = vadd.f32 %v1283, %v1450
        %v1452 = vpop.f32.mrb[0].mxu0
        %1453 = vmatprep.mubr.bf16.mxu0 0
        %1454 = vmatmul.mubr.bf16.gmra.mrb[0].mxu0 %v1273
        %v1455 = vpop.f32.mrb[0].mxu0
        %v1456 = vadd.f32 %v1283, %v1455
        %v1457 = vpop.f32.mrb[0].mxu0
        %v1458 = vpop.f32.mrb[0].mxu0
        %v1459 = vadd.f32 %v1283, %v1458
        %v1460 = vpop.f32.mrb[0].mxu0
        %1461 = vmatprep.mubr.bf16.mxu0 0
        %1462 = vmatmul.mubr.bf16.gmra.mrb[0].mxu0 %v1274
        %v1463 = vpop.f32.mrb[0].mxu0
        %v1464 = vadd.f32 %v1283, %v1463
        %v1465 = vpop.f32.mrb[0].mxu0
        %v1466 = vpop.f32.mrb[0].mxu0
        %v1467 = vadd.f32 %v1283, %v1466
        %v1468 = vpop.f32.mrb[0].mxu0
        %1469 = vmatprep.mubr.bf16.mxu0 0
        %1470 = vmatmul.mubr.bf16.gmra.mrb[0].mxu0 %v1275
        %v1471 = vpop.f32.mrb[0].mxu0
        %v1472 = vadd.f32 %v1283, %v1471
        %v1473 = vpop.f32.mrb[0].mxu0
        %v1474 = vpop.f32.mrb[0].mxu0
        %v1475 = vadd.f32 %v1283, %v1474
        %v1476 = vpop.f32.mrb[0].mxu0
        %1477 = vmatprep.mubr.bf16.mxu0 0
        %1478 = vmatmul.mubr.bf16.gmra.mrb[0].mxu0 %v1276
        %v1479 = vpop.f32.mrb[0].mxu0
        %v1480 = vadd.f32 %v1283, %v1479
        %v1481 = vpop.f32.mrb[0].mxu0
        %v1482 = vpop.f32.mrb[0].mxu0
        %v1483 = vadd.f32 %v1283, %v1482
        %v1484 = vpop.f32.mrb[0].mxu0
        %1485 = vmatprep.mubr.bf16.mxu0 0
        %1486 = vmatmul.mubr.bf16.gmra.mrb[0].mxu0 %v1277
        %v1487 = vpop.f32.mrb[0].mxu0
        %v1488 = vadd.f32 %v1283, %v1487
        %v1489 = vpop.f32.mrb[0].mxu0
        %v1490 = vpop.f32.mrb[0].mxu0
        %v1491 = vadd.f32 %v1283, %v1490
        %v1492 = vpop.f32.mrb[0].mxu0
        %1493 = vdwg.mxu0
        %v1494 = vmul.f32 %v1368, 0.01
        %v1495 = vmul.f32 %v1371, 0.01
        %v1496 = vmul.f32 %v1376, 0.01
        %v1497 = vmul.f32 %v1379, 0.01
        %v1498 = vmul.f32 %v1384, 0.01
        %v1499 = vmul.f32 %v1387, 0.01
        %v1500 = vmul.f32 %v1392, 0.01
        %v1501 = vmul.f32 %v1395, 0.01
        %v1502 = vmul.f32 %v1400, 0.01
        %v1503 = vmul.f32 %v1403, 0.01
        %v1504 = vmul.f32 %v1408, 0.01
        %v1505 = vmul.f32 %v1411, 0.01
        %v1506 = vmul.f32 %v1416, 0.01
        %v1507 = vmul.f32 %v1419, 0.01
        %v1508 = vmul.f32 %v1424, 0.01
        %v1509 = vmul.f32 %v1427, 0.01
        %v1510 = vmul.f32 %v1432, 0.01
        %v1511 = vmul.f32 %v1435, 0.01
        %v1512 = vmul.f32 %v1440, 0.01
        %v1513 = vmul.f32 %v1443, 0.01
        %v1514 = vmul.f32 %v1448, 0.01
        %v1515 = vmul.f32 %v1451, 0.01
        %v1516 = vmul.f32 %v1456, 0.01
        %v1517 = vmul.f32 %v1459, 0.01
        %v1518 = vmul.f32 %v1464, 0.01
        %v1519 = vmul.f32 %v1467, 0.01
        %v1520 = vmul.f32 %v1472, 0.01
        %v1521 = vmul.f32 %v1475, 0.01
        %v1522 = vmul.f32 %v1480, 0.01
        %v1523 = vmul.f32 %v1483, 0.01
        %v1524 = vmul.f32 %v1488, 0.01
        %v1525 = vmul.f32 %v1491, 0.01
        %v1526 = vmax.f32 %v1368, %v1494
        %v1527 = vmax.f32 %v1371, %v1495
        %v1528 = vmax.f32 %v1376, %v1496
        %v1529 = vmax.f32 %v1379, %v1497
        %v1530 = vmax.f32 %v1384, %v1498
        %v1531 = vmax.f32 %v1387, %v1499
        %v1532 = vmax.f32 %v1392, %v1500
        %v1533 = vmax.f32 %v1395, %v1501
        %v1534 = vmax.f32 %v1400, %v1502
        %v1535 = vmax.f32 %v1403, %v1503
        %v1536 = vmax.f32 %v1408, %v1504
        %v1537 = vmax.f32 %v1411, %v1505
        %v1538 = vmax.f32 %v1416, %v1506
        %v1539 = vmax.f32 %v1419, %v1507
        %v1540 = vmax.f32 %v1424, %v1508
        %v1541 = vmax.f32 %v1427, %v1509
        %v1542 = vmax.f32 %v1432, %v1510
        %v1543 = vmax.f32 %v1435, %v1511
        %v1544 = vmax.f32 %v1440, %v1512
        %v1545 = vmax.f32 %v1443, %v1513
        %v1546 = vmax.f32 %v1448, %v1514
        %v1547 = vmax.f32 %v1451, %v1515
        %v1548 = vmax.f32 %v1456, %v1516
        %v1549 = vmax.f32 %v1459, %v1517
        %v1550 = vmax.f32 %v1464, %v1518
        %v1551 = vmax.f32 %v1467, %v1519
        %v1552 = vmax.f32 %v1472, %v1520
        %v1553 = vmax.f32 %v1475, %v1521
        %v1554 = vmax.f32 %v1480, %v1522
        %v1555 = vmax.f32 %v1483, %v1523
        %v1556 = vmax.f32 %v1488, %v1524
        %v1557 = vmax.f32 %v1491, %v1525
        %v1558 = vld [vmem:[%s5] sm:$0xf]
        %v1559 = vld [vmem:[%s5 + $0x4] sm:$0xf]
        %v1560 = vld [vmem:[%s5 + $0x8] sm:$0xf]
        %v1561 = vld [vmem:[%s5 + $0xc] sm:$0xf]
        %v1562 = vld [vmem:[%s5 + $0x10] sm:$0xf]
        %v1563 = vld [vmem:[%s5 + $0x14] sm:$0xf]
        %v1564 = vld [vmem:[%s5 + $0x18] sm:$0xf]
        %v1565 = vld [vmem:[%s5 + $0x1c] sm:$0xf]
        %v1566 = vld [vmem:[%s5 + $0x20] sm:$0xf]
        %v1567 = vld [vmem:[%s5 + $0x24] sm:$0xf]
        %v1568 = vld [vmem:[%s5 + $0x28] sm:$0xf]
        %v1569 = vld [vmem:[%s5 + $0x2c] sm:$0xf]
        %v1570 = vld [vmem:[%s5 + $0x30] sm:$0xf]
        %v1571 = vld [vmem:[%s5 + $0x34] sm:$0xf]
        %v1572 = vld [vmem:[%s5 + $0x38] sm:$0xf]
        %v1573 = vld [vmem:[%s5 + $0x3c] sm:$0xf]
        %v1574 = vpack.c.bf16 %v1527, %v1526
        %v1575 = vpack.c.bf16 %v1529, %v1528
        %v1576 = vpack.c.bf16 %v1531, %v1530
        %v1577 = vpack.c.bf16 %v1533, %v1532
        %v1578 = vpack.c.bf16 %v1535, %v1534
        %v1579 = vpack.c.bf16 %v1537, %v1536
        %v1580 = vpack.c.bf16 %v1539, %v1538
        %v1581 = vpack.c.bf16 %v1541, %v1540
        %v1582 = vpack.c.bf16 %v1543, %v1542
        %v1583 = vpack.c.bf16 %v1545, %v1544
        %v1584 = vpack.c.bf16 %v1547, %v1546
        %v1585 = vpack.c.bf16 %v1549, %v1548
        %v1586 = vpack.c.bf16 %v1551, %v1550
        %v1587 = vpack.c.bf16 %v1553, %v1552
        %v1588 = vpack.c.bf16 %v1555, %v1554
        %v1589 = vpack.c.bf16 %v1557, %v1556
        %v1590 = vld [vmem:[%s6] sm:$0x1]
        %v1592 = vlaneseq
        %v1593 = vshrl.u32 %v1592, 7
        %v1594 = vsub.s32 0, %v1593
        %v1595 = vrot.slane %v1590, %v1594
        %v1613 = vunpack.c.l.b16 %v1558
        %v1614 = vunpack.c.l.b16 %v1559
        %v1615 = vunpack.c.l.b16 %v1560
        %v1616 = vunpack.c.l.b16 %v1561
        %v1617 = vunpack.c.l.b16 %v1562
        %v1618 = vunpack.c.l.b16 %v1563
        %v1619 = vunpack.c.l.b16 %v1564
        %v1620 = vunpack.c.l.b16 %v1565
        %v1621 = vunpack.c.l.b16 %v1566
        %v1622 = vunpack.c.l.b16 %v1567
        %v1623 = vunpack.c.l.b16 %v1568
        %v1624 = vunpack.c.l.b16 %v1569
        %v1625 = vunpack.c.l.b16 %v1570
        %v1626 = vunpack.c.l.b16 %v1571
        %v1627 = vunpack.c.l.b16 %v1572
        %v1628 = vunpack.c.l.b16 %v1573
        %v1629 = vpack.c.b16 %v1614, %v1613
        %v1630 = vpack.c.b16 %v1616, %v1615
        %v1631 = vpack.c.b16 %v1618, %v1617
        %v1632 = vpack.c.b16 %v1620, %v1619
        %v1633 = vpack.c.b16 %v1622, %v1621
        %v1634 = vpack.c.b16 %v1624, %v1623
        %v1635 = vpack.c.b16 %v1626, %v1625
        %v1636 = vpack.c.b16 %v1628, %v1627
        %1645 = vmatprep.subr.bf16.mxu0 0
        %1646 = vmatpush1.bf16.msra.mxu0 %v1629
        %1647 = vmatprep.subr.bf16.mxu0 0
        %1648 = vmatpush1.bf16.msra.mxu0 %v1630
        %1649 = vmatprep.subr.bf16.mxu0 0
        %1650 = vmatpush1.bf16.msra.mxu0 %v1631
        %1651 = vmatprep.subr.bf16.mxu0 0
        %1652 = vmatpush1.bf16.msra.mxu0 %v1632
        %1653 = vmatprep.subr.bf16.mxu0 0
        %1654 = vmatpush1.bf16.msra.mxu0 %v1633
        %1655 = vmatprep.subr.bf16.mxu0 0
        %1656 = vmatpush1.bf16.msra.mxu0 %v1634
        %1657 = vmatprep.subr.bf16.mxu0 0
        %1658 = vmatpush1.bf16.msra.mxu0 %v1635
        %1659 = vmatprep.subr.bf16.mxu0 0
        %1660 = vmatpush1.bf16.msra.mxu0 %v1636
        %1661 = vmatprep.subr.bf16.mxu0 0
        %1662 = vmatpush1.bf16.msra.mxu0 0
        %1663 = vmatprep.subr.bf16.mxu0 0
        %1664 = vmatpush1.bf16.msra.mxu0 0
        %1665 = vmatprep.subr.bf16.mxu0 0
        %1666 = vmatpush1.bf16.msra.mxu0 0
        %1667 = vmatprep.subr.bf16.mxu0 0
        %1668 = vmatpush1.bf16.msra.mxu0 0
        %1669 = vmatprep.subr.bf16.mxu0 0
        %1670 = vmatpush1.bf16.msra.mxu0 0
        %1671 = vmatprep.subr.bf16.mxu0 0
        %1672 = vmatpush1.bf16.msra.mxu0 0
        %1673 = vmatprep.subr.bf16.mxu0 0
        %1674 = vmatpush1.bf16.msra.mxu0 0
        %1675 = vmatprep.subr.bf16.mxu0 0
        %1676 = vmatpush1.bf16.msra.mxu0 0
        %1677 = vmatprep.mubr.bf16.mxu0 0
        %1678 = vmatmul.mubr.bf16.gmra.mrb[0].mxu0 %v1574
        %v1679 = vpop.f32.mrb[0].mxu0
        %v1680 = vadd.f32 %v1595, %v1679
        %v1681 = vpop.f32.mrb[0].mxu0
        %v1682 = vpop.f32.mrb[0].mxu0
        %v1683 = vadd.f32 %v1595, %v1682
        %v1684 = vpop.f32.mrb[0].mxu0
        %1685 = vmatprep.mubr.bf16.mxu0 0
        %1686 = vmatmul.mubr.bf16.gmra.mrb[0].mxu0 %v1575
        %v1687 = vpop.f32.mrb[0].mxu0
        %v1688 = vadd.f32 %v1595, %v1687
        %v1689 = vpop.f32.mrb[0].mxu0
        %v1690 = vpop.f32.mrb[0].mxu0
        %v1691 = vadd.f32 %v1595, %v1690
        %v1692 = vpop.f32.mrb[0].mxu0
        %1693 = vmatprep.mubr.bf16.mxu0 0
        %1694 = vmatmul.mubr.bf16.gmra.mrb[0].mxu0 %v1576
        %v1695 = vpop.f32.mrb[0].mxu0
        %v1696 = vadd.f32 %v1595, %v1695
        %v1697 = vpop.f32.mrb[0].mxu0
        %v1698 = vpop.f32.mrb[0].mxu0
        %v1699 = vadd.f32 %v1595, %v1698
        %v1700 = vpop.f32.mrb[0].mxu0
        %1701 = vmatprep.mubr.bf16.mxu0 0
        %1702 = vmatmul.mubr.bf16.gmra.mrb[0].mxu0 %v1577
        %v1703 = vpop.f32.mrb[0].mxu0
        %v1704 = vadd.f32 %v1595, %v1703
        %v1705 = vpop.f32.mrb[0].mxu0
        %v1706 = vpop.f32.mrb[0].mxu0
        %v1707 = vadd.f32 %v1595, %v1706
        %v1708 = vpop.f32.mrb[0].mxu0
        %1709 = vmatprep.mubr.bf16.mxu0 0
        %1710 = vmatmul.mubr.bf16.gmra.mrb[0].mxu0 %v1578
        %v1711 = vpop.f32.mrb[0].mxu0
        %v1712 = vadd.f32 %v1595, %v1711
        %v1713 = vpop.f32.mrb[0].mxu0
        %v1714 = vpop.f32.mrb[0].mxu0
        %v1715 = vadd.f32 %v1595, %v1714
        %v1716 = vpop.f32.mrb[0].mxu0
        %1717 = vmatprep.mubr.bf16.mxu0 0
        %1718 = vmatmul.mubr.bf16.gmra.mrb[0].mxu0 %v1579
        %v1719 = vpop.f32.mrb[0].mxu0
        %v1720 = vadd.f32 %v1595, %v1719
        %v1721 = vpop.f32.mrb[0].mxu0
        %v1722 = vpop.f32.mrb[0].mxu0
        %v1723 = vadd.f32 %v1595, %v1722
        %v1724 = vpop.f32.mrb[0].mxu0
        %1725 = vmatprep.mubr.bf16.mxu0 0
        %1726 = vmatmul.mubr.bf16.gmra.mrb[0].mxu0 %v1580
        %v1727 = vpop.f32.mrb[0].mxu0
        %v1728 = vadd.f32 %v1595, %v1727
        %v1729 = vpop.f32.mrb[0].mxu0
        %v1730 = vpop.f32.mrb[0].mxu0
        %v1731 = vadd.f32 %v1595, %v1730
        %v1732 = vpop.f32.mrb[0].mxu0
        %1733 = vmatprep.mubr.bf16.mxu0 0
        %1734 = vmatmul.mubr.bf16.gmra.mrb[0].mxu0 %v1581
        %v1735 = vpop.f32.mrb[0].mxu0
        %v1736 = vadd.f32 %v1595, %v1735
        %v1737 = vpop.f32.mrb[0].mxu0
        %v1738 = vpop.f32.mrb[0].mxu0
        %v1739 = vadd.f32 %v1595, %v1738
        %v1740 = vpop.f32.mrb[0].mxu0
        %1741 = vmatprep.mubr.bf16.mxu0 0
        %1742 = vmatmul.mubr.bf16.gmra.mrb[0].mxu0 %v1582
        %v1743 = vpop.f32.mrb[0].mxu0
        %v1744 = vadd.f32 %v1595, %v1743
        %v1745 = vpop.f32.mrb[0].mxu0
        %v1746 = vpop.f32.mrb[0].mxu0
        %v1747 = vadd.f32 %v1595, %v1746
        %v1748 = vpop.f32.mrb[0].mxu0
        %1749 = vmatprep.mubr.bf16.mxu0 0
        %1750 = vmatmul.mubr.bf16.gmra.mrb[0].mxu0 %v1583
        %v1751 = vpop.f32.mrb[0].mxu0
        %v1752 = vadd.f32 %v1595, %v1751
        %v1753 = vpop.f32.mrb[0].mxu0
        %v1754 = vpop.f32.mrb[0].mxu0
        %v1755 = vadd.f32 %v1595, %v1754
        %v1756 = vpop.f32.mrb[0].mxu0
        %1757 = vmatprep.mubr.bf16.mxu0 0
        %1758 = vmatmul.mubr.bf16.gmra.mrb[0].mxu0 %v1584
        %v1759 = vpop.f32.mrb[0].mxu0
        %v1760 = vadd.f32 %v1595, %v1759
        %v1761 = vpop.f32.mrb[0].mxu0
        %v1762 = vpop.f32.mrb[0].mxu0
        %v1763 = vadd.f32 %v1595, %v1762
        %v1764 = vpop.f32.mrb[0].mxu0
        %1765 = vmatprep.mubr.bf16.mxu0 0
        %1766 = vmatmul.mubr.bf16.gmra.mrb[0].mxu0 %v1585
        %v1767 = vpop.f32.mrb[0].mxu0
        %v1768 = vadd.f32 %v1595, %v1767
        %v1769 = vpop.f32.mrb[0].mxu0
        %v1770 = vpop.f32.mrb[0].mxu0
        %v1771 = vadd.f32 %v1595, %v1770
        %v1772 = vpop.f32.mrb[0].mxu0
        %1773 = vmatprep.mubr.bf16.mxu0 0
        %1774 = vmatmul.mubr.bf16.gmra.mrb[0].mxu0 %v1586
        %v1775 = vpop.f32.mrb[0].mxu0
        %v1776 = vadd.f32 %v1595, %v1775
        %v1777 = vpop.f32.mrb[0].mxu0
        %v1778 = vpop.f32.mrb[0].mxu0
        %v1779 = vadd.f32 %v1595, %v1778
        %v1780 = vpop.f32.mrb[0].mxu0
        %1781 = vmatprep.mubr.bf16.mxu0 0
        %1782 = vmatmul.mubr.bf16.gmra.mrb[0].mxu0 %v1587
        %v1783 = vpop.f32.mrb[0].mxu0
        %v1784 = vadd.f32 %v1595, %v1783
        %v1785 = vpop.f32.mrb[0].mxu0
        %v1786 = vpop.f32.mrb[0].mxu0
        %v1787 = vadd.f32 %v1595, %v1786
        %v1788 = vpop.f32.mrb[0].mxu0
        %1789 = vmatprep.mubr.bf16.mxu0 0
        %1790 = vmatmul.mubr.bf16.gmra.mrb[0].mxu0 %v1588
        %v1791 = vpop.f32.mrb[0].mxu0
        %v1792 = vadd.f32 %v1595, %v1791
        %v1793 = vpop.f32.mrb[0].mxu0
        %v1794 = vpop.f32.mrb[0].mxu0
        %v1795 = vadd.f32 %v1595, %v1794
        %v1796 = vpop.f32.mrb[0].mxu0
        %1797 = vmatprep.mubr.bf16.mxu0 0
        %1798 = vmatmul.mubr.bf16.gmra.mrb[0].mxu0 %v1589
        %v1799 = vpop.f32.mrb[0].mxu0
        %v1800 = vadd.f32 %v1595, %v1799
        %v1801 = vpop.f32.mrb[0].mxu0
        %v1802 = vpop.f32.mrb[0].mxu0
        %v1803 = vadd.f32 %v1595, %v1802
        %v1804 = vpop.f32.mrb[0].mxu0
        %1805 = vdwg.mxu0
        %v1806 = vld [vmem:[%s578] sm:$0xf]
        %v1807 = vld [vmem:[%s578 + $0x4] sm:$0xf]
        %v1808 = vld [vmem:[%s578 + $0x8] sm:$0xf]
        %v1809 = vld [vmem:[%s578 + $0xc] sm:$0xf]
        %v1810 = vld [vmem:[%s578 + $0x10] sm:$0xf]
        %v1811 = vld [vmem:[%s578 + $0x14] sm:$0xf]
        %v1812 = vld [vmem:[%s578 + $0x18] sm:$0xf]
        %v1813 = vld [vmem:[%s578 + $0x1c] sm:$0xf]
        %v1814 = vld [vmem:[%s578 + $0x20] sm:$0xf]
        %v1815 = vld [vmem:[%s578 + $0x24] sm:$0xf]
        %v1816 = vld [vmem:[%s578 + $0x28] sm:$0xf]
        %v1817 = vld [vmem:[%s578 + $0x2c] sm:$0xf]
        %v1818 = vld [vmem:[%s578 + $0x30] sm:$0xf]
        %v1819 = vld [vmem:[%s578 + $0x34] sm:$0xf]
        %v1820 = vld [vmem:[%s578 + $0x38] sm:$0xf]
        %v1821 = vld [vmem:[%s578 + $0x3c] sm:$0xf]
        %v1822 = vld [vmem:[%s578 + $0x40] sm:$0xf]
        %v1823 = vld [vmem:[%s578 + $0x44] sm:$0xf]
        %v1824 = vld [vmem:[%s578 + $0x48] sm:$0xf]
        %v1825 = vld [vmem:[%s578 + $0x4c] sm:$0xf]
        %v1826 = vld [vmem:[%s578 + $0x50] sm:$0xf]
        %v1827 = vld [vmem:[%s578 + $0x54] sm:$0xf]
        %v1828 = vld [vmem:[%s578 + $0x58] sm:$0xf]
        %v1829 = vld [vmem:[%s578 + $0x5c] sm:$0xf]
        %v1830 = vld [vmem:[%s578 + $0x60] sm:$0xf]
        %v1831 = vld [vmem:[%s578 + $0x64] sm:$0xf]
        %v1832 = vld [vmem:[%s578 + $0x68] sm:$0xf]
        %v1833 = vld [vmem:[%s578 + $0x6c] sm:$0xf]
        %v1834 = vld [vmem:[%s578 + $0x70] sm:$0xf]
        %v1835 = vld [vmem:[%s578 + $0x74] sm:$0xf]
        %v1836 = vld [vmem:[%s578 + $0x78] sm:$0xf]
        %v1837 = vld [vmem:[%s578 + $0x7c] sm:$0xf]
        %v1838 = vld [vmem:[%s7] sm:$0xf]
        %v1839 = vld [vmem:[%s7 + $0x4] sm:$0xf]
        %v1840 = vld [vmem:[%s7 + $0x8] sm:$0xf]
        %v1841 = vld [vmem:[%s7 + $0xc] sm:$0xf]
        %v1842 = vld [vmem:[%s7 + $0x10] sm:$0xf]
        %v1843 = vld [vmem:[%s7 + $0x14] sm:$0xf]
        %v1844 = vld [vmem:[%s7 + $0x18] sm:$0xf]
        %v1845 = vld [vmem:[%s7 + $0x1c] sm:$0xf]
        %v1846 = vld [vmem:[%s7 + $0x20] sm:$0xf]
        %v1847 = vld [vmem:[%s7 + $0x24] sm:$0xf]
        %v1848 = vld [vmem:[%s7 + $0x28] sm:$0xf]
        %v1849 = vld [vmem:[%s7 + $0x2c] sm:$0xf]
        %v1850 = vld [vmem:[%s7 + $0x30] sm:$0xf]
        %v1851 = vld [vmem:[%s7 + $0x34] sm:$0xf]
        %v1852 = vld [vmem:[%s7 + $0x38] sm:$0xf]
        %v1853 = vld [vmem:[%s7 + $0x3c] sm:$0xf]
        %v1854 = vld [vmem:[%s8] sm:$0x1]
        %v1856 = vlaneseq
        %v1857 = vshrl.u32 %v1856, 7
        %v1858 = vsub.s32 0, %v1857
        %v1859 = vrot.slane %v1854, %v1858
        %v1893 = vunpack.c.l.b16 %v1806
        %v1894 = vunpack.c.l.b16 %v1807
        %v1895 = vunpack.c.l.b16 %v1808
        %v1896 = vunpack.c.l.b16 %v1809
        %v1897 = vunpack.c.l.b16 %v1810
        %v1898 = vunpack.c.l.b16 %v1811
        %v1899 = vunpack.c.l.b16 %v1812
        %v1900 = vunpack.c.l.b16 %v1813
        %v1901 = vunpack.c.l.b16 %v1814
        %v1902 = vunpack.c.l.b16 %v1815
        %v1903 = vunpack.c.l.b16 %v1816
        %v1904 = vunpack.c.l.b16 %v1817
        %v1905 = vunpack.c.l.b16 %v1818
        %v1906 = vunpack.c.l.b16 %v1819
        %v1907 = vunpack.c.l.b16 %v1820
        %v1908 = vunpack.c.l.b16 %v1821
        %v1909 = vunpack.c.l.b16 %v1822
        %v1910 = vunpack.c.l.b16 %v1823
        %v1911 = vunpack.c.l.b16 %v1824
        %v1912 = vunpack.c.l.b16 %v1825
        %v1913 = vunpack.c.l.b16 %v1826
        %v1914 = vunpack.c.l.b16 %v1827
        %v1915 = vunpack.c.l.b16 %v1828
        %v1916 = vunpack.c.l.b16 %v1829
        %v1917 = vunpack.c.l.b16 %v1830
        %v1918 = vunpack.c.l.b16 %v1831
        %v1919 = vunpack.c.l.b16 %v1832
        %v1920 = vunpack.c.l.b16 %v1833
        %v1921 = vunpack.c.l.b16 %v1834
        %v1922 = vunpack.c.l.b16 %v1835
        %v1923 = vunpack.c.l.b16 %v1836
        %v1924 = vunpack.c.l.b16 %v1837
        %v1925 = vpack.c.b16 %v1894, %v1893
        %v1926 = vpack.c.b16 %v1896, %v1895
        %v1927 = vpack.c.b16 %v1898, %v1897
        %v1928 = vpack.c.b16 %v1900, %v1899
        %v1929 = vpack.c.b16 %v1902, %v1901
        %v1930 = vpack.c.b16 %v1904, %v1903
        %v1931 = vpack.c.b16 %v1906, %v1905
        %v1932 = vpack.c.b16 %v1908, %v1907
        %v1933 = vpack.c.b16 %v1910, %v1909
        %v1934 = vpack.c.b16 %v1912, %v1911
        %v1935 = vpack.c.b16 %v1914, %v1913
        %v1936 = vpack.c.b16 %v1916, %v1915
        %v1937 = vpack.c.b16 %v1918, %v1917
        %v1938 = vpack.c.b16 %v1920, %v1919
        %v1939 = vpack.c.b16 %v1922, %v1921
        %v1940 = vpack.c.b16 %v1924, %v1923
        %v1973 = vunpack.c.l.b16 %v1838
        %v1974 = vunpack.c.l.b16 %v1839
        %v1975 = vunpack.c.l.b16 %v1840
        %v1976 = vunpack.c.l.b16 %v1841
        %v1977 = vunpack.c.l.b16 %v1842
        %v1978 = vunpack.c.l.b16 %v1843
        %v1979 = vunpack.c.l.b16 %v1844
        %v1980 = vunpack.c.l.b16 %v1845
        %v1981 = vunpack.c.l.b16 %v1846
        %v1982 = vunpack.c.l.b16 %v1847
        %v1983 = vunpack.c.l.b16 %v1848
        %v1984 = vunpack.c.l.b16 %v1849
        %v1985 = vunpack.c.l.b16 %v1850
        %v1986 = vunpack.c.l.b16 %v1851
        %v1987 = vunpack.c.l.b16 %v1852
        %v1988 = vunpack.c.l.b16 %v1853
        %v1989 = vpack.c.b16 %v1974, %v1973
        %v1990 = vpack.c.b16 %v1976, %v1975
        %v1991 = vpack.c.b16 %v1978, %v1977
        %v1992 = vpack.c.b16 %v1980, %v1979
        %v1993 = vpack.c.b16 %v1982, %v1981
        %v1994 = vpack.c.b16 %v1984, %v1983
        %v1995 = vpack.c.b16 %v1986, %v1985
        %v1996 = vpack.c.b16 %v1988, %v1987
        %2005 = vmatprep.subr.bf16.mxu0 0
        %2006 = vmatpush1.bf16.msra.mxu0 %v1989
        %2007 = vmatprep.subr.bf16.mxu0 0
        %2008 = vmatpush1.bf16.msra.mxu0 %v1990
        %2009 = vmatprep.subr.bf16.mxu0 0
        %2010 = vmatpush1.bf16.msra.mxu0 %v1991
        %2011 = vmatprep.subr.bf16.mxu0 0
        %2012 = vmatpush1.bf16.msra.mxu0 %v1992
        %2013 = vmatprep.subr.bf16.mxu0 0
        %2014 = vmatpush1.bf16.msra.mxu0 %v1993
        %2015 = vmatprep.subr.bf16.mxu0 0
        %2016 = vmatpush1.bf16.msra.mxu0 %v1994
        %2017 = vmatprep.subr.bf16.mxu0 0
        %2018 = vmatpush1.bf16.msra.mxu0 %v1995
        %2019 = vmatprep.subr.bf16.mxu0 0
        %2020 = vmatpush1.bf16.msra.mxu0 %v1996
        %2021 = vmatprep.subr.bf16.mxu0 0
        %2022 = vmatpush1.bf16.msra.mxu0 0
        %2023 = vmatprep.subr.bf16.mxu0 0
        %2024 = vmatpush1.bf16.msra.mxu0 0
        %2025 = vmatprep.subr.bf16.mxu0 0
        %2026 = vmatpush1.bf16.msra.mxu0 0
        %2027 = vmatprep.subr.bf16.mxu0 0
        %2028 = vmatpush1.bf16.msra.mxu0 0
        %2029 = vmatprep.subr.bf16.mxu0 0
        %2030 = vmatpush1.bf16.msra.mxu0 0
        %2031 = vmatprep.subr.bf16.mxu0 0
        %2032 = vmatpush1.bf16.msra.mxu0 0
        %2033 = vmatprep.subr.bf16.mxu0 0
        %2034 = vmatpush1.bf16.msra.mxu0 0
        %2035 = vmatprep.subr.bf16.mxu0 0
        %2036 = vmatpush1.bf16.msra.mxu0 0
        %2037 = vmatprep.mubr.bf16.mxu0 0
        %2038 = vmatmul.mubr.bf16.gmra.mrb[0].mxu0 %v1925
        %v2039 = vpop.f32.mrb[0].mxu0
        %v2040 = vadd.f32 %v1859, %v2039
        %v2041 = vpop.f32.mrb[0].mxu0
        %v2042 = vpop.f32.mrb[0].mxu0
        %v2043 = vadd.f32 %v1859, %v2042
        %v2044 = vpop.f32.mrb[0].mxu0
        %2045 = vmatprep.mubr.bf16.mxu0 0
        %2046 = vmatmul.mubr.bf16.gmra.mrb[0].mxu0 %v1926
        %v2047 = vpop.f32.mrb[0].mxu0
        %v2048 = vadd.f32 %v1859, %v2047
        %v2049 = vpop.f32.mrb[0].mxu0
        %v2050 = vpop.f32.mrb[0].mxu0
        %v2051 = vadd.f32 %v1859, %v2050
        %v2052 = vpop.f32.mrb[0].mxu0
        %2053 = vmatprep.mubr.bf16.mxu0 0
        %2054 = vmatmul.mubr.bf16.gmra.mrb[0].mxu0 %v1927
        %v2055 = vpop.f32.mrb[0].mxu0
        %v2056 = vadd.f32 %v1859, %v2055
        %v2057 = vpop.f32.mrb[0].mxu0
        %v2058 = vpop.f32.mrb[0].mxu0
        %v2059 = vadd.f32 %v1859, %v2058
        %v2060 = vpop.f32.mrb[0].mxu0
        %2061 = vmatprep.mubr.bf16.mxu0 0
        %2062 = vmatmul.mubr.bf16.gmra.mrb[0].mxu0 %v1928
        %v2063 = vpop.f32.mrb[0].mxu0
        %v2064 = vadd.f32 %v1859, %v2063
        %v2065 = vpop.f32.mrb[0].mxu0
        %v2066 = vpop.f32.mrb[0].mxu0
        %v2067 = vadd.f32 %v1859, %v2066
        %v2068 = vpop.f32.mrb[0].mxu0
        %2069 = vmatprep.mubr.bf16.mxu0 0
        %2070 = vmatmul.mubr.bf16.gmra.mrb[0].mxu0 %v1929
        %v2071 = vpop.f32.mrb[0].mxu0
        %v2072 = vadd.f32 %v1859, %v2071
        %v2073 = vpop.f32.mrb[0].mxu0
        %v2074 = vpop.f32.mrb[0].mxu0
        %v2075 = vadd.f32 %v1859, %v2074
        %v2076 = vpop.f32.mrb[0].mxu0
        %2077 = vmatprep.mubr.bf16.mxu0 0
        %2078 = vmatmul.mubr.bf16.gmra.mrb[0].mxu0 %v1930
        %v2079 = vpop.f32.mrb[0].mxu0
        %v2080 = vadd.f32 %v1859, %v2079
        %v2081 = vpop.f32.mrb[0].mxu0
        %v2082 = vpop.f32.mrb[0].mxu0
        %v2083 = vadd.f32 %v1859, %v2082
        %v2084 = vpop.f32.mrb[0].mxu0
        %2085 = vmatprep.mubr.bf16.mxu0 0
        %2086 = vmatmul.mubr.bf16.gmra.mrb[0].mxu0 %v1931
        %v2087 = vpop.f32.mrb[0].mxu0
        %v2088 = vadd.f32 %v1859, %v2087
        %v2089 = vpop.f32.mrb[0].mxu0
        %v2090 = vpop.f32.mrb[0].mxu0
        %v2091 = vadd.f32 %v1859, %v2090
        %v2092 = vpop.f32.mrb[0].mxu0
        %2093 = vmatprep.mubr.bf16.mxu0 0
        %2094 = vmatmul.mubr.bf16.gmra.mrb[0].mxu0 %v1932
        %v2095 = vpop.f32.mrb[0].mxu0
        %v2096 = vadd.f32 %v1859, %v2095
        %v2097 = vpop.f32.mrb[0].mxu0
        %v2098 = vpop.f32.mrb[0].mxu0
        %v2099 = vadd.f32 %v1859, %v2098
        %v2100 = vpop.f32.mrb[0].mxu0
        %2101 = vmatprep.mubr.bf16.mxu0 0
        %2102 = vmatmul.mubr.bf16.gmra.mrb[0].mxu0 %v1933
        %v2103 = vpop.f32.mrb[0].mxu0
        %v2104 = vadd.f32 %v1859, %v2103
        %v2105 = vpop.f32.mrb[0].mxu0
        %v2106 = vpop.f32.mrb[0].mxu0
        %v2107 = vadd.f32 %v1859, %v2106
        %v2108 = vpop.f32.mrb[0].mxu0
        %2109 = vmatprep.mubr.bf16.mxu0 0
        %2110 = vmatmul.mubr.bf16.gmra.mrb[0].mxu0 %v1934
        %v2111 = vpop.f32.mrb[0].mxu0
        %v2112 = vadd.f32 %v1859, %v2111
        %v2113 = vpop.f32.mrb[0].mxu0
        %v2114 = vpop.f32.mrb[0].mxu0
        %v2115 = vadd.f32 %v1859, %v2114
        %v2116 = vpop.f32.mrb[0].mxu0
        %2117 = vmatprep.mubr.bf16.mxu0 0
        %2118 = vmatmul.mubr.bf16.gmra.mrb[0].mxu0 %v1935
        %v2119 = vpop.f32.mrb[0].mxu0
        %v2120 = vadd.f32 %v1859, %v2119
        %v2121 = vpop.f32.mrb[0].mxu0
        %v2122 = vpop.f32.mrb[0].mxu0
        %v2123 = vadd.f32 %v1859, %v2122
        %v2124 = vpop.f32.mrb[0].mxu0
        %2125 = vmatprep.mubr.bf16.mxu0 0
        %2126 = vmatmul.mubr.bf16.gmra.mrb[0].mxu0 %v1936
        %v2127 = vpop.f32.mrb[0].mxu0
        %v2128 = vadd.f32 %v1859, %v2127
        %v2129 = vpop.f32.mrb[0].mxu0
        %v2130 = vpop.f32.mrb[0].mxu0
        %v2131 = vadd.f32 %v1859, %v2130
        %v2132 = vpop.f32.mrb[0].mxu0
        %2133 = vmatprep.mubr.bf16.mxu0 0
        %2134 = vmatmul.mubr.bf16.gmra.mrb[0].mxu0 %v1937
        %v2135 = vpop.f32.mrb[0].mxu0
        %v2136 = vadd.f32 %v1859, %v2135
        %v2137 = vpop.f32.mrb[0].mxu0
        %v2138 = vpop.f32.mrb[0].mxu0
        %v2139 = vadd.f32 %v1859, %v2138
        %v2140 = vpop.f32.mrb[0].mxu0
        %2141 = vmatprep.mubr.bf16.mxu0 0
        %2142 = vmatmul.mubr.bf16.gmra.mrb[0].mxu0 %v1938
        %v2143 = vpop.f32.mrb[0].mxu0
        %v2144 = vadd.f32 %v1859, %v2143
        %v2145 = vpop.f32.mrb[0].mxu0
        %v2146 = vpop.f32.mrb[0].mxu0
        %v2147 = vadd.f32 %v1859, %v2146
        %v2148 = vpop.f32.mrb[0].mxu0
        %2149 = vmatprep.mubr.bf16.mxu0 0
        %2150 = vmatmul.mubr.bf16.gmra.mrb[0].mxu0 %v1939
        %v2151 = vpop.f32.mrb[0].mxu0
        %v2152 = vadd.f32 %v1859, %v2151
        %v2153 = vpop.f32.mrb[0].mxu0
        %v2154 = vpop.f32.mrb[0].mxu0
        %v2155 = vadd.f32 %v1859, %v2154
        %v2156 = vpop.f32.mrb[0].mxu0
        %2157 = vmatprep.mubr.bf16.mxu0 0
        %2158 = vmatmul.mubr.bf16.gmra.mrb[0].mxu0 %v1940
        %v2159 = vpop.f32.mrb[0].mxu0
        %v2160 = vadd.f32 %v1859, %v2159
        %v2161 = vpop.f32.mrb[0].mxu0
        %v2162 = vpop.f32.mrb[0].mxu0
        %v2163 = vadd.f32 %v1859, %v2162
        %v2164 = vpop.f32.mrb[0].mxu0
        %2165 = vdwg.mxu0
        %v2166 = vmul.f32 %v2040, 0.01
        %v2167 = vmul.f32 %v2043, 0.01
        %v2168 = vmul.f32 %v2048, 0.01
        %v2169 = vmul.f32 %v2051, 0.01
        %v2170 = vmul.f32 %v2056, 0.01
        %v2171 = vmul.f32 %v2059, 0.01
        %v2172 = vmul.f32 %v2064, 0.01
        %v2173 = vmul.f32 %v2067, 0.01
        %v2174 = vmul.f32 %v2072, 0.01
        %v2175 = vmul.f32 %v2075, 0.01
        %v2176 = vmul.f32 %v2080, 0.01
        %v2177 = vmul.f32 %v2083, 0.01
        %v2178 = vmul.f32 %v2088, 0.01
        %v2179 = vmul.f32 %v2091, 0.01
        %v2180 = vmul.f32 %v2096, 0.01
        %v2181 = vmul.f32 %v2099, 0.01
        %v2182 = vmul.f32 %v2104, 0.01
        %v2183 = vmul.f32 %v2107, 0.01
        %v2184 = vmul.f32 %v2112, 0.01
        %v2185 = vmul.f32 %v2115, 0.01
        %v2186 = vmul.f32 %v2120, 0.01
        %v2187 = vmul.f32 %v2123, 0.01
        %v2188 = vmul.f32 %v2128, 0.01
        %v2189 = vmul.f32 %v2131, 0.01
        %v2190 = vmul.f32 %v2136, 0.01
        %v2191 = vmul.f32 %v2139, 0.01
        %v2192 = vmul.f32 %v2144, 0.01
        %v2193 = vmul.f32 %v2147, 0.01
        %v2194 = vmul.f32 %v2152, 0.01
        %v2195 = vmul.f32 %v2155, 0.01
        %v2196 = vmul.f32 %v2160, 0.01
        %v2197 = vmul.f32 %v2163, 0.01
        %v2198 = vmax.f32 %v2040, %v2166
        %v2199 = vmax.f32 %v2043, %v2167
        %v2200 = vmax.f32 %v2048, %v2168
        %v2201 = vmax.f32 %v2051, %v2169
        %v2202 = vmax.f32 %v2056, %v2170
        %v2203 = vmax.f32 %v2059, %v2171
        %v2204 = vmax.f32 %v2064, %v2172
        %v2205 = vmax.f32 %v2067, %v2173
        %v2206 = vmax.f32 %v2072, %v2174
        %v2207 = vmax.f32 %v2075, %v2175
        %v2208 = vmax.f32 %v2080, %v2176
        %v2209 = vmax.f32 %v2083, %v2177
        %v2210 = vmax.f32 %v2088, %v2178
        %v2211 = vmax.f32 %v2091, %v2179
        %v2212 = vmax.f32 %v2096, %v2180
        %v2213 = vmax.f32 %v2099, %v2181
        %v2214 = vmax.f32 %v2104, %v2182
        %v2215 = vmax.f32 %v2107, %v2183
        %v2216 = vmax.f32 %v2112, %v2184
        %v2217 = vmax.f32 %v2115, %v2185
        %v2218 = vmax.f32 %v2120, %v2186
        %v2219 = vmax.f32 %v2123, %v2187
        %v2220 = vmax.f32 %v2128, %v2188
        %v2221 = vmax.f32 %v2131, %v2189
        %v2222 = vmax.f32 %v2136, %v2190
        %v2223 = vmax.f32 %v2139, %v2191
        %v2224 = vmax.f32 %v2144, %v2192
        %v2225 = vmax.f32 %v2147, %v2193
        %v2226 = vmax.f32 %v2152, %v2194
        %v2227 = vmax.f32 %v2155, %v2195
        %v2228 = vmax.f32 %v2160, %v2196
        %v2229 = vmax.f32 %v2163, %v2197
        %v2230 = vld [vmem:[%s9] sm:$0xf]
        %v2231 = vld [vmem:[%s9 + $0x4] sm:$0xf]
        %v2232 = vld [vmem:[%s9 + $0x8] sm:$0xf]
        %v2233 = vld [vmem:[%s9 + $0xc] sm:$0xf]
        %v2234 = vld [vmem:[%s9 + $0x10] sm:$0xf]
        %v2235 = vld [vmem:[%s9 + $0x14] sm:$0xf]
        %v2236 = vld [vmem:[%s9 + $0x18] sm:$0xf]
        %v2237 = vld [vmem:[%s9 + $0x1c] sm:$0xf]
        %v2238 = vld [vmem:[%s9 + $0x20] sm:$0xf]
        %v2239 = vld [vmem:[%s9 + $0x24] sm:$0xf]
        %v2240 = vld [vmem:[%s9 + $0x28] sm:$0xf]
        %v2241 = vld [vmem:[%s9 + $0x2c] sm:$0xf]
        %v2242 = vld [vmem:[%s9 + $0x30] sm:$0xf]
        %v2243 = vld [vmem:[%s9 + $0x34] sm:$0xf]
        %v2244 = vld [vmem:[%s9 + $0x38] sm:$0xf]
        %v2245 = vld [vmem:[%s9 + $0x3c] sm:$0xf]
        %v2246 = vpack.c.bf16 %v2199, %v2198
        %v2247 = vpack.c.bf16 %v2201, %v2200
        %v2248 = vpack.c.bf16 %v2203, %v2202
        %v2249 = vpack.c.bf16 %v2205, %v2204
        %v2250 = vpack.c.bf16 %v2207, %v2206
        %v2251 = vpack.c.bf16 %v2209, %v2208
        %v2252 = vpack.c.bf16 %v2211, %v2210
        %v2253 = vpack.c.bf16 %v2213, %v2212
        %v2254 = vpack.c.bf16 %v2215, %v2214
        %v2255 = vpack.c.bf16 %v2217, %v2216
        %v2256 = vpack.c.bf16 %v2219, %v2218
        %v2257 = vpack.c.bf16 %v2221, %v2220
        %v2258 = vpack.c.bf16 %v2223, %v2222
        %v2259 = vpack.c.bf16 %v2225, %v2224
        %v2260 = vpack.c.bf16 %v2227, %v2226
        %v2261 = vpack.c.bf16 %v2229, %v2228
        %v2262 = vld [vmem:[%s10] sm:$0x1]
        %v2264 = vlaneseq
        %v2265 = vshrl.u32 %v2264, 7
        %v2266 = vsub.s32 0, %v2265
        %v2267 = vrot.slane %v2262, %v2266
        %v2285 = vunpack.c.l.b16 %v2230
        %v2286 = vunpack.c.l.b16 %v2231
        %v2287 = vunpack.c.l.b16 %v2232
        %v2288 = vunpack.c.l.b16 %v2233
        %v2289 = vunpack.c.l.b16 %v2234
        %v2290 = vunpack.c.l.b16 %v2235
        %v2291 = vunpack.c.l.b16 %v2236
        %v2292 = vunpack.c.l.b16 %v2237
        %v2293 = vunpack.c.l.b16 %v2238
        %v2294 = vunpack.c.l.b16 %v2239
        %v2295 = vunpack.c.l.b16 %v2240
        %v2296 = vunpack.c.l.b16 %v2241
        %v2297 = vunpack.c.l.b16 %v2242
        %v2298 = vunpack.c.l.b16 %v2243
        %v2299 = vunpack.c.l.b16 %v2244
        %v2300 = vunpack.c.l.b16 %v2245
        %v2301 = vpack.c.b16 %v2286, %v2285
        %v2302 = vpack.c.b16 %v2288, %v2287
        %v2303 = vpack.c.b16 %v2290, %v2289
        %v2304 = vpack.c.b16 %v2292, %v2291
        %v2305 = vpack.c.b16 %v2294, %v2293
        %v2306 = vpack.c.b16 %v2296, %v2295
        %v2307 = vpack.c.b16 %v2298, %v2297
        %v2308 = vpack.c.b16 %v2300, %v2299
        %2317 = vmatprep.subr.bf16.mxu0 0
        %2318 = vmatpush1.bf16.msra.mxu0 %v2301
        %2319 = vmatprep.subr.bf16.mxu0 0
        %2320 = vmatpush1.bf16.msra.mxu0 %v2302
        %2321 = vmatprep.subr.bf16.mxu0 0
        %2322 = vmatpush1.bf16.msra.mxu0 %v2303
        %2323 = vmatprep.subr.bf16.mxu0 0
        %2324 = vmatpush1.bf16.msra.mxu0 %v2304
        %2325 = vmatprep.subr.bf16.mxu0 0
        %2326 = vmatpush1.bf16.msra.mxu0 %v2305
        %2327 = vmatprep.subr.bf16.mxu0 0
        %2328 = vmatpush1.bf16.msra.mxu0 %v2306
        %2329 = vmatprep.subr.bf16.mxu0 0
        %2330 = vmatpush1.bf16.msra.mxu0 %v2307
        %2331 = vmatprep.subr.bf16.mxu0 0
        %2332 = vmatpush1.bf16.msra.mxu0 %v2308
        %2333 = vmatprep.subr.bf16.mxu0 0
        %2334 = vmatpush1.bf16.msra.mxu0 0
        %2335 = vmatprep.subr.bf16.mxu0 0
        %2336 = vmatpush1.bf16.msra.mxu0 0
        %2337 = vmatprep.subr.bf16.mxu0 0
        %2338 = vmatpush1.bf16.msra.mxu0 0
        %2339 = vmatprep.subr.bf16.mxu0 0
        %2340 = vmatpush1.bf16.msra.mxu0 0
        %2341 = vmatprep.subr.bf16.mxu0 0
        %2342 = vmatpush1.bf16.msra.mxu0 0
        %2343 = vmatprep.subr.bf16.mxu0 0
        %2344 = vmatpush1.bf16.msra.mxu0 0
        %2345 = vmatprep.subr.bf16.mxu0 0
        %2346 = vmatpush1.bf16.msra.mxu0 0
        %2347 = vmatprep.subr.bf16.mxu0 0
        %2348 = vmatpush1.bf16.msra.mxu0 0
        %2349 = vmatprep.mubr.bf16.mxu0 0
        %2350 = vmatmul.mubr.bf16.gmra.mrb[0].mxu0 %v2246
        %v2351 = vpop.f32.mrb[0].mxu0
        %v2352 = vadd.f32 %v2267, %v2351
        %v2353 = vpop.f32.mrb[0].mxu0
        %v2354 = vpop.f32.mrb[0].mxu0
        %v2355 = vadd.f32 %v2267, %v2354
        %v2356 = vpop.f32.mrb[0].mxu0
        %2357 = vmatprep.mubr.bf16.mxu0 0
        %2358 = vmatmul.mubr.bf16.gmra.mrb[0].mxu0 %v2247
        %v2359 = vpop.f32.mrb[0].mxu0
        %v2360 = vadd.f32 %v2267, %v2359
        %v2361 = vpop.f32.mrb[0].mxu0
        %v2362 = vpop.f32.mrb[0].mxu0
        %v2363 = vadd.f32 %v2267, %v2362
        %v2364 = vpop.f32.mrb[0].mxu0
        %2365 = vmatprep.mubr.bf16.mxu0 0
        %2366 = vmatmul.mubr.bf16.gmra.mrb[0].mxu0 %v2248
        %v2367 = vpop.f32.mrb[0].mxu0
        %v2368 = vadd.f32 %v2267, %v2367
        %v2369 = vpop.f32.mrb[0].mxu0
        %v2370 = vpop.f32.mrb[0].mxu0
        %v2371 = vadd.f32 %v2267, %v2370
        %v2372 = vpop.f32.mrb[0].mxu0
        %2373 = vmatprep.mubr.bf16.mxu0 0
        %2374 = vmatmul.mubr.bf16.gmra.mrb[0].mxu0 %v2249
        %v2375 = vpop.f32.mrb[0].mxu0
        %v2376 = vadd.f32 %v2267, %v2375
        %v2377 = vpop.f32.mrb[0].mxu0
        %v2378 = vpop.f32.mrb[0].mxu0
        %v2379 = vadd.f32 %v2267, %v2378
        %v2380 = vpop.f32.mrb[0].mxu0
        %2381 = vmatprep.mubr.bf16.mxu0 0
        %2382 = vmatmul.mubr.bf16.gmra.mrb[0].mxu0 %v2250
        %v2383 = vpop.f32.mrb[0].mxu0
        %v2384 = vadd.f32 %v2267, %v2383
        %v2385 = vpop.f32.mrb[0].mxu0
        %v2386 = vpop.f32.mrb[0].mxu0
        %v2387 = vadd.f32 %v2267, %v2386
        %v2388 = vpop.f32.mrb[0].mxu0
        %2389 = vmatprep.mubr.bf16.mxu0 0
        %2390 = vmatmul.mubr.bf16.gmra.mrb[0].mxu0 %v2251
        %v2391 = vpop.f32.mrb[0].mxu0
        %v2392 = vadd.f32 %v2267, %v2391
        %v2393 = vpop.f32.mrb[0].mxu0
        %v2394 = vpop.f32.mrb[0].mxu0
        %v2395 = vadd.f32 %v2267, %v2394
        %v2396 = vpop.f32.mrb[0].mxu0
        %2397 = vmatprep.mubr.bf16.mxu0 0
        %2398 = vmatmul.mubr.bf16.gmra.mrb[0].mxu0 %v2252
        %v2399 = vpop.f32.mrb[0].mxu0
        %v2400 = vadd.f32 %v2267, %v2399
        %v2401 = vpop.f32.mrb[0].mxu0
        %v2402 = vpop.f32.mrb[0].mxu0
        %v2403 = vadd.f32 %v2267, %v2402
        %v2404 = vpop.f32.mrb[0].mxu0
        %2405 = vmatprep.mubr.bf16.mxu0 0
        %2406 = vmatmul.mubr.bf16.gmra.mrb[0].mxu0 %v2253
        %v2407 = vpop.f32.mrb[0].mxu0
        %v2408 = vadd.f32 %v2267, %v2407
        %v2409 = vpop.f32.mrb[0].mxu0
        %v2410 = vpop.f32.mrb[0].mxu0
        %v2411 = vadd.f32 %v2267, %v2410
        %v2412 = vpop.f32.mrb[0].mxu0
        %2413 = vmatprep.mubr.bf16.mxu0 0
        %2414 = vmatmul.mubr.bf16.gmra.mrb[0].mxu0 %v2254
        %v2415 = vpop.f32.mrb[0].mxu0
        %v2416 = vadd.f32 %v2267, %v2415
        %v2417 = vpop.f32.mrb[0].mxu0
        %v2418 = vpop.f32.mrb[0].mxu0
        %v2419 = vadd.f32 %v2267, %v2418
        %v2420 = vpop.f32.mrb[0].mxu0
        %2421 = vmatprep.mubr.bf16.mxu0 0
        %2422 = vmatmul.mubr.bf16.gmra.mrb[0].mxu0 %v2255
        %v2423 = vpop.f32.mrb[0].mxu0
        %v2424 = vadd.f32 %v2267, %v2423
        %v2425 = vpop.f32.mrb[0].mxu0
        %v2426 = vpop.f32.mrb[0].mxu0
        %v2427 = vadd.f32 %v2267, %v2426
        %v2428 = vpop.f32.mrb[0].mxu0
        %2429 = vmatprep.mubr.bf16.mxu0 0
        %2430 = vmatmul.mubr.bf16.gmra.mrb[0].mxu0 %v2256
        %v2431 = vpop.f32.mrb[0].mxu0
        %v2432 = vadd.f32 %v2267, %v2431
        %v2433 = vpop.f32.mrb[0].mxu0
        %v2434 = vpop.f32.mrb[0].mxu0
        %v2435 = vadd.f32 %v2267, %v2434
        %v2436 = vpop.f32.mrb[0].mxu0
        %2437 = vmatprep.mubr.bf16.mxu0 0
        %2438 = vmatmul.mubr.bf16.gmra.mrb[0].mxu0 %v2257
        %v2439 = vpop.f32.mrb[0].mxu0
        %v2440 = vadd.f32 %v2267, %v2439
        %v2441 = vpop.f32.mrb[0].mxu0
        %v2442 = vpop.f32.mrb[0].mxu0
        %v2443 = vadd.f32 %v2267, %v2442
        %v2444 = vpop.f32.mrb[0].mxu0
        %2445 = vmatprep.mubr.bf16.mxu0 0
        %2446 = vmatmul.mubr.bf16.gmra.mrb[0].mxu0 %v2258
        %v2447 = vpop.f32.mrb[0].mxu0
        %v2448 = vadd.f32 %v2267, %v2447
        %v2449 = vpop.f32.mrb[0].mxu0
        %v2450 = vpop.f32.mrb[0].mxu0
        %v2451 = vadd.f32 %v2267, %v2450
        %v2452 = vpop.f32.mrb[0].mxu0
        %2453 = vmatprep.mubr.bf16.mxu0 0
        %2454 = vmatmul.mubr.bf16.gmra.mrb[0].mxu0 %v2259
        %v2455 = vpop.f32.mrb[0].mxu0
        %v2456 = vadd.f32 %v2267, %v2455
        %v2457 = vpop.f32.mrb[0].mxu0
        %v2458 = vpop.f32.mrb[0].mxu0
        %v2459 = vadd.f32 %v2267, %v2458
        %v2460 = vpop.f32.mrb[0].mxu0
        %2461 = vmatprep.mubr.bf16.mxu0 0
        %2462 = vmatmul.mubr.bf16.gmra.mrb[0].mxu0 %v2260
        %v2463 = vpop.f32.mrb[0].mxu0
        %v2464 = vadd.f32 %v2267, %v2463
        %v2465 = vpop.f32.mrb[0].mxu0
        %v2466 = vpop.f32.mrb[0].mxu0
        %v2467 = vadd.f32 %v2267, %v2466
        %v2468 = vpop.f32.mrb[0].mxu0
        %2469 = vmatprep.mubr.bf16.mxu0 0
        %2470 = vmatmul.mubr.bf16.gmra.mrb[0].mxu0 %v2261
        %v2471 = vpop.f32.mrb[0].mxu0
        %v2472 = vadd.f32 %v2267, %v2471
        %v2473 = vpop.f32.mrb[0].mxu0
        %v2474 = vpop.f32.mrb[0].mxu0
        %v2475 = vadd.f32 %v2267, %v2474
        %v2476 = vpop.f32.mrb[0].mxu0
        %2477 = vdwg.mxu0
        %v2478 = vadd.f32 %v2352, %v1680
        %v2479 = vadd.f32 %v2355, %v1683
        %v2480 = vadd.f32 %v2360, %v1688
        %v2481 = vadd.f32 %v2363, %v1691
        %v2482 = vadd.f32 %v2368, %v1696
        %v2483 = vadd.f32 %v2371, %v1699
        %v2484 = vadd.f32 %v2376, %v1704
        %v2485 = vadd.f32 %v2379, %v1707
        %v2486 = vadd.f32 %v2384, %v1712
        %v2487 = vadd.f32 %v2387, %v1715
        %v2488 = vadd.f32 %v2392, %v1720
        %v2489 = vadd.f32 %v2395, %v1723
        %v2490 = vadd.f32 %v2400, %v1728
        %v2491 = vadd.f32 %v2403, %v1731
        %v2492 = vadd.f32 %v2408, %v1736
        %v2493 = vadd.f32 %v2411, %v1739
        %v2494 = vadd.f32 %v2416, %v1744
        %v2495 = vadd.f32 %v2419, %v1747
        %v2496 = vadd.f32 %v2424, %v1752
        %v2497 = vadd.f32 %v2427, %v1755
        %v2498 = vadd.f32 %v2432, %v1760
        %v2499 = vadd.f32 %v2435, %v1763
        %v2500 = vadd.f32 %v2440, %v1768
        %v2501 = vadd.f32 %v2443, %v1771
        %v2502 = vadd.f32 %v2448, %v1776
        %v2503 = vadd.f32 %v2451, %v1779
        %v2504 = vadd.f32 %v2456, %v1784
        %v2505 = vadd.f32 %v2459, %v1787
        %v2506 = vadd.f32 %v2464, %v1792
        %v2507 = vadd.f32 %v2467, %v1795
        %v2508 = vadd.f32 %v2472, %v1800
        %v2509 = vadd.f32 %v2475, %v1803
        %v2510 = vld [vmem:[%s11] sm:$0xf]
        %v2511 = vld [vmem:[%s11 + $0x4] sm:$0xf]
        %v2512 = vld [vmem:[%s11 + $0x8] sm:$0xf]
        %v2513 = vld [vmem:[%s11 + $0xc] sm:$0xf]
        %v2514 = vld [vmem:[%s11 + $0x10] sm:$0xf]
        %v2515 = vld [vmem:[%s11 + $0x14] sm:$0xf]
        %v2516 = vld [vmem:[%s11 + $0x18] sm:$0xf]
        %v2517 = vld [vmem:[%s11 + $0x1c] sm:$0xf]
        %v2518 = vld [vmem:[%s11 + $0x20] sm:$0xf]
        %v2519 = vld [vmem:[%s11 + $0x24] sm:$0xf]
        %v2520 = vld [vmem:[%s11 + $0x28] sm:$0xf]
        %v2521 = vld [vmem:[%s11 + $0x2c] sm:$0xf]
        %v2522 = vld [vmem:[%s11 + $0x30] sm:$0xf]
        %v2523 = vld [vmem:[%s11 + $0x34] sm:$0xf]
        %v2524 = vld [vmem:[%s11 + $0x38] sm:$0xf]
        %v2525 = vld [vmem:[%s11 + $0x3c] sm:$0xf]
        %v2526 = vpack.c.bf16 %v2479, %v2478
        %v2527 = vpack.c.bf16 %v2481, %v2480
        %v2528 = vpack.c.bf16 %v2483, %v2482
        %v2529 = vpack.c.bf16 %v2485, %v2484
        %v2530 = vpack.c.bf16 %v2487, %v2486
        %v2531 = vpack.c.bf16 %v2489, %v2488
        %v2532 = vpack.c.bf16 %v2491, %v2490
        %v2533 = vpack.c.bf16 %v2493, %v2492
        %v2534 = vpack.c.bf16 %v2495, %v2494
        %v2535 = vpack.c.bf16 %v2497, %v2496
        %v2536 = vpack.c.bf16 %v2499, %v2498
        %v2537 = vpack.c.bf16 %v2501, %v2500
        %v2538 = vpack.c.bf16 %v2503, %v2502
        %v2539 = vpack.c.bf16 %v2505, %v2504
        %v2540 = vpack.c.bf16 %v2507, %v2506
        %v2541 = vpack.c.bf16 %v2509, %v2508
        %v2542 = vld [vmem:[%s12] sm:$0x1]
        %v2544 = vlaneseq
        %v2545 = vshrl.u32 %v2544, 7
        %v2546 = vsub.s32 0, %v2545
        %v2547 = vrot.slane %v2542, %v2546
        %v2565 = vunpack.c.l.b16 %v2510
        %v2566 = vunpack.c.l.b16 %v2511
        %v2567 = vunpack.c.l.b16 %v2512
        %v2568 = vunpack.c.l.b16 %v2513
        %v2569 = vunpack.c.l.b16 %v2514
        %v2570 = vunpack.c.l.b16 %v2515
        %v2571 = vunpack.c.l.b16 %v2516
        %v2572 = vunpack.c.l.b16 %v2517
        %v2573 = vunpack.c.l.b16 %v2518
        %v2574 = vunpack.c.l.b16 %v2519
        %v2575 = vunpack.c.l.b16 %v2520
        %v2576 = vunpack.c.l.b16 %v2521
        %v2577 = vunpack.c.l.b16 %v2522
        %v2578 = vunpack.c.l.b16 %v2523
        %v2579 = vunpack.c.l.b16 %v2524
        %v2580 = vunpack.c.l.b16 %v2525
        %v2581 = vpack.c.b16 %v2566, %v2565
        %v2582 = vpack.c.b16 %v2568, %v2567
        %v2583 = vpack.c.b16 %v2570, %v2569
        %v2584 = vpack.c.b16 %v2572, %v2571
        %v2585 = vpack.c.b16 %v2574, %v2573
        %v2586 = vpack.c.b16 %v2576, %v2575
        %v2587 = vpack.c.b16 %v2578, %v2577
        %v2588 = vpack.c.b16 %v2580, %v2579
        %2597 = vmatprep.subr.bf16.mxu0 0
        %2598 = vmatpush1.bf16.msra.mxu0 %v2581
        %2599 = vmatprep.subr.bf16.mxu0 0
        %2600 = vmatpush1.bf16.msra.mxu0 %v2582
        %2601 = vmatprep.subr.bf16.mxu0 0
        %2602 = vmatpush1.bf16.msra.mxu0 %v2583
        %2603 = vmatprep.subr.bf16.mxu0 0
        %2604 = vmatpush1.bf16.msra.mxu0 %v2584
        %2605 = vmatprep.subr.bf16.mxu0 0
        %2606 = vmatpush1.bf16.msra.mxu0 %v2585
        %2607 = vmatprep.subr.bf16.mxu0 0
        %2608 = vmatpush1.bf16.msra.mxu0 %v2586
        %2609 = vmatprep.subr.bf16.mxu0 0
        %2610 = vmatpush1.bf16.msra.mxu0 %v2587
        %2611 = vmatprep.subr.bf16.mxu0 0
        %2612 = vmatpush1.bf16.msra.mxu0 %v2588
        %2613 = vmatprep.subr.bf16.mxu0 0
        %2614 = vmatpush1.bf16.msra.mxu0 0
        %2615 = vmatprep.subr.bf16.mxu0 0
        %2616 = vmatpush1.bf16.msra.mxu0 0
        %2617 = vmatprep.subr.bf16.mxu0 0
        %2618 = vmatpush1.bf16.msra.mxu0 0
        %2619 = vmatprep.subr.bf16.mxu0 0
        %2620 = vmatpush1.bf16.msra.mxu0 0
        %2621 = vmatprep.subr.bf16.mxu0 0
        %2622 = vmatpush1.bf16.msra.mxu0 0
        %2623 = vmatprep.subr.bf16.mxu0 0
        %2624 = vmatpush1.bf16.msra.mxu0 0
        %2625 = vmatprep.subr.bf16.mxu0 0
        %2626 = vmatpush1.bf16.msra.mxu0 0
        %2627 = vmatprep.subr.bf16.mxu0 0
        %2628 = vmatpush1.bf16.msra.mxu0 0
        %2629 = vmatprep.mubr.bf16.mxu0 0
        %2630 = vmatmul.mubr.bf16.gmra.mrb[0].mxu0 %v2526
        %v2631 = vpop.f32.mrb[0].mxu0
        %v2632 = vadd.f32 %v2547, %v2631
        %v2633 = vpop.f32.mrb[0].mxu0
        %v2634 = vpop.f32.mrb[0].mxu0
        %v2635 = vadd.f32 %v2547, %v2634
        %v2636 = vpop.f32.mrb[0].mxu0
        %2637 = vmatprep.mubr.bf16.mxu0 0
        %2638 = vmatmul.mubr.bf16.gmra.mrb[0].mxu0 %v2527
        %v2639 = vpop.f32.mrb[0].mxu0
        %v2640 = vadd.f32 %v2547, %v2639
        %v2641 = vpop.f32.mrb[0].mxu0
        %v2642 = vpop.f32.mrb[0].mxu0
        %v2643 = vadd.f32 %v2547, %v2642
        %v2644 = vpop.f32.mrb[0].mxu0
        %2645 = vmatprep.mubr.bf16.mxu0 0
        %2646 = vmatmul.mubr.bf16.gmra.mrb[0].mxu0 %v2528
        %v2647 = vpop.f32.mrb[0].mxu0
        %v2648 = vadd.f32 %v2547, %v2647
        %v2649 = vpop.f32.mrb[0].mxu0
        %v2650 = vpop.f32.mrb[0].mxu0
        %v2651 = vadd.f32 %v2547, %v2650
        %v2652 = vpop.f32.mrb[0].mxu0
        %2653 = vmatprep.mubr.bf16.mxu0 0
        %2654 = vmatmul.mubr.bf16.gmra.mrb[0].mxu0 %v2529
        %v2655 = vpop.f32.mrb[0].mxu0
        %v2656 = vadd.f32 %v2547, %v2655
        %v2657 = vpop.f32.mrb[0].mxu0
        %v2658 = vpop.f32.mrb[0].mxu0
        %v2659 = vadd.f32 %v2547, %v2658
        %v2660 = vpop.f32.mrb[0].mxu0
        %2661 = vmatprep.mubr.bf16.mxu0 0
        %2662 = vmatmul.mubr.bf16.gmra.mrb[0].mxu0 %v2530
        %v2663 = vpop.f32.mrb[0].mxu0
        %v2664 = vadd.f32 %v2547, %v2663
        %v2665 = vpop.f32.mrb[0].mxu0
        %v2666 = vpop.f32.mrb[0].mxu0
        %v2667 = vadd.f32 %v2547, %v2666
        %v2668 = vpop.f32.mrb[0].mxu0
        %2669 = vmatprep.mubr.bf16.mxu0 0
        %2670 = vmatmul.mubr.bf16.gmra.mrb[0].mxu0 %v2531
        %v2671 = vpop.f32.mrb[0].mxu0
        %v2672 = vadd.f32 %v2547, %v2671
        %v2673 = vpop.f32.mrb[0].mxu0
        %v2674 = vpop.f32.mrb[0].mxu0
        %v2675 = vadd.f32 %v2547, %v2674
        %v2676 = vpop.f32.mrb[0].mxu0
        %2677 = vmatprep.mubr.bf16.mxu0 0
        %2678 = vmatmul.mubr.bf16.gmra.mrb[0].mxu0 %v2532
        %v2679 = vpop.f32.mrb[0].mxu0
        %v2680 = vadd.f32 %v2547, %v2679
        %v2681 = vpop.f32.mrb[0].mxu0
        %v2682 = vpop.f32.mrb[0].mxu0
        %v2683 = vadd.f32 %v2547, %v2682
        %v2684 = vpop.f32.mrb[0].mxu0
        %2685 = vmatprep.mubr.bf16.mxu0 0
        %2686 = vmatmul.mubr.bf16.gmra.mrb[0].mxu0 %v2533
        %v2687 = vpop.f32.mrb[0].mxu0
        %v2688 = vadd.f32 %v2547, %v2687
        %v2689 = vpop.f32.mrb[0].mxu0
        %v2690 = vpop.f32.mrb[0].mxu0
        %v2691 = vadd.f32 %v2547, %v2690
        %v2692 = vpop.f32.mrb[0].mxu0
        %2693 = vmatprep.mubr.bf16.mxu0 0
        %2694 = vmatmul.mubr.bf16.gmra.mrb[0].mxu0 %v2534
        %v2695 = vpop.f32.mrb[0].mxu0
        %v2696 = vadd.f32 %v2547, %v2695
        %v2697 = vpop.f32.mrb[0].mxu0
        %v2698 = vpop.f32.mrb[0].mxu0
        %v2699 = vadd.f32 %v2547, %v2698
        %v2700 = vpop.f32.mrb[0].mxu0
        %2701 = vmatprep.mubr.bf16.mxu0 0
        %2702 = vmatmul.mubr.bf16.gmra.mrb[0].mxu0 %v2535
        %v2703 = vpop.f32.mrb[0].mxu0
        %v2704 = vadd.f32 %v2547, %v2703
        %v2705 = vpop.f32.mrb[0].mxu0
        %v2706 = vpop.f32.mrb[0].mxu0
        %v2707 = vadd.f32 %v2547, %v2706
        %v2708 = vpop.f32.mrb[0].mxu0
        %2709 = vmatprep.mubr.bf16.mxu0 0
        %2710 = vmatmul.mubr.bf16.gmra.mrb[0].mxu0 %v2536
        %v2711 = vpop.f32.mrb[0].mxu0
        %v2712 = vadd.f32 %v2547, %v2711
        %v2713 = vpop.f32.mrb[0].mxu0
        %v2714 = vpop.f32.mrb[0].mxu0
        %v2715 = vadd.f32 %v2547, %v2714
        %v2716 = vpop.f32.mrb[0].mxu0
        %2717 = vmatprep.mubr.bf16.mxu0 0
        %2718 = vmatmul.mubr.bf16.gmra.mrb[0].mxu0 %v2537
        %v2719 = vpop.f32.mrb[0].mxu0
        %v2720 = vadd.f32 %v2547, %v2719
        %v2721 = vpop.f32.mrb[0].mxu0
        %v2722 = vpop.f32.mrb[0].mxu0
        %v2723 = vadd.f32 %v2547, %v2722
        %v2724 = vpop.f32.mrb[0].mxu0
        %2725 = vmatprep.mubr.bf16.mxu0 0
        %2726 = vmatmul.mubr.bf16.gmra.mrb[0].mxu0 %v2538
        %v2727 = vpop.f32.mrb[0].mxu0
        %v2728 = vadd.f32 %v2547, %v2727
        %v2729 = vpop.f32.mrb[0].mxu0
        %v2730 = vpop.f32.mrb[0].mxu0
        %v2731 = vadd.f32 %v2547, %v2730
        %v2732 = vpop.f32.mrb[0].mxu0
        %2733 = vmatprep.mubr.bf16.mxu0 0
        %2734 = vmatmul.mubr.bf16.gmra.mrb[0].mxu0 %v2539
        %v2735 = vpop.f32.mrb[0].mxu0
        %v2736 = vadd.f32 %v2547, %v2735
        %v2737 = vpop.f32.mrb[0].mxu0
        %v2738 = vpop.f32.mrb[0].mxu0
        %v2739 = vadd.f32 %v2547, %v2738
        %v2740 = vpop.f32.mrb[0].mxu0
        %2741 = vmatprep.mubr.bf16.mxu0 0
        %2742 = vmatmul.mubr.bf16.gmra.mrb[0].mxu0 %v2540
        %v2743 = vpop.f32.mrb[0].mxu0
        %v2744 = vadd.f32 %v2547, %v2743
        %v2745 = vpop.f32.mrb[0].mxu0
        %v2746 = vpop.f32.mrb[0].mxu0
        %v2747 = vadd.f32 %v2547, %v2746
        %v2748 = vpop.f32.mrb[0].mxu0
        %2749 = vmatprep.mubr.bf16.mxu0 0
        %2750 = vmatmul.mubr.bf16.gmra.mrb[0].mxu0 %v2541
        %v2751 = vpop.f32.mrb[0].mxu0
        %v2752 = vadd.f32 %v2547, %v2751
        %v2753 = vpop.f32.mrb[0].mxu0
        %v2754 = vpop.f32.mrb[0].mxu0
        %v2755 = vadd.f32 %v2547, %v2754
        %v2756 = vpop.f32.mrb[0].mxu0
        %2757 = vdwg.mxu0
        %v2758 = vmul.f32 %v2632, 0.01
        %v2759 = vmul.f32 %v2635, 0.01
        %v2760 = vmul.f32 %v2640, 0.01
        %v2761 = vmul.f32 %v2643, 0.01
        %v2762 = vmul.f32 %v2648, 0.01
        %v2763 = vmul.f32 %v2651, 0.01
        %v2764 = vmul.f32 %v2656, 0.01
        %v2765 = vmul.f32 %v2659, 0.01
        %v2766 = vmul.f32 %v2664, 0.01
        %v2767 = vmul.f32 %v2667, 0.01
        %v2768 = vmul.f32 %v2672, 0.01
        %v2769 = vmul.f32 %v2675, 0.01
        %v2770 = vmul.f32 %v2680, 0.01
        %v2771 = vmul.f32 %v2683, 0.01
        %v2772 = vmul.f32 %v2688, 0.01
        %v2773 = vmul.f32 %v2691, 0.01
        %v2774 = vmul.f32 %v2696, 0.01
        %v2775 = vmul.f32 %v2699, 0.01
        %v2776 = vmul.f32 %v2704, 0.01
        %v2777 = vmul.f32 %v2707, 0.01
        %v2778 = vmul.f32 %v2712, 0.01
        %v2779 = vmul.f32 %v2715, 0.01
        %v2780 = vmul.f32 %v2720, 0.01
        %v2781 = vmul.f32 %v2723, 0.01
        %v2782 = vmul.f32 %v2728, 0.01
        %v2783 = vmul.f32 %v2731, 0.01
        %v2784 = vmul.f32 %v2736, 0.01
        %v2785 = vmul.f32 %v2739, 0.01
        %v2786 = vmul.f32 %v2744, 0.01
        %v2787 = vmul.f32 %v2747, 0.01
        %v2788 = vmul.f32 %v2752, 0.01
        %v2789 = vmul.f32 %v2755, 0.01
        %v2790 = vmax.f32 %v2632, %v2758
        %v2791 = vmax.f32 %v2635, %v2759
        %v2792 = vmax.f32 %v2640, %v2760
        %v2793 = vmax.f32 %v2643, %v2761
        %v2794 = vmax.f32 %v2648, %v2762
        %v2795 = vmax.f32 %v2651, %v2763
        %v2796 = vmax.f32 %v2656, %v2764
        %v2797 = vmax.f32 %v2659, %v2765
        %v2798 = vmax.f32 %v2664, %v2766
        %v2799 = vmax.f32 %v2667, %v2767
        %v2800 = vmax.f32 %v2672, %v2768
        %v2801 = vmax.f32 %v2675, %v2769
        %v2802 = vmax.f32 %v2680, %v2770
        %v2803 = vmax.f32 %v2683, %v2771
        %v2804 = vmax.f32 %v2688, %v2772
        %v2805 = vmax.f32 %v2691, %v2773
        %v2806 = vmax.f32 %v2696, %v2774
        %v2807 = vmax.f32 %v2699, %v2775
        %v2808 = vmax.f32 %v2704, %v2776
        %v2809 = vmax.f32 %v2707, %v2777
        %v2810 = vmax.f32 %v2712, %v2778
        %v2811 = vmax.f32 %v2715, %v2779
        %v2812 = vmax.f32 %v2720, %v2780
        %v2813 = vmax.f32 %v2723, %v2781
        %v2814 = vmax.f32 %v2728, %v2782
        %v2815 = vmax.f32 %v2731, %v2783
        %v2816 = vmax.f32 %v2736, %v2784
        %v2817 = vmax.f32 %v2739, %v2785
        %v2818 = vmax.f32 %v2744, %v2786
        %v2819 = vmax.f32 %v2747, %v2787
        %v2820 = vmax.f32 %v2752, %v2788
        %v2821 = vmax.f32 %v2755, %v2789
        %v2822 = vld [vmem:[%s13] sm:$0xf]
        %v2823 = vld [vmem:[%s13 + $0x4] sm:$0xf]
        %v2824 = vld [vmem:[%s13 + $0x8] sm:$0xf]
        %v2825 = vld [vmem:[%s13 + $0xc] sm:$0xf]
        %v2826 = vld [vmem:[%s13 + $0x10] sm:$0xf]
        %v2827 = vld [vmem:[%s13 + $0x14] sm:$0xf]
        %v2828 = vld [vmem:[%s13 + $0x18] sm:$0xf]
        %v2829 = vld [vmem:[%s13 + $0x1c] sm:$0xf]
        %v2830 = vld [vmem:[%s13 + $0x20] sm:$0xf]
        %v2831 = vld [vmem:[%s13 + $0x24] sm:$0xf]
        %v2832 = vld [vmem:[%s13 + $0x28] sm:$0xf]
        %v2833 = vld [vmem:[%s13 + $0x2c] sm:$0xf]
        %v2834 = vld [vmem:[%s13 + $0x30] sm:$0xf]
        %v2835 = vld [vmem:[%s13 + $0x34] sm:$0xf]
        %v2836 = vld [vmem:[%s13 + $0x38] sm:$0xf]
        %v2837 = vld [vmem:[%s13 + $0x3c] sm:$0xf]
        %v2838 = vpack.c.bf16 %v2791, %v2790
        %v2839 = vpack.c.bf16 %v2793, %v2792
        %v2840 = vpack.c.bf16 %v2795, %v2794
        %v2841 = vpack.c.bf16 %v2797, %v2796
        %v2842 = vpack.c.bf16 %v2799, %v2798
        %v2843 = vpack.c.bf16 %v2801, %v2800
        %v2844 = vpack.c.bf16 %v2803, %v2802
        %v2845 = vpack.c.bf16 %v2805, %v2804
        %v2846 = vpack.c.bf16 %v2807, %v2806
        %v2847 = vpack.c.bf16 %v2809, %v2808
        %v2848 = vpack.c.bf16 %v2811, %v2810
        %v2849 = vpack.c.bf16 %v2813, %v2812
        %v2850 = vpack.c.bf16 %v2815, %v2814
        %v2851 = vpack.c.bf16 %v2817, %v2816
        %v2852 = vpack.c.bf16 %v2819, %v2818
        %v2853 = vpack.c.bf16 %v2821, %v2820
        %v2854 = vld [vmem:[%s14] sm:$0x1]
        %v2856 = vlaneseq
        %v2857 = vshrl.u32 %v2856, 7
        %v2858 = vsub.s32 0, %v2857
        %v2859 = vrot.slane %v2854, %v2858
        %v2877 = vunpack.c.l.b16 %v2822
        %v2878 = vunpack.c.l.b16 %v2823
        %v2879 = vunpack.c.l.b16 %v2824
        %v2880 = vunpack.c.l.b16 %v2825
        %v2881 = vunpack.c.l.b16 %v2826
        %v2882 = vunpack.c.l.b16 %v2827
        %v2883 = vunpack.c.l.b16 %v2828
        %v2884 = vunpack.c.l.b16 %v2829
        %v2885 = vunpack.c.l.b16 %v2830
        %v2886 = vunpack.c.l.b16 %v2831
        %v2887 = vunpack.c.l.b16 %v2832
        %v2888 = vunpack.c.l.b16 %v2833
        %v2889 = vunpack.c.l.b16 %v2834
        %v2890 = vunpack.c.l.b16 %v2835
        %v2891 = vunpack.c.l.b16 %v2836
        %v2892 = vunpack.c.l.b16 %v2837
        %v2893 = vpack.c.b16 %v2878, %v2877
        %v2894 = vpack.c.b16 %v2880, %v2879
        %v2895 = vpack.c.b16 %v2882, %v2881
        %v2896 = vpack.c.b16 %v2884, %v2883
        %v2897 = vpack.c.b16 %v2886, %v2885
        %v2898 = vpack.c.b16 %v2888, %v2887
        %v2899 = vpack.c.b16 %v2890, %v2889
        %v2900 = vpack.c.b16 %v2892, %v2891
        %2909 = vmatprep.subr.bf16.mxu0 0
        %2910 = vmatpush1.bf16.msra.mxu0 %v2893
        %2911 = vmatprep.subr.bf16.mxu0 0
        %2912 = vmatpush1.bf16.msra.mxu0 %v2894
        %2913 = vmatprep.subr.bf16.mxu0 0
        %2914 = vmatpush1.bf16.msra.mxu0 %v2895
        %2915 = vmatprep.subr.bf16.mxu0 0
        %2916 = vmatpush1.bf16.msra.mxu0 %v2896
        %2917 = vmatprep.subr.bf16.mxu0 0
        %2918 = vmatpush1.bf16.msra.mxu0 %v2897
        %2919 = vmatprep.subr.bf16.mxu0 0
        %2920 = vmatpush1.bf16.msra.mxu0 %v2898
        %2921 = vmatprep.subr.bf16.mxu0 0
        %2922 = vmatpush1.bf16.msra.mxu0 %v2899
        %2923 = vmatprep.subr.bf16.mxu0 0
        %2924 = vmatpush1.bf16.msra.mxu0 %v2900
        %2925 = vmatprep.subr.bf16.mxu0 0
        %2926 = vmatpush1.bf16.msra.mxu0 0
        %2927 = vmatprep.subr.bf16.mxu0 0
        %2928 = vmatpush1.bf16.msra.mxu0 0
        %2929 = vmatprep.subr.bf16.mxu0 0
        %2930 = vmatpush1.bf16.msra.mxu0 0
        %2931 = vmatprep.subr.bf16.mxu0 0
        %2932 = vmatpush1.bf16.msra.mxu0 0
        %2933 = vmatprep.subr.bf16.mxu0 0
        %2934 = vmatpush1.bf16.msra.mxu0 0
        %2935 = vmatprep.subr.bf16.mxu0 0
        %2936 = vmatpush1.bf16.msra.mxu0 0
        %2937 = vmatprep.subr.bf16.mxu0 0
        %2938 = vmatpush1.bf16.msra.mxu0 0
        %2939 = vmatprep.subr.bf16.mxu0 0
        %2940 = vmatpush1.bf16.msra.mxu0 0
        %2941 = vmatprep.mubr.bf16.mxu0 0
        %2942 = vmatmul.mubr.bf16.gmra.mrb[0].mxu0 %v2838
        %v2943 = vpop.f32.mrb[0].mxu0
        %v2944 = vadd.f32 %v2859, %v2943
        %v2945 = vpop.f32.mrb[0].mxu0
        %v2946 = vpop.f32.mrb[0].mxu0
        %v2947 = vadd.f32 %v2859, %v2946
        %v2948 = vpop.f32.mrb[0].mxu0
        %2949 = vmatprep.mubr.bf16.mxu0 0
        %2950 = vmatmul.mubr.bf16.gmra.mrb[0].mxu0 %v2839
        %v2951 = vpop.f32.mrb[0].mxu0
        %v2952 = vadd.f32 %v2859, %v2951
        %v2953 = vpop.f32.mrb[0].mxu0
        %v2954 = vpop.f32.mrb[0].mxu0
        %v2955 = vadd.f32 %v2859, %v2954
        %v2956 = vpop.f32.mrb[0].mxu0
        %2957 = vmatprep.mubr.bf16.mxu0 0
        %2958 = vmatmul.mubr.bf16.gmra.mrb[0].mxu0 %v2840
        %v2959 = vpop.f32.mrb[0].mxu0
        %v2960 = vadd.f32 %v2859, %v2959
        %v2961 = vpop.f32.mrb[0].mxu0
        %v2962 = vpop.f32.mrb[0].mxu0
        %v2963 = vadd.f32 %v2859, %v2962
        %v2964 = vpop.f32.mrb[0].mxu0
        %2965 = vmatprep.mubr.bf16.mxu0 0
        %2966 = vmatmul.mubr.bf16.gmra.mrb[0].mxu0 %v2841
        %v2967 = vpop.f32.mrb[0].mxu0
        %v2968 = vadd.f32 %v2859, %v2967
        %v2969 = vpop.f32.mrb[0].mxu0
        %v2970 = vpop.f32.mrb[0].mxu0
        %v2971 = vadd.f32 %v2859, %v2970
        %v2972 = vpop.f32.mrb[0].mxu0
        %2973 = vmatprep.mubr.bf16.mxu0 0
        %2974 = vmatmul.mubr.bf16.gmra.mrb[0].mxu0 %v2842
        %v2975 = vpop.f32.mrb[0].mxu0
        %v2976 = vadd.f32 %v2859, %v2975
        %v2977 = vpop.f32.mrb[0].mxu0
        %v2978 = vpop.f32.mrb[0].mxu0
        %v2979 = vadd.f32 %v2859, %v2978
        %v2980 = vpop.f32.mrb[0].mxu0
        %2981 = vmatprep.mubr.bf16.mxu0 0
        %2982 = vmatmul.mubr.bf16.gmra.mrb[0].mxu0 %v2843
        %v2983 = vpop.f32.mrb[0].mxu0
        %v2984 = vadd.f32 %v2859, %v2983
        %v2985 = vpop.f32.mrb[0].mxu0
        %v2986 = vpop.f32.mrb[0].mxu0
        %v2987 = vadd.f32 %v2859, %v2986
        %v2988 = vpop.f32.mrb[0].mxu0
        %2989 = vmatprep.mubr.bf16.mxu0 0
        %2990 = vmatmul.mubr.bf16.gmra.mrb[0].mxu0 %v2844
        %v2991 = vpop.f32.mrb[0].mxu0
        %v2992 = vadd.f32 %v2859, %v2991
        %v2993 = vpop.f32.mrb[0].mxu0
        %v2994 = vpop.f32.mrb[0].mxu0
        %v2995 = vadd.f32 %v2859, %v2994
        %v2996 = vpop.f32.mrb[0].mxu0
        %2997 = vmatprep.mubr.bf16.mxu0 0
        %2998 = vmatmul.mubr.bf16.gmra.mrb[0].mxu0 %v2845
        %v2999 = vpop.f32.mrb[0].mxu0
        %v3000 = vadd.f32 %v2859, %v2999
        %v3001 = vpop.f32.mrb[0].mxu0
        %v3002 = vpop.f32.mrb[0].mxu0
        %v3003 = vadd.f32 %v2859, %v3002
        %v3004 = vpop.f32.mrb[0].mxu0
        %3005 = vmatprep.mubr.bf16.mxu0 0
        %3006 = vmatmul.mubr.bf16.gmra.mrb[0].mxu0 %v2846
        %v3007 = vpop.f32.mrb[0].mxu0
        %v3008 = vadd.f32 %v2859, %v3007
        %v3009 = vpop.f32.mrb[0].mxu0
        %v3010 = vpop.f32.mrb[0].mxu0
        %v3011 = vadd.f32 %v2859, %v3010
        %v3012 = vpop.f32.mrb[0].mxu0
        %3013 = vmatprep.mubr.bf16.mxu0 0
        %3014 = vmatmul.mubr.bf16.gmra.mrb[0].mxu0 %v2847
        %v3015 = vpop.f32.mrb[0].mxu0
        %v3016 = vadd.f32 %v2859, %v3015
        %v3017 = vpop.f32.mrb[0].mxu0
        %v3018 = vpop.f32.mrb[0].mxu0
        %v3019 = vadd.f32 %v2859, %v3018
        %v3020 = vpop.f32.mrb[0].mxu0
        %3021 = vmatprep.mubr.bf16.mxu0 0
        %3022 = vmatmul.mubr.bf16.gmra.mrb[0].mxu0 %v2848
        %v3023 = vpop.f32.mrb[0].mxu0
        %v3024 = vadd.f32 %v2859, %v3023
        %v3025 = vpop.f32.mrb[0].mxu0
        %v3026 = vpop.f32.mrb[0].mxu0
        %v3027 = vadd.f32 %v2859, %v3026
        %v3028 = vpop.f32.mrb[0].mxu0
        %3029 = vmatprep.mubr.bf16.mxu0 0
        %3030 = vmatmul.mubr.bf16.gmra.mrb[0].mxu0 %v2849
        %v3031 = vpop.f32.mrb[0].mxu0
        %v3032 = vadd.f32 %v2859, %v3031
        %v3033 = vpop.f32.mrb[0].mxu0
        %v3034 = vpop.f32.mrb[0].mxu0
        %v3035 = vadd.f32 %v2859, %v3034
        %v3036 = vpop.f32.mrb[0].mxu0
        %3037 = vmatprep.mubr.bf16.mxu0 0
        %3038 = vmatmul.mubr.bf16.gmra.mrb[0].mxu0 %v2850
        %v3039 = vpop.f32.mrb[0].mxu0
        %v3040 = vadd.f32 %v2859, %v3039
        %v3041 = vpop.f32.mrb[0].mxu0
        %v3042 = vpop.f32.mrb[0].mxu0
        %v3043 = vadd.f32 %v2859, %v3042
        %v3044 = vpop.f32.mrb[0].mxu0
        %3045 = vmatprep.mubr.bf16.mxu0 0
        %3046 = vmatmul.mubr.bf16.gmra.mrb[0].mxu0 %v2851
        %v3047 = vpop.f32.mrb[0].mxu0
        %v3048 = vadd.f32 %v2859, %v3047
        %v3049 = vpop.f32.mrb[0].mxu0
        %v3050 = vpop.f32.mrb[0].mxu0
        %v3051 = vadd.f32 %v2859, %v3050
        %v3052 = vpop.f32.mrb[0].mxu0
        %3053 = vmatprep.mubr.bf16.mxu0 0
        %3054 = vmatmul.mubr.bf16.gmra.mrb[0].mxu0 %v2852
        %v3055 = vpop.f32.mrb[0].mxu0
        %v3056 = vadd.f32 %v2859, %v3055
        %v3057 = vpop.f32.mrb[0].mxu0
        %v3058 = vpop.f32.mrb[0].mxu0
        %v3059 = vadd.f32 %v2859, %v3058
        %v3060 = vpop.f32.mrb[0].mxu0
        %3061 = vmatprep.mubr.bf16.mxu0 0
        %3062 = vmatmul.mubr.bf16.gmra.mrb[0].mxu0 %v2853
        %v3063 = vpop.f32.mrb[0].mxu0
        %v3064 = vadd.f32 %v2859, %v3063
        %v3065 = vpop.f32.mrb[0].mxu0
        %v3066 = vpop.f32.mrb[0].mxu0
        %v3067 = vadd.f32 %v2859, %v3066
        %v3068 = vpop.f32.mrb[0].mxu0
        %3069 = vdwg.mxu0
        %3070 = vst [vmem:[%s584] sm:$0xff] %v2944
        %3071 = vst [vmem:[%s584 + $0x8] sm:$0xff] %v2947
        %3072 = vst [vmem:[%s584 + $0x10] sm:$0xff] %v2952
        %3073 = vst [vmem:[%s584 + $0x18] sm:$0xff] %v2955
        %3074 = vst [vmem:[%s584 + $0x20] sm:$0xff] %v2960
        %3075 = vst [vmem:[%s584 + $0x28] sm:$0xff] %v2963
        %3076 = vst [vmem:[%s584 + $0x30] sm:$0xff] %v2968
        %3077 = vst [vmem:[%s584 + $0x38] sm:$0xff] %v2971
        %3078 = vst [vmem:[%s584 + $0x40] sm:$0xff] %v2976
        %3079 = vst [vmem:[%s584 + $0x48] sm:$0xff] %v2979
        %3080 = vst [vmem:[%s584 + $0x50] sm:$0xff] %v2984
        %3081 = vst [vmem:[%s584 + $0x58] sm:$0xff] %v2987
        %3082 = vst [vmem:[%s584 + $0x60] sm:$0xff] %v2992
        %3083 = vst [vmem:[%s584 + $0x68] sm:$0xff] %v2995
        %3084 = vst [vmem:[%s584 + $0x70] sm:$0xff] %v3000
        %3085 = vst [vmem:[%s584 + $0x78] sm:$0xff] %v3003
        %3086 = vst [vmem:[%s584 + $0x80] sm:$0xff] %v3008
        %3087 = vst [vmem:[%s584 + $0x88] sm:$0xff] %v3011
        %3088 = vst [vmem:[%s584 + $0x90] sm:$0xff] %v3016
        %3089 = vst [vmem:[%s584 + $0x98] sm:$0xff] %v3019
        %3090 = vst [vmem:[%s584 + $0xa0] sm:$0xff] %v3024
        %3091 = vst [vmem:[%s584 + $0xa8] sm:$0xff] %v3027
        %3092 = vst [vmem:[%s584 + $0xb0] sm:$0xff] %v3032
        %3093 = vst [vmem:[%s584 + $0xb8] sm:$0xff] %v3035
        %3094 = vst [vmem:[%s584 + $0xc0] sm:$0xff] %v3040
        %3095 = vst [vmem:[%s584 + $0xc8] sm:$0xff] %v3043
        %3096 = vst [vmem:[%s584 + $0xd0] sm:$0xff] %v3048
        %3097 = vst [vmem:[%s584 + $0xd8] sm:$0xff] %v3051
        %3098 = vst [vmem:[%s584 + $0xe0] sm:$0xff] %v3056
        %3099 = vst [vmem:[%s584 + $0xe8] sm:$0xff] %v3059
        %3100 = vst [vmem:[%s584 + $0xf0] sm:$0xff] %v3064
        %3101 = vst [vmem:[%s584 + $0xf8] sm:$0xff] %v3067
        %v3102 = vpack.c.bf16 %v2947, %v2944
        %v3103 = vpack.c.bf16 %v2955, %v2952
        %v3104 = vpack.c.bf16 %v2963, %v2960
        %v3105 = vpack.c.bf16 %v2971, %v2968
        %v3106 = vpack.c.bf16 %v2979, %v2976
        %v3107 = vpack.c.bf16 %v2987, %v2984
        %v3108 = vpack.c.bf16 %v2995, %v2992
        %v3109 = vpack.c.bf16 %v3003, %v3000
        %v3110 = vpack.c.bf16 %v3011, %v3008
        %v3111 = vpack.c.bf16 %v3019, %v3016
        %v3112 = vpack.c.bf16 %v3027, %v3024
        %v3113 = vpack.c.bf16 %v3035, %v3032
        %v3114 = vpack.c.bf16 %v3043, %v3040
        %v3115 = vpack.c.bf16 %v3051, %v3048
        %v3116 = vpack.c.bf16 %v3059, %v3056
        %v3117 = vpack.c.bf16 %v3067, %v3064
        %v3134 = vunpack.c.l.b16 %v3102
        %v3135 = vunpack.c.h.b16 %v3102
        %v3136 = vunpack.c.l.b16 %v3103
        %v3137 = vunpack.c.h.b16 %v3103
        %v3138 = vunpack.c.l.b16 %v3104
        %v3139 = vunpack.c.h.b16 %v3104
        %v3140 = vunpack.c.l.b16 %v3105
        %v3141 = vunpack.c.h.b16 %v3105
        %v3142 = vunpack.c.l.b16 %v3106
        %v3143 = vunpack.c.h.b16 %v3106
        %v3144 = vunpack.c.l.b16 %v3107
        %v3145 = vunpack.c.h.b16 %v3107
        %v3146 = vunpack.c.l.b16 %v3108
        %v3147 = vunpack.c.h.b16 %v3108
        %v3148 = vunpack.c.l.b16 %v3109
        %v3149 = vunpack.c.h.b16 %v3109
        %v3150 = vunpack.c.l.b16 %v3110
        %v3151 = vunpack.c.h.b16 %v3110
        %v3152 = vunpack.c.l.b16 %v3111
        %v3153 = vunpack.c.h.b16 %v3111
        %v3154 = vunpack.c.l.b16 %v3112
        %v3155 = vunpack.c.h.b16 %v3112
        %v3156 = vunpack.c.l.b16 %v3113
        %v3157 = vunpack.c.h.b16 %v3113
        %v3158 = vunpack.c.l.b16 %v3114
        %v3159 = vunpack.c.h.b16 %v3114
        %v3160 = vunpack.c.l.b16 %v3115
        %v3161 = vunpack.c.h.b16 %v3115
        %v3162 = vunpack.c.l.b16 %v3116
        %v3163 = vunpack.c.h.b16 %v3116
        %v3164 = vunpack.c.l.b16 %v3117
        %v3165 = vunpack.c.h.b16 %v3117
        %v3166 = vpack.c.b16 %v3134, %v3134
        %v3167 = vpack.c.b16 %v3135, %v3135
        %v3168 = vpack.c.b16 %v3136, %v3136
        %v3169 = vpack.c.b16 %v3137, %v3137
        %v3170 = vpack.c.b16 %v3138, %v3138
        %v3171 = vpack.c.b16 %v3139, %v3139
        %v3172 = vpack.c.b16 %v3140, %v3140
        %v3173 = vpack.c.b16 %v3141, %v3141
        %v3174 = vpack.c.b16 %v3142, %v3142
        %v3175 = vpack.c.b16 %v3143, %v3143
        %v3176 = vpack.c.b16 %v3144, %v3144
        %v3177 = vpack.c.b16 %v3145, %v3145
        %v3178 = vpack.c.b16 %v3146, %v3146
        %v3179 = vpack.c.b16 %v3147, %v3147
        %v3180 = vpack.c.b16 %v3148, %v3148
        %v3181 = vpack.c.b16 %v3149, %v3149
        %v3182 = vpack.c.b16 %v3150, %v3150
        %v3183 = vpack.c.b16 %v3151, %v3151
        %v3184 = vpack.c.b16 %v3152, %v3152
        %v3185 = vpack.c.b16 %v3153, %v3153
        %v3186 = vpack.c.b16 %v3154, %v3154
        %v3187 = vpack.c.b16 %v3155, %v3155
        %v3188 = vpack.c.b16 %v3156, %v3156
        %v3189 = vpack.c.b16 %v3157, %v3157
        %v3190 = vpack.c.b16 %v3158, %v3158
        %v3191 = vpack.c.b16 %v3159, %v3159
        %v3192 = vpack.c.b16 %v3160, %v3160
        %v3193 = vpack.c.b16 %v3161, %v3161
        %v3194 = vpack.c.b16 %v3162, %v3162
        %v3195 = vpack.c.b16 %v3163, %v3163
        %v3196 = vpack.c.b16 %v3164, %v3164
        %v3197 = vpack.c.b16 %v3165, %v3165
        %3230 = vst [vmem:[%s590] sm:$0xf] %v3166
        %3231 = vst [vmem:[%s590 + $0x4] sm:$0xf] %v3167
        %3232 = vst [vmem:[%s590 + $0x8] sm:$0xf] %v3168
        %3233 = vst [vmem:[%s590 + $0xc] sm:$0xf] %v3169
        %3234 = vst [vmem:[%s590 + $0x10] sm:$0xf] %v3170
        %3235 = vst [vmem:[%s590 + $0x14] sm:$0xf] %v3171
        %3236 = vst [vmem:[%s590 + $0x18] sm:$0xf] %v3172
        %3237 = vst [vmem:[%s590 + $0x1c] sm:$0xf] %v3173
        %3238 = vst [vmem:[%s590 + $0x20] sm:$0xf] %v3174
        %3239 = vst [vmem:[%s590 + $0x24] sm:$0xf] %v3175
        %3240 = vst [vmem:[%s590 + $0x28] sm:$0xf] %v3176
        %3241 = vst [vmem:[%s590 + $0x2c] sm:$0xf] %v3177
        %3242 = vst [vmem:[%s590 + $0x30] sm:$0xf] %v3178
        %3243 = vst [vmem:[%s590 + $0x34] sm:$0xf] %v3179
        %3244 = vst [vmem:[%s590 + $0x38] sm:$0xf] %v3180
        %3245 = vst [vmem:[%s590 + $0x3c] sm:$0xf] %v3181
        %3246 = vst [vmem:[%s590 + $0x40] sm:$0xf] %v3182
        %3247 = vst [vmem:[%s590 + $0x44] sm:$0xf] %v3183
        %3248 = vst [vmem:[%s590 + $0x48] sm:$0xf] %v3184
        %3249 = vst [vmem:[%s590 + $0x4c] sm:$0xf] %v3185
        %3250 = vst [vmem:[%s590 + $0x50] sm:$0xf] %v3186
        %3251 = vst [vmem:[%s590 + $0x54] sm:$0xf] %v3187
        %3252 = vst [vmem:[%s590 + $0x58] sm:$0xf] %v3188
        %3253 = vst [vmem:[%s590 + $0x5c] sm:$0xf] %v3189
        %3254 = vst [vmem:[%s590 + $0x60] sm:$0xf] %v3190
        %3255 = vst [vmem:[%s590 + $0x64] sm:$0xf] %v3191
        %3256 = vst [vmem:[%s590 + $0x68] sm:$0xf] %v3192
        %3257 = vst [vmem:[%s590 + $0x6c] sm:$0xf] %v3193
        %3258 = vst [vmem:[%s590 + $0x70] sm:$0xf] %v3194
        %3259 = vst [vmem:[%s590 + $0x74] sm:$0xf] %v3195
        %3260 = vst [vmem:[%s590 + $0x78] sm:$0xf] %v3196
        %3261 = vst [vmem:[%s590 + $0x7c] sm:$0xf] %v3197
      $region88: #{gcn_layer_forward.2} parent=79 // pred_fallthru
        _
      %s3262 = smul.u32 32, %s32
      %p3263 = scmp.lt.s32.totalorder %s3262, 63
      %s3264 = scalar_select %p3263, %s3262, 63
      %s3265 = smul.addr %s3264, 8
      %s3266 = scalar_lea.vmem %s15, %s3265
      %s3267 = smul.u32 32, %s32
      %p3268 = scmp.lt.s32.totalorder %s3267, 63
      %s3269 = scalar_select %p3268, %s3267, 63
      %s3270 = smul.addr %s3269, 4
      %s3271 = scalar_lea.vmem %s16, %s3270
      // Predicated region
      $region89: #{gcn_layer_forward.2} parent=79 // pred_check
        %p3272 = pneg %p385
      $region90: #{gcn_layer_forward.2} parent=79 // pred_check_branch
        %3274 = sbr.rel (%p3272) target = $region92
      $region91: #{gcn_layer_forward.2} parent=79 // pred_region
        %s3275 = smul.u32 32, %s32
      $region92: #{gcn_layer_forward.2} parent=79 // pred_fallthru
        _
      // Predicated region
      $region93: #{gcn_layer_forward.2} parent=79 // pred_check
        %p3276 = pneg %p411
      $region94: #{gcn_layer_forward.2} parent=79 // pred_check_branch
        %3278 = sbr.rel (%p3276) target = $region96
      $region95: #{gcn_layer_forward.2} parent=79 // pred_region
        %s3279 = smul.u32 32, %s32
      $region96: #{gcn_layer_forward.2} parent=79 // pred_fallthru
        _
    $region80: #{gcn_layer_forward.2} parent=5 // pred_fallthru
      _
    %p3280 = scmp.le.s32.totalorder 2, %s23
    // Predicated region
    $region97: #{gcn_layer_forward.2} parent=5 // pred_check
      %p3281 = pneg %p3280
    $region98: #{gcn_layer_forward.2} parent=5 // pred_check_branch
      %3283 = sbr.rel (%p3281) target = $region100
    $region99: #{gcn_layer_forward.2} parent=5 // pred_region
      %s3284 = ssub.s32 %s23, 2
      // Predicated region
      $region101: #{gcn_layer_forward.2} parent=99 // pred_check
        %p3285 = pneg %p391
      $region102: #{gcn_layer_forward.2} parent=99 // pred_check_branch
        %3287 = sbr.rel (%p3285) target = $region104
      $region103: #{gcn_layer_forward.2} parent=99 // pred_region
        %s3288 = smul.u32 32, %s34
        %p3289 = scmp.lt.s32.totalorder %s3288, 63
        %s3290 = scalar_select %p3289, %s3288, 63
        %s3291 = smul.addr %s3290, 8
        %s3292 = scalar_lea.vmem %s15, %s3291
      $region104: #{gcn_layer_forward.2} parent=99 // pred_fallthru
        _
      // Predicated region
      $region105: #{gcn_layer_forward.2} parent=99 // pred_check
        %p3293 = pneg %p417
      $region106: #{gcn_layer_forward.2} parent=99 // pred_check_branch
        %3295 = sbr.rel (%p3293) target = $region108
      $region107: #{gcn_layer_forward.2} parent=99 // pred_region
        %s3296 = smul.u32 32, %s34
        %p3297 = scmp.lt.s32.totalorder %s3296, 63
        %s3298 = scalar_select %p3297, %s3296, 63
        %s3299 = smul.addr %s3298, 4
        %s3300 = scalar_lea.vmem %s16, %s3299
      $region108: #{gcn_layer_forward.2} parent=99 // pred_fallthru
        _
    $region100: #{gcn_layer_forward.2} parent=5 // pred_fallthru
      _
  $region6: #{gcn_layer_forward.2} parent=0 // loop_footer
    %s27 = sadd.s32 1, %s23
  $region7: #{gcn_layer_forward.2} parent=0 // loop_footer_branch
    %22 = sbr.rel target = $region3
  $region8: #{gcn_layer_forward.2} parent=0 // loop_exit
    _

// kernel: gcn_layer_forward.3
$region0: #{gcn_layer_forward.3}
  #allocation0 [shape = 'u32[]', space=smem, size = 0x4, offset = 0x4, fixed_abs, tag = 'smem constant byte address 0x4 - core index']
  #allocation1 [shape = 'u32[144,128]{1,0:T(1,128)}', space=vmem, size = 0x12000, scoped, tag = 'internal scratch']
  #allocation2 [shape = 'f32[256,128]{1,0:T(8,128)}', space=vmem, size = 0x20000, scoped, tag = 'scratch operand']
  %s0 = inlined_call_operand.vmem [shape: bf16[512,256], index: 0, kind: input, shape index: {}]
  %s1 = inlined_call_operand.vmem [shape: bf16[512,128], index: 1, kind: input, shape index: {}]
  %s2 = inlined_call_operand.vmem [shape: bf16[256,128], index: 2, kind: input, shape index: {}]
  %s3 = inlined_call_operand.vmem [shape: bf16[128,128], index: 3, kind: input, shape index: {}]
  %s4 = inlined_call_operand.vmem [shape: f32[1,128], index: 4, kind: input, shape index: {}]
  %s5 = inlined_call_operand.vmem [shape: bf16[128,128], index: 5, kind: input, shape index: {}]
  %s6 = inlined_call_operand.vmem [shape: f32[1,128], index: 6, kind: input, shape index: {}]
  %s7 = inlined_call_operand.vmem [shape: bf16[128,128], index: 7, kind: input, shape index: {}]
  %s8 = inlined_call_operand.vmem [shape: f32[1,128], index: 8, kind: input, shape index: {}]
  %s9 = inlined_call_operand.vmem [shape: bf16[128,128], index: 9, kind: input, shape index: {}]
  %s10 = inlined_call_operand.vmem [shape: f32[1,128], index: 10, kind: input, shape index: {}]
  %s11 = inlined_call_operand.vmem [shape: bf16[128,128], index: 11, kind: input, shape index: {}]
  %s12 = inlined_call_operand.vmem [shape: f32[1,128], index: 12, kind: input, shape index: {}]
  %s13 = inlined_call_operand.vmem [shape: bf16[128,128], index: 13, kind: input, shape index: {}]
  %s14 = inlined_call_operand.vmem [shape: f32[1,128], index: 14, kind: input, shape index: {}]
  %s15 = inlined_call_operand.vmem [shape: f32[256,128], index: 15, kind: output, shape index: {}]
  %s16 = sld [smem:[#allocation0]]
  $region78: #{gcn_layer_forward.3} parent=0
    _
  %s18 = ssub.s32 1, %s16
  %s19 = scalar_select 0, %s18, %s16
  // Predicated region
  $region2: #{gcn_layer_forward.3} parent=0 // pred_check
    _
  $region3: #{gcn_layer_forward.3} parent=0 // pred_check_branch
    %21 = sbr.rel (0) target = $region5
  $region4: #{gcn_layer_forward.3} parent=0 // pred_region
    _
  $region5: #{gcn_layer_forward.3} parent=0 // pred_fallthru
    _
  // Predicated region
  $region6: #{gcn_layer_forward.3} parent=0 // pred_check
    _
  $region7: #{gcn_layer_forward.3} parent=0 // pred_check_branch
    %23 = sbr.rel (0) target = $region9
  $region8: #{gcn_layer_forward.3} parent=0 // pred_region
    _
  $region9: #{gcn_layer_forward.3} parent=0 // pred_fallthru
    _
  // Predicated region
  $region10: #{gcn_layer_forward.3} parent=0 // pred_check
    _
  $region11: #{gcn_layer_forward.3} parent=0 // pred_check_branch
    %25 = sbr.rel (0) target = $region13
  $region12: #{gcn_layer_forward.3} parent=0 // pred_region
    _
  $region13: #{gcn_layer_forward.3} parent=0 // pred_fallthru
    _
  // Predicated region
  $region14: #{gcn_layer_forward.3} parent=0 // pred_check
    _
  $region15: #{gcn_layer_forward.3} parent=0 // pred_check_branch
    %27 = sbr.rel (0) target = $region17
  $region16: #{gcn_layer_forward.3} parent=0 // pred_region
    _
  $region17: #{gcn_layer_forward.3} parent=0 // pred_fallthru
    _
  // Predicated region
  $region18: #{gcn_layer_forward.3} parent=0 // pred_check
    _
  $region19: #{gcn_layer_forward.3} parent=0 // pred_check_branch
    %29 = sbr.rel (0) target = $region21
  $region20: #{gcn_layer_forward.3} parent=0 // pred_region
    _
  $region21: #{gcn_layer_forward.3} parent=0 // pred_fallthru
    _
  // Predicated region
  $region22: #{gcn_layer_forward.3} parent=0 // pred_check
    _
  $region23: #{gcn_layer_forward.3} parent=0 // pred_check_branch
    %31 = sbr.rel (0) target = $region25
  $region24: #{gcn_layer_forward.3} parent=0 // pred_region
    _
  $region25: #{gcn_layer_forward.3} parent=0 // pred_fallthru
    _
  // Predicated region
  $region26: #{gcn_layer_forward.3} parent=0 // pred_check
    _
  $region27: #{gcn_layer_forward.3} parent=0 // pred_check_branch
    %33 = sbr.rel (0) target = $region29
  $region28: #{gcn_layer_forward.3} parent=0 // pred_region
    _
  $region29: #{gcn_layer_forward.3} parent=0 // pred_fallthru
    _
  // Predicated region
  $region30: #{gcn_layer_forward.3} parent=0 // pred_check
    _
  $region31: #{gcn_layer_forward.3} parent=0 // pred_check_branch
    %35 = sbr.rel (0) target = $region33
  $region32: #{gcn_layer_forward.3} parent=0 // pred_region
    _
  $region33: #{gcn_layer_forward.3} parent=0 // pred_fallthru
    _
  // Predicated region
  $region34: #{gcn_layer_forward.3} parent=0 // pred_check
    _
  $region35: #{gcn_layer_forward.3} parent=0 // pred_check_branch
    %37 = sbr.rel (0) target = $region37
  $region36: #{gcn_layer_forward.3} parent=0 // pred_region
    _
  $region37: #{gcn_layer_forward.3} parent=0 // pred_fallthru
    _
  // Predicated region
  $region38: #{gcn_layer_forward.3} parent=0 // pred_check
    _
  $region39: #{gcn_layer_forward.3} parent=0 // pred_check_branch
    %39 = sbr.rel (0) target = $region41
  $region40: #{gcn_layer_forward.3} parent=0 // pred_region
    _
  $region41: #{gcn_layer_forward.3} parent=0 // pred_fallthru
    _
  // Predicated region
  $region42: #{gcn_layer_forward.3} parent=0 // pred_check
    _
  $region43: #{gcn_layer_forward.3} parent=0 // pred_check_branch
    %41 = sbr.rel (0) target = $region45
  $region44: #{gcn_layer_forward.3} parent=0 // pred_region
    _
  $region45: #{gcn_layer_forward.3} parent=0 // pred_fallthru
    _
  // Predicated region
  $region46: #{gcn_layer_forward.3} parent=0 // pred_check
    _
  $region47: #{gcn_layer_forward.3} parent=0 // pred_check_branch
    %43 = sbr.rel (0) target = $region49
  $region48: #{gcn_layer_forward.3} parent=0 // pred_region
    _
  $region49: #{gcn_layer_forward.3} parent=0 // pred_fallthru
    _
  // Predicated region
  $region50: #{gcn_layer_forward.3} parent=0 // pred_check
    _
  $region51: #{gcn_layer_forward.3} parent=0 // pred_check_branch
    %45 = sbr.rel (0) target = $region53
  $region52: #{gcn_layer_forward.3} parent=0 // pred_region
    _
  $region53: #{gcn_layer_forward.3} parent=0 // pred_fallthru
    _
  // Predicated region
  $region54: #{gcn_layer_forward.3} parent=0 // pred_check
    _
  $region55: #{gcn_layer_forward.3} parent=0 // pred_check_branch
    %47 = sbr.rel (0) target = $region57
  $region56: #{gcn_layer_forward.3} parent=0 // pred_region
    _
  $region57: #{gcn_layer_forward.3} parent=0 // pred_fallthru
    _
  // Predicated region
  $region58: #{gcn_layer_forward.3} parent=0 // pred_check
    _
  $region59: #{gcn_layer_forward.3} parent=0 // pred_check_branch
    %49 = sbr.rel (0) target = $region61
  $region60: #{gcn_layer_forward.3} parent=0 // pred_region
    _
  $region61: #{gcn_layer_forward.3} parent=0 // pred_fallthru
    _
  %p51 = scmp.eq.s32.totalorder 0, 0
  // Predicated region
  $region62: #{gcn_layer_forward.3} parent=0 // pred_check
    %p52 = pneg %p51
  $region63: #{gcn_layer_forward.3} parent=0 // pred_check_branch
    %54 = sbr.rel (%p52) target = $region65
  $region64: #{gcn_layer_forward.3} parent=0 // pred_region
    %55 = vst [vmem:[#allocation2] sm:$0xff] 0.0
    %56 = vst [vmem:[#allocation2 + $0x8] sm:$0xff] 0.0
    %57 = vst [vmem:[#allocation2 + $0x10] sm:$0xff] 0.0
    %58 = vst [vmem:[#allocation2 + $0x18] sm:$0xff] 0.0
    %59 = vst [vmem:[#allocation2 + $0x20] sm:$0xff] 0.0
    %60 = vst [vmem:[#allocation2 + $0x28] sm:$0xff] 0.0
    %61 = vst [vmem:[#allocation2 + $0x30] sm:$0xff] 0.0
    %62 = vst [vmem:[#allocation2 + $0x38] sm:$0xff] 0.0
    %63 = vst [vmem:[#allocation2 + $0x40] sm:$0xff] 0.0
    %64 = vst [vmem:[#allocation2 + $0x48] sm:$0xff] 0.0
    %65 = vst [vmem:[#allocation2 + $0x50] sm:$0xff] 0.0
    %66 = vst [vmem:[#allocation2 + $0x58] sm:$0xff] 0.0
    %67 = vst [vmem:[#allocation2 + $0x60] sm:$0xff] 0.0
    %68 = vst [vmem:[#allocation2 + $0x68] sm:$0xff] 0.0
    %69 = vst [vmem:[#allocation2 + $0x70] sm:$0xff] 0.0
    %70 = vst [vmem:[#allocation2 + $0x78] sm:$0xff] 0.0
    %71 = vst [vmem:[#allocation2 + $0x80] sm:$0xff] 0.0
    %72 = vst [vmem:[#allocation2 + $0x88] sm:$0xff] 0.0
    %73 = vst [vmem:[#allocation2 + $0x90] sm:$0xff] 0.0
    %74 = vst [vmem:[#allocation2 + $0x98] sm:$0xff] 0.0
    %75 = vst [vmem:[#allocation2 + $0xa0] sm:$0xff] 0.0
    %76 = vst [vmem:[#allocation2 + $0xa8] sm:$0xff] 0.0
    %77 = vst [vmem:[#allocation2 + $0xb0] sm:$0xff] 0.0
    %78 = vst [vmem:[#allocation2 + $0xb8] sm:$0xff] 0.0
    %79 = vst [vmem:[#allocation2 + $0xc0] sm:$0xff] 0.0
    %80 = vst [vmem:[#allocation2 + $0xc8] sm:$0xff] 0.0
    %81 = vst [vmem:[#allocation2 + $0xd0] sm:$0xff] 0.0
    %82 = vst [vmem:[#allocation2 + $0xd8] sm:$0xff] 0.0
    %83 = vst [vmem:[#allocation2 + $0xe0] sm:$0xff] 0.0
    %84 = vst [vmem:[#allocation2 + $0xe8] sm:$0xff] 0.0
    %85 = vst [vmem:[#allocation2 + $0xf0] sm:$0xff] 0.0
    %86 = vst [vmem:[#allocation2 + $0xf8] sm:$0xff] 0.0
  $region65: #{gcn_layer_forward.3} parent=0 // pred_fallthru
    _
  %s87 = smul.u32 0, 512
  %s88 = sshra.s32 %s87, 3
  %s89 = sand.u32 %s87, 7
  %s90 = smul.addr %s88, 4
  %s91 = scalar_lea.vmem %s1, %s90
  %v92 = vld [vmem:[%s91] sm:$0xf]
  %v93 = vld [vmem:[%s91 + $0x4] sm:$0xf]
  %v94 = vld [vmem:[%s91 + $0x8] sm:$0xf]
  %v95 = vld [vmem:[%s91 + $0xc] sm:$0xf]
  %v96 = vld [vmem:[%s91 + $0x10] sm:$0xf]
  %v97 = vld [vmem:[%s91 + $0x14] sm:$0xf]
  %v98 = vld [vmem:[%s91 + $0x18] sm:$0xf]
  %v99 = vld [vmem:[%s91 + $0x1c] sm:$0xf]
  %v100 = vld [vmem:[%s91 + $0x20] sm:$0xf]
  %v101 = vld [vmem:[%s91 + $0x24] sm:$0xf]
  %v102 = vld [vmem:[%s91 + $0x28] sm:$0xf]
  %v103 = vld [vmem:[%s91 + $0x2c] sm:$0xf]
  %v104 = vld [vmem:[%s91 + $0x30] sm:$0xf]
  %v105 = vld [vmem:[%s91 + $0x34] sm:$0xf]
  %v106 = vld [vmem:[%s91 + $0x38] sm:$0xf]
  %v107 = vld [vmem:[%s91 + $0x3c] sm:$0xf]
  %v108 = vld [vmem:[%s91 + $0x40] sm:$0xf]
  %v109 = vld [vmem:[%s91 + $0x44] sm:$0xf]
  %v110 = vld [vmem:[%s91 + $0x48] sm:$0xf]
  %v111 = vld [vmem:[%s91 + $0x4c] sm:$0xf]
  %v112 = vld [vmem:[%s91 + $0x50] sm:$0xf]
  %v113 = vld [vmem:[%s91 + $0x54] sm:$0xf]
  %v114 = vld [vmem:[%s91 + $0x58] sm:$0xf]
  %v115 = vld [vmem:[%s91 + $0x5c] sm:$0xf]
  %v116 = vld [vmem:[%s91 + $0x60] sm:$0xf]
  %v117 = vld [vmem:[%s91 + $0x64] sm:$0xf]
  %v118 = vld [vmem:[%s91 + $0x68] sm:$0xf]
  %v119 = vld [vmem:[%s91 + $0x6c] sm:$0xf]
  %v120 = vld [vmem:[%s91 + $0x70] sm:$0xf]
  %v121 = vld [vmem:[%s91 + $0x74] sm:$0xf]
  %v122 = vld [vmem:[%s91 + $0x78] sm:$0xf]
  %v123 = vld [vmem:[%s91 + $0x7c] sm:$0xf]
  %v124 = vld [vmem:[%s91 + $0x80] sm:$0xf]
  %v125 = vld [vmem:[%s91 + $0x84] sm:$0xf]
  %v126 = vld [vmem:[%s91 + $0x88] sm:$0xf]
  %v127 = vld [vmem:[%s91 + $0x8c] sm:$0xf]
  %v128 = vld [vmem:[%s91 + $0x90] sm:$0xf]
  %v129 = vld [vmem:[%s91 + $0x94] sm:$0xf]
  %v130 = vld [vmem:[%s91 + $0x98] sm:$0xf]
  %v131 = vld [vmem:[%s91 + $0x9c] sm:$0xf]
  %v132 = vld [vmem:[%s91 + $0xa0] sm:$0xf]
  %v133 = vld [vmem:[%s91 + $0xa4] sm:$0xf]
  %v134 = vld [vmem:[%s91 + $0xa8] sm:$0xf]
  %v135 = vld [vmem:[%s91 + $0xac] sm:$0xf]
  %v136 = vld [vmem:[%s91 + $0xb0] sm:$0xf]
  %v137 = vld [vmem:[%s91 + $0xb4] sm:$0xf]
  %v138 = vld [vmem:[%s91 + $0xb8] sm:$0xf]
  %v139 = vld [vmem:[%s91 + $0xbc] sm:$0xf]
  %v140 = vld [vmem:[%s91 + $0xc0] sm:$0xf]
  %v141 = vld [vmem:[%s91 + $0xc4] sm:$0xf]
  %v142 = vld [vmem:[%s91 + $0xc8] sm:$0xf]
  %v143 = vld [vmem:[%s91 + $0xcc] sm:$0xf]
  %v144 = vld [vmem:[%s91 + $0xd0] sm:$0xf]
  %v145 = vld [vmem:[%s91 + $0xd4] sm:$0xf]
  %v146 = vld [vmem:[%s91 + $0xd8] sm:$0xf]
  %v147 = vld [vmem:[%s91 + $0xdc] sm:$0xf]
  %v148 = vld [vmem:[%s91 + $0xe0] sm:$0xf]
  %v149 = vld [vmem:[%s91 + $0xe4] sm:$0xf]
  %v150 = vld [vmem:[%s91 + $0xe8] sm:$0xf]
  %v151 = vld [vmem:[%s91 + $0xec] sm:$0xf]
  %v152 = vld [vmem:[%s91 + $0xf0] sm:$0xf]
  %v153 = vld [vmem:[%s91 + $0xf4] sm:$0xf]
  %v154 = vld [vmem:[%s91 + $0xf8] sm:$0xf]
  %v155 = vld [vmem:[%s91 + $0xfc] sm:$0xf]
  %v156 = vld [vmem:[#allocation2] sm:$0xff]
  %v157 = vld [vmem:[#allocation2 + $0x8] sm:$0xff]
  %v158 = vld [vmem:[#allocation2 + $0x10] sm:$0xff]
  %v159 = vld [vmem:[#allocation2 + $0x18] sm:$0xff]
  %v160 = vld [vmem:[#allocation2 + $0x20] sm:$0xff]
  %v161 = vld [vmem:[#allocation2 + $0x28] sm:$0xff]
  %v162 = vld [vmem:[#allocation2 + $0x30] sm:$0xff]
  %v163 = vld [vmem:[#allocation2 + $0x38] sm:$0xff]
  %v164 = vld [vmem:[#allocation2 + $0x40] sm:$0xff]
  %v165 = vld [vmem:[#allocation2 + $0x48] sm:$0xff]
  %v166 = vld [vmem:[#allocation2 + $0x50] sm:$0xff]
  %v167 = vld [vmem:[#allocation2 + $0x58] sm:$0xff]
  %v168 = vld [vmem:[#allocation2 + $0x60] sm:$0xff]
  %v169 = vld [vmem:[#allocation2 + $0x68] sm:$0xff]
  %v170 = vld [vmem:[#allocation2 + $0x70] sm:$0xff]
  %v171 = vld [vmem:[#allocation2 + $0x78] sm:$0xff]
  %v172 = vld [vmem:[#allocation2 + $0x80] sm:$0xff]
  %v173 = vld [vmem:[#allocation2 + $0x88] sm:$0xff]
  %v174 = vld [vmem:[#allocation2 + $0x90] sm:$0xff]
  %v175 = vld [vmem:[#allocation2 + $0x98] sm:$0xff]
  %v176 = vld [vmem:[#allocation2 + $0xa0] sm:$0xff]
  %v177 = vld [vmem:[#allocation2 + $0xa8] sm:$0xff]
  %v178 = vld [vmem:[#allocation2 + $0xb0] sm:$0xff]
  %v179 = vld [vmem:[#allocation2 + $0xb8] sm:$0xff]
  %v180 = vld [vmem:[#allocation2 + $0xc0] sm:$0xff]
  %v181 = vld [vmem:[#allocation2 + $0xc8] sm:$0xff]
  %v182 = vld [vmem:[#allocation2 + $0xd0] sm:$0xff]
  %v183 = vld [vmem:[#allocation2 + $0xd8] sm:$0xff]
  %v184 = vld [vmem:[#allocation2 + $0xe0] sm:$0xff]
  %v185 = vld [vmem:[#allocation2 + $0xe8] sm:$0xff]
  %v186 = vld [vmem:[#allocation2 + $0xf0] sm:$0xff]
  %v187 = vld [vmem:[#allocation2 + $0xf8] sm:$0xff]
  %v188 = vld [vmem:[%s0] sm:$0xff]
  %v189 = vld [vmem:[%s0 + $0x8] sm:$0xff]
  %v190 = vld [vmem:[%s0 + $0x10] sm:$0xff]
  %v191 = vld [vmem:[%s0 + $0x18] sm:$0xff]
  %v192 = vld [vmem:[%s0 + $0x20] sm:$0xff]
  %v193 = vld [vmem:[%s0 + $0x28] sm:$0xff]
  %v194 = vld [vmem:[%s0 + $0x30] sm:$0xff]
  %v195 = vld [vmem:[%s0 + $0x38] sm:$0xff]
  %v196 = vld [vmem:[%s0 + $0x40] sm:$0xff]
  %v197 = vld [vmem:[%s0 + $0x48] sm:$0xff]
  %v198 = vld [vmem:[%s0 + $0x50] sm:$0xff]
  %v199 = vld [vmem:[%s0 + $0x58] sm:$0xff]
  %v200 = vld [vmem:[%s0 + $0x60] sm:$0xff]
  %v201 = vld [vmem:[%s0 + $0x68] sm:$0xff]
  %v202 = vld [vmem:[%s0 + $0x70] sm:$0xff]
  %v203 = vld [vmem:[%s0 + $0x78] sm:$0xff]
  %v204 = vld [vmem:[%s0 + $0x80] sm:$0xff]
  %v205 = vld [vmem:[%s0 + $0x88] sm:$0xff]
  %v206 = vld [vmem:[%s0 + $0x90] sm:$0xff]
  %v207 = vld [vmem:[%s0 + $0x98] sm:$0xff]
  %v208 = vld [vmem:[%s0 + $0xa0] sm:$0xff]
  %v209 = vld [vmem:[%s0 + $0xa8] sm:$0xff]
  %v210 = vld [vmem:[%s0 + $0xb0] sm:$0xff]
  %v211 = vld [vmem:[%s0 + $0xb8] sm:$0xff]
  %v212 = vld [vmem:[%s0 + $0xc0] sm:$0xff]
  %v213 = vld [vmem:[%s0 + $0xc8] sm:$0xff]
  %v214 = vld [vmem:[%s0 + $0xd0] sm:$0xff]
  %v215 = vld [vmem:[%s0 + $0xd8] sm:$0xff]
  %v216 = vld [vmem:[%s0 + $0xe0] sm:$0xff]
  %v217 = vld [vmem:[%s0 + $0xe8] sm:$0xff]
  %v218 = vld [vmem:[%s0 + $0xf0] sm:$0xff]
  %v219 = vld [vmem:[%s0 + $0xf8] sm:$0xff]
  %v220 = vld [vmem:[%s0 + $0x100] sm:$0xff]
  %v221 = vld [vmem:[%s0 + $0x108] sm:$0xff]
  %v222 = vld [vmem:[%s0 + $0x110] sm:$0xff]
  %v223 = vld [vmem:[%s0 + $0x118] sm:$0xff]
  %v224 = vld [vmem:[%s0 + $0x120] sm:$0xff]
  %v225 = vld [vmem:[%s0 + $0x128] sm:$0xff]
  %v226 = vld [vmem:[%s0 + $0x130] sm:$0xff]
  %v227 = vld [vmem:[%s0 + $0x138] sm:$0xff]
  %v228 = vld [vmem:[%s0 + $0x140] sm:$0xff]
  %v229 = vld [vmem:[%s0 + $0x148] sm:$0xff]
  %v230 = vld [vmem:[%s0 + $0x150] sm:$0xff]
  %v231 = vld [vmem:[%s0 + $0x158] sm:$0xff]
  %v232 = vld [vmem:[%s0 + $0x160] sm:$0xff]
  %v233 = vld [vmem:[%s0 + $0x168] sm:$0xff]
  %v234 = vld [vmem:[%s0 + $0x170] sm:$0xff]
  %v235 = vld [vmem:[%s0 + $0x178] sm:$0xff]
  %v236 = vld [vmem:[%s0 + $0x180] sm:$0xff]
  %v237 = vld [vmem:[%s0 + $0x188] sm:$0xff]
  %v238 = vld [vmem:[%s0 + $0x190] sm:$0xff]
  %v239 = vld [vmem:[%s0 + $0x198] sm:$0xff]
  %v240 = vld [vmem:[%s0 + $0x1a0] sm:$0xff]
  %v241 = vld [vmem:[%s0 + $0x1a8] sm:$0xff]
  %v242 = vld [vmem:[%s0 + $0x1b0] sm:$0xff]
  %v243 = vld [vmem:[%s0 + $0x1b8] sm:$0xff]
  %v244 = vld [vmem:[%s0 + $0x1c0] sm:$0xff]
  %v245 = vld [vmem:[%s0 + $0x1c8] sm:$0xff]
  %v246 = vld [vmem:[%s0 + $0x1d0] sm:$0xff]
  %v247 = vld [vmem:[%s0 + $0x1d8] sm:$0xff]
  %v248 = vld [vmem:[%s0 + $0x1e0] sm:$0xff]
  %v249 = vld [vmem:[%s0 + $0x1e8] sm:$0xff]
  %v250 = vld [vmem:[%s0 + $0x1f0] sm:$0xff]
  %v251 = vld [vmem:[%s0 + $0x1f8] sm:$0xff]
  %v316 = vunpack.c.l.b16 %v188
  %v317 = vunpack.c.h.b16 %v188
  %v318 = vunpack.c.l.b16 %v189
  %v319 = vunpack.c.h.b16 %v189
  %v320 = vunpack.c.l.b16 %v190
  %v321 = vunpack.c.h.b16 %v190
  %v322 = vunpack.c.l.b16 %v191
  %v323 = vunpack.c.h.b16 %v191
  %v324 = vunpack.c.l.b16 %v192
  %v325 = vunpack.c.h.b16 %v192
  %v326 = vunpack.c.l.b16 %v193
  %v327 = vunpack.c.h.b16 %v193
  %v328 = vunpack.c.l.b16 %v194
  %v329 = vunpack.c.h.b16 %v194
  %v330 = vunpack.c.l.b16 %v195
  %v331 = vunpack.c.h.b16 %v195
  %v332 = vunpack.c.l.b16 %v196
  %v333 = vunpack.c.h.b16 %v196
  %v334 = vunpack.c.l.b16 %v197
  %v335 = vunpack.c.h.b16 %v197
  %v336 = vunpack.c.l.b16 %v198
  %v337 = vunpack.c.h.b16 %v198
  %v338 = vunpack.c.l.b16 %v199
  %v339 = vunpack.c.h.b16 %v199
  %v340 = vunpack.c.l.b16 %v200
  %v341 = vunpack.c.h.b16 %v200
  %v342 = vunpack.c.l.b16 %v201
  %v343 = vunpack.c.h.b16 %v201
  %v344 = vunpack.c.l.b16 %v202
  %v345 = vunpack.c.h.b16 %v202
  %v346 = vunpack.c.l.b16 %v203
  %v347 = vunpack.c.h.b16 %v203
  %v348 = vunpack.c.l.b16 %v204
  %v349 = vunpack.c.h.b16 %v204
  %v350 = vunpack.c.l.b16 %v205
  %v351 = vunpack.c.h.b16 %v205
  %v352 = vunpack.c.l.b16 %v206
  %v353 = vunpack.c.h.b16 %v206
  %v354 = vunpack.c.l.b16 %v207
  %v355 = vunpack.c.h.b16 %v207
  %v356 = vunpack.c.l.b16 %v208
  %v357 = vunpack.c.h.b16 %v208
  %v358 = vunpack.c.l.b16 %v209
  %v359 = vunpack.c.h.b16 %v209
  %v360 = vunpack.c.l.b16 %v210
  %v361 = vunpack.c.h.b16 %v210
  %v362 = vunpack.c.l.b16 %v211
  %v363 = vunpack.c.h.b16 %v211
  %v364 = vunpack.c.l.b16 %v212
  %v365 = vunpack.c.h.b16 %v212
  %v366 = vunpack.c.l.b16 %v213
  %v367 = vunpack.c.h.b16 %v213
  %v368 = vunpack.c.l.b16 %v214
  %v369 = vunpack.c.h.b16 %v214
  %v370 = vunpack.c.l.b16 %v215
  %v371 = vunpack.c.h.b16 %v215
  %v372 = vunpack.c.l.b16 %v216
  %v373 = vunpack.c.h.b16 %v216
  %v374 = vunpack.c.l.b16 %v217
  %v375 = vunpack.c.h.b16 %v217
  %v376 = vunpack.c.l.b16 %v218
  %v377 = vunpack.c.h.b16 %v218
  %v378 = vunpack.c.l.b16 %v219
  %v379 = vunpack.c.h.b16 %v219
  %v380 = vunpack.c.l.b16 %v220
  %v381 = vunpack.c.h.b16 %v220
  %v382 = vunpack.c.l.b16 %v221
  %v383 = vunpack.c.h.b16 %v221
  %v384 = vunpack.c.l.b16 %v222
  %v385 = vunpack.c.h.b16 %v222
  %v386 = vunpack.c.l.b16 %v223
  %v387 = vunpack.c.h.b16 %v223
  %v388 = vunpack.c.l.b16 %v224
  %v389 = vunpack.c.h.b16 %v224
  %v390 = vunpack.c.l.b16 %v225
  %v391 = vunpack.c.h.b16 %v225
  %v392 = vunpack.c.l.b16 %v226
  %v393 = vunpack.c.h.b16 %v226
  %v394 = vunpack.c.l.b16 %v227
  %v395 = vunpack.c.h.b16 %v227
  %v396 = vunpack.c.l.b16 %v228
  %v397 = vunpack.c.h.b16 %v228
  %v398 = vunpack.c.l.b16 %v229
  %v399 = vunpack.c.h.b16 %v229
  %v400 = vunpack.c.l.b16 %v230
  %v401 = vunpack.c.h.b16 %v230
  %v402 = vunpack.c.l.b16 %v231
  %v403 = vunpack.c.h.b16 %v231
  %v404 = vunpack.c.l.b16 %v232
  %v405 = vunpack.c.h.b16 %v232
  %v406 = vunpack.c.l.b16 %v233
  %v407 = vunpack.c.h.b16 %v233
  %v408 = vunpack.c.l.b16 %v234
  %v409 = vunpack.c.h.b16 %v234
  %v410 = vunpack.c.l.b16 %v235
  %v411 = vunpack.c.h.b16 %v235
  %v412 = vunpack.c.l.b16 %v236
  %v413 = vunpack.c.h.b16 %v236
  %v414 = vunpack.c.l.b16 %v237
  %v415 = vunpack.c.h.b16 %v237
  %v416 = vunpack.c.l.b16 %v238
  %v417 = vunpack.c.h.b16 %v238
  %v418 = vunpack.c.l.b16 %v239
  %v419 = vunpack.c.h.b16 %v239
  %v420 = vunpack.c.l.b16 %v240
  %v421 = vunpack.c.h.b16 %v240
  %v422 = vunpack.c.l.b16 %v241
  %v423 = vunpack.c.h.b16 %v241
  %v424 = vunpack.c.l.b16 %v242
  %v425 = vunpack.c.h.b16 %v242
  %v426 = vunpack.c.l.b16 %v243
  %v427 = vunpack.c.h.b16 %v243
  %v428 = vunpack.c.l.b16 %v244
  %v429 = vunpack.c.h.b16 %v244
  %v430 = vunpack.c.l.b16 %v245
  %v431 = vunpack.c.h.b16 %v245
  %v432 = vunpack.c.l.b16 %v246
  %v433 = vunpack.c.h.b16 %v246
  %v434 = vunpack.c.l.b16 %v247
  %v435 = vunpack.c.h.b16 %v247
  %v436 = vunpack.c.l.b16 %v248
  %v437 = vunpack.c.h.b16 %v248
  %v438 = vunpack.c.l.b16 %v249
  %v439 = vunpack.c.h.b16 %v249
  %v440 = vunpack.c.l.b16 %v250
  %v441 = vunpack.c.h.b16 %v250
  %v442 = vunpack.c.l.b16 %v251
  %v443 = vunpack.c.h.b16 %v251
  %v444 = vpack.c.b16 %v318, %v316
  %v445 = vpack.c.b16 %v319, %v317
  %v446 = vpack.c.b16 %v322, %v320
  %v447 = vpack.c.b16 %v323, %v321
  %v448 = vpack.c.b16 %v326, %v324
  %v449 = vpack.c.b16 %v327, %v325
  %v450 = vpack.c.b16 %v330, %v328
  %v451 = vpack.c.b16 %v331, %v329
  %v452 = vpack.c.b16 %v334, %v332
  %v453 = vpack.c.b16 %v335, %v333
  %v454 = vpack.c.b16 %v338, %v336
  %v455 = vpack.c.b16 %v339, %v337
  %v456 = vpack.c.b16 %v342, %v340
  %v457 = vpack.c.b16 %v343, %v341
  %v458 = vpack.c.b16 %v346, %v344
  %v459 = vpack.c.b16 %v347, %v345
  %v460 = vpack.c.b16 %v350, %v348
  %v461 = vpack.c.b16 %v351, %v349
  %v462 = vpack.c.b16 %v354, %v352
  %v463 = vpack.c.b16 %v355, %v353
  %v464 = vpack.c.b16 %v358, %v356
  %v465 = vpack.c.b16 %v359, %v357
  %v466 = vpack.c.b16 %v362, %v360
  %v467 = vpack.c.b16 %v363, %v361
  %v468 = vpack.c.b16 %v366, %v364
  %v469 = vpack.c.b16 %v367, %v365
  %v470 = vpack.c.b16 %v370, %v368
  %v471 = vpack.c.b16 %v371, %v369
  %v472 = vpack.c.b16 %v374, %v372
  %v473 = vpack.c.b16 %v375, %v373
  %v474 = vpack.c.b16 %v378, %v376
  %v475 = vpack.c.b16 %v379, %v377
  %v476 = vpack.c.b16 %v382, %v380
  %v477 = vpack.c.b16 %v383, %v381
  %v478 = vpack.c.b16 %v386, %v384
  %v479 = vpack.c.b16 %v387, %v385
  %v480 = vpack.c.b16 %v390, %v388
  %v481 = vpack.c.b16 %v391, %v389
  %v482 = vpack.c.b16 %v394, %v392
  %v483 = vpack.c.b16 %v395, %v393
  %v484 = vpack.c.b16 %v398, %v396
  %v485 = vpack.c.b16 %v399, %v397
  %v486 = vpack.c.b16 %v402, %v400
  %v487 = vpack.c.b16 %v403, %v401
  %v488 = vpack.c.b16 %v406, %v404
  %v489 = vpack.c.b16 %v407, %v405
  %v490 = vpack.c.b16 %v410, %v408
  %v491 = vpack.c.b16 %v411, %v409
  %v492 = vpack.c.b16 %v414, %v412
  %v493 = vpack.c.b16 %v415, %v413
  %v494 = vpack.c.b16 %v418, %v416
  %v495 = vpack.c.b16 %v419, %v417
  %v496 = vpack.c.b16 %v422, %v420
  %v497 = vpack.c.b16 %v423, %v421
  %v498 = vpack.c.b16 %v426, %v424
  %v499 = vpack.c.b16 %v427, %v425
  %v500 = vpack.c.b16 %v430, %v428
  %v501 = vpack.c.b16 %v431, %v429
  %v502 = vpack.c.b16 %v434, %v432
  %v503 = vpack.c.b16 %v435, %v433
  %v504 = vpack.c.b16 %v438, %v436
  %v505 = vpack.c.b16 %v439, %v437
  %v506 = vpack.c.b16 %v442, %v440
  %v507 = vpack.c.b16 %v443, %v441
  %572 = vxpose.xlu0.c.b16.start [1/8] %v444, 128
  %573 = vxpose.xlu0.c.b16.cont [2/8] %v446, 128
  %574 = vxpose.xlu0.c.b16.cont [3/8] %v448, 128
  %575 = vxpose.xlu0.c.b16.cont [4/8] %v450, 128
  %576 = vxpose.xlu0.c.b16.cont [5/8] %v452, 128
  %577 = vxpose.xlu0.c.b16.cont [6/8] %v454, 128
  %578 = vxpose.xlu0.c.b16.cont [7/8] %v456, 128
  %579 = vxpose.xlu0.c.b16.end [8/8] %v458, 128
  %v580 = vpop.trf.xlu0
  %v581 = vpop.trf.xlu0
  %v582 = vpop.trf.xlu0
  %v583 = vpop.trf.xlu0
  %v584 = vpop.trf.xlu0
  %v585 = vpop.trf.xlu0
  %v586 = vpop.trf.xlu0
  %v587 = vpop.trf.xlu0
  %588 = vxpose.xlu0.c.b16.start [1/8] %v445, 128
  %589 = vxpose.xlu0.c.b16.cont [2/8] %v447, 128
  %590 = vxpose.xlu0.c.b16.cont [3/8] %v449, 128
  %591 = vxpose.xlu0.c.b16.cont [4/8] %v451, 128
  %592 = vxpose.xlu0.c.b16.cont [5/8] %v453, 128
  %593 = vxpose.xlu0.c.b16.cont [6/8] %v455, 128
  %594 = vxpose.xlu0.c.b16.cont [7/8] %v457, 128
  %595 = vxpose.xlu0.c.b16.end [8/8] %v459, 128
  %v596 = vpop.trf.xlu0
  %v597 = vpop.trf.xlu0
  %v598 = vpop.trf.xlu0
  %v599 = vpop.trf.xlu0
  %v600 = vpop.trf.xlu0
  %v601 = vpop.trf.xlu0
  %v602 = vpop.trf.xlu0
  %v603 = vpop.trf.xlu0
  %604 = vxpose.xlu0.c.b16.start [1/8] %v460, 128
  %605 = vxpose.xlu0.c.b16.cont [2/8] %v462, 128
  %606 = vxpose.xlu0.c.b16.cont [3/8] %v464, 128
  %607 = vxpose.xlu0.c.b16.cont [4/8] %v466, 128
  %608 = vxpose.xlu0.c.b16.cont [5/8] %v468, 128
  %609 = vxpose.xlu0.c.b16.cont [6/8] %v470, 128
  %610 = vxpose.xlu0.c.b16.cont [7/8] %v472, 128
  %611 = vxpose.xlu0.c.b16.end [8/8] %v474, 128
  %v612 = vpop.trf.xlu0
  %v613 = vpop.trf.xlu0
  %v614 = vpop.trf.xlu0
  %v615 = vpop.trf.xlu0
  %v616 = vpop.trf.xlu0
  %v617 = vpop.trf.xlu0
  %v618 = vpop.trf.xlu0
  %v619 = vpop.trf.xlu0
  %620 = vxpose.xlu0.c.b16.start [1/8] %v461, 128
  %621 = vxpose.xlu0.c.b16.cont [2/8] %v463, 128
  %622 = vxpose.xlu0.c.b16.cont [3/8] %v465, 128
  %623 = vxpose.xlu0.c.b16.cont [4/8] %v467, 128
  %624 = vxpose.xlu0.c.b16.cont [5/8] %v469, 128
  %625 = vxpose.xlu0.c.b16.cont [6/8] %v471, 128
  %626 = vxpose.xlu0.c.b16.cont [7/8] %v473, 128
  %627 = vxpose.xlu0.c.b16.end [8/8] %v475, 128
  %v628 = vpop.trf.xlu0
  %v629 = vpop.trf.xlu0
  %v630 = vpop.trf.xlu0
  %v631 = vpop.trf.xlu0
  %v632 = vpop.trf.xlu0
  %v633 = vpop.trf.xlu0
  %v634 = vpop.trf.xlu0
  %v635 = vpop.trf.xlu0
  %636 = vxpose.xlu0.c.b16.start [1/8] %v476, 128
  %637 = vxpose.xlu0.c.b16.cont [2/8] %v478, 128
  %638 = vxpose.xlu0.c.b16.cont [3/8] %v480, 128
  %639 = vxpose.xlu0.c.b16.cont [4/8] %v482, 128
  %640 = vxpose.xlu0.c.b16.cont [5/8] %v484, 128
  %641 = vxpose.xlu0.c.b16.cont [6/8] %v486, 128
  %642 = vxpose.xlu0.c.b16.cont [7/8] %v488, 128
  %643 = vxpose.xlu0.c.b16.end [8/8] %v490, 128
  %v644 = vpop.trf.xlu0
  %v645 = vpop.trf.xlu0
  %v646 = vpop.trf.xlu0
  %v647 = vpop.trf.xlu0
  %v648 = vpop.trf.xlu0
  %v649 = vpop.trf.xlu0
  %v650 = vpop.trf.xlu0
  %v651 = vpop.trf.xlu0
  %652 = vxpose.xlu0.c.b16.start [1/8] %v477, 128
  %653 = vxpose.xlu0.c.b16.cont [2/8] %v479, 128
  %654 = vxpose.xlu0.c.b16.cont [3/8] %v481, 128
  %655 = vxpose.xlu0.c.b16.cont [4/8] %v483, 128
  %656 = vxpose.xlu0.c.b16.cont [5/8] %v485, 128
  %657 = vxpose.xlu0.c.b16.cont [6/8] %v487, 128
  %658 = vxpose.xlu0.c.b16.cont [7/8] %v489, 128
  %659 = vxpose.xlu0.c.b16.end [8/8] %v491, 128
  %v660 = vpop.trf.xlu0
  %v661 = vpop.trf.xlu0
  %v662 = vpop.trf.xlu0
  %v663 = vpop.trf.xlu0
  %v664 = vpop.trf.xlu0
  %v665 = vpop.trf.xlu0
  %v666 = vpop.trf.xlu0
  %v667 = vpop.trf.xlu0
  %668 = vxpose.xlu0.c.b16.start [1/8] %v492, 128
  %669 = vxpose.xlu0.c.b16.cont [2/8] %v494, 128
  %670 = vxpose.xlu0.c.b16.cont [3/8] %v496, 128
  %671 = vxpose.xlu0.c.b16.cont [4/8] %v498, 128
  %672 = vxpose.xlu0.c.b16.cont [5/8] %v500, 128
  %673 = vxpose.xlu0.c.b16.cont [6/8] %v502, 128
  %674 = vxpose.xlu0.c.b16.cont [7/8] %v504, 128
  %675 = vxpose.xlu0.c.b16.end [8/8] %v506, 128
  %v676 = vpop.trf.xlu0
  %v677 = vpop.trf.xlu0
  %v678 = vpop.trf.xlu0
  %v679 = vpop.trf.xlu0
  %v680 = vpop.trf.xlu0
  %v681 = vpop.trf.xlu0
  %v682 = vpop.trf.xlu0
  %v683 = vpop.trf.xlu0
  %684 = vxpose.xlu0.c.b16.start [1/8] %v493, 128
  %685 = vxpose.xlu0.c.b16.cont [2/8] %v495, 128
  %686 = vxpose.xlu0.c.b16.cont [3/8] %v497, 128
  %687 = vxpose.xlu0.c.b16.cont [4/8] %v499, 128
  %688 = vxpose.xlu0.c.b16.cont [5/8] %v501, 128
  %689 = vxpose.xlu0.c.b16.cont [6/8] %v503, 128
  %690 = vxpose.xlu0.c.b16.cont [7/8] %v505, 128
  %691 = vxpose.xlu0.c.b16.end [8/8] %v507, 128
  %v692 = vpop.trf.xlu0
  %v693 = vpop.trf.xlu0
  %v694 = vpop.trf.xlu0
  %v695 = vpop.trf.xlu0
  %v696 = vpop.trf.xlu0
  %v697 = vpop.trf.xlu0
  %v698 = vpop.trf.xlu0
  %v699 = vpop.trf.xlu0
  %v764 = vunpack.c.l.b16 %v92
  %v765 = vunpack.c.l.b16 %v93
  %v766 = vunpack.c.l.b16 %v94
  %v767 = vunpack.c.l.b16 %v95
  %v768 = vunpack.c.l.b16 %v96
  %v769 = vunpack.c.l.b16 %v97
  %v770 = vunpack.c.l.b16 %v98
  %v771 = vunpack.c.l.b16 %v99
  %v772 = vunpack.c.l.b16 %v100
  %v773 = vunpack.c.l.b16 %v101
  %v774 = vunpack.c.l.b16 %v102
  %v775 = vunpack.c.l.b16 %v103
  %v776 = vunpack.c.l.b16 %v104
  %v777 = vunpack.c.l.b16 %v105
  %v778 = vunpack.c.l.b16 %v106
  %v779 = vunpack.c.l.b16 %v107
  %v780 = vunpack.c.l.b16 %v108
  %v781 = vunpack.c.l.b16 %v109
  %v782 = vunpack.c.l.b16 %v110
  %v783 = vunpack.c.l.b16 %v111
  %v784 = vunpack.c.l.b16 %v112
  %v785 = vunpack.c.l.b16 %v113
  %v786 = vunpack.c.l.b16 %v114
  %v787 = vunpack.c.l.b16 %v115
  %v788 = vunpack.c.l.b16 %v116
  %v789 = vunpack.c.l.b16 %v117
  %v790 = vunpack.c.l.b16 %v118
  %v791 = vunpack.c.l.b16 %v119
  %v792 = vunpack.c.l.b16 %v120
  %v793 = vunpack.c.l.b16 %v121
  %v794 = vunpack.c.l.b16 %v122
  %v795 = vunpack.c.l.b16 %v123
  %v796 = vunpack.c.l.b16 %v124
  %v797 = vunpack.c.l.b16 %v125
  %v798 = vunpack.c.l.b16 %v126
  %v799 = vunpack.c.l.b16 %v127
  %v800 = vunpack.c.l.b16 %v128
  %v801 = vunpack.c.l.b16 %v129
  %v802 = vunpack.c.l.b16 %v130
  %v803 = vunpack.c.l.b16 %v131
  %v804 = vunpack.c.l.b16 %v132
  %v805 = vunpack.c.l.b16 %v133
  %v806 = vunpack.c.l.b16 %v134
  %v807 = vunpack.c.l.b16 %v135
  %v808 = vunpack.c.l.b16 %v136
  %v809 = vunpack.c.l.b16 %v137
  %v810 = vunpack.c.l.b16 %v138
  %v811 = vunpack.c.l.b16 %v139
  %v812 = vunpack.c.l.b16 %v140
  %v813 = vunpack.c.l.b16 %v141
  %v814 = vunpack.c.l.b16 %v142
  %v815 = vunpack.c.l.b16 %v143
  %v816 = vunpack.c.l.b16 %v144
  %v817 = vunpack.c.l.b16 %v145
  %v818 = vunpack.c.l.b16 %v146
  %v819 = vunpack.c.l.b16 %v147
  %v820 = vunpack.c.l.b16 %v148
  %v821 = vunpack.c.l.b16 %v149
  %v822 = vunpack.c.l.b16 %v150
  %v823 = vunpack.c.l.b16 %v151
  %v824 = vunpack.c.l.b16 %v152
  %v825 = vunpack.c.l.b16 %v153
  %v826 = vunpack.c.l.b16 %v154
  %v827 = vunpack.c.l.b16 %v155
  %v828 = vpack.c.b16 %v765, %v764
  %v829 = vpack.c.b16 %v767, %v766
  %v830 = vpack.c.b16 %v769, %v768
  %v831 = vpack.c.b16 %v771, %v770
  %v832 = vpack.c.b16 %v773, %v772
  %v833 = vpack.c.b16 %v775, %v774
  %v834 = vpack.c.b16 %v777, %v776
  %v835 = vpack.c.b16 %v779, %v778
  %v836 = vpack.c.b16 %v781, %v780
  %v837 = vpack.c.b16 %v783, %v782
  %v838 = vpack.c.b16 %v785, %v784
  %v839 = vpack.c.b16 %v787, %v786
  %v840 = vpack.c.b16 %v789, %v788
  %v841 = vpack.c.b16 %v791, %v790
  %v842 = vpack.c.b16 %v793, %v792
  %v843 = vpack.c.b16 %v795, %v794
  %v844 = vpack.c.b16 %v797, %v796
  %v845 = vpack.c.b16 %v799, %v798
  %v846 = vpack.c.b16 %v801, %v800
  %v847 = vpack.c.b16 %v803, %v802
  %v848 = vpack.c.b16 %v805, %v804
  %v849 = vpack.c.b16 %v807, %v806
  %v850 = vpack.c.b16 %v809, %v808
  %v851 = vpack.c.b16 %v811, %v810
  %v852 = vpack.c.b16 %v813, %v812
  %v853 = vpack.c.b16 %v815, %v814
  %v854 = vpack.c.b16 %v817, %v816
  %v855 = vpack.c.b16 %v819, %v818
  %v856 = vpack.c.b16 %v821, %v820
  %v857 = vpack.c.b16 %v823, %v822
  %v858 = vpack.c.b16 %v825, %v824
  %v859 = vpack.c.b16 %v827, %v826
  %892 = vmatprep.subr.bf16.mxu0 0
  %893 = vmatpush1.bf16.msra.mxu0 %v828
  %894 = vmatprep.subr.bf16.mxu0 0
  %895 = vmatpush1.bf16.msra.mxu0 %v829
  %896 = vmatprep.subr.bf16.mxu0 0
  %897 = vmatpush1.bf16.msra.mxu0 %v830
  %898 = vmatprep.subr.bf16.mxu0 0
  %899 = vmatpush1.bf16.msra.mxu0 %v831
  %900 = vmatprep.subr.bf16.mxu0 0
  %901 = vmatpush1.bf16.msra.mxu0 %v832
  %902 = vmatprep.subr.bf16.mxu0 0
  %903 = vmatpush1.bf16.msra.mxu0 %v833
  %904 = vmatprep.subr.bf16.mxu0 0
  %905 = vmatpush1.bf16.msra.mxu0 %v834
  %906 = vmatprep.subr.bf16.mxu0 0
  %907 = vmatpush1.bf16.msra.mxu0 %v835
  %908 = vmatprep.subr.bf16.mxu0 0
  %909 = vmatpush1.bf16.msra.mxu0 %v836
  %910 = vmatprep.subr.bf16.mxu0 0
  %911 = vmatpush1.bf16.msra.mxu0 %v837
  %912 = vmatprep.subr.bf16.mxu0 0
  %913 = vmatpush1.bf16.msra.mxu0 %v838
  %914 = vmatprep.subr.bf16.mxu0 0
  %915 = vmatpush1.bf16.msra.mxu0 %v839
  %916 = vmatprep.subr.bf16.mxu0 0
  %917 = vmatpush1.bf16.msra.mxu0 %v840
  %918 = vmatprep.subr.bf16.mxu0 0
  %919 = vmatpush1.bf16.msra.mxu0 %v841
  %920 = vmatprep.subr.bf16.mxu0 0
  %921 = vmatpush1.bf16.msra.mxu0 %v842
  %922 = vmatprep.subr.bf16.mxu0 0
  %923 = vmatpush1.bf16.msra.mxu0 %v843
  %924 = vmatprep.mubr.bf16.mxu0 %v612
  %925 = vmatmul.mubr.bf16.gmra.mrb[0].mxu0 %v580
  %v926 = vpop.f32.mrb[0].mxu0
  %v927 = vadd.f32 0.0, %v926
  %v928 = vpop.f32.mrb[0].mxu0
  %v929 = vpop.f32.mrb[0].mxu0
  %v930 = vadd.f32 0.0, %v929
  %v931 = vpop.f32.mrb[0].mxu0
  %932 = vmatprep.mubr.bf16.mxu0 %v613
  %933 = vmatmul.mubr.bf16.gmra.mrb[0].mxu0 %v581
  %v934 = vpop.f32.mrb[0].mxu0
  %v935 = vadd.f32 0.0, %v934
  %v936 = vpop.f32.mrb[0].mxu0
  %v937 = vpop.f32.mrb[0].mxu0
  %v938 = vadd.f32 0.0, %v937
  %v939 = vpop.f32.mrb[0].mxu0
  %940 = vmatprep.mubr.bf16.mxu0 %v614
  %941 = vmatmul.mubr.bf16.gmra.mrb[0].mxu0 %v582
  %v942 = vpop.f32.mrb[0].mxu0
  %v943 = vadd.f32 0.0, %v942
  %v944 = vpop.f32.mrb[0].mxu0
  %v945 = vpop.f32.mrb[0].mxu0
  %v946 = vadd.f32 0.0, %v945
  %v947 = vpop.f32.mrb[0].mxu0
  %948 = vmatprep.mubr.bf16.mxu0 %v615
  %949 = vmatmul.mubr.bf16.gmra.mrb[0].mxu0 %v583
  %v950 = vpop.f32.mrb[0].mxu0
  %v951 = vadd.f32 0.0, %v950
  %v952 = vpop.f32.mrb[0].mxu0
  %v953 = vpop.f32.mrb[0].mxu0
  %v954 = vadd.f32 0.0, %v953
  %v955 = vpop.f32.mrb[0].mxu0
  %956 = vmatprep.mubr.bf16.mxu0 %v616
  %957 = vmatmul.mubr.bf16.gmra.mrb[0].mxu0 %v584
  %v958 = vpop.f32.mrb[0].mxu0
  %v959 = vadd.f32 0.0, %v958
  %v960 = vpop.f32.mrb[0].mxu0
  %v961 = vpop.f32.mrb[0].mxu0
  %v962 = vadd.f32 0.0, %v961
  %v963 = vpop.f32.mrb[0].mxu0
  %964 = vmatprep.mubr.bf16.mxu0 %v617
  %965 = vmatmul.mubr.bf16.gmra.mrb[0].mxu0 %v585
  %v966 = vpop.f32.mrb[0].mxu0
  %v967 = vadd.f32 0.0, %v966
  %v968 = vpop.f32.mrb[0].mxu0
  %v969 = vpop.f32.mrb[0].mxu0
  %v970 = vadd.f32 0.0, %v969
  %v971 = vpop.f32.mrb[0].mxu0
  %972 = vmatprep.mubr.bf16.mxu0 %v618
  %973 = vmatmul.mubr.bf16.gmra.mrb[0].mxu0 %v586
  %v974 = vpop.f32.mrb[0].mxu0
  %v975 = vadd.f32 0.0, %v974
  %v976 = vpop.f32.mrb[0].mxu0
  %v977 = vpop.f32.mrb[0].mxu0
  %v978 = vadd.f32 0.0, %v977
  %v979 = vpop.f32.mrb[0].mxu0
  %980 = vmatprep.mubr.bf16.mxu0 %v619
  %981 = vmatmul.mubr.bf16.gmra.mrb[0].mxu0 %v587
  %v982 = vpop.f32.mrb[0].mxu0
  %v983 = vadd.f32 0.0, %v982
  %v984 = vpop.f32.mrb[0].mxu0
  %v985 = vpop.f32.mrb[0].mxu0
  %v986 = vadd.f32 0.0, %v985
  %v987 = vpop.f32.mrb[0].mxu0
  %988 = vmatprep.mubr.bf16.mxu0 %v628
  %989 = vmatmul.mubr.bf16.gmra.mrb[0].mxu0 %v596
  %v990 = vpop.f32.mrb[0].mxu0
  %v991 = vadd.f32 0.0, %v990
  %v992 = vpop.f32.mrb[0].mxu0
  %v993 = vpop.f32.mrb[0].mxu0
  %v994 = vadd.f32 0.0, %v993
  %v995 = vpop.f32.mrb[0].mxu0
  %996 = vmatprep.mubr.bf16.mxu0 %v629
  %997 = vmatmul.mubr.bf16.gmra.mrb[0].mxu0 %v597
  %v998 = vpop.f32.mrb[0].mxu0
  %v999 = vadd.f32 0.0, %v998
  %v1000 = vpop.f32.mrb[0].mxu0
  %v1001 = vpop.f32.mrb[0].mxu0
  %v1002 = vadd.f32 0.0, %v1001
  %v1003 = vpop.f32.mrb[0].mxu0
  %1004 = vmatprep.mubr.bf16.mxu0 %v630
  %1005 = vmatmul.mubr.bf16.gmra.mrb[0].mxu0 %v598
  %v1006 = vpop.f32.mrb[0].mxu0
  %v1007 = vadd.f32 0.0, %v1006
  %v1008 = vpop.f32.mrb[0].mxu0
  %v1009 = vpop.f32.mrb[0].mxu0
  %v1010 = vadd.f32 0.0, %v1009
  %v1011 = vpop.f32.mrb[0].mxu0
  %1012 = vmatprep.mubr.bf16.mxu0 %v631
  %1013 = vmatmul.mubr.bf16.gmra.mrb[0].mxu0 %v599
  %v1014 = vpop.f32.mrb[0].mxu0
  %v1015 = vadd.f32 0.0, %v1014
  %v1016 = vpop.f32.mrb[0].mxu0
  %v1017 = vpop.f32.mrb[0].mxu0
  %v1018 = vadd.f32 0.0, %v1017
  %v1019 = vpop.f32.mrb[0].mxu0
  %1020 = vmatprep.mubr.bf16.mxu0 %v632
  %1021 = vmatmul.mubr.bf16.gmra.mrb[0].mxu0 %v600
  %v1022 = vpop.f32.mrb[0].mxu0
  %v1023 = vadd.f32 0.0, %v1022
  %v1024 = vpop.f32.mrb[0].mxu0
  %v1025 = vpop.f32.mrb[0].mxu0
  %v1026 = vadd.f32 0.0, %v1025
  %v1027 = vpop.f32.mrb[0].mxu0
  %1028 = vmatprep.mubr.bf16.mxu0 %v633
  %1029 = vmatmul.mubr.bf16.gmra.mrb[0].mxu0 %v601
  %v1030 = vpop.f32.mrb[0].mxu0
  %v1031 = vadd.f32 0.0, %v1030
  %v1032 = vpop.f32.mrb[0].mxu0
  %v1033 = vpop.f32.mrb[0].mxu0
  %v1034 = vadd.f32 0.0, %v1033
  %v1035 = vpop.f32.mrb[0].mxu0
  %1036 = vmatprep.mubr.bf16.mxu0 %v634
  %1037 = vmatmul.mubr.bf16.gmra.mrb[0].mxu0 %v602
  %v1038 = vpop.f32.mrb[0].mxu0
  %v1039 = vadd.f32 0.0, %v1038
  %v1040 = vpop.f32.mrb[0].mxu0
  %v1041 = vpop.f32.mrb[0].mxu0
  %v1042 = vadd.f32 0.0, %v1041
  %v1043 = vpop.f32.mrb[0].mxu0
  %1044 = vmatprep.mubr.bf16.mxu0 %v635
  %1045 = vmatmul.mubr.bf16.gmra.mrb[0].mxu0 %v603
  %v1046 = vpop.f32.mrb[0].mxu0
  %v1047 = vadd.f32 0.0, %v1046
  %v1048 = vpop.f32.mrb[0].mxu0
  %v1049 = vpop.f32.mrb[0].mxu0
  %v1050 = vadd.f32 0.0, %v1049
  %v1051 = vpop.f32.mrb[0].mxu0
  %1052 = vdwg.mxu0
  %1053 = vmatprep.subr.bf16.mxu0 0
  %1054 = vmatpush1.bf16.msra.mxu0 %v844
  %1055 = vmatprep.subr.bf16.mxu0 0
  %1056 = vmatpush1.bf16.msra.mxu0 %v845
  %1057 = vmatprep.subr.bf16.mxu0 0
  %1058 = vmatpush1.bf16.msra.mxu0 %v846
  %1059 = vmatprep.subr.bf16.mxu0 0
  %1060 = vmatpush1.bf16.msra.mxu0 %v847
  %1061 = vmatprep.subr.bf16.mxu0 0
  %1062 = vmatpush1.bf16.msra.mxu0 %v848
  %1063 = vmatprep.subr.bf16.mxu0 0
  %1064 = vmatpush1.bf16.msra.mxu0 %v849
  %1065 = vmatprep.subr.bf16.mxu0 0
  %1066 = vmatpush1.bf16.msra.mxu0 %v850
  %1067 = vmatprep.subr.bf16.mxu0 0
  %1068 = vmatpush1.bf16.msra.mxu0 %v851
  %1069 = vmatprep.subr.bf16.mxu0 0
  %1070 = vmatpush1.bf16.msra.mxu0 %v852
  %1071 = vmatprep.subr.bf16.mxu0 0
  %1072 = vmatpush1.bf16.msra.mxu0 %v853
  %1073 = vmatprep.subr.bf16.mxu0 0
  %1074 = vmatpush1.bf16.msra.mxu0 %v854
  %1075 = vmatprep.subr.bf16.mxu0 0
  %1076 = vmatpush1.bf16.msra.mxu0 %v855
  %1077 = vmatprep.subr.bf16.mxu0 0
  %1078 = vmatpush1.bf16.msra.mxu0 %v856
  %1079 = vmatprep.subr.bf16.mxu0 0
  %1080 = vmatpush1.bf16.msra.mxu0 %v857
  %1081 = vmatprep.subr.bf16.mxu0 0
  %1082 = vmatpush1.bf16.msra.mxu0 %v858
  %1083 = vmatprep.subr.bf16.mxu0 0
  %1084 = vmatpush1.bf16.msra.mxu0 %v859
  %1085 = vmatprep.mubr.bf16.mxu0 %v676
  %1086 = vmatmul.mubr.bf16.gmra.mrb[0].mxu0 %v644
  %v1087 = vpop.f32.mrb[0].mxu0
  %v1088 = vadd.f32 %v927, %v1087
  %v1089 = vpop.f32.mrb[0].mxu0
  %v1090 = vpop.f32.mrb[0].mxu0
  %v1091 = vadd.f32 %v930, %v1090
  %v1092 = vpop.f32.mrb[0].mxu0
  %1093 = vmatprep.mubr.bf16.mxu0 %v677
  %1094 = vmatmul.mubr.bf16.gmra.mrb[0].mxu0 %v645
  %v1095 = vpop.f32.mrb[0].mxu0
  %v1096 = vadd.f32 %v935, %v1095
  %v1097 = vpop.f32.mrb[0].mxu0
  %v1098 = vpop.f32.mrb[0].mxu0
  %v1099 = vadd.f32 %v938, %v1098
  %v1100 = vpop.f32.mrb[0].mxu0
  %1101 = vmatprep.mubr.bf16.mxu0 %v678
  %1102 = vmatmul.mubr.bf16.gmra.mrb[0].mxu0 %v646
  %v1103 = vpop.f32.mrb[0].mxu0
  %v1104 = vadd.f32 %v943, %v1103
  %v1105 = vpop.f32.mrb[0].mxu0
  %v1106 = vpop.f32.mrb[0].mxu0
  %v1107 = vadd.f32 %v946, %v1106
  %v1108 = vpop.f32.mrb[0].mxu0
  %1109 = vmatprep.mubr.bf16.mxu0 %v679
  %1110 = vmatmul.mubr.bf16.gmra.mrb[0].mxu0 %v647
  %v1111 = vpop.f32.mrb[0].mxu0
  %v1112 = vadd.f32 %v951, %v1111
  %v1113 = vpop.f32.mrb[0].mxu0
  %v1114 = vpop.f32.mrb[0].mxu0
  %v1115 = vadd.f32 %v954, %v1114
  %v1116 = vpop.f32.mrb[0].mxu0
  %1117 = vmatprep.mubr.bf16.mxu0 %v680
  %1118 = vmatmul.mubr.bf16.gmra.mrb[0].mxu0 %v648
  %v1119 = vpop.f32.mrb[0].mxu0
  %v1120 = vadd.f32 %v959, %v1119
  %v1121 = vpop.f32.mrb[0].mxu0
  %v1122 = vpop.f32.mrb[0].mxu0
  %v1123 = vadd.f32 %v962, %v1122
  %v1124 = vpop.f32.mrb[0].mxu0
  %1125 = vmatprep.mubr.bf16.mxu0 %v681
  %1126 = vmatmul.mubr.bf16.gmra.mrb[0].mxu0 %v649
  %v1127 = vpop.f32.mrb[0].mxu0
  %v1128 = vadd.f32 %v967, %v1127
  %v1129 = vpop.f32.mrb[0].mxu0
  %v1130 = vpop.f32.mrb[0].mxu0
  %v1131 = vadd.f32 %v970, %v1130
  %v1132 = vpop.f32.mrb[0].mxu0
  %1133 = vmatprep.mubr.bf16.mxu0 %v682
  %1134 = vmatmul.mubr.bf16.gmra.mrb[0].mxu0 %v650
  %v1135 = vpop.f32.mrb[0].mxu0
  %v1136 = vadd.f32 %v975, %v1135
  %v1137 = vpop.f32.mrb[0].mxu0
  %v1138 = vpop.f32.mrb[0].mxu0
  %v1139 = vadd.f32 %v978, %v1138
  %v1140 = vpop.f32.mrb[0].mxu0
  %1141 = vmatprep.mubr.bf16.mxu0 %v683
  %1142 = vmatmul.mubr.bf16.gmra.mrb[0].mxu0 %v651
  %v1143 = vpop.f32.mrb[0].mxu0
  %v1144 = vadd.f32 %v983, %v1143
  %v1145 = vpop.f32.mrb[0].mxu0
  %v1146 = vpop.f32.mrb[0].mxu0
  %v1147 = vadd.f32 %v986, %v1146
  %v1148 = vpop.f32.mrb[0].mxu0
  %1149 = vmatprep.mubr.bf16.mxu0 %v692
  %1150 = vmatmul.mubr.bf16.gmra.mrb[0].mxu0 %v660
  %v1151 = vpop.f32.mrb[0].mxu0
  %v1152 = vadd.f32 %v991, %v1151
  %v1153 = vpop.f32.mrb[0].mxu0
  %v1154 = vpop.f32.mrb[0].mxu0
  %v1155 = vadd.f32 %v994, %v1154
  %v1156 = vpop.f32.mrb[0].mxu0
  %1157 = vmatprep.mubr.bf16.mxu0 %v693
  %1158 = vmatmul.mubr.bf16.gmra.mrb[0].mxu0 %v661
  %v1159 = vpop.f32.mrb[0].mxu0
  %v1160 = vadd.f32 %v999, %v1159
  %v1161 = vpop.f32.mrb[0].mxu0
  %v1162 = vpop.f32.mrb[0].mxu0
  %v1163 = vadd.f32 %v1002, %v1162
  %v1164 = vpop.f32.mrb[0].mxu0
  %1165 = vmatprep.mubr.bf16.mxu0 %v694
  %1166 = vmatmul.mubr.bf16.gmra.mrb[0].mxu0 %v662
  %v1167 = vpop.f32.mrb[0].mxu0
  %v1168 = vadd.f32 %v1007, %v1167
  %v1169 = vpop.f32.mrb[0].mxu0
  %v1170 = vpop.f32.mrb[0].mxu0
  %v1171 = vadd.f32 %v1010, %v1170
  %v1172 = vpop.f32.mrb[0].mxu0
  %1173 = vmatprep.mubr.bf16.mxu0 %v695
  %1174 = vmatmul.mubr.bf16.gmra.mrb[0].mxu0 %v663
  %v1175 = vpop.f32.mrb[0].mxu0
  %v1176 = vadd.f32 %v1015, %v1175
  %v1177 = vpop.f32.mrb[0].mxu0
  %v1178 = vpop.f32.mrb[0].mxu0
  %v1179 = vadd.f32 %v1018, %v1178
  %v1180 = vpop.f32.mrb[0].mxu0
  %1181 = vmatprep.mubr.bf16.mxu0 %v696
  %1182 = vmatmul.mubr.bf16.gmra.mrb[0].mxu0 %v664
  %v1183 = vpop.f32.mrb[0].mxu0
  %v1184 = vadd.f32 %v1023, %v1183
  %v1185 = vpop.f32.mrb[0].mxu0
  %v1186 = vpop.f32.mrb[0].mxu0
  %v1187 = vadd.f32 %v1026, %v1186
  %v1188 = vpop.f32.mrb[0].mxu0
  %1189 = vmatprep.mubr.bf16.mxu0 %v697
  %1190 = vmatmul.mubr.bf16.gmra.mrb[0].mxu0 %v665
  %v1191 = vpop.f32.mrb[0].mxu0
  %v1192 = vadd.f32 %v1031, %v1191
  %v1193 = vpop.f32.mrb[0].mxu0
  %v1194 = vpop.f32.mrb[0].mxu0
  %v1195 = vadd.f32 %v1034, %v1194
  %v1196 = vpop.f32.mrb[0].mxu0
  %1197 = vmatprep.mubr.bf16.mxu0 %v698
  %1198 = vmatmul.mubr.bf16.gmra.mrb[0].mxu0 %v666
  %v1199 = vpop.f32.mrb[0].mxu0
  %v1200 = vadd.f32 %v1039, %v1199
  %v1201 = vpop.f32.mrb[0].mxu0
  %v1202 = vpop.f32.mrb[0].mxu0
  %v1203 = vadd.f32 %v1042, %v1202
  %v1204 = vpop.f32.mrb[0].mxu0
  %1205 = vmatprep.mubr.bf16.mxu0 %v699
  %1206 = vmatmul.mubr.bf16.gmra.mrb[0].mxu0 %v667
  %v1207 = vpop.f32.mrb[0].mxu0
  %v1208 = vadd.f32 %v1047, %v1207
  %v1209 = vpop.f32.mrb[0].mxu0
  %v1210 = vpop.f32.mrb[0].mxu0
  %v1211 = vadd.f32 %v1050, %v1210
  %v1212 = vpop.f32.mrb[0].mxu0
  %1213 = vdwg.mxu0
  %v1214 = vadd.f32 %v156, %v1088
  %v1215 = vadd.f32 %v157, %v1091
  %v1216 = vadd.f32 %v158, %v1096
  %v1217 = vadd.f32 %v159, %v1099
  %v1218 = vadd.f32 %v160, %v1104
  %v1219 = vadd.f32 %v161, %v1107
  %v1220 = vadd.f32 %v162, %v1112
  %v1221 = vadd.f32 %v163, %v1115
  %v1222 = vadd.f32 %v164, %v1120
  %v1223 = vadd.f32 %v165, %v1123
  %v1224 = vadd.f32 %v166, %v1128
  %v1225 = vadd.f32 %v167, %v1131
  %v1226 = vadd.f32 %v168, %v1136
  %v1227 = vadd.f32 %v169, %v1139
  %v1228 = vadd.f32 %v170, %v1144
  %v1229 = vadd.f32 %v171, %v1147
  %v1230 = vadd.f32 %v172, %v1152
  %v1231 = vadd.f32 %v173, %v1155
  %v1232 = vadd.f32 %v174, %v1160
  %v1233 = vadd.f32 %v175, %v1163
  %v1234 = vadd.f32 %v176, %v1168
  %v1235 = vadd.f32 %v177, %v1171
  %v1236 = vadd.f32 %v178, %v1176
  %v1237 = vadd.f32 %v179, %v1179
  %v1238 = vadd.f32 %v180, %v1184
  %v1239 = vadd.f32 %v181, %v1187
  %v1240 = vadd.f32 %v182, %v1192
  %v1241 = vadd.f32 %v183, %v1195
  %v1242 = vadd.f32 %v184, %v1200
  %v1243 = vadd.f32 %v185, %v1203
  %v1244 = vadd.f32 %v186, %v1208
  %v1245 = vadd.f32 %v187, %v1211
  %1246 = vst [vmem:[#allocation2] sm:$0xff] %v1214
  %1247 = vst [vmem:[#allocation2 + $0x8] sm:$0xff] %v1215
  %1248 = vst [vmem:[#allocation2 + $0x10] sm:$0xff] %v1216
  %1249 = vst [vmem:[#allocation2 + $0x18] sm:$0xff] %v1217
  %1250 = vst [vmem:[#allocation2 + $0x20] sm:$0xff] %v1218
  %1251 = vst [vmem:[#allocation2 + $0x28] sm:$0xff] %v1219
  %1252 = vst [vmem:[#allocation2 + $0x30] sm:$0xff] %v1220
  %1253 = vst [vmem:[#allocation2 + $0x38] sm:$0xff] %v1221
  %1254 = vst [vmem:[#allocation2 + $0x40] sm:$0xff] %v1222
  %1255 = vst [vmem:[#allocation2 + $0x48] sm:$0xff] %v1223
  %1256 = vst [vmem:[#allocation2 + $0x50] sm:$0xff] %v1224
  %1257 = vst [vmem:[#allocation2 + $0x58] sm:$0xff] %v1225
  %1258 = vst [vmem:[#allocation2 + $0x60] sm:$0xff] %v1226
  %1259 = vst [vmem:[#allocation2 + $0x68] sm:$0xff] %v1227
  %1260 = vst [vmem:[#allocation2 + $0x70] sm:$0xff] %v1228
  %1261 = vst [vmem:[#allocation2 + $0x78] sm:$0xff] %v1229
  %1262 = vst [vmem:[#allocation2 + $0x80] sm:$0xff] %v1230
  %1263 = vst [vmem:[#allocation2 + $0x88] sm:$0xff] %v1231
  %1264 = vst [vmem:[#allocation2 + $0x90] sm:$0xff] %v1232
  %1265 = vst [vmem:[#allocation2 + $0x98] sm:$0xff] %v1233
  %1266 = vst [vmem:[#allocation2 + $0xa0] sm:$0xff] %v1234
  %1267 = vst [vmem:[#allocation2 + $0xa8] sm:$0xff] %v1235
  %1268 = vst [vmem:[#allocation2 + $0xb0] sm:$0xff] %v1236
  %1269 = vst [vmem:[#allocation2 + $0xb8] sm:$0xff] %v1237
  %1270 = vst [vmem:[#allocation2 + $0xc0] sm:$0xff] %v1238
  %1271 = vst [vmem:[#allocation2 + $0xc8] sm:$0xff] %v1239
  %1272 = vst [vmem:[#allocation2 + $0xd0] sm:$0xff] %v1240
  %1273 = vst [vmem:[#allocation2 + $0xd8] sm:$0xff] %v1241
  %1274 = vst [vmem:[#allocation2 + $0xe0] sm:$0xff] %v1242
  %1275 = vst [vmem:[#allocation2 + $0xe8] sm:$0xff] %v1243
  %1276 = vst [vmem:[#allocation2 + $0xf0] sm:$0xff] %v1244
  %1277 = vst [vmem:[#allocation2 + $0xf8] sm:$0xff] %v1245
  // Predicated region
  $region66: #{gcn_layer_forward.3} parent=0 // pred_check
    %p1278 = pneg %p51
  $region67: #{gcn_layer_forward.3} parent=0 // pred_check_branch
    %1280 = sbr.rel (%p1278) target = $region69
  $region68: #{gcn_layer_forward.3} parent=0 // pred_region
    %v1281 = vld [vmem:[#allocation2] sm:$0xff]
    %v1282 = vld [vmem:[#allocation2 + $0x8] sm:$0xff]
    %v1283 = vld [vmem:[#allocation2 + $0x10] sm:$0xff]
    %v1284 = vld [vmem:[#allocation2 + $0x18] sm:$0xff]
    %v1285 = vld [vmem:[#allocation2 + $0x20] sm:$0xff]
    %v1286 = vld [vmem:[#allocation2 + $0x28] sm:$0xff]
    %v1287 = vld [vmem:[#allocation2 + $0x30] sm:$0xff]
    %v1288 = vld [vmem:[#allocation2 + $0x38] sm:$0xff]
    %v1289 = vld [vmem:[#allocation2 + $0x40] sm:$0xff]
    %v1290 = vld [vmem:[#allocation2 + $0x48] sm:$0xff]
    %v1291 = vld [vmem:[#allocation2 + $0x50] sm:$0xff]
    %v1292 = vld [vmem:[#allocation2 + $0x58] sm:$0xff]
    %v1293 = vld [vmem:[#allocation2 + $0x60] sm:$0xff]
    %v1294 = vld [vmem:[#allocation2 + $0x68] sm:$0xff]
    %v1295 = vld [vmem:[#allocation2 + $0x70] sm:$0xff]
    %v1296 = vld [vmem:[#allocation2 + $0x78] sm:$0xff]
    %v1297 = vld [vmem:[#allocation2 + $0x80] sm:$0xff]
    %v1298 = vld [vmem:[#allocation2 + $0x88] sm:$0xff]
    %v1299 = vld [vmem:[#allocation2 + $0x90] sm:$0xff]
    %v1300 = vld [vmem:[#allocation2 + $0x98] sm:$0xff]
    %v1301 = vld [vmem:[#allocation2 + $0xa0] sm:$0xff]
    %v1302 = vld [vmem:[#allocation2 + $0xa8] sm:$0xff]
    %v1303 = vld [vmem:[#allocation2 + $0xb0] sm:$0xff]
    %v1304 = vld [vmem:[#allocation2 + $0xb8] sm:$0xff]
    %v1305 = vld [vmem:[#allocation2 + $0xc0] sm:$0xff]
    %v1306 = vld [vmem:[#allocation2 + $0xc8] sm:$0xff]
    %v1307 = vld [vmem:[#allocation2 + $0xd0] sm:$0xff]
    %v1308 = vld [vmem:[#allocation2 + $0xd8] sm:$0xff]
    %v1309 = vld [vmem:[#allocation2 + $0xe0] sm:$0xff]
    %v1310 = vld [vmem:[#allocation2 + $0xe8] sm:$0xff]
    %v1311 = vld [vmem:[#allocation2 + $0xf0] sm:$0xff]
    %v1312 = vld [vmem:[#allocation2 + $0xf8] sm:$0xff]
    %v1313 = vld [vmem:[%s3] sm:$0xf]
    %v1314 = vld [vmem:[%s3 + $0x4] sm:$0xf]
    %v1315 = vld [vmem:[%s3 + $0x8] sm:$0xf]
    %v1316 = vld [vmem:[%s3 + $0xc] sm:$0xf]
    %v1317 = vld [vmem:[%s3 + $0x10] sm:$0xf]
    %v1318 = vld [vmem:[%s3 + $0x14] sm:$0xf]
    %v1319 = vld [vmem:[%s3 + $0x18] sm:$0xf]
    %v1320 = vld [vmem:[%s3 + $0x1c] sm:$0xf]
    %v1321 = vld [vmem:[%s3 + $0x20] sm:$0xf]
    %v1322 = vld [vmem:[%s3 + $0x24] sm:$0xf]
    %v1323 = vld [vmem:[%s3 + $0x28] sm:$0xf]
    %v1324 = vld [vmem:[%s3 + $0x2c] sm:$0xf]
    %v1325 = vld [vmem:[%s3 + $0x30] sm:$0xf]
    %v1326 = vld [vmem:[%s3 + $0x34] sm:$0xf]
    %v1327 = vld [vmem:[%s3 + $0x38] sm:$0xf]
    %v1328 = vld [vmem:[%s3 + $0x3c] sm:$0xf]
    %v1329 = vpack.c.bf16 %v1282, %v1281
    %v1330 = vpack.c.bf16 %v1284, %v1283
    %v1331 = vpack.c.bf16 %v1286, %v1285
    %v1332 = vpack.c.bf16 %v1288, %v1287
    %v1333 = vpack.c.bf16 %v1290, %v1289
    %v1334 = vpack.c.bf16 %v1292, %v1291
    %v1335 = vpack.c.bf16 %v1294, %v1293
    %v1336 = vpack.c.bf16 %v1296, %v1295
    %v1337 = vpack.c.bf16 %v1298, %v1297
    %v1338 = vpack.c.bf16 %v1300, %v1299
    %v1339 = vpack.c.bf16 %v1302, %v1301
    %v1340 = vpack.c.bf16 %v1304, %v1303
    %v1341 = vpack.c.bf16 %v1306, %v1305
    %v1342 = vpack.c.bf16 %v1308, %v1307
    %v1343 = vpack.c.bf16 %v1310, %v1309
    %v1344 = vpack.c.bf16 %v1312, %v1311
    %v1345 = vld [vmem:[%s4] sm:$0x1]
    %v1347 = vlaneseq
    %v1348 = vshrl.u32 %v1347, 7
    %v1349 = vsub.s32 0, %v1348
    %v1350 = vrot.slane %v1345, %v1349
    %v1368 = vunpack.c.l.b16 %v1313
    %v1369 = vunpack.c.l.b16 %v1314
    %v1370 = vunpack.c.l.b16 %v1315
    %v1371 = vunpack.c.l.b16 %v1316
    %v1372 = vunpack.c.l.b16 %v1317
    %v1373 = vunpack.c.l.b16 %v1318
    %v1374 = vunpack.c.l.b16 %v1319
    %v1375 = vunpack.c.l.b16 %v1320
    %v1376 = vunpack.c.l.b16 %v1321
    %v1377 = vunpack.c.l.b16 %v1322
    %v1378 = vunpack.c.l.b16 %v1323
    %v1379 = vunpack.c.l.b16 %v1324
    %v1380 = vunpack.c.l.b16 %v1325
    %v1381 = vunpack.c.l.b16 %v1326
    %v1382 = vunpack.c.l.b16 %v1327
    %v1383 = vunpack.c.l.b16 %v1328
    %v1384 = vpack.c.b16 %v1369, %v1368
    %v1385 = vpack.c.b16 %v1371, %v1370
    %v1386 = vpack.c.b16 %v1373, %v1372
    %v1387 = vpack.c.b16 %v1375, %v1374
    %v1388 = vpack.c.b16 %v1377, %v1376
    %v1389 = vpack.c.b16 %v1379, %v1378
    %v1390 = vpack.c.b16 %v1381, %v1380
    %v1391 = vpack.c.b16 %v1383, %v1382
    %1400 = vmatprep.subr.bf16.mxu0 0
    %1401 = vmatpush1.bf16.msra.mxu0 %v1384
    %1402 = vmatprep.subr.bf16.mxu0 0
    %1403 = vmatpush1.bf16.msra.mxu0 %v1385
    %1404 = vmatprep.subr.bf16.mxu0 0
    %1405 = vmatpush1.bf16.msra.mxu0 %v1386
    %1406 = vmatprep.subr.bf16.mxu0 0
    %1407 = vmatpush1.bf16.msra.mxu0 %v1387
    %1408 = vmatprep.subr.bf16.mxu0 0
    %1409 = vmatpush1.bf16.msra.mxu0 %v1388
    %1410 = vmatprep.subr.bf16.mxu0 0
    %1411 = vmatpush1.bf16.msra.mxu0 %v1389
    %1412 = vmatprep.subr.bf16.mxu0 0
    %1413 = vmatpush1.bf16.msra.mxu0 %v1390
    %1414 = vmatprep.subr.bf16.mxu0 0
    %1415 = vmatpush1.bf16.msra.mxu0 %v1391
    %1416 = vmatprep.subr.bf16.mxu0 0
    %1417 = vmatpush1.bf16.msra.mxu0 0
    %1418 = vmatprep.subr.bf16.mxu0 0
    %1419 = vmatpush1.bf16.msra.mxu0 0
    %1420 = vmatprep.subr.bf16.mxu0 0
    %1421 = vmatpush1.bf16.msra.mxu0 0
    %1422 = vmatprep.subr.bf16.mxu0 0
    %1423 = vmatpush1.bf16.msra.mxu0 0
    %1424 = vmatprep.subr.bf16.mxu0 0
    %1425 = vmatpush1.bf16.msra.mxu0 0
    %1426 = vmatprep.subr.bf16.mxu0 0
    %1427 = vmatpush1.bf16.msra.mxu0 0
    %1428 = vmatprep.subr.bf16.mxu0 0
    %1429 = vmatpush1.bf16.msra.mxu0 0
    %1430 = vmatprep.subr.bf16.mxu0 0
    %1431 = vmatpush1.bf16.msra.mxu0 0
    %1432 = vmatprep.mubr.bf16.mxu0 0
    %1433 = vmatmul.mubr.bf16.gmra.mrb[0].mxu0 %v1329
    %v1434 = vpop.f32.mrb[0].mxu0
    %v1435 = vadd.f32 %v1350, %v1434
    %v1436 = vpop.f32.mrb[0].mxu0
    %v1437 = vpop.f32.mrb[0].mxu0
    %v1438 = vadd.f32 %v1350, %v1437
    %v1439 = vpop.f32.mrb[0].mxu0
    %1440 = vmatprep.mubr.bf16.mxu0 0
    %1441 = vmatmul.mubr.bf16.gmra.mrb[0].mxu0 %v1330
    %v1442 = vpop.f32.mrb[0].mxu0
    %v1443 = vadd.f32 %v1350, %v1442
    %v1444 = vpop.f32.mrb[0].mxu0
    %v1445 = vpop.f32.mrb[0].mxu0
    %v1446 = vadd.f32 %v1350, %v1445
    %v1447 = vpop.f32.mrb[0].mxu0
    %1448 = vmatprep.mubr.bf16.mxu0 0
    %1449 = vmatmul.mubr.bf16.gmra.mrb[0].mxu0 %v1331
    %v1450 = vpop.f32.mrb[0].mxu0
    %v1451 = vadd.f32 %v1350, %v1450
    %v1452 = vpop.f32.mrb[0].mxu0
    %v1453 = vpop.f32.mrb[0].mxu0
    %v1454 = vadd.f32 %v1350, %v1453
    %v1455 = vpop.f32.mrb[0].mxu0
    %1456 = vmatprep.mubr.bf16.mxu0 0
    %1457 = vmatmul.mubr.bf16.gmra.mrb[0].mxu0 %v1332
    %v1458 = vpop.f32.mrb[0].mxu0
    %v1459 = vadd.f32 %v1350, %v1458
    %v1460 = vpop.f32.mrb[0].mxu0
    %v1461 = vpop.f32.mrb[0].mxu0
    %v1462 = vadd.f32 %v1350, %v1461
    %v1463 = vpop.f32.mrb[0].mxu0
    %1464 = vmatprep.mubr.bf16.mxu0 0
    %1465 = vmatmul.mubr.bf16.gmra.mrb[0].mxu0 %v1333
    %v1466 = vpop.f32.mrb[0].mxu0
    %v1467 = vadd.f32 %v1350, %v1466
    %v1468 = vpop.f32.mrb[0].mxu0
    %v1469 = vpop.f32.mrb[0].mxu0
    %v1470 = vadd.f32 %v1350, %v1469
    %v1471 = vpop.f32.mrb[0].mxu0
    %1472 = vmatprep.mubr.bf16.mxu0 0
    %1473 = vmatmul.mubr.bf16.gmra.mrb[0].mxu0 %v1334
    %v1474 = vpop.f32.mrb[0].mxu0
    %v1475 = vadd.f32 %v1350, %v1474
    %v1476 = vpop.f32.mrb[0].mxu0
    %v1477 = vpop.f32.mrb[0].mxu0
    %v1478 = vadd.f32 %v1350, %v1477
    %v1479 = vpop.f32.mrb[0].mxu0
    %1480 = vmatprep.mubr.bf16.mxu0 0
    %1481 = vmatmul.mubr.bf16.gmra.mrb[0].mxu0 %v1335
    %v1482 = vpop.f32.mrb[0].mxu0
    %v1483 = vadd.f32 %v1350, %v1482
    %v1484 = vpop.f32.mrb[0].mxu0
    %v1485 = vpop.f32.mrb[0].mxu0
    %v1486 = vadd.f32 %v1350, %v1485
    %v1487 = vpop.f32.mrb[0].mxu0
    %1488 = vmatprep.mubr.bf16.mxu0 0
    %1489 = vmatmul.mubr.bf16.gmra.mrb[0].mxu0 %v1336
    %v1490 = vpop.f32.mrb[0].mxu0
    %v1491 = vadd.f32 %v1350, %v1490
    %v1492 = vpop.f32.mrb[0].mxu0
    %v1493 = vpop.f32.mrb[0].mxu0
    %v1494 = vadd.f32 %v1350, %v1493
    %v1495 = vpop.f32.mrb[0].mxu0
    %1496 = vmatprep.mubr.bf16.mxu0 0
    %1497 = vmatmul.mubr.bf16.gmra.mrb[0].mxu0 %v1337
    %v1498 = vpop.f32.mrb[0].mxu0
    %v1499 = vadd.f32 %v1350, %v1498
    %v1500 = vpop.f32.mrb[0].mxu0
    %v1501 = vpop.f32.mrb[0].mxu0
    %v1502 = vadd.f32 %v1350, %v1501
    %v1503 = vpop.f32.mrb[0].mxu0
    %1504 = vmatprep.mubr.bf16.mxu0 0
    %1505 = vmatmul.mubr.bf16.gmra.mrb[0].mxu0 %v1338
    %v1506 = vpop.f32.mrb[0].mxu0
    %v1507 = vadd.f32 %v1350, %v1506
    %v1508 = vpop.f32.mrb[0].mxu0
    %v1509 = vpop.f32.mrb[0].mxu0
    %v1510 = vadd.f32 %v1350, %v1509
    %v1511 = vpop.f32.mrb[0].mxu0
    %1512 = vmatprep.mubr.bf16.mxu0 0
    %1513 = vmatmul.mubr.bf16.gmra.mrb[0].mxu0 %v1339
    %v1514 = vpop.f32.mrb[0].mxu0
    %v1515 = vadd.f32 %v1350, %v1514
    %v1516 = vpop.f32.mrb[0].mxu0
    %v1517 = vpop.f32.mrb[0].mxu0
    %v1518 = vadd.f32 %v1350, %v1517
    %v1519 = vpop.f32.mrb[0].mxu0
    %1520 = vmatprep.mubr.bf16.mxu0 0
    %1521 = vmatmul.mubr.bf16.gmra.mrb[0].mxu0 %v1340
    %v1522 = vpop.f32.mrb[0].mxu0
    %v1523 = vadd.f32 %v1350, %v1522
    %v1524 = vpop.f32.mrb[0].mxu0
    %v1525 = vpop.f32.mrb[0].mxu0
    %v1526 = vadd.f32 %v1350, %v1525
    %v1527 = vpop.f32.mrb[0].mxu0
    %1528 = vmatprep.mubr.bf16.mxu0 0
    %1529 = vmatmul.mubr.bf16.gmra.mrb[0].mxu0 %v1341
    %v1530 = vpop.f32.mrb[0].mxu0
    %v1531 = vadd.f32 %v1350, %v1530
    %v1532 = vpop.f32.mrb[0].mxu0
    %v1533 = vpop.f32.mrb[0].mxu0
    %v1534 = vadd.f32 %v1350, %v1533
    %v1535 = vpop.f32.mrb[0].mxu0
    %1536 = vmatprep.mubr.bf16.mxu0 0
    %1537 = vmatmul.mubr.bf16.gmra.mrb[0].mxu0 %v1342
    %v1538 = vpop.f32.mrb[0].mxu0
    %v1539 = vadd.f32 %v1350, %v1538
    %v1540 = vpop.f32.mrb[0].mxu0
    %v1541 = vpop.f32.mrb[0].mxu0
    %v1542 = vadd.f32 %v1350, %v1541
    %v1543 = vpop.f32.mrb[0].mxu0
    %1544 = vmatprep.mubr.bf16.mxu0 0
    %1545 = vmatmul.mubr.bf16.gmra.mrb[0].mxu0 %v1343
    %v1546 = vpop.f32.mrb[0].mxu0
    %v1547 = vadd.f32 %v1350, %v1546
    %v1548 = vpop.f32.mrb[0].mxu0
    %v1549 = vpop.f32.mrb[0].mxu0
    %v1550 = vadd.f32 %v1350, %v1549
    %v1551 = vpop.f32.mrb[0].mxu0
    %1552 = vmatprep.mubr.bf16.mxu0 0
    %1553 = vmatmul.mubr.bf16.gmra.mrb[0].mxu0 %v1344
    %v1554 = vpop.f32.mrb[0].mxu0
    %v1555 = vadd.f32 %v1350, %v1554
    %v1556 = vpop.f32.mrb[0].mxu0
    %v1557 = vpop.f32.mrb[0].mxu0
    %v1558 = vadd.f32 %v1350, %v1557
    %v1559 = vpop.f32.mrb[0].mxu0
    %1560 = vdwg.mxu0
    %v1561 = vmul.f32 %v1435, 0.01
    %v1562 = vmul.f32 %v1438, 0.01
    %v1563 = vmul.f32 %v1443, 0.01
    %v1564 = vmul.f32 %v1446, 0.01
    %v1565 = vmul.f32 %v1451, 0.01
    %v1566 = vmul.f32 %v1454, 0.01
    %v1567 = vmul.f32 %v1459, 0.01
    %v1568 = vmul.f32 %v1462, 0.01
    %v1569 = vmul.f32 %v1467, 0.01
    %v1570 = vmul.f32 %v1470, 0.01
    %v1571 = vmul.f32 %v1475, 0.01
    %v1572 = vmul.f32 %v1478, 0.01
    %v1573 = vmul.f32 %v1483, 0.01
    %v1574 = vmul.f32 %v1486, 0.01
    %v1575 = vmul.f32 %v1491, 0.01
    %v1576 = vmul.f32 %v1494, 0.01
    %v1577 = vmul.f32 %v1499, 0.01
    %v1578 = vmul.f32 %v1502, 0.01
    %v1579 = vmul.f32 %v1507, 0.01
    %v1580 = vmul.f32 %v1510, 0.01
    %v1581 = vmul.f32 %v1515, 0.01
    %v1582 = vmul.f32 %v1518, 0.01
    %v1583 = vmul.f32 %v1523, 0.01
    %v1584 = vmul.f32 %v1526, 0.01
    %v1585 = vmul.f32 %v1531, 0.01
    %v1586 = vmul.f32 %v1534, 0.01
    %v1587 = vmul.f32 %v1539, 0.01
    %v1588 = vmul.f32 %v1542, 0.01
    %v1589 = vmul.f32 %v1547, 0.01
    %v1590 = vmul.f32 %v1550, 0.01
    %v1591 = vmul.f32 %v1555, 0.01
    %v1592 = vmul.f32 %v1558, 0.01
    %v1593 = vmax.f32 %v1435, %v1561
    %v1594 = vmax.f32 %v1438, %v1562
    %v1595 = vmax.f32 %v1443, %v1563
    %v1596 = vmax.f32 %v1446, %v1564
    %v1597 = vmax.f32 %v1451, %v1565
    %v1598 = vmax.f32 %v1454, %v1566
    %v1599 = vmax.f32 %v1459, %v1567
    %v1600 = vmax.f32 %v1462, %v1568
    %v1601 = vmax.f32 %v1467, %v1569
    %v1602 = vmax.f32 %v1470, %v1570
    %v1603 = vmax.f32 %v1475, %v1571
    %v1604 = vmax.f32 %v1478, %v1572
    %v1605 = vmax.f32 %v1483, %v1573
    %v1606 = vmax.f32 %v1486, %v1574
    %v1607 = vmax.f32 %v1491, %v1575
    %v1608 = vmax.f32 %v1494, %v1576
    %v1609 = vmax.f32 %v1499, %v1577
    %v1610 = vmax.f32 %v1502, %v1578
    %v1611 = vmax.f32 %v1507, %v1579
    %v1612 = vmax.f32 %v1510, %v1580
    %v1613 = vmax.f32 %v1515, %v1581
    %v1614 = vmax.f32 %v1518, %v1582
    %v1615 = vmax.f32 %v1523, %v1583
    %v1616 = vmax.f32 %v1526, %v1584
    %v1617 = vmax.f32 %v1531, %v1585
    %v1618 = vmax.f32 %v1534, %v1586
    %v1619 = vmax.f32 %v1539, %v1587
    %v1620 = vmax.f32 %v1542, %v1588
    %v1621 = vmax.f32 %v1547, %v1589
    %v1622 = vmax.f32 %v1550, %v1590
    %v1623 = vmax.f32 %v1555, %v1591
    %v1624 = vmax.f32 %v1558, %v1592
    %v1625 = vld [vmem:[%s5] sm:$0xf]
    %v1626 = vld [vmem:[%s5 + $0x4] sm:$0xf]
    %v1627 = vld [vmem:[%s5 + $0x8] sm:$0xf]
    %v1628 = vld [vmem:[%s5 + $0xc] sm:$0xf]
    %v1629 = vld [vmem:[%s5 + $0x10] sm:$0xf]
    %v1630 = vld [vmem:[%s5 + $0x14] sm:$0xf]
    %v1631 = vld [vmem:[%s5 + $0x18] sm:$0xf]
    %v1632 = vld [vmem:[%s5 + $0x1c] sm:$0xf]
    %v1633 = vld [vmem:[%s5 + $0x20] sm:$0xf]
    %v1634 = vld [vmem:[%s5 + $0x24] sm:$0xf]
    %v1635 = vld [vmem:[%s5 + $0x28] sm:$0xf]
    %v1636 = vld [vmem:[%s5 + $0x2c] sm:$0xf]
    %v1637 = vld [vmem:[%s5 + $0x30] sm:$0xf]
    %v1638 = vld [vmem:[%s5 + $0x34] sm:$0xf]
    %v1639 = vld [vmem:[%s5 + $0x38] sm:$0xf]
    %v1640 = vld [vmem:[%s5 + $0x3c] sm:$0xf]
    %v1641 = vpack.c.bf16 %v1594, %v1593
    %v1642 = vpack.c.bf16 %v1596, %v1595
    %v1643 = vpack.c.bf16 %v1598, %v1597
    %v1644 = vpack.c.bf16 %v1600, %v1599
    %v1645 = vpack.c.bf16 %v1602, %v1601
    %v1646 = vpack.c.bf16 %v1604, %v1603
    %v1647 = vpack.c.bf16 %v1606, %v1605
    %v1648 = vpack.c.bf16 %v1608, %v1607
    %v1649 = vpack.c.bf16 %v1610, %v1609
    %v1650 = vpack.c.bf16 %v1612, %v1611
    %v1651 = vpack.c.bf16 %v1614, %v1613
    %v1652 = vpack.c.bf16 %v1616, %v1615
    %v1653 = vpack.c.bf16 %v1618, %v1617
    %v1654 = vpack.c.bf16 %v1620, %v1619
    %v1655 = vpack.c.bf16 %v1622, %v1621
    %v1656 = vpack.c.bf16 %v1624, %v1623
    %v1657 = vld [vmem:[%s6] sm:$0x1]
    %v1659 = vlaneseq
    %v1660 = vshrl.u32 %v1659, 7
    %v1661 = vsub.s32 0, %v1660
    %v1662 = vrot.slane %v1657, %v1661
    %v1680 = vunpack.c.l.b16 %v1625
    %v1681 = vunpack.c.l.b16 %v1626
    %v1682 = vunpack.c.l.b16 %v1627
    %v1683 = vunpack.c.l.b16 %v1628
    %v1684 = vunpack.c.l.b16 %v1629
    %v1685 = vunpack.c.l.b16 %v1630
    %v1686 = vunpack.c.l.b16 %v1631
    %v1687 = vunpack.c.l.b16 %v1632
    %v1688 = vunpack.c.l.b16 %v1633
    %v1689 = vunpack.c.l.b16 %v1634
    %v1690 = vunpack.c.l.b16 %v1635
    %v1691 = vunpack.c.l.b16 %v1636
    %v1692 = vunpack.c.l.b16 %v1637
    %v1693 = vunpack.c.l.b16 %v1638
    %v1694 = vunpack.c.l.b16 %v1639
    %v1695 = vunpack.c.l.b16 %v1640
    %v1696 = vpack.c.b16 %v1681, %v1680
    %v1697 = vpack.c.b16 %v1683, %v1682
    %v1698 = vpack.c.b16 %v1685, %v1684
    %v1699 = vpack.c.b16 %v1687, %v1686
    %v1700 = vpack.c.b16 %v1689, %v1688
    %v1701 = vpack.c.b16 %v1691, %v1690
    %v1702 = vpack.c.b16 %v1693, %v1692
    %v1703 = vpack.c.b16 %v1695, %v1694
    %1712 = vmatprep.subr.bf16.mxu0 0
    %1713 = vmatpush1.bf16.msra.mxu0 %v1696
    %1714 = vmatprep.subr.bf16.mxu0 0
    %1715 = vmatpush1.bf16.msra.mxu0 %v1697
    %1716 = vmatprep.subr.bf16.mxu0 0
    %1717 = vmatpush1.bf16.msra.mxu0 %v1698
    %1718 = vmatprep.subr.bf16.mxu0 0
    %1719 = vmatpush1.bf16.msra.mxu0 %v1699
    %1720 = vmatprep.subr.bf16.mxu0 0
    %1721 = vmatpush1.bf16.msra.mxu0 %v1700
    %1722 = vmatprep.subr.bf16.mxu0 0
    %1723 = vmatpush1.bf16.msra.mxu0 %v1701
    %1724 = vmatprep.subr.bf16.mxu0 0
    %1725 = vmatpush1.bf16.msra.mxu0 %v1702
    %1726 = vmatprep.subr.bf16.mxu0 0
    %1727 = vmatpush1.bf16.msra.mxu0 %v1703
    %1728 = vmatprep.subr.bf16.mxu0 0
    %1729 = vmatpush1.bf16.msra.mxu0 0
    %1730 = vmatprep.subr.bf16.mxu0 0
    %1731 = vmatpush1.bf16.msra.mxu0 0
    %1732 = vmatprep.subr.bf16.mxu0 0
    %1733 = vmatpush1.bf16.msra.mxu0 0
    %1734 = vmatprep.subr.bf16.mxu0 0
    %1735 = vmatpush1.bf16.msra.mxu0 0
    %1736 = vmatprep.subr.bf16.mxu0 0
    %1737 = vmatpush1.bf16.msra.mxu0 0
    %1738 = vmatprep.subr.bf16.mxu0 0
    %1739 = vmatpush1.bf16.msra.mxu0 0
    %1740 = vmatprep.subr.bf16.mxu0 0
    %1741 = vmatpush1.bf16.msra.mxu0 0
    %1742 = vmatprep.subr.bf16.mxu0 0
    %1743 = vmatpush1.bf16.msra.mxu0 0
    %1744 = vmatprep.mubr.bf16.mxu0 0
    %1745 = vmatmul.mubr.bf16.gmra.mrb[0].mxu0 %v1641
    %v1746 = vpop.f32.mrb[0].mxu0
    %v1747 = vadd.f32 %v1662, %v1746
    %v1748 = vpop.f32.mrb[0].mxu0
    %v1749 = vpop.f32.mrb[0].mxu0
    %v1750 = vadd.f32 %v1662, %v1749
    %v1751 = vpop.f32.mrb[0].mxu0
    %1752 = vmatprep.mubr.bf16.mxu0 0
    %1753 = vmatmul.mubr.bf16.gmra.mrb[0].mxu0 %v1642
    %v1754 = vpop.f32.mrb[0].mxu0
    %v1755 = vadd.f32 %v1662, %v1754
    %v1756 = vpop.f32.mrb[0].mxu0
    %v1757 = vpop.f32.mrb[0].mxu0
    %v1758 = vadd.f32 %v1662, %v1757
    %v1759 = vpop.f32.mrb[0].mxu0
    %1760 = vmatprep.mubr.bf16.mxu0 0
    %1761 = vmatmul.mubr.bf16.gmra.mrb[0].mxu0 %v1643
    %v1762 = vpop.f32.mrb[0].mxu0
    %v1763 = vadd.f32 %v1662, %v1762
    %v1764 = vpop.f32.mrb[0].mxu0
    %v1765 = vpop.f32.mrb[0].mxu0
    %v1766 = vadd.f32 %v1662, %v1765
    %v1767 = vpop.f32.mrb[0].mxu0
    %1768 = vmatprep.mubr.bf16.mxu0 0
    %1769 = vmatmul.mubr.bf16.gmra.mrb[0].mxu0 %v1644
    %v1770 = vpop.f32.mrb[0].mxu0
    %v1771 = vadd.f32 %v1662, %v1770
    %v1772 = vpop.f32.mrb[0].mxu0
    %v1773 = vpop.f32.mrb[0].mxu0
    %v1774 = vadd.f32 %v1662, %v1773
    %v1775 = vpop.f32.mrb[0].mxu0
    %1776 = vmatprep.mubr.bf16.mxu0 0
    %1777 = vmatmul.mubr.bf16.gmra.mrb[0].mxu0 %v1645
    %v1778 = vpop.f32.mrb[0].mxu0
    %v1779 = vadd.f32 %v1662, %v1778
    %v1780 = vpop.f32.mrb[0].mxu0
    %v1781 = vpop.f32.mrb[0].mxu0
    %v1782 = vadd.f32 %v1662, %v1781
    %v1783 = vpop.f32.mrb[0].mxu0
    %1784 = vmatprep.mubr.bf16.mxu0 0
    %1785 = vmatmul.mubr.bf16.gmra.mrb[0].mxu0 %v1646
    %v1786 = vpop.f32.mrb[0].mxu0
    %v1787 = vadd.f32 %v1662, %v1786
    %v1788 = vpop.f32.mrb[0].mxu0
    %v1789 = vpop.f32.mrb[0].mxu0
    %v1790 = vadd.f32 %v1662, %v1789
    %v1791 = vpop.f32.mrb[0].mxu0
    %1792 = vmatprep.mubr.bf16.mxu0 0
    %1793 = vmatmul.mubr.bf16.gmra.mrb[0].mxu0 %v1647
    %v1794 = vpop.f32.mrb[0].mxu0
    %v1795 = vadd.f32 %v1662, %v1794
    %v1796 = vpop.f32.mrb[0].mxu0
    %v1797 = vpop.f32.mrb[0].mxu0
    %v1798 = vadd.f32 %v1662, %v1797
    %v1799 = vpop.f32.mrb[0].mxu0
    %1800 = vmatprep.mubr.bf16.mxu0 0
    %1801 = vmatmul.mubr.bf16.gmra.mrb[0].mxu0 %v1648
    %v1802 = vpop.f32.mrb[0].mxu0
    %v1803 = vadd.f32 %v1662, %v1802
    %v1804 = vpop.f32.mrb[0].mxu0
    %v1805 = vpop.f32.mrb[0].mxu0
    %v1806 = vadd.f32 %v1662, %v1805
    %v1807 = vpop.f32.mrb[0].mxu0
    %1808 = vmatprep.mubr.bf16.mxu0 0
    %1809 = vmatmul.mubr.bf16.gmra.mrb[0].mxu0 %v1649
    %v1810 = vpop.f32.mrb[0].mxu0
    %v1811 = vadd.f32 %v1662, %v1810
    %v1812 = vpop.f32.mrb[0].mxu0
    %v1813 = vpop.f32.mrb[0].mxu0
    %v1814 = vadd.f32 %v1662, %v1813
    %v1815 = vpop.f32.mrb[0].mxu0
    %1816 = vmatprep.mubr.bf16.mxu0 0
    %1817 = vmatmul.mubr.bf16.gmra.mrb[0].mxu0 %v1650
    %v1818 = vpop.f32.mrb[0].mxu0
    %v1819 = vadd.f32 %v1662, %v1818
    %v1820 = vpop.f32.mrb[0].mxu0
    %v1821 = vpop.f32.mrb[0].mxu0
    %v1822 = vadd.f32 %v1662, %v1821
    %v1823 = vpop.f32.mrb[0].mxu0
    %1824 = vmatprep.mubr.bf16.mxu0 0
    %1825 = vmatmul.mubr.bf16.gmra.mrb[0].mxu0 %v1651
    %v1826 = vpop.f32.mrb[0].mxu0
    %v1827 = vadd.f32 %v1662, %v1826
    %v1828 = vpop.f32.mrb[0].mxu0
    %v1829 = vpop.f32.mrb[0].mxu0
    %v1830 = vadd.f32 %v1662, %v1829
    %v1831 = vpop.f32.mrb[0].mxu0
    %1832 = vmatprep.mubr.bf16.mxu0 0
    %1833 = vmatmul.mubr.bf16.gmra.mrb[0].mxu0 %v1652
    %v1834 = vpop.f32.mrb[0].mxu0
    %v1835 = vadd.f32 %v1662, %v1834
    %v1836 = vpop.f32.mrb[0].mxu0
    %v1837 = vpop.f32.mrb[0].mxu0
    %v1838 = vadd.f32 %v1662, %v1837
    %v1839 = vpop.f32.mrb[0].mxu0
    %1840 = vmatprep.mubr.bf16.mxu0 0
    %1841 = vmatmul.mubr.bf16.gmra.mrb[0].mxu0 %v1653
    %v1842 = vpop.f32.mrb[0].mxu0
    %v1843 = vadd.f32 %v1662, %v1842
    %v1844 = vpop.f32.mrb[0].mxu0
    %v1845 = vpop.f32.mrb[0].mxu0
    %v1846 = vadd.f32 %v1662, %v1845
    %v1847 = vpop.f32.mrb[0].mxu0
    %1848 = vmatprep.mubr.bf16.mxu0 0
    %1849 = vmatmul.mubr.bf16.gmra.mrb[0].mxu0 %v1654
    %v1850 = vpop.f32.mrb[0].mxu0
    %v1851 = vadd.f32 %v1662, %v1850
    %v1852 = vpop.f32.mrb[0].mxu0
    %v1853 = vpop.f32.mrb[0].mxu0
    %v1854 = vadd.f32 %v1662, %v1853
    %v1855 = vpop.f32.mrb[0].mxu0
    %1856 = vmatprep.mubr.bf16.mxu0 0
    %1857 = vmatmul.mubr.bf16.gmra.mrb[0].mxu0 %v1655
    %v1858 = vpop.f32.mrb[0].mxu0
    %v1859 = vadd.f32 %v1662, %v1858
    %v1860 = vpop.f32.mrb[0].mxu0
    %v1861 = vpop.f32.mrb[0].mxu0
    %v1862 = vadd.f32 %v1662, %v1861
    %v1863 = vpop.f32.mrb[0].mxu0
    %1864 = vmatprep.mubr.bf16.mxu0 0
    %1865 = vmatmul.mubr.bf16.gmra.mrb[0].mxu0 %v1656
    %v1866 = vpop.f32.mrb[0].mxu0
    %v1867 = vadd.f32 %v1662, %v1866
    %v1868 = vpop.f32.mrb[0].mxu0
    %v1869 = vpop.f32.mrb[0].mxu0
    %v1870 = vadd.f32 %v1662, %v1869
    %v1871 = vpop.f32.mrb[0].mxu0
    %1872 = vdwg.mxu0
    %v1873 = vld [vmem:[%s2] sm:$0xf]
    %v1874 = vld [vmem:[%s2 + $0x4] sm:$0xf]
    %v1875 = vld [vmem:[%s2 + $0x8] sm:$0xf]
    %v1876 = vld [vmem:[%s2 + $0xc] sm:$0xf]
    %v1877 = vld [vmem:[%s2 + $0x10] sm:$0xf]
    %v1878 = vld [vmem:[%s2 + $0x14] sm:$0xf]
    %v1879 = vld [vmem:[%s2 + $0x18] sm:$0xf]
    %v1880 = vld [vmem:[%s2 + $0x1c] sm:$0xf]
    %v1881 = vld [vmem:[%s2 + $0x20] sm:$0xf]
    %v1882 = vld [vmem:[%s2 + $0x24] sm:$0xf]
    %v1883 = vld [vmem:[%s2 + $0x28] sm:$0xf]
    %v1884 = vld [vmem:[%s2 + $0x2c] sm:$0xf]
    %v1885 = vld [vmem:[%s2 + $0x30] sm:$0xf]
    %v1886 = vld [vmem:[%s2 + $0x34] sm:$0xf]
    %v1887 = vld [vmem:[%s2 + $0x38] sm:$0xf]
    %v1888 = vld [vmem:[%s2 + $0x3c] sm:$0xf]
    %v1889 = vld [vmem:[%s2 + $0x40] sm:$0xf]
    %v1890 = vld [vmem:[%s2 + $0x44] sm:$0xf]
    %v1891 = vld [vmem:[%s2 + $0x48] sm:$0xf]
    %v1892 = vld [vmem:[%s2 + $0x4c] sm:$0xf]
    %v1893 = vld [vmem:[%s2 + $0x50] sm:$0xf]
    %v1894 = vld [vmem:[%s2 + $0x54] sm:$0xf]
    %v1895 = vld [vmem:[%s2 + $0x58] sm:$0xf]
    %v1896 = vld [vmem:[%s2 + $0x5c] sm:$0xf]
    %v1897 = vld [vmem:[%s2 + $0x60] sm:$0xf]
    %v1898 = vld [vmem:[%s2 + $0x64] sm:$0xf]
    %v1899 = vld [vmem:[%s2 + $0x68] sm:$0xf]
    %v1900 = vld [vmem:[%s2 + $0x6c] sm:$0xf]
    %v1901 = vld [vmem:[%s2 + $0x70] sm:$0xf]
    %v1902 = vld [vmem:[%s2 + $0x74] sm:$0xf]
    %v1903 = vld [vmem:[%s2 + $0x78] sm:$0xf]
    %v1904 = vld [vmem:[%s2 + $0x7c] sm:$0xf]
    %v1905 = vld [vmem:[%s7] sm:$0xf]
    %v1906 = vld [vmem:[%s7 + $0x4] sm:$0xf]
    %v1907 = vld [vmem:[%s7 + $0x8] sm:$0xf]
    %v1908 = vld [vmem:[%s7 + $0xc] sm:$0xf]
    %v1909 = vld [vmem:[%s7 + $0x10] sm:$0xf]
    %v1910 = vld [vmem:[%s7 + $0x14] sm:$0xf]
    %v1911 = vld [vmem:[%s7 + $0x18] sm:$0xf]
    %v1912 = vld [vmem:[%s7 + $0x1c] sm:$0xf]
    %v1913 = vld [vmem:[%s7 + $0x20] sm:$0xf]
    %v1914 = vld [vmem:[%s7 + $0x24] sm:$0xf]
    %v1915 = vld [vmem:[%s7 + $0x28] sm:$0xf]
    %v1916 = vld [vmem:[%s7 + $0x2c] sm:$0xf]
    %v1917 = vld [vmem:[%s7 + $0x30] sm:$0xf]
    %v1918 = vld [vmem:[%s7 + $0x34] sm:$0xf]
    %v1919 = vld [vmem:[%s7 + $0x38] sm:$0xf]
    %v1920 = vld [vmem:[%s7 + $0x3c] sm:$0xf]
    %v1921 = vld [vmem:[%s8] sm:$0x1]
    %v1923 = vlaneseq
    %v1924 = vshrl.u32 %v1923, 7
    %v1925 = vsub.s32 0, %v1924
    %v1926 = vrot.slane %v1921, %v1925
    %v1960 = vunpack.c.l.b16 %v1873
    %v1961 = vunpack.c.l.b16 %v1874
    %v1962 = vunpack.c.l.b16 %v1875
    %v1963 = vunpack.c.l.b16 %v1876
    %v1964 = vunpack.c.l.b16 %v1877
    %v1965 = vunpack.c.l.b16 %v1878
    %v1966 = vunpack.c.l.b16 %v1879
    %v1967 = vunpack.c.l.b16 %v1880
    %v1968 = vunpack.c.l.b16 %v1881
    %v1969 = vunpack.c.l.b16 %v1882
    %v1970 = vunpack.c.l.b16 %v1883
    %v1971 = vunpack.c.l.b16 %v1884
    %v1972 = vunpack.c.l.b16 %v1885
    %v1973 = vunpack.c.l.b16 %v1886
    %v1974 = vunpack.c.l.b16 %v1887
    %v1975 = vunpack.c.l.b16 %v1888
    %v1976 = vunpack.c.l.b16 %v1889
    %v1977 = vunpack.c.l.b16 %v1890
    %v1978 = vunpack.c.l.b16 %v1891
    %v1979 = vunpack.c.l.b16 %v1892
    %v1980 = vunpack.c.l.b16 %v1893
    %v1981 = vunpack.c.l.b16 %v1894
    %v1982 = vunpack.c.l.b16 %v1895
    %v1983 = vunpack.c.l.b16 %v1896
    %v1984 = vunpack.c.l.b16 %v1897
    %v1985 = vunpack.c.l.b16 %v1898
    %v1986 = vunpack.c.l.b16 %v1899
    %v1987 = vunpack.c.l.b16 %v1900
    %v1988 = vunpack.c.l.b16 %v1901
    %v1989 = vunpack.c.l.b16 %v1902
    %v1990 = vunpack.c.l.b16 %v1903
    %v1991 = vunpack.c.l.b16 %v1904
    %v1992 = vpack.c.b16 %v1961, %v1960
    %v1993 = vpack.c.b16 %v1963, %v1962
    %v1994 = vpack.c.b16 %v1965, %v1964
    %v1995 = vpack.c.b16 %v1967, %v1966
    %v1996 = vpack.c.b16 %v1969, %v1968
    %v1997 = vpack.c.b16 %v1971, %v1970
    %v1998 = vpack.c.b16 %v1973, %v1972
    %v1999 = vpack.c.b16 %v1975, %v1974
    %v2000 = vpack.c.b16 %v1977, %v1976
    %v2001 = vpack.c.b16 %v1979, %v1978
    %v2002 = vpack.c.b16 %v1981, %v1980
    %v2003 = vpack.c.b16 %v1983, %v1982
    %v2004 = vpack.c.b16 %v1985, %v1984
    %v2005 = vpack.c.b16 %v1987, %v1986
    %v2006 = vpack.c.b16 %v1989, %v1988
    %v2007 = vpack.c.b16 %v1991, %v1990
    %v2040 = vunpack.c.l.b16 %v1905
    %v2041 = vunpack.c.l.b16 %v1906
    %v2042 = vunpack.c.l.b16 %v1907
    %v2043 = vunpack.c.l.b16 %v1908
    %v2044 = vunpack.c.l.b16 %v1909
    %v2045 = vunpack.c.l.b16 %v1910
    %v2046 = vunpack.c.l.b16 %v1911
    %v2047 = vunpack.c.l.b16 %v1912
    %v2048 = vunpack.c.l.b16 %v1913
    %v2049 = vunpack.c.l.b16 %v1914
    %v2050 = vunpack.c.l.b16 %v1915
    %v2051 = vunpack.c.l.b16 %v1916
    %v2052 = vunpack.c.l.b16 %v1917
    %v2053 = vunpack.c.l.b16 %v1918
    %v2054 = vunpack.c.l.b16 %v1919
    %v2055 = vunpack.c.l.b16 %v1920
    %v2056 = vpack.c.b16 %v2041, %v2040
    %v2057 = vpack.c.b16 %v2043, %v2042
    %v2058 = vpack.c.b16 %v2045, %v2044
    %v2059 = vpack.c.b16 %v2047, %v2046
    %v2060 = vpack.c.b16 %v2049, %v2048
    %v2061 = vpack.c.b16 %v2051, %v2050
    %v2062 = vpack.c.b16 %v2053, %v2052
    %v2063 = vpack.c.b16 %v2055, %v2054
    %2072 = vmatprep.subr.bf16.mxu0 0
    %2073 = vmatpush1.bf16.msra.mxu0 %v2056
    %2074 = vmatprep.subr.bf16.mxu0 0
    %2075 = vmatpush1.bf16.msra.mxu0 %v2057
    %2076 = vmatprep.subr.bf16.mxu0 0
    %2077 = vmatpush1.bf16.msra.mxu0 %v2058
    %2078 = vmatprep.subr.bf16.mxu0 0
    %2079 = vmatpush1.bf16.msra.mxu0 %v2059
    %2080 = vmatprep.subr.bf16.mxu0 0
    %2081 = vmatpush1.bf16.msra.mxu0 %v2060
    %2082 = vmatprep.subr.bf16.mxu0 0
    %2083 = vmatpush1.bf16.msra.mxu0 %v2061
    %2084 = vmatprep.subr.bf16.mxu0 0
    %2085 = vmatpush1.bf16.msra.mxu0 %v2062
    %2086 = vmatprep.subr.bf16.mxu0 0
    %2087 = vmatpush1.bf16.msra.mxu0 %v2063
    %2088 = vmatprep.subr.bf16.mxu0 0
    %2089 = vmatpush1.bf16.msra.mxu0 0
    %2090 = vmatprep.subr.bf16.mxu0 0
    %2091 = vmatpush1.bf16.msra.mxu0 0
    %2092 = vmatprep.subr.bf16.mxu0 0
    %2093 = vmatpush1.bf16.msra.mxu0 0
    %2094 = vmatprep.subr.bf16.mxu0 0
    %2095 = vmatpush1.bf16.msra.mxu0 0
    %2096 = vmatprep.subr.bf16.mxu0 0
    %2097 = vmatpush1.bf16.msra.mxu0 0
    %2098 = vmatprep.subr.bf16.mxu0 0
    %2099 = vmatpush1.bf16.msra.mxu0 0
    %2100 = vmatprep.subr.bf16.mxu0 0
    %2101 = vmatpush1.bf16.msra.mxu0 0
    %2102 = vmatprep.subr.bf16.mxu0 0
    %2103 = vmatpush1.bf16.msra.mxu0 0
    %2104 = vmatprep.mubr.bf16.mxu0 0
    %2105 = vmatmul.mubr.bf16.gmra.mrb[0].mxu0 %v1992
    %v2106 = vpop.f32.mrb[0].mxu0
    %v2107 = vadd.f32 %v1926, %v2106
    %v2108 = vpop.f32.mrb[0].mxu0
    %v2109 = vpop.f32.mrb[0].mxu0
    %v2110 = vadd.f32 %v1926, %v2109
    %v2111 = vpop.f32.mrb[0].mxu0
    %2112 = vmatprep.mubr.bf16.mxu0 0
    %2113 = vmatmul.mubr.bf16.gmra.mrb[0].mxu0 %v1993
    %v2114 = vpop.f32.mrb[0].mxu0
    %v2115 = vadd.f32 %v1926, %v2114
    %v2116 = vpop.f32.mrb[0].mxu0
    %v2117 = vpop.f32.mrb[0].mxu0
    %v2118 = vadd.f32 %v1926, %v2117
    %v2119 = vpop.f32.mrb[0].mxu0
    %2120 = vmatprep.mubr.bf16.mxu0 0
    %2121 = vmatmul.mubr.bf16.gmra.mrb[0].mxu0 %v1994
    %v2122 = vpop.f32.mrb[0].mxu0
    %v2123 = vadd.f32 %v1926, %v2122
    %v2124 = vpop.f32.mrb[0].mxu0
    %v2125 = vpop.f32.mrb[0].mxu0
    %v2126 = vadd.f32 %v1926, %v2125
    %v2127 = vpop.f32.mrb[0].mxu0
    %2128 = vmatprep.mubr.bf16.mxu0 0
    %2129 = vmatmul.mubr.bf16.gmra.mrb[0].mxu0 %v1995
    %v2130 = vpop.f32.mrb[0].mxu0
    %v2131 = vadd.f32 %v1926, %v2130
    %v2132 = vpop.f32.mrb[0].mxu0
    %v2133 = vpop.f32.mrb[0].mxu0
    %v2134 = vadd.f32 %v1926, %v2133
    %v2135 = vpop.f32.mrb[0].mxu0
    %2136 = vmatprep.mubr.bf16.mxu0 0
    %2137 = vmatmul.mubr.bf16.gmra.mrb[0].mxu0 %v1996
    %v2138 = vpop.f32.mrb[0].mxu0
    %v2139 = vadd.f32 %v1926, %v2138
    %v2140 = vpop.f32.mrb[0].mxu0
    %v2141 = vpop.f32.mrb[0].mxu0
    %v2142 = vadd.f32 %v1926, %v2141
    %v2143 = vpop.f32.mrb[0].mxu0
    %2144 = vmatprep.mubr.bf16.mxu0 0
    %2145 = vmatmul.mubr.bf16.gmra.mrb[0].mxu0 %v1997
    %v2146 = vpop.f32.mrb[0].mxu0
    %v2147 = vadd.f32 %v1926, %v2146
    %v2148 = vpop.f32.mrb[0].mxu0
    %v2149 = vpop.f32.mrb[0].mxu0
    %v2150 = vadd.f32 %v1926, %v2149
    %v2151 = vpop.f32.mrb[0].mxu0
    %2152 = vmatprep.mubr.bf16.mxu0 0
    %2153 = vmatmul.mubr.bf16.gmra.mrb[0].mxu0 %v1998
    %v2154 = vpop.f32.mrb[0].mxu0
    %v2155 = vadd.f32 %v1926, %v2154
    %v2156 = vpop.f32.mrb[0].mxu0
    %v2157 = vpop.f32.mrb[0].mxu0
    %v2158 = vadd.f32 %v1926, %v2157
    %v2159 = vpop.f32.mrb[0].mxu0
    %2160 = vmatprep.mubr.bf16.mxu0 0
    %2161 = vmatmul.mubr.bf16.gmra.mrb[0].mxu0 %v1999
    %v2162 = vpop.f32.mrb[0].mxu0
    %v2163 = vadd.f32 %v1926, %v2162
    %v2164 = vpop.f32.mrb[0].mxu0
    %v2165 = vpop.f32.mrb[0].mxu0
    %v2166 = vadd.f32 %v1926, %v2165
    %v2167 = vpop.f32.mrb[0].mxu0
    %2168 = vmatprep.mubr.bf16.mxu0 0
    %2169 = vmatmul.mubr.bf16.gmra.mrb[0].mxu0 %v2000
    %v2170 = vpop.f32.mrb[0].mxu0
    %v2171 = vadd.f32 %v1926, %v2170
    %v2172 = vpop.f32.mrb[0].mxu0
    %v2173 = vpop.f32.mrb[0].mxu0
    %v2174 = vadd.f32 %v1926, %v2173
    %v2175 = vpop.f32.mrb[0].mxu0
    %2176 = vmatprep.mubr.bf16.mxu0 0
    %2177 = vmatmul.mubr.bf16.gmra.mrb[0].mxu0 %v2001
    %v2178 = vpop.f32.mrb[0].mxu0
    %v2179 = vadd.f32 %v1926, %v2178
    %v2180 = vpop.f32.mrb[0].mxu0
    %v2181 = vpop.f32.mrb[0].mxu0
    %v2182 = vadd.f32 %v1926, %v2181
    %v2183 = vpop.f32.mrb[0].mxu0
    %2184 = vmatprep.mubr.bf16.mxu0 0
    %2185 = vmatmul.mubr.bf16.gmra.mrb[0].mxu0 %v2002
    %v2186 = vpop.f32.mrb[0].mxu0
    %v2187 = vadd.f32 %v1926, %v2186
    %v2188 = vpop.f32.mrb[0].mxu0
    %v2189 = vpop.f32.mrb[0].mxu0
    %v2190 = vadd.f32 %v1926, %v2189
    %v2191 = vpop.f32.mrb[0].mxu0
    %2192 = vmatprep.mubr.bf16.mxu0 0
    %2193 = vmatmul.mubr.bf16.gmra.mrb[0].mxu0 %v2003
    %v2194 = vpop.f32.mrb[0].mxu0
    %v2195 = vadd.f32 %v1926, %v2194
    %v2196 = vpop.f32.mrb[0].mxu0
    %v2197 = vpop.f32.mrb[0].mxu0
    %v2198 = vadd.f32 %v1926, %v2197
    %v2199 = vpop.f32.mrb[0].mxu0
    %2200 = vmatprep.mubr.bf16.mxu0 0
    %2201 = vmatmul.mubr.bf16.gmra.mrb[0].mxu0 %v2004
    %v2202 = vpop.f32.mrb[0].mxu0
    %v2203 = vadd.f32 %v1926, %v2202
    %v2204 = vpop.f32.mrb[0].mxu0
    %v2205 = vpop.f32.mrb[0].mxu0
    %v2206 = vadd.f32 %v1926, %v2205
    %v2207 = vpop.f32.mrb[0].mxu0
    %2208 = vmatprep.mubr.bf16.mxu0 0
    %2209 = vmatmul.mubr.bf16.gmra.mrb[0].mxu0 %v2005
    %v2210 = vpop.f32.mrb[0].mxu0
    %v2211 = vadd.f32 %v1926, %v2210
    %v2212 = vpop.f32.mrb[0].mxu0
    %v2213 = vpop.f32.mrb[0].mxu0
    %v2214 = vadd.f32 %v1926, %v2213
    %v2215 = vpop.f32.mrb[0].mxu0
    %2216 = vmatprep.mubr.bf16.mxu0 0
    %2217 = vmatmul.mubr.bf16.gmra.mrb[0].mxu0 %v2006
    %v2218 = vpop.f32.mrb[0].mxu0
    %v2219 = vadd.f32 %v1926, %v2218
    %v2220 = vpop.f32.mrb[0].mxu0
    %v2221 = vpop.f32.mrb[0].mxu0
    %v2222 = vadd.f32 %v1926, %v2221
    %v2223 = vpop.f32.mrb[0].mxu0
    %2224 = vmatprep.mubr.bf16.mxu0 0
    %2225 = vmatmul.mubr.bf16.gmra.mrb[0].mxu0 %v2007
    %v2226 = vpop.f32.mrb[0].mxu0
    %v2227 = vadd.f32 %v1926, %v2226
    %v2228 = vpop.f32.mrb[0].mxu0
    %v2229 = vpop.f32.mrb[0].mxu0
    %v2230 = vadd.f32 %v1926, %v2229
    %v2231 = vpop.f32.mrb[0].mxu0
    %2232 = vdwg.mxu0
    %v2233 = vmul.f32 %v2107, 0.01
    %v2234 = vmul.f32 %v2110, 0.01
    %v2235 = vmul.f32 %v2115, 0.01
    %v2236 = vmul.f32 %v2118, 0.01
    %v2237 = vmul.f32 %v2123, 0.01
    %v2238 = vmul.f32 %v2126, 0.01
    %v2239 = vmul.f32 %v2131, 0.01
    %v2240 = vmul.f32 %v2134, 0.01
    %v2241 = vmul.f32 %v2139, 0.01
    %v2242 = vmul.f32 %v2142, 0.01
    %v2243 = vmul.f32 %v2147, 0.01
    %v2244 = vmul.f32 %v2150, 0.01
    %v2245 = vmul.f32 %v2155, 0.01
    %v2246 = vmul.f32 %v2158, 0.01
    %v2247 = vmul.f32 %v2163, 0.01
    %v2248 = vmul.f32 %v2166, 0.01
    %v2249 = vmul.f32 %v2171, 0.01
    %v2250 = vmul.f32 %v2174, 0.01
    %v2251 = vmul.f32 %v2179, 0.01
    %v2252 = vmul.f32 %v2182, 0.01
    %v2253 = vmul.f32 %v2187, 0.01
    %v2254 = vmul.f32 %v2190, 0.01
    %v2255 = vmul.f32 %v2195, 0.01
    %v2256 = vmul.f32 %v2198, 0.01
    %v2257 = vmul.f32 %v2203, 0.01
    %v2258 = vmul.f32 %v2206, 0.01
    %v2259 = vmul.f32 %v2211, 0.01
    %v2260 = vmul.f32 %v2214, 0.01
    %v2261 = vmul.f32 %v2219, 0.01
    %v2262 = vmul.f32 %v2222, 0.01
    %v2263 = vmul.f32 %v2227, 0.01
    %v2264 = vmul.f32 %v2230, 0.01
    %v2265 = vmax.f32 %v2107, %v2233
    %v2266 = vmax.f32 %v2110, %v2234
    %v2267 = vmax.f32 %v2115, %v2235
    %v2268 = vmax.f32 %v2118, %v2236
    %v2269 = vmax.f32 %v2123, %v2237
    %v2270 = vmax.f32 %v2126, %v2238
    %v2271 = vmax.f32 %v2131, %v2239
    %v2272 = vmax.f32 %v2134, %v2240
    %v2273 = vmax.f32 %v2139, %v2241
    %v2274 = vmax.f32 %v2142, %v2242
    %v2275 = vmax.f32 %v2147, %v2243
    %v2276 = vmax.f32 %v2150, %v2244
    %v2277 = vmax.f32 %v2155, %v2245
    %v2278 = vmax.f32 %v2158, %v2246
    %v2279 = vmax.f32 %v2163, %v2247
    %v2280 = vmax.f32 %v2166, %v2248
    %v2281 = vmax.f32 %v2171, %v2249
    %v2282 = vmax.f32 %v2174, %v2250
    %v2283 = vmax.f32 %v2179, %v2251
    %v2284 = vmax.f32 %v2182, %v2252
    %v2285 = vmax.f32 %v2187, %v2253
    %v2286 = vmax.f32 %v2190, %v2254
    %v2287 = vmax.f32 %v2195, %v2255
    %v2288 = vmax.f32 %v2198, %v2256
    %v2289 = vmax.f32 %v2203, %v2257
    %v2290 = vmax.f32 %v2206, %v2258
    %v2291 = vmax.f32 %v2211, %v2259
    %v2292 = vmax.f32 %v2214, %v2260
    %v2293 = vmax.f32 %v2219, %v2261
    %v2294 = vmax.f32 %v2222, %v2262
    %v2295 = vmax.f32 %v2227, %v2263
    %v2296 = vmax.f32 %v2230, %v2264
    %v2297 = vld [vmem:[%s9] sm:$0xf]
    %v2298 = vld [vmem:[%s9 + $0x4] sm:$0xf]
    %v2299 = vld [vmem:[%s9 + $0x8] sm:$0xf]
    %v2300 = vld [vmem:[%s9 + $0xc] sm:$0xf]
    %v2301 = vld [vmem:[%s9 + $0x10] sm:$0xf]
    %v2302 = vld [vmem:[%s9 + $0x14] sm:$0xf]
    %v2303 = vld [vmem:[%s9 + $0x18] sm:$0xf]
    %v2304 = vld [vmem:[%s9 + $0x1c] sm:$0xf]
    %v2305 = vld [vmem:[%s9 + $0x20] sm:$0xf]
    %v2306 = vld [vmem:[%s9 + $0x24] sm:$0xf]
    %v2307 = vld [vmem:[%s9 + $0x28] sm:$0xf]
    %v2308 = vld [vmem:[%s9 + $0x2c] sm:$0xf]
    %v2309 = vld [vmem:[%s9 + $0x30] sm:$0xf]
    %v2310 = vld [vmem:[%s9 + $0x34] sm:$0xf]
    %v2311 = vld [vmem:[%s9 + $0x38] sm:$0xf]
    %v2312 = vld [vmem:[%s9 + $0x3c] sm:$0xf]
    %v2313 = vpack.c.bf16 %v2266, %v2265
    %v2314 = vpack.c.bf16 %v2268, %v2267
    %v2315 = vpack.c.bf16 %v2270, %v2269
    %v2316 = vpack.c.bf16 %v2272, %v2271
    %v2317 = vpack.c.bf16 %v2274, %v2273
    %v2318 = vpack.c.bf16 %v2276, %v2275
    %v2319 = vpack.c.bf16 %v2278, %v2277
    %v2320 = vpack.c.bf16 %v2280, %v2279
    %v2321 = vpack.c.bf16 %v2282, %v2281
    %v2322 = vpack.c.bf16 %v2284, %v2283
    %v2323 = vpack.c.bf16 %v2286, %v2285
    %v2324 = vpack.c.bf16 %v2288, %v2287
    %v2325 = vpack.c.bf16 %v2290, %v2289
    %v2326 = vpack.c.bf16 %v2292, %v2291
    %v2327 = vpack.c.bf16 %v2294, %v2293
    %v2328 = vpack.c.bf16 %v2296, %v2295
    %v2329 = vld [vmem:[%s10] sm:$0x1]
    %v2331 = vlaneseq
    %v2332 = vshrl.u32 %v2331, 7
    %v2333 = vsub.s32 0, %v2332
    %v2334 = vrot.slane %v2329, %v2333
    %v2352 = vunpack.c.l.b16 %v2297
    %v2353 = vunpack.c.l.b16 %v2298
    %v2354 = vunpack.c.l.b16 %v2299
    %v2355 = vunpack.c.l.b16 %v2300
    %v2356 = vunpack.c.l.b16 %v2301
    %v2357 = vunpack.c.l.b16 %v2302
    %v2358 = vunpack.c.l.b16 %v2303
    %v2359 = vunpack.c.l.b16 %v2304
    %v2360 = vunpack.c.l.b16 %v2305
    %v2361 = vunpack.c.l.b16 %v2306
    %v2362 = vunpack.c.l.b16 %v2307
    %v2363 = vunpack.c.l.b16 %v2308
    %v2364 = vunpack.c.l.b16 %v2309
    %v2365 = vunpack.c.l.b16 %v2310
    %v2366 = vunpack.c.l.b16 %v2311
    %v2367 = vunpack.c.l.b16 %v2312
    %v2368 = vpack.c.b16 %v2353, %v2352
    %v2369 = vpack.c.b16 %v2355, %v2354
    %v2370 = vpack.c.b16 %v2357, %v2356
    %v2371 = vpack.c.b16 %v2359, %v2358
    %v2372 = vpack.c.b16 %v2361, %v2360
    %v2373 = vpack.c.b16 %v2363, %v2362
    %v2374 = vpack.c.b16 %v2365, %v2364
    %v2375 = vpack.c.b16 %v2367, %v2366
    %2384 = vmatprep.subr.bf16.mxu0 0
    %2385 = vmatpush1.bf16.msra.mxu0 %v2368
    %2386 = vmatprep.subr.bf16.mxu0 0
    %2387 = vmatpush1.bf16.msra.mxu0 %v2369
    %2388 = vmatprep.subr.bf16.mxu0 0
    %2389 = vmatpush1.bf16.msra.mxu0 %v2370
    %2390 = vmatprep.subr.bf16.mxu0 0
    %2391 = vmatpush1.bf16.msra.mxu0 %v2371
    %2392 = vmatprep.subr.bf16.mxu0 0
    %2393 = vmatpush1.bf16.msra.mxu0 %v2372
    %2394 = vmatprep.subr.bf16.mxu0 0
    %2395 = vmatpush1.bf16.msra.mxu0 %v2373
    %2396 = vmatprep.subr.bf16.mxu0 0
    %2397 = vmatpush1.bf16.msra.mxu0 %v2374
    %2398 = vmatprep.subr.bf16.mxu0 0
    %2399 = vmatpush1.bf16.msra.mxu0 %v2375
    %2400 = vmatprep.subr.bf16.mxu0 0
    %2401 = vmatpush1.bf16.msra.mxu0 0
    %2402 = vmatprep.subr.bf16.mxu0 0
    %2403 = vmatpush1.bf16.msra.mxu0 0
    %2404 = vmatprep.subr.bf16.mxu0 0
    %2405 = vmatpush1.bf16.msra.mxu0 0
    %2406 = vmatprep.subr.bf16.mxu0 0
    %2407 = vmatpush1.bf16.msra.mxu0 0
    %2408 = vmatprep.subr.bf16.mxu0 0
    %2409 = vmatpush1.bf16.msra.mxu0 0
    %2410 = vmatprep.subr.bf16.mxu0 0
    %2411 = vmatpush1.bf16.msra.mxu0 0
    %2412 = vmatprep.subr.bf16.mxu0 0
    %2413 = vmatpush1.bf16.msra.mxu0 0
    %2414 = vmatprep.subr.bf16.mxu0 0
    %2415 = vmatpush1.bf16.msra.mxu0 0
    %2416 = vmatprep.mubr.bf16.mxu0 0
    %2417 = vmatmul.mubr.bf16.gmra.mrb[0].mxu0 %v2313
    %v2418 = vpop.f32.mrb[0].mxu0
    %v2419 = vadd.f32 %v2334, %v2418
    %v2420 = vpop.f32.mrb[0].mxu0
    %v2421 = vpop.f32.mrb[0].mxu0
    %v2422 = vadd.f32 %v2334, %v2421
    %v2423 = vpop.f32.mrb[0].mxu0
    %2424 = vmatprep.mubr.bf16.mxu0 0
    %2425 = vmatmul.mubr.bf16.gmra.mrb[0].mxu0 %v2314
    %v2426 = vpop.f32.mrb[0].mxu0
    %v2427 = vadd.f32 %v2334, %v2426
    %v2428 = vpop.f32.mrb[0].mxu0
    %v2429 = vpop.f32.mrb[0].mxu0
    %v2430 = vadd.f32 %v2334, %v2429
    %v2431 = vpop.f32.mrb[0].mxu0
    %2432 = vmatprep.mubr.bf16.mxu0 0
    %2433 = vmatmul.mubr.bf16.gmra.mrb[0].mxu0 %v2315
    %v2434 = vpop.f32.mrb[0].mxu0
    %v2435 = vadd.f32 %v2334, %v2434
    %v2436 = vpop.f32.mrb[0].mxu0
    %v2437 = vpop.f32.mrb[0].mxu0
    %v2438 = vadd.f32 %v2334, %v2437
    %v2439 = vpop.f32.mrb[0].mxu0
    %2440 = vmatprep.mubr.bf16.mxu0 0
    %2441 = vmatmul.mubr.bf16.gmra.mrb[0].mxu0 %v2316
    %v2442 = vpop.f32.mrb[0].mxu0
    %v2443 = vadd.f32 %v2334, %v2442
    %v2444 = vpop.f32.mrb[0].mxu0
    %v2445 = vpop.f32.mrb[0].mxu0
    %v2446 = vadd.f32 %v2334, %v2445
    %v2447 = vpop.f32.mrb[0].mxu0
    %2448 = vmatprep.mubr.bf16.mxu0 0
    %2449 = vmatmul.mubr.bf16.gmra.mrb[0].mxu0 %v2317
    %v2450 = vpop.f32.mrb[0].mxu0
    %v2451 = vadd.f32 %v2334, %v2450
    %v2452 = vpop.f32.mrb[0].mxu0
    %v2453 = vpop.f32.mrb[0].mxu0
    %v2454 = vadd.f32 %v2334, %v2453
    %v2455 = vpop.f32.mrb[0].mxu0
    %2456 = vmatprep.mubr.bf16.mxu0 0
    %2457 = vmatmul.mubr.bf16.gmra.mrb[0].mxu0 %v2318
    %v2458 = vpop.f32.mrb[0].mxu0
    %v2459 = vadd.f32 %v2334, %v2458
    %v2460 = vpop.f32.mrb[0].mxu0
    %v2461 = vpop.f32.mrb[0].mxu0
    %v2462 = vadd.f32 %v2334, %v2461
    %v2463 = vpop.f32.mrb[0].mxu0
    %2464 = vmatprep.mubr.bf16.mxu0 0
    %2465 = vmatmul.mubr.bf16.gmra.mrb[0].mxu0 %v2319
    %v2466 = vpop.f32.mrb[0].mxu0
    %v2467 = vadd.f32 %v2334, %v2466
    %v2468 = vpop.f32.mrb[0].mxu0
    %v2469 = vpop.f32.mrb[0].mxu0
    %v2470 = vadd.f32 %v2334, %v2469
    %v2471 = vpop.f32.mrb[0].mxu0
    %2472 = vmatprep.mubr.bf16.mxu0 0
    %2473 = vmatmul.mubr.bf16.gmra.mrb[0].mxu0 %v2320
    %v2474 = vpop.f32.mrb[0].mxu0
    %v2475 = vadd.f32 %v2334, %v2474
    %v2476 = vpop.f32.mrb[0].mxu0
    %v2477 = vpop.f32.mrb[0].mxu0
    %v2478 = vadd.f32 %v2334, %v2477
    %v2479 = vpop.f32.mrb[0].mxu0
    %2480 = vmatprep.mubr.bf16.mxu0 0
    %2481 = vmatmul.mubr.bf16.gmra.mrb[0].mxu0 %v2321
    %v2482 = vpop.f32.mrb[0].mxu0
    %v2483 = vadd.f32 %v2334, %v2482
    %v2484 = vpop.f32.mrb[0].mxu0
    %v2485 = vpop.f32.mrb[0].mxu0
    %v2486 = vadd.f32 %v2334, %v2485
    %v2487 = vpop.f32.mrb[0].mxu0
    %2488 = vmatprep.mubr.bf16.mxu0 0
    %2489 = vmatmul.mubr.bf16.gmra.mrb[0].mxu0 %v2322
    %v2490 = vpop.f32.mrb[0].mxu0
    %v2491 = vadd.f32 %v2334, %v2490
    %v2492 = vpop.f32.mrb[0].mxu0
    %v2493 = vpop.f32.mrb[0].mxu0
    %v2494 = vadd.f32 %v2334, %v2493
    %v2495 = vpop.f32.mrb[0].mxu0
    %2496 = vmatprep.mubr.bf16.mxu0 0
    %2497 = vmatmul.mubr.bf16.gmra.mrb[0].mxu0 %v2323
    %v2498 = vpop.f32.mrb[0].mxu0
    %v2499 = vadd.f32 %v2334, %v2498
    %v2500 = vpop.f32.mrb[0].mxu0
    %v2501 = vpop.f32.mrb[0].mxu0
    %v2502 = vadd.f32 %v2334, %v2501
    %v2503 = vpop.f32.mrb[0].mxu0
    %2504 = vmatprep.mubr.bf16.mxu0 0
    %2505 = vmatmul.mubr.bf16.gmra.mrb[0].mxu0 %v2324
    %v2506 = vpop.f32.mrb[0].mxu0
    %v2507 = vadd.f32 %v2334, %v2506
    %v2508 = vpop.f32.mrb[0].mxu0
    %v2509 = vpop.f32.mrb[0].mxu0
    %v2510 = vadd.f32 %v2334, %v2509
    %v2511 = vpop.f32.mrb[0].mxu0
    %2512 = vmatprep.mubr.bf16.mxu0 0
    %2513 = vmatmul.mubr.bf16.gmra.mrb[0].mxu0 %v2325
    %v2514 = vpop.f32.mrb[0].mxu0
    %v2515 = vadd.f32 %v2334, %v2514
    %v2516 = vpop.f32.mrb[0].mxu0
    %v2517 = vpop.f32.mrb[0].mxu0
    %v2518 = vadd.f32 %v2334, %v2517
    %v2519 = vpop.f32.mrb[0].mxu0
    %2520 = vmatprep.mubr.bf16.mxu0 0
    %2521 = vmatmul.mubr.bf16.gmra.mrb[0].mxu0 %v2326
    %v2522 = vpop.f32.mrb[0].mxu0
    %v2523 = vadd.f32 %v2334, %v2522
    %v2524 = vpop.f32.mrb[0].mxu0
    %v2525 = vpop.f32.mrb[0].mxu0
    %v2526 = vadd.f32 %v2334, %v2525
    %v2527 = vpop.f32.mrb[0].mxu0
    %2528 = vmatprep.mubr.bf16.mxu0 0
    %2529 = vmatmul.mubr.bf16.gmra.mrb[0].mxu0 %v2327
    %v2530 = vpop.f32.mrb[0].mxu0
    %v2531 = vadd.f32 %v2334, %v2530
    %v2532 = vpop.f32.mrb[0].mxu0
    %v2533 = vpop.f32.mrb[0].mxu0
    %v2534 = vadd.f32 %v2334, %v2533
    %v2535 = vpop.f32.mrb[0].mxu0
    %2536 = vmatprep.mubr.bf16.mxu0 0
    %2537 = vmatmul.mubr.bf16.gmra.mrb[0].mxu0 %v2328
    %v2538 = vpop.f32.mrb[0].mxu0
    %v2539 = vadd.f32 %v2334, %v2538
    %v2540 = vpop.f32.mrb[0].mxu0
    %v2541 = vpop.f32.mrb[0].mxu0
    %v2542 = vadd.f32 %v2334, %v2541
    %v2543 = vpop.f32.mrb[0].mxu0
    %2544 = vdwg.mxu0
    %v2545 = vadd.f32 %v2419, %v1747
    %v2546 = vadd.f32 %v2422, %v1750
    %v2547 = vadd.f32 %v2427, %v1755
    %v2548 = vadd.f32 %v2430, %v1758
    %v2549 = vadd.f32 %v2435, %v1763
    %v2550 = vadd.f32 %v2438, %v1766
    %v2551 = vadd.f32 %v2443, %v1771
    %v2552 = vadd.f32 %v2446, %v1774
    %v2553 = vadd.f32 %v2451, %v1779
    %v2554 = vadd.f32 %v2454, %v1782
    %v2555 = vadd.f32 %v2459, %v1787
    %v2556 = vadd.f32 %v2462, %v1790
    %v2557 = vadd.f32 %v2467, %v1795
    %v2558 = vadd.f32 %v2470, %v1798
    %v2559 = vadd.f32 %v2475, %v1803
    %v2560 = vadd.f32 %v2478, %v1806
    %v2561 = vadd.f32 %v2483, %v1811
    %v2562 = vadd.f32 %v2486, %v1814
    %v2563 = vadd.f32 %v2491, %v1819
    %v2564 = vadd.f32 %v2494, %v1822
    %v2565 = vadd.f32 %v2499, %v1827
    %v2566 = vadd.f32 %v2502, %v1830
    %v2567 = vadd.f32 %v2507, %v1835
    %v2568 = vadd.f32 %v2510, %v1838
    %v2569 = vadd.f32 %v2515, %v1843
    %v2570 = vadd.f32 %v2518, %v1846
    %v2571 = vadd.f32 %v2523, %v1851
    %v2572 = vadd.f32 %v2526, %v1854
    %v2573 = vadd.f32 %v2531, %v1859
    %v2574 = vadd.f32 %v2534, %v1862
    %v2575 = vadd.f32 %v2539, %v1867
    %v2576 = vadd.f32 %v2542, %v1870
    %v2577 = vld [vmem:[%s11] sm:$0xf]
    %v2578 = vld [vmem:[%s11 + $0x4] sm:$0xf]
    %v2579 = vld [vmem:[%s11 + $0x8] sm:$0xf]
    %v2580 = vld [vmem:[%s11 + $0xc] sm:$0xf]
    %v2581 = vld [vmem:[%s11 + $0x10] sm:$0xf]
    %v2582 = vld [vmem:[%s11 + $0x14] sm:$0xf]
    %v2583 = vld [vmem:[%s11 + $0x18] sm:$0xf]
    %v2584 = vld [vmem:[%s11 + $0x1c] sm:$0xf]
    %v2585 = vld [vmem:[%s11 + $0x20] sm:$0xf]
    %v2586 = vld [vmem:[%s11 + $0x24] sm:$0xf]
    %v2587 = vld [vmem:[%s11 + $0x28] sm:$0xf]
    %v2588 = vld [vmem:[%s11 + $0x2c] sm:$0xf]
    %v2589 = vld [vmem:[%s11 + $0x30] sm:$0xf]
    %v2590 = vld [vmem:[%s11 + $0x34] sm:$0xf]
    %v2591 = vld [vmem:[%s11 + $0x38] sm:$0xf]
    %v2592 = vld [vmem:[%s11 + $0x3c] sm:$0xf]
    %v2593 = vpack.c.bf16 %v2546, %v2545
    %v2594 = vpack.c.bf16 %v2548, %v2547
    %v2595 = vpack.c.bf16 %v2550, %v2549
    %v2596 = vpack.c.bf16 %v2552, %v2551
    %v2597 = vpack.c.bf16 %v2554, %v2553
    %v2598 = vpack.c.bf16 %v2556, %v2555
    %v2599 = vpack.c.bf16 %v2558, %v2557
    %v2600 = vpack.c.bf16 %v2560, %v2559
    %v2601 = vpack.c.bf16 %v2562, %v2561
    %v2602 = vpack.c.bf16 %v2564, %v2563
    %v2603 = vpack.c.bf16 %v2566, %v2565
    %v2604 = vpack.c.bf16 %v2568, %v2567
    %v2605 = vpack.c.bf16 %v2570, %v2569
    %v2606 = vpack.c.bf16 %v2572, %v2571
    %v2607 = vpack.c.bf16 %v2574, %v2573
    %v2608 = vpack.c.bf16 %v2576, %v2575
    %v2609 = vld [vmem:[%s12] sm:$0x1]
    %v2611 = vlaneseq
    %v2612 = vshrl.u32 %v2611, 7
    %v2613 = vsub.s32 0, %v2612
    %v2614 = vrot.slane %v2609, %v2613
    %v2632 = vunpack.c.l.b16 %v2577
    %v2633 = vunpack.c.l.b16 %v2578
    %v2634 = vunpack.c.l.b16 %v2579
    %v2635 = vunpack.c.l.b16 %v2580
    %v2636 = vunpack.c.l.b16 %v2581
    %v2637 = vunpack.c.l.b16 %v2582
    %v2638 = vunpack.c.l.b16 %v2583
    %v2639 = vunpack.c.l.b16 %v2584
    %v2640 = vunpack.c.l.b16 %v2585
    %v2641 = vunpack.c.l.b16 %v2586
    %v2642 = vunpack.c.l.b16 %v2587
    %v2643 = vunpack.c.l.b16 %v2588
    %v2644 = vunpack.c.l.b16 %v2589
    %v2645 = vunpack.c.l.b16 %v2590
    %v2646 = vunpack.c.l.b16 %v2591
    %v2647 = vunpack.c.l.b16 %v2592
    %v2648 = vpack.c.b16 %v2633, %v2632
    %v2649 = vpack.c.b16 %v2635, %v2634
    %v2650 = vpack.c.b16 %v2637, %v2636
    %v2651 = vpack.c.b16 %v2639, %v2638
    %v2652 = vpack.c.b16 %v2641, %v2640
    %v2653 = vpack.c.b16 %v2643, %v2642
    %v2654 = vpack.c.b16 %v2645, %v2644
    %v2655 = vpack.c.b16 %v2647, %v2646
    %2664 = vmatprep.subr.bf16.mxu0 0
    %2665 = vmatpush1.bf16.msra.mxu0 %v2648
    %2666 = vmatprep.subr.bf16.mxu0 0
    %2667 = vmatpush1.bf16.msra.mxu0 %v2649
    %2668 = vmatprep.subr.bf16.mxu0 0
    %2669 = vmatpush1.bf16.msra.mxu0 %v2650
    %2670 = vmatprep.subr.bf16.mxu0 0
    %2671 = vmatpush1.bf16.msra.mxu0 %v2651
    %2672 = vmatprep.subr.bf16.mxu0 0
    %2673 = vmatpush1.bf16.msra.mxu0 %v2652
    %2674 = vmatprep.subr.bf16.mxu0 0
    %2675 = vmatpush1.bf16.msra.mxu0 %v2653
    %2676 = vmatprep.subr.bf16.mxu0 0
    %2677 = vmatpush1.bf16.msra.mxu0 %v2654
    %2678 = vmatprep.subr.bf16.mxu0 0
    %2679 = vmatpush1.bf16.msra.mxu0 %v2655
    %2680 = vmatprep.subr.bf16.mxu0 0
    %2681 = vmatpush1.bf16.msra.mxu0 0
    %2682 = vmatprep.subr.bf16.mxu0 0
    %2683 = vmatpush1.bf16.msra.mxu0 0
    %2684 = vmatprep.subr.bf16.mxu0 0
    %2685 = vmatpush1.bf16.msra.mxu0 0
    %2686 = vmatprep.subr.bf16.mxu0 0
    %2687 = vmatpush1.bf16.msra.mxu0 0
    %2688 = vmatprep.subr.bf16.mxu0 0
    %2689 = vmatpush1.bf16.msra.mxu0 0
    %2690 = vmatprep.subr.bf16.mxu0 0
    %2691 = vmatpush1.bf16.msra.mxu0 0
    %2692 = vmatprep.subr.bf16.mxu0 0
    %2693 = vmatpush1.bf16.msra.mxu0 0
    %2694 = vmatprep.subr.bf16.mxu0 0
    %2695 = vmatpush1.bf16.msra.mxu0 0
    %2696 = vmatprep.mubr.bf16.mxu0 0
    %2697 = vmatmul.mubr.bf16.gmra.mrb[0].mxu0 %v2593
    %v2698 = vpop.f32.mrb[0].mxu0
    %v2699 = vadd.f32 %v2614, %v2698
    %v2700 = vpop.f32.mrb[0].mxu0
    %v2701 = vpop.f32.mrb[0].mxu0
    %v2702 = vadd.f32 %v2614, %v2701
    %v2703 = vpop.f32.mrb[0].mxu0
    %2704 = vmatprep.mubr.bf16.mxu0 0
    %2705 = vmatmul.mubr.bf16.gmra.mrb[0].mxu0 %v2594
    %v2706 = vpop.f32.mrb[0].mxu0
    %v2707 = vadd.f32 %v2614, %v2706
    %v2708 = vpop.f32.mrb[0].mxu0
    %v2709 = vpop.f32.mrb[0].mxu0
    %v2710 = vadd.f32 %v2614, %v2709
    %v2711 = vpop.f32.mrb[0].mxu0
    %2712 = vmatprep.mubr.bf16.mxu0 0
    %2713 = vmatmul.mubr.bf16.gmra.mrb[0].mxu0 %v2595
    %v2714 = vpop.f32.mrb[0].mxu0
    %v2715 = vadd.f32 %v2614, %v2714
    %v2716 = vpop.f32.mrb[0].mxu0
    %v2717 = vpop.f32.mrb[0].mxu0
    %v2718 = vadd.f32 %v2614, %v2717
    %v2719 = vpop.f32.mrb[0].mxu0
    %2720 = vmatprep.mubr.bf16.mxu0 0
    %2721 = vmatmul.mubr.bf16.gmra.mrb[0].mxu0 %v2596
    %v2722 = vpop.f32.mrb[0].mxu0
    %v2723 = vadd.f32 %v2614, %v2722
    %v2724 = vpop.f32.mrb[0].mxu0
    %v2725 = vpop.f32.mrb[0].mxu0
    %v2726 = vadd.f32 %v2614, %v2725
    %v2727 = vpop.f32.mrb[0].mxu0
    %2728 = vmatprep.mubr.bf16.mxu0 0
    %2729 = vmatmul.mubr.bf16.gmra.mrb[0].mxu0 %v2597
    %v2730 = vpop.f32.mrb[0].mxu0
    %v2731 = vadd.f32 %v2614, %v2730
    %v2732 = vpop.f32.mrb[0].mxu0
    %v2733 = vpop.f32.mrb[0].mxu0
    %v2734 = vadd.f32 %v2614, %v2733
    %v2735 = vpop.f32.mrb[0].mxu0
    %2736 = vmatprep.mubr.bf16.mxu0 0
    %2737 = vmatmul.mubr.bf16.gmra.mrb[0].mxu0 %v2598
    %v2738 = vpop.f32.mrb[0].mxu0
    %v2739 = vadd.f32 %v2614, %v2738
    %v2740 = vpop.f32.mrb[0].mxu0
    %v2741 = vpop.f32.mrb[0].mxu0
    %v2742 = vadd.f32 %v2614, %v2741
    %v2743 = vpop.f32.mrb[0].mxu0
    %2744 = vmatprep.mubr.bf16.mxu0 0
    %2745 = vmatmul.mubr.bf16.gmra.mrb[0].mxu0 %v2599
    %v2746 = vpop.f32.mrb[0].mxu0
    %v2747 = vadd.f32 %v2614, %v2746
    %v2748 = vpop.f32.mrb[0].mxu0
    %v2749 = vpop.f32.mrb[0].mxu0
    %v2750 = vadd.f32 %v2614, %v2749
    %v2751 = vpop.f32.mrb[0].mxu0
    %2752 = vmatprep.mubr.bf16.mxu0 0
    %2753 = vmatmul.mubr.bf16.gmra.mrb[0].mxu0 %v2600
    %v2754 = vpop.f32.mrb[0].mxu0
    %v2755 = vadd.f32 %v2614, %v2754
    %v2756 = vpop.f32.mrb[0].mxu0
    %v2757 = vpop.f32.mrb[0].mxu0
    %v2758 = vadd.f32 %v2614, %v2757
    %v2759 = vpop.f32.mrb[0].mxu0
    %2760 = vmatprep.mubr.bf16.mxu0 0
    %2761 = vmatmul.mubr.bf16.gmra.mrb[0].mxu0 %v2601
    %v2762 = vpop.f32.mrb[0].mxu0
    %v2763 = vadd.f32 %v2614, %v2762
    %v2764 = vpop.f32.mrb[0].mxu0
    %v2765 = vpop.f32.mrb[0].mxu0
    %v2766 = vadd.f32 %v2614, %v2765
    %v2767 = vpop.f32.mrb[0].mxu0
    %2768 = vmatprep.mubr.bf16.mxu0 0
    %2769 = vmatmul.mubr.bf16.gmra.mrb[0].mxu0 %v2602
    %v2770 = vpop.f32.mrb[0].mxu0
    %v2771 = vadd.f32 %v2614, %v2770
    %v2772 = vpop.f32.mrb[0].mxu0
    %v2773 = vpop.f32.mrb[0].mxu0
    %v2774 = vadd.f32 %v2614, %v2773
    %v2775 = vpop.f32.mrb[0].mxu0
    %2776 = vmatprep.mubr.bf16.mxu0 0
    %2777 = vmatmul.mubr.bf16.gmra.mrb[0].mxu0 %v2603
    %v2778 = vpop.f32.mrb[0].mxu0
    %v2779 = vadd.f32 %v2614, %v2778
    %v2780 = vpop.f32.mrb[0].mxu0
    %v2781 = vpop.f32.mrb[0].mxu0
    %v2782 = vadd.f32 %v2614, %v2781
    %v2783 = vpop.f32.mrb[0].mxu0
    %2784 = vmatprep.mubr.bf16.mxu0 0
    %2785 = vmatmul.mubr.bf16.gmra.mrb[0].mxu0 %v2604
    %v2786 = vpop.f32.mrb[0].mxu0
    %v2787 = vadd.f32 %v2614, %v2786
    %v2788 = vpop.f32.mrb[0].mxu0
    %v2789 = vpop.f32.mrb[0].mxu0
    %v2790 = vadd.f32 %v2614, %v2789
    %v2791 = vpop.f32.mrb[0].mxu0
    %2792 = vmatprep.mubr.bf16.mxu0 0
    %2793 = vmatmul.mubr.bf16.gmra.mrb[0].mxu0 %v2605
    %v2794 = vpop.f32.mrb[0].mxu0
    %v2795 = vadd.f32 %v2614, %v2794
    %v2796 = vpop.f32.mrb[0].mxu0
    %v2797 = vpop.f32.mrb[0].mxu0
    %v2798 = vadd.f32 %v2614, %v2797
    %v2799 = vpop.f32.mrb[0].mxu0
    %2800 = vmatprep.mubr.bf16.mxu0 0
    %2801 = vmatmul.mubr.bf16.gmra.mrb[0].mxu0 %v2606
    %v2802 = vpop.f32.mrb[0].mxu0
    %v2803 = vadd.f32 %v2614, %v2802
    %v2804 = vpop.f32.mrb[0].mxu0
    %v2805 = vpop.f32.mrb[0].mxu0
    %v2806 = vadd.f32 %v2614, %v2805
    %v2807 = vpop.f32.mrb[0].mxu0
    %2808 = vmatprep.mubr.bf16.mxu0 0
    %2809 = vmatmul.mubr.bf16.gmra.mrb[0].mxu0 %v2607
    %v2810 = vpop.f32.mrb[0].mxu0
    %v2811 = vadd.f32 %v2614, %v2810
    %v2812 = vpop.f32.mrb[0].mxu0
    %v2813 = vpop.f32.mrb[0].mxu0
    %v2814 = vadd.f32 %v2614, %v2813
    %v2815 = vpop.f32.mrb[0].mxu0
    %2816 = vmatprep.mubr.bf16.mxu0 0
    %2817 = vmatmul.mubr.bf16.gmra.mrb[0].mxu0 %v2608
    %v2818 = vpop.f32.mrb[0].mxu0
    %v2819 = vadd.f32 %v2614, %v2818
    %v2820 = vpop.f32.mrb[0].mxu0
    %v2821 = vpop.f32.mrb[0].mxu0
    %v2822 = vadd.f32 %v2614, %v2821
    %v2823 = vpop.f32.mrb[0].mxu0
    %2824 = vdwg.mxu0
    %v2825 = vmul.f32 %v2699, 0.01
    %v2826 = vmul.f32 %v2702, 0.01
    %v2827 = vmul.f32 %v2707, 0.01
    %v2828 = vmul.f32 %v2710, 0.01
    %v2829 = vmul.f32 %v2715, 0.01
    %v2830 = vmul.f32 %v2718, 0.01
    %v2831 = vmul.f32 %v2723, 0.01
    %v2832 = vmul.f32 %v2726, 0.01
    %v2833 = vmul.f32 %v2731, 0.01
    %v2834 = vmul.f32 %v2734, 0.01
    %v2835 = vmul.f32 %v2739, 0.01
    %v2836 = vmul.f32 %v2742, 0.01
    %v2837 = vmul.f32 %v2747, 0.01
    %v2838 = vmul.f32 %v2750, 0.01
    %v2839 = vmul.f32 %v2755, 0.01
    %v2840 = vmul.f32 %v2758, 0.01
    %v2841 = vmul.f32 %v2763, 0.01
    %v2842 = vmul.f32 %v2766, 0.01
    %v2843 = vmul.f32 %v2771, 0.01
    %v2844 = vmul.f32 %v2774, 0.01
    %v2845 = vmul.f32 %v2779, 0.01
    %v2846 = vmul.f32 %v2782, 0.01
    %v2847 = vmul.f32 %v2787, 0.01
    %v2848 = vmul.f32 %v2790, 0.01
    %v2849 = vmul.f32 %v2795, 0.01
    %v2850 = vmul.f32 %v2798, 0.01
    %v2851 = vmul.f32 %v2803, 0.01
    %v2852 = vmul.f32 %v2806, 0.01
    %v2853 = vmul.f32 %v2811, 0.01
    %v2854 = vmul.f32 %v2814, 0.01
    %v2855 = vmul.f32 %v2819, 0.01
    %v2856 = vmul.f32 %v2822, 0.01
    %v2857 = vmax.f32 %v2699, %v2825
    %v2858 = vmax.f32 %v2702, %v2826
    %v2859 = vmax.f32 %v2707, %v2827
    %v2860 = vmax.f32 %v2710, %v2828
    %v2861 = vmax.f32 %v2715, %v2829
    %v2862 = vmax.f32 %v2718, %v2830
    %v2863 = vmax.f32 %v2723, %v2831
    %v2864 = vmax.f32 %v2726, %v2832
    %v2865 = vmax.f32 %v2731, %v2833
    %v2866 = vmax.f32 %v2734, %v2834
    %v2867 = vmax.f32 %v2739, %v2835
    %v2868 = vmax.f32 %v2742, %v2836
    %v2869 = vmax.f32 %v2747, %v2837
    %v2870 = vmax.f32 %v2750, %v2838
    %v2871 = vmax.f32 %v2755, %v2839
    %v2872 = vmax.f32 %v2758, %v2840
    %v2873 = vmax.f32 %v2763, %v2841
    %v2874 = vmax.f32 %v2766, %v2842
    %v2875 = vmax.f32 %v2771, %v2843
    %v2876 = vmax.f32 %v2774, %v2844
    %v2877 = vmax.f32 %v2779, %v2845
    %v2878 = vmax.f32 %v2782, %v2846
    %v2879 = vmax.f32 %v2787, %v2847
    %v2880 = vmax.f32 %v2790, %v2848
    %v2881 = vmax.f32 %v2795, %v2849
    %v2882 = vmax.f32 %v2798, %v2850
    %v2883 = vmax.f32 %v2803, %v2851
    %v2884 = vmax.f32 %v2806, %v2852
    %v2885 = vmax.f32 %v2811, %v2853
    %v2886 = vmax.f32 %v2814, %v2854
    %v2887 = vmax.f32 %v2819, %v2855
    %v2888 = vmax.f32 %v2822, %v2856
    %v2889 = vld [vmem:[%s13] sm:$0xf]
    %v2890 = vld [vmem:[%s13 + $0x4] sm:$0xf]
    %v2891 = vld [vmem:[%s13 + $0x8] sm:$0xf]
    %v2892 = vld [vmem:[%s13 + $0xc] sm:$0xf]
    %v2893 = vld [vmem:[%s13 + $0x10] sm:$0xf]
    %v2894 = vld [vmem:[%s13 + $0x14] sm:$0xf]
    %v2895 = vld [vmem:[%s13 + $0x18] sm:$0xf]
    %v2896 = vld [vmem:[%s13 + $0x1c] sm:$0xf]
    %v2897 = vld [vmem:[%s13 + $0x20] sm:$0xf]
    %v2898 = vld [vmem:[%s13 + $0x24] sm:$0xf]
    %v2899 = vld [vmem:[%s13 + $0x28] sm:$0xf]
    %v2900 = vld [vmem:[%s13 + $0x2c] sm:$0xf]
    %v2901 = vld [vmem:[%s13 + $0x30] sm:$0xf]
    %v2902 = vld [vmem:[%s13 + $0x34] sm:$0xf]
    %v2903 = vld [vmem:[%s13 + $0x38] sm:$0xf]
    %v2904 = vld [vmem:[%s13 + $0x3c] sm:$0xf]
    %v2905 = vpack.c.bf16 %v2858, %v2857
    %v2906 = vpack.c.bf16 %v2860, %v2859
    %v2907 = vpack.c.bf16 %v2862, %v2861
    %v2908 = vpack.c.bf16 %v2864, %v2863
    %v2909 = vpack.c.bf16 %v2866, %v2865
    %v2910 = vpack.c.bf16 %v2868, %v2867
    %v2911 = vpack.c.bf16 %v2870, %v2869
    %v2912 = vpack.c.bf16 %v2872, %v2871
    %v2913 = vpack.c.bf16 %v2874, %v2873
    %v2914 = vpack.c.bf16 %v2876, %v2875
    %v2915 = vpack.c.bf16 %v2878, %v2877
    %v2916 = vpack.c.bf16 %v2880, %v2879
    %v2917 = vpack.c.bf16 %v2882, %v2881
    %v2918 = vpack.c.bf16 %v2884, %v2883
    %v2919 = vpack.c.bf16 %v2886, %v2885
    %v2920 = vpack.c.bf16 %v2888, %v2887
    %v2921 = vld [vmem:[%s14] sm:$0x1]
    %v2923 = vlaneseq
    %v2924 = vshrl.u32 %v2923, 7
    %v2925 = vsub.s32 0, %v2924
    %v2926 = vrot.slane %v2921, %v2925
    %v2944 = vunpack.c.l.b16 %v2889
    %v2945 = vunpack.c.l.b16 %v2890
    %v2946 = vunpack.c.l.b16 %v2891
    %v2947 = vunpack.c.l.b16 %v2892
    %v2948 = vunpack.c.l.b16 %v2893
    %v2949 = vunpack.c.l.b16 %v2894
    %v2950 = vunpack.c.l.b16 %v2895
    %v2951 = vunpack.c.l.b16 %v2896
    %v2952 = vunpack.c.l.b16 %v2897
    %v2953 = vunpack.c.l.b16 %v2898
    %v2954 = vunpack.c.l.b16 %v2899
    %v2955 = vunpack.c.l.b16 %v2900
    %v2956 = vunpack.c.l.b16 %v2901
    %v2957 = vunpack.c.l.b16 %v2902
    %v2958 = vunpack.c.l.b16 %v2903
    %v2959 = vunpack.c.l.b16 %v2904
    %v2960 = vpack.c.b16 %v2945, %v2944
    %v2961 = vpack.c.b16 %v2947, %v2946
    %v2962 = vpack.c.b16 %v2949, %v2948
    %v2963 = vpack.c.b16 %v2951, %v2950
    %v2964 = vpack.c.b16 %v2953, %v2952
    %v2965 = vpack.c.b16 %v2955, %v2954
    %v2966 = vpack.c.b16 %v2957, %v2956
    %v2967 = vpack.c.b16 %v2959, %v2958
    %2976 = vmatprep.subr.bf16.mxu0 0
    %2977 = vmatpush1.bf16.msra.mxu0 %v2960
    %2978 = vmatprep.subr.bf16.mxu0 0
    %2979 = vmatpush1.bf16.msra.mxu0 %v2961
    %2980 = vmatprep.subr.bf16.mxu0 0
    %2981 = vmatpush1.bf16.msra.mxu0 %v2962
    %2982 = vmatprep.subr.bf16.mxu0 0
    %2983 = vmatpush1.bf16.msra.mxu0 %v2963
    %2984 = vmatprep.subr.bf16.mxu0 0
    %2985 = vmatpush1.bf16.msra.mxu0 %v2964
    %2986 = vmatprep.subr.bf16.mxu0 0
    %2987 = vmatpush1.bf16.msra.mxu0 %v2965
    %2988 = vmatprep.subr.bf16.mxu0 0
    %2989 = vmatpush1.bf16.msra.mxu0 %v2966
    %2990 = vmatprep.subr.bf16.mxu0 0
    %2991 = vmatpush1.bf16.msra.mxu0 %v2967
    %2992 = vmatprep.subr.bf16.mxu0 0
    %2993 = vmatpush1.bf16.msra.mxu0 0
    %2994 = vmatprep.subr.bf16.mxu0 0
    %2995 = vmatpush1.bf16.msra.mxu0 0
    %2996 = vmatprep.subr.bf16.mxu0 0
    %2997 = vmatpush1.bf16.msra.mxu0 0
    %2998 = vmatprep.subr.bf16.mxu0 0
    %2999 = vmatpush1.bf16.msra.mxu0 0
    %3000 = vmatprep.subr.bf16.mxu0 0
    %3001 = vmatpush1.bf16.msra.mxu0 0
    %3002 = vmatprep.subr.bf16.mxu0 0
    %3003 = vmatpush1.bf16.msra.mxu0 0
    %3004 = vmatprep.subr.bf16.mxu0 0
    %3005 = vmatpush1.bf16.msra.mxu0 0
    %3006 = vmatprep.subr.bf16.mxu0 0
    %3007 = vmatpush1.bf16.msra.mxu0 0
    %3008 = vmatprep.mubr.bf16.mxu0 0
    %3009 = vmatmul.mubr.bf16.gmra.mrb[0].mxu0 %v2905
    %v3010 = vpop.f32.mrb[0].mxu0
    %v3011 = vadd.f32 %v2926, %v3010
    %v3012 = vpop.f32.mrb[0].mxu0
    %v3013 = vpop.f32.mrb[0].mxu0
    %v3014 = vadd.f32 %v2926, %v3013
    %v3015 = vpop.f32.mrb[0].mxu0
    %3016 = vmatprep.mubr.bf16.mxu0 0
    %3017 = vmatmul.mubr.bf16.gmra.mrb[0].mxu0 %v2906
    %v3018 = vpop.f32.mrb[0].mxu0
    %v3019 = vadd.f32 %v2926, %v3018
    %v3020 = vpop.f32.mrb[0].mxu0
    %v3021 = vpop.f32.mrb[0].mxu0
    %v3022 = vadd.f32 %v2926, %v3021
    %v3023 = vpop.f32.mrb[0].mxu0
    %3024 = vmatprep.mubr.bf16.mxu0 0
    %3025 = vmatmul.mubr.bf16.gmra.mrb[0].mxu0 %v2907
    %v3026 = vpop.f32.mrb[0].mxu0
    %v3027 = vadd.f32 %v2926, %v3026
    %v3028 = vpop.f32.mrb[0].mxu0
    %v3029 = vpop.f32.mrb[0].mxu0
    %v3030 = vadd.f32 %v2926, %v3029
    %v3031 = vpop.f32.mrb[0].mxu0
    %3032 = vmatprep.mubr.bf16.mxu0 0
    %3033 = vmatmul.mubr.bf16.gmra.mrb[0].mxu0 %v2908
    %v3034 = vpop.f32.mrb[0].mxu0
    %v3035 = vadd.f32 %v2926, %v3034
    %v3036 = vpop.f32.mrb[0].mxu0
    %v3037 = vpop.f32.mrb[0].mxu0
    %v3038 = vadd.f32 %v2926, %v3037
    %v3039 = vpop.f32.mrb[0].mxu0
    %3040 = vmatprep.mubr.bf16.mxu0 0
    %3041 = vmatmul.mubr.bf16.gmra.mrb[0].mxu0 %v2909
    %v3042 = vpop.f32.mrb[0].mxu0
    %v3043 = vadd.f32 %v2926, %v3042
    %v3044 = vpop.f32.mrb[0].mxu0
    %v3045 = vpop.f32.mrb[0].mxu0
    %v3046 = vadd.f32 %v2926, %v3045
    %v3047 = vpop.f32.mrb[0].mxu0
    %3048 = vmatprep.mubr.bf16.mxu0 0
    %3049 = vmatmul.mubr.bf16.gmra.mrb[0].mxu0 %v2910
    %v3050 = vpop.f32.mrb[0].mxu0
    %v3051 = vadd.f32 %v2926, %v3050
    %v3052 = vpop.f32.mrb[0].mxu0
    %v3053 = vpop.f32.mrb[0].mxu0
    %v3054 = vadd.f32 %v2926, %v3053
    %v3055 = vpop.f32.mrb[0].mxu0
    %3056 = vmatprep.mubr.bf16.mxu0 0
    %3057 = vmatmul.mubr.bf16.gmra.mrb[0].mxu0 %v2911
    %v3058 = vpop.f32.mrb[0].mxu0
    %v3059 = vadd.f32 %v2926, %v3058
    %v3060 = vpop.f32.mrb[0].mxu0
    %v3061 = vpop.f32.mrb[0].mxu0
    %v3062 = vadd.f32 %v2926, %v3061
    %v3063 = vpop.f32.mrb[0].mxu0
    %3064 = vmatprep.mubr.bf16.mxu0 0
    %3065 = vmatmul.mubr.bf16.gmra.mrb[0].mxu0 %v2912
    %v3066 = vpop.f32.mrb[0].mxu0
    %v3067 = vadd.f32 %v2926, %v3066
    %v3068 = vpop.f32.mrb[0].mxu0
    %v3069 = vpop.f32.mrb[0].mxu0
    %v3070 = vadd.f32 %v2926, %v3069
    %v3071 = vpop.f32.mrb[0].mxu0
    %3072 = vmatprep.mubr.bf16.mxu0 0
    %3073 = vmatmul.mubr.bf16.gmra.mrb[0].mxu0 %v2913
    %v3074 = vpop.f32.mrb[0].mxu0
    %v3075 = vadd.f32 %v2926, %v3074
    %v3076 = vpop.f32.mrb[0].mxu0
    %v3077 = vpop.f32.mrb[0].mxu0
    %v3078 = vadd.f32 %v2926, %v3077
    %v3079 = vpop.f32.mrb[0].mxu0
    %3080 = vmatprep.mubr.bf16.mxu0 0
    %3081 = vmatmul.mubr.bf16.gmra.mrb[0].mxu0 %v2914
    %v3082 = vpop.f32.mrb[0].mxu0
    %v3083 = vadd.f32 %v2926, %v3082
    %v3084 = vpop.f32.mrb[0].mxu0
    %v3085 = vpop.f32.mrb[0].mxu0
    %v3086 = vadd.f32 %v2926, %v3085
    %v3087 = vpop.f32.mrb[0].mxu0
    %3088 = vmatprep.mubr.bf16.mxu0 0
    %3089 = vmatmul.mubr.bf16.gmra.mrb[0].mxu0 %v2915
    %v3090 = vpop.f32.mrb[0].mxu0
    %v3091 = vadd.f32 %v2926, %v3090
    %v3092 = vpop.f32.mrb[0].mxu0
    %v3093 = vpop.f32.mrb[0].mxu0
    %v3094 = vadd.f32 %v2926, %v3093
    %v3095 = vpop.f32.mrb[0].mxu0
    %3096 = vmatprep.mubr.bf16.mxu0 0
    %3097 = vmatmul.mubr.bf16.gmra.mrb[0].mxu0 %v2916
    %v3098 = vpop.f32.mrb[0].mxu0
    %v3099 = vadd.f32 %v2926, %v3098
    %v3100 = vpop.f32.mrb[0].mxu0
    %v3101 = vpop.f32.mrb[0].mxu0
    %v3102 = vadd.f32 %v2926, %v3101
    %v3103 = vpop.f32.mrb[0].mxu0
    %3104 = vmatprep.mubr.bf16.mxu0 0
    %3105 = vmatmul.mubr.bf16.gmra.mrb[0].mxu0 %v2917
    %v3106 = vpop.f32.mrb[0].mxu0
    %v3107 = vadd.f32 %v2926, %v3106
    %v3108 = vpop.f32.mrb[0].mxu0
    %v3109 = vpop.f32.mrb[0].mxu0
    %v3110 = vadd.f32 %v2926, %v3109
    %v3111 = vpop.f32.mrb[0].mxu0
    %3112 = vmatprep.mubr.bf16.mxu0 0
    %3113 = vmatmul.mubr.bf16.gmra.mrb[0].mxu0 %v2918
    %v3114 = vpop.f32.mrb[0].mxu0
    %v3115 = vadd.f32 %v2926, %v3114
    %v3116 = vpop.f32.mrb[0].mxu0
    %v3117 = vpop.f32.mrb[0].mxu0
    %v3118 = vadd.f32 %v2926, %v3117
    %v3119 = vpop.f32.mrb[0].mxu0
    %3120 = vmatprep.mubr.bf16.mxu0 0
    %3121 = vmatmul.mubr.bf16.gmra.mrb[0].mxu0 %v2919
    %v3122 = vpop.f32.mrb[0].mxu0
    %v3123 = vadd.f32 %v2926, %v3122
    %v3124 = vpop.f32.mrb[0].mxu0
    %v3125 = vpop.f32.mrb[0].mxu0
    %v3126 = vadd.f32 %v2926, %v3125
    %v3127 = vpop.f32.mrb[0].mxu0
    %3128 = vmatprep.mubr.bf16.mxu0 0
    %3129 = vmatmul.mubr.bf16.gmra.mrb[0].mxu0 %v2920
    %v3130 = vpop.f32.mrb[0].mxu0
    %v3131 = vadd.f32 %v2926, %v3130
    %v3132 = vpop.f32.mrb[0].mxu0
    %v3133 = vpop.f32.mrb[0].mxu0
    %v3134 = vadd.f32 %v2926, %v3133
    %v3135 = vpop.f32.mrb[0].mxu0
    %3136 = vdwg.mxu0
    %3137 = vst [vmem:[%s15] sm:$0xff] %v3011
    %3138 = vst [vmem:[%s15 + $0x8] sm:$0xff] %v3014
    %3139 = vst [vmem:[%s15 + $0x10] sm:$0xff] %v3019
    %3140 = vst [vmem:[%s15 + $0x18] sm:$0xff] %v3022
    %3141 = vst [vmem:[%s15 + $0x20] sm:$0xff] %v3027
    %3142 = vst [vmem:[%s15 + $0x28] sm:$0xff] %v3030
    %3143 = vst [vmem:[%s15 + $0x30] sm:$0xff] %v3035
    %3144 = vst [vmem:[%s15 + $0x38] sm:$0xff] %v3038
    %3145 = vst [vmem:[%s15 + $0x40] sm:$0xff] %v3043
    %3146 = vst [vmem:[%s15 + $0x48] sm:$0xff] %v3046
    %3147 = vst [vmem:[%s15 + $0x50] sm:$0xff] %v3051
    %3148 = vst [vmem:[%s15 + $0x58] sm:$0xff] %v3054
    %3149 = vst [vmem:[%s15 + $0x60] sm:$0xff] %v3059
    %3150 = vst [vmem:[%s15 + $0x68] sm:$0xff] %v3062
    %3151 = vst [vmem:[%s15 + $0x70] sm:$0xff] %v3067
    %3152 = vst [vmem:[%s15 + $0x78] sm:$0xff] %v3070
    %3153 = vst [vmem:[%s15 + $0x80] sm:$0xff] %v3075
    %3154 = vst [vmem:[%s15 + $0x88] sm:$0xff] %v3078
    %3155 = vst [vmem:[%s15 + $0x90] sm:$0xff] %v3083
    %3156 = vst [vmem:[%s15 + $0x98] sm:$0xff] %v3086
    %3157 = vst [vmem:[%s15 + $0xa0] sm:$0xff] %v3091
    %3158 = vst [vmem:[%s15 + $0xa8] sm:$0xff] %v3094
    %3159 = vst [vmem:[%s15 + $0xb0] sm:$0xff] %v3099
    %3160 = vst [vmem:[%s15 + $0xb8] sm:$0xff] %v3102
    %3161 = vst [vmem:[%s15 + $0xc0] sm:$0xff] %v3107
    %3162 = vst [vmem:[%s15 + $0xc8] sm:$0xff] %v3110
    %3163 = vst [vmem:[%s15 + $0xd0] sm:$0xff] %v3115
    %3164 = vst [vmem:[%s15 + $0xd8] sm:$0xff] %v3118
    %3165 = vst [vmem:[%s15 + $0xe0] sm:$0xff] %v3123
    %3166 = vst [vmem:[%s15 + $0xe8] sm:$0xff] %v3126
    %3167 = vst [vmem:[%s15 + $0xf0] sm:$0xff] %v3131
    %3168 = vst [vmem:[%s15 + $0xf8] sm:$0xff] %v3134
  $region69: #{gcn_layer_forward.3} parent=0 // pred_fallthru
    _
  // Predicated region
  $region70: #{gcn_layer_forward.3} parent=0 // pred_check
    _
  $region71: #{gcn_layer_forward.3} parent=0 // pred_check_branch
    %3170 = sbr.rel (0) target = $region73
  $region72: #{gcn_layer_forward.3} parent=0 // pred_region
    _
  $region73: #{gcn_layer_forward.3} parent=0 // pred_fallthru
    _
  // Predicated region
  $region74: #{gcn_layer_forward.3} parent=0 // pred_check
    _
  $region75: #{gcn_layer_forward.3} parent=0 // pred_check_branch
    %3172 = sbr.rel (0) target = $region77
  $region76: #{gcn_layer_forward.3} parent=0 // pred_region
    _
  $region77: #{gcn_layer_forward.3} parent=0 // pred_fallthru
    _

</llo_original>
